<compile_context>
chip_gen: v7x
topology: tpu7x:2x2x1
jax: 0.10.0
libtpu: 0.0.40
codegen_flags: <defaults>
</compile_context>

<pallas_src>
import functools

import jax
import jax.numpy as jnp
from jax.experimental import pallas as pl
from jax.experimental.pallas import tpu as pltpu


def _round_up(x, n):
    return ((x + n - 1) // n) * n


@functools.lru_cache(maxsize=None)
def _vmem_limit_bytes():
    """Generation-aware VMEM budget (v7x only has 64 MiB per TensorCore)."""
    try:
        cap = pltpu.get_tpu_info().vmem_capacity_bytes
    except Exception:  # query unavailable -> assume the smallest (v7x) budget
        cap = 64 * 1024 * 1024
    return int(min(cap // 2, 64 * 1024 * 1024))


# ---------------------------------------------------------------------------
# Pallas kernel: K-tiled (im2col-matmul) conv + bias + activation
# ---------------------------------------------------------------------------
def _conv_mm_kernel(x_ref, w_ref, b_ref, o_ref, acc_ref, *, act):
    # x_ref: (tm, tk) bf16 patch tile; w_ref: (tk, Cout) bf16 (BN scale folded)
    # b_ref: (1, Cout) f32 bias;       acc_ref: (tm, Cout) f32 accumulator.
    k = pl.program_id(1)

    @pl.when(k == 0)
    def _():
        acc_ref[...] = jnp.zeros_like(acc_ref)

    acc_ref[...] += jnp.dot(x_ref[...], w_ref[...],
                            preferred_element_type=jnp.float32)

    @pl.when(k == pl.num_programs(1) - 1)
    def _():
        y = acc_ref[...] + b_ref[...]                # folded BatchNorm bias
        if act == "lrelu":
            y = jnp.where(y > 0, y, 0.2 * y)         # LeakyReLU(0.2)
        elif act == "sigmoid":
            y = 1.0 / (1.0 + jnp.exp(-y))            # Sigmoid (exact, in [0,1])
        o_ref[...] = y.astype(o_ref.dtype)


# ---------------------------------------------------------------------------
# Glue: im2col patch extraction (pure JAX reshape/slicing, bf16)
# ---------------------------------------------------------------------------
def _im2col(x, kh, kw, stride, pad):
    # TODO(synk): patch extraction is still materialized by XLA (in bf16);
    # fully in-kernel strided gathers would remove this extra HBM round trip.
    n, h, w, c = x.shape
    xp = jnp.pad(x, ((0, 0), (pad, pad), (pad, pad), (0, 0)))
    ho = (h + 2 * pad - kh) // stride + 1
    wo = (w + 2 * pad - kw) // stride + 1
    cols = []
    for i in range(kh):
        for j in range(kw):
            cols.append(xp[:, i:i + ho * stride:stride,
                           j:j + wo * stride:stride, :])
    cols = jnp.concatenate(cols, axis=-1)            # (N, Ho, Wo, KH*KW*C)
    return cols.reshape(n * ho * wo, kh * kw * c), ho, wo


def conv2d_bn_act(x_nhwc, w_oihw, scale, bias, *, stride, pad, act):
    """Conv2d (PyTorch OIHW weight) + folded BatchNorm + activation via Pallas."""
    cout, cin, kh, kw = w_oihw.shape
    cols, ho, wo = _im2col(x_nhwc.astype(jnp.bfloat16), kh, kw, stride, pad)
    m, k = cols.shape

    # Fold the BatchNorm scale into the weight; only a bias stream remains.
    wmat = jnp.transpose(w_oihw, (2, 3, 1, 0)).reshape(kh * kw * cin, cout)
    wmat = (wmat * scale[None, :].astype(wmat.dtype)).astype(jnp.bfloat16)
    bias2d = bias.reshape(1, cout).astype(jnp.float32)

    # M tiling: pad M up to a multiple of tm (no "tile == whole array" case).
    tm = min(256, _round_up(m, 8))
    m_pad = _round_up(m, tm)
    if m_pad != m:
        cols = jnp.pad(cols, ((0, m_pad - m), (0, 0)))

    # K tiling: 1024-wide slices (multiple of 256 for the v6e/v7x MXU) whenever
    # K divides evenly; otherwise take the whole (small) K in a single block.
    tk = 1024 if (k % 1024 == 0 and k >= 1024) else k
    grid = (m_pad // tm, k // tk)

    cost = pl.CostEstimate(
        flops=2 * m_pad * k * cout,
        transcendentals=m_pad * cout if act == "sigmoid" else 0,
        bytes_accessed=2 * (m_pad * k + k * cout) + 4 * (m_pad * cout + cout),
    )

    out = pl.pallas_call(
        functools.partial(_conv_mm_kernel, act=act),
        out_shape=jax.ShapeDtypeStruct((m_pad, cout), jnp.float32),
        grid=grid,
        in_specs=[
            pl.BlockSpec((tm, tk), lambda i, kk: (i, kk)),     # patches
            pl.BlockSpec((tk, cout), lambda i, kk: (kk, 0)),   # weight slice
            pl.BlockSpec((1, cout), lambda i, kk: (0, 0)),     # bias
        ],
        out_specs=pl.BlockSpec((tm, cout), lambda i, kk: (i, 0)),
        scratch_shapes=[pltpu.VMEM((tm, cout), jnp.float32)],
        compiler_params=pltpu.CompilerParams(
            dimension_semantics=("parallel", "arbitrary"),
            vmem_limit_bytes=_vmem_limit_bytes(),
        ),
        cost_estimate=cost,
    )(cols, wmat, bias2d)

    n = x_nhwc.shape[0]
    return out[:m].reshape(n, ho, wo, cout)


# ---------------------------------------------------------------------------
# Parameter initialization (deterministic, DCGAN-style N(0, 0.02))
# ---------------------------------------------------------------------------
def _bn_fold(gamma, beta, mean, var, eps=1e-5):
    s = gamma / jnp.sqrt(var + eps)
    return s, beta - mean * s


def init_discriminator_params(key):
    ks = jax.random.split(key, 11)

    def conv_w(k, cout, cin, ksz=4):
        return 0.02 * jax.random.normal(k, (cout, cin, ksz, ksz), jnp.float32)

    p = {
        "w1": conv_w(ks[0], 64, 3),
        "w2": conv_w(ks[1], 128, 64),
        "w3": conv_w(ks[2], 256, 128),
        "w4": conv_w(ks[3], 512, 256),
        "w5": conv_w(ks[4], 1024, 512),   # conv128 first conv
        "w6": conv_w(ks[5], 1, 1024),     # conv128 final conv
        "w64": conv_w(ks[6], 1, 512),     # conv64 final conv
    }
    # BatchNorm params (inference mode: running_mean=0, running_var=1)
    for name, c, kk in (("bn2", 128, ks[7]), ("bn3", 256, ks[8]),
                        ("bn4", 512, ks[9]), ("bn5", 1024, ks[10])):
        gamma = 1.0 + 0.02 * jax.random.normal(kk, (c,), jnp.float32)
        beta = jnp.zeros((c,), jnp.float32)
        s, b = _bn_fold(gamma, beta,
                        jnp.zeros((c,), jnp.float32),
                        jnp.ones((c,), jnp.float32))
        p[name + "_scale"], p[name + "_bias"] = s, b
    return p


# ---------------------------------------------------------------------------
# Discriminator forward (matches the PyTorch module's forward semantics)
# ---------------------------------------------------------------------------
def discriminator_forward(params, image_size, x_nchw):
    # TODO(synk): Dropout2d(0.25) layers are identity in eval mode; no RNG drop applied.
    x = jnp.transpose(x_nchw, (0, 2, 3, 1))  # NCHW -> NHWC
    ones = lambda c: jnp.ones((c,), jnp.float32)
    zeros = lambda c: jnp.zeros((c,), jnp.float32)

    # self.conv
    x = conv2d_bn_act(x, params["w1"], ones(64), zeros(64),
                      stride=2, pad=1, act="lrelu")
    x = conv2d_bn_act(x, params["w2"], params["bn2_scale"], params["bn2_bias"],
                      stride=2, pad=1, act="lrelu")
    x = conv2d_bn_act(x, params["w3"], params["bn3_scale"], params["bn3_bias"],
                      stride=2, pad=1, act="lrelu")
    x = conv2d_bn_act(x, params["w4"], params["bn4_scale"], params["bn4_bias"],
                      stride=2, pad=1, act="lrelu")

    if image_size == 64:
        # self.conv64
        x = conv2d_bn_act(x, params["w64"], ones(1), zeros(1),
                          stride=1, pad=0, act="sigmoid")
    else:
        # self.conv128
        x = conv2d_bn_act(x, params["w5"], params["bn5_scale"],
                          params["bn5_bias"], stride=2, pad=1, act="lrelu")
        x = conv2d_bn_act(x, params["w6"], ones(1), zeros(1),
                          stride=1, pad=0, act="sigmoid")

    return jnp.transpose(x, (0, 3, 1, 2))  # NHWC -> NCHW


# ---------------------------------------------------------------------------
if __name__ == "__main__":
    key = jax.random.PRNGKey(0)
    k_params, k_input = jax.random.split(key)

    params = init_discriminator_params(k_params)
    # image_size=64 path: input (N=2, C=3, H=64, W=64)  ->  output (2, 1, 1, 1)
    x = jax.random.normal(k_input, (2, 3, 64, 64), jnp.float32)

    fwd = jax.jit(discriminator_forward, static_argnums=1)
    out = jax.block_until_ready(fwd(params, 64, x))

    assert out.shape == (2, 1, 1, 1), out.shape
    assert bool(jnp.all((out >= 0.0) & (out <= 1.0))), "sigmoid range violated"
    print("KERNEL_OK")
</pallas_src>

<mosaic_0001>
module attributes {stable_mosaic.version = 11 : i64} {
  func.func @_conv_mm_kernel(%arg0: i32, %arg1: i32, %arg2: memref<256x48xbf16, #tpu.memory_space<vmem>>, %arg3: memref<48x64xbf16, #tpu.memory_space<vmem>>, %arg4: memref<1x64xf32, #tpu.memory_space<vmem>>, %arg5: memref<256x64xf32, #tpu.memory_space<vmem>>, %arg6: memref<256x64xf32, #tpu.memory_space<vmem>>) attributes {dimension_semantics = [#tpu.dimension_semantics<parallel>, #tpu.dimension_semantics<arbitrary>], iteration_bounds = array<i64: 8, 1>, scalar_prefetch = 0 : i64, scratch_operands = 1 : i64, tpu.core_type = #tpu.core_type<tc>, window_params = [{transform_indices = @transform_0, window_bounds = array<i64: 256, 48>}, {transform_indices = @transform_1, window_bounds = array<i64: 48, 64>}, {pipeline_mode = #tpu.pipeline_mode<synchronous>, transform_indices = @transform_2, window_bounds = array<i64: 1, 64>}, {transform_indices = @transform_3, window_bounds = array<i64: 256, 64>}]} {
    %c0_i32 = arith.constant 0 : i32
    %0 = arith.cmpi eq, %arg1, %c0_i32 : i32
    %1 = arith.extui %0 : i1 to i32
    %c0_i32_0 = arith.constant 0 : i32
    %2 = arith.cmpi ne, %1, %c0_i32_0 : i32
    scf.if %2 {
      %cst_10 = arith.constant 0.000000e+00 : f32
      %12 = vector.broadcast %cst_10 : f32 to vector<256x64xf32>
      %c0_11 = arith.constant 0 : index
      %c0_12 = arith.constant 0 : index
      %13 = vector.load %arg6[%c0_11, %c0_12] : memref<256x64xf32, #tpu.memory_space<vmem>>, vector<256x64xf32>
      tpu.vector_store %arg6[%c0_11, %c0_12], %12 {strides = array<i32>} : memref<256x64xf32, #tpu.memory_space<vmem>>, vector<256x64xf32>,
    } else {
    }
    %c0 = arith.constant 0 : index
    %c0_1 = arith.constant 0 : index
    %3 = vector.load %arg6[%c0, %c0_1] : memref<256x64xf32, #tpu.memory_space<vmem>>, vector<256x64xf32>
    %c0_2 = arith.constant 0 : index
    %c0_3 = arith.constant 0 : index
    %4 = vector.load %arg2[%c0_2, %c0_3] : memref<256x48xbf16, #tpu.memory_space<vmem>>, vector<256x48xbf16>
    %c0_4 = arith.constant 0 : index
    %c0_5 = arith.constant 0 : index
    %5 = vector.load %arg3[%c0_4, %c0_5] : memref<48x64xbf16, #tpu.memory_space<vmem>>, vector<48x64xbf16>
    %cst = arith.constant dense<0.000000e+00> : vector<256x64xf32>
    %6 = tpu.matmul %4, %5, %cst {dimension_numbers = #tpu.dot_dimension_numbers<[1], [0], [0], [1], [0, 0, 1, 1], [], []>} : vector<256x48xbf16>, vector<48x64xbf16>, vector<256x64xf32> -> vector<256x64xf32>
    %7 = arith.addf %3, %6 : vector<256x64xf32>
    %c0_6 = arith.constant 0 : index
    %c0_7 = arith.constant 0 : index
    %8 = vector.load %arg6[%c0_6, %c0_7] : memref<256x64xf32, #tpu.memory_space<vmem>>, vector<256x64xf32>
    tpu.vector_store %arg6[%c0_6, %c0_7], %7 {strides = array<i32>} : memref<256x64xf32, #tpu.memory_space<vmem>>, vector<256x64xf32>,
    %c0_i32_8 = arith.constant 0 : i32
    %9 = arith.cmpi eq, %arg1, %c0_i32_8 : i32
    %10 = arith.extui %9 : i1 to i32
    %c0_i32_9 = arith.constant 0 : i32
    %11 = arith.cmpi ne, %10, %c0_i32_9 : i32
    scf.if %11 {
      %c0_10 = arith.constant 0 : index
      %c0_11 = arith.constant 0 : index
      %12 = vector.load %arg6[%c0_10, %c0_11] : memref<256x64xf32, #tpu.memory_space<vmem>>, vector<256x64xf32>
      %c0_12 = arith.constant 0 : index
      %c0_13 = arith.constant 0 : index
      %13 = vector.load %arg4[%c0_12, %c0_13] : memref<1x64xf32, #tpu.memory_space<vmem>>, vector<1x64xf32>
      %14 = vector.broadcast %13 : vector<1x64xf32> to vector<256x64xf32>
      %15 = arith.addf %12, %14 : vector<256x64xf32>
      %cst_14 = arith.constant 0.000000e+00 : f32
      %16 = vector.broadcast %cst_14 : f32 to vector<256x64xf32>
      %17 = arith.cmpf ogt, %15, %16 : vector<256x64xf32>
      %cst_15 = arith.constant 2.000000e-01 : f32
      %18 = vector.broadcast %cst_15 : f32 to vector<256x64xf32>
      %19 = arith.mulf %18, %15 : vector<256x64xf32>
      %20 = arith.select %17, %15, %19 : vector<256x64xi1>, vector<256x64xf32>
      %c0_16 = arith.constant 0 : index
      %c0_17 = arith.constant 0 : index
      %21 = vector.load %arg5[%c0_16, %c0_17] : memref<256x64xf32, #tpu.memory_space<vmem>>, vector<256x64xf32>
      tpu.vector_store %arg5[%c0_16, %c0_17], %20 {strides = array<i32>} : memref<256x64xf32, #tpu.memory_space<vmem>>, vector<256x64xf32>,
    } else {
    }
    return
  }
  func.func @transform_0(%arg0: i32, %arg1: i32) -> (i32, i32) {
    %c0_i32 = arith.constant 0 : i32
    return %arg0, %arg1 : i32, i32
  }
  func.func @transform_1(%arg0: i32, %arg1: i32) -> (i32, i32) {
    %c0_i32 = arith.constant 0 : i32
    %c0_i32_0 = arith.constant 0 : i32
    return %arg1, %c0_i32 : i32, i32
  }
  func.func @transform_2(%arg0: i32, %arg1: i32) -> (i32, i32) {
    %c0_i32 = arith.constant 0 : i32
    %c0_i32_0 = arith.constant 0 : i32
    %c0_i32_1 = arith.constant 0 : i32
    return %c0_i32, %c0_i32_0 : i32, i32
  }
  func.func @transform_3(%arg0: i32, %arg1: i32) -> (i32, i32) {
    %c0_i32 = arith.constant 0 : i32
    %c0_i32_0 = arith.constant 0 : i32
    return %arg0, %c0_i32 : i32, i32
  }
}

module attributes {stable_mosaic.version = 11 : i64} {
  func.func @_conv_mm_kernel(%arg0: i32, %arg1: i32, %arg2: memref<256x1024xbf16, #tpu.memory_space<vmem>>, %arg3: memref<1024x128xbf16, #tpu.memory_space<vmem>>, %arg4: memref<1x128xf32, #tpu.memory_space<vmem>>, %arg5: memref<256x128xf32, #tpu.memory_space<vmem>>, %arg6: memref<256x128xf32, #tpu.memory_space<vmem>>) attributes {dimension_semantics = [#tpu.dimension_semantics<parallel>, #tpu.dimension_semantics<arbitrary>], iteration_bounds = array<i64: 2, 1>, scalar_prefetch = 0 : i64, scratch_operands = 1 : i64, tpu.core_type = #tpu.core_type<tc>, window_params = [{transform_indices = @transform_0, window_bounds = array<i64: 256, 1024>}, {transform_indices = @transform_1, window_bounds = array<i64: 1024, 128>}, {pipeline_mode = #tpu.pipeline_mode<synchronous>, transform_indices = @transform_2, window_bounds = array<i64: 1, 128>}, {transform_indices = @transform_3, window_bounds = array<i64: 256, 128>}]} {
    %c0_i32 = arith.constant 0 : i32
    %0 = arith.cmpi eq, %arg1, %c0_i32 : i32
    %1 = arith.extui %0 : i1 to i32
    %c0_i32_0 = arith.constant 0 : i32
    %2 = arith.cmpi ne, %1, %c0_i32_0 : i32
    scf.if %2 {
      %cst_10 = arith.constant 0.000000e+00 : f32
      %12 = vector.broadcast %cst_10 : f32 to vector<256x128xf32>
      %c0_11 = arith.constant 0 : index
      %c0_12 = arith.constant 0 : index
      %13 = vector.load %arg6[%c0_11, %c0_12] : memref<256x128xf32, #tpu.memory_space<vmem>>, vector<256x128xf32>
      tpu.vector_store %arg6[%c0_11, %c0_12], %12 {strides = array<i32>} : memref<256x128xf32, #tpu.memory_space<vmem>>, vector<256x128xf32>,
    } else {
    }
    %c0 = arith.constant 0 : index
    %c0_1 = arith.constant 0 : index
    %3 = vector.load %arg6[%c0, %c0_1] : memref<256x128xf32, #tpu.memory_space<vmem>>, vector<256x128xf32>
    %c0_2 = arith.constant 0 : index
    %c0_3 = arith.constant 0 : index
    %4 = vector.load %arg2[%c0_2, %c0_3] : memref<256x1024xbf16, #tpu.memory_space<vmem>>, vector<256x1024xbf16>
    %c0_4 = arith.constant 0 : index
    %c0_5 = arith.constant 0 : index
    %5 = vector.load %arg3[%c0_4, %c0_5] : memref<1024x128xbf16, #tpu.memory_space<vmem>>, vector<1024x128xbf16>
    %cst = arith.constant dense<0.000000e+00> : vector<256x128xf32>
    %6 = tpu.matmul %4, %5, %cst {dimension_numbers = #tpu.dot_dimension_numbers<[1], [0], [0], [1], [0, 0, 1, 1], [], []>} : vector<256x1024xbf16>, vector<1024x128xbf16>, vector<256x128xf32> -> vector<256x128xf32>
    %7 = arith.addf %3, %6 : vector<256x128xf32>
    %c0_6 = arith.constant 0 : index
    %c0_7 = arith.constant 0 : index
    %8 = vector.load %arg6[%c0_6, %c0_7] : memref<256x128xf32, #tpu.memory_space<vmem>>, vector<256x128xf32>
    tpu.vector_store %arg6[%c0_6, %c0_7], %7 {strides = array<i32>} : memref<256x128xf32, #tpu.memory_space<vmem>>, vector<256x128xf32>,
    %c0_i32_8 = arith.constant 0 : i32
    %9 = arith.cmpi eq, %arg1, %c0_i32_8 : i32
    %10 = arith.extui %9 : i1 to i32
    %c0_i32_9 = arith.constant 0 : i32
    %11 = arith.cmpi ne, %10, %c0_i32_9 : i32
    scf.if %11 {
      %c0_10 = arith.constant 0 : index
      %c0_11 = arith.constant 0 : index
      %12 = vector.load %arg6[%c0_10, %c0_11] : memref<256x128xf32, #tpu.memory_space<vmem>>, vector<256x128xf32>
      %c0_12 = arith.constant 0 : index
      %c0_13 = arith.constant 0 : index
      %13 = vector.load %arg4[%c0_12, %c0_13] : memref<1x128xf32, #tpu.memory_space<vmem>>, vector<1x128xf32>
      %14 = vector.broadcast %13 : vector<1x128xf32> to vector<256x128xf32>
      %15 = arith.addf %12, %14 : vector<256x128xf32>
      %cst_14 = arith.constant 0.000000e+00 : f32
      %16 = vector.broadcast %cst_14 : f32 to vector<256x128xf32>
      %17 = arith.cmpf ogt, %15, %16 : vector<256x128xf32>
      %cst_15 = arith.constant 2.000000e-01 : f32
      %18 = vector.broadcast %cst_15 : f32 to vector<256x128xf32>
      %19 = arith.mulf %18, %15 : vector<256x128xf32>
      %20 = arith.select %17, %15, %19 : vector<256x128xi1>, vector<256x128xf32>
      %c0_16 = arith.constant 0 : index
      %c0_17 = arith.constant 0 : index
      %21 = vector.load %arg5[%c0_16, %c0_17] : memref<256x128xf32, #tpu.memory_space<vmem>>, vector<256x128xf32>
      tpu.vector_store %arg5[%c0_16, %c0_17], %20 {strides = array<i32>} : memref<256x128xf32, #tpu.memory_space<vmem>>, vector<256x128xf32>,
    } else {
    }
    return
  }
  func.func @transform_0(%arg0: i32, %arg1: i32) -> (i32, i32) {
    %c0_i32 = arith.constant 0 : i32
    return %arg0, %arg1 : i32, i32
  }
  func.func @transform_1(%arg0: i32, %arg1: i32) -> (i32, i32) {
    %c0_i32 = arith.constant 0 : i32
    %c0_i32_0 = arith.constant 0 : i32
    return %arg1, %c0_i32 : i32, i32
  }
  func.func @transform_2(%arg0: i32, %arg1: i32) -> (i32, i32) {
    %c0_i32 = arith.constant 0 : i32
    %c0_i32_0 = arith.constant 0 : i32
    %c0_i32_1 = arith.constant 0 : i32
    return %c0_i32, %c0_i32_0 : i32, i32
  }
  func.func @transform_3(%arg0: i32, %arg1: i32) -> (i32, i32) {
    %c0_i32 = arith.constant 0 : i32
    %c0_i32_0 = arith.constant 0 : i32
    return %arg0, %c0_i32 : i32, i32
  }
}

module attributes {stable_mosaic.version = 11 : i64} {
  func.func @_conv_mm_kernel(%arg0: i32, %arg1: i32, %arg2: memref<128x1024xbf16, #tpu.memory_space<vmem>>, %arg3: memref<1024x256xbf16, #tpu.memory_space<vmem>>, %arg4: memref<1x256xf32, #tpu.memory_space<vmem>>, %arg5: memref<128x256xf32, #tpu.memory_space<vmem>>, %arg6: memref<128x256xf32, #tpu.memory_space<vmem>>) attributes {dimension_semantics = [#tpu.dimension_semantics<parallel>, #tpu.dimension_semantics<arbitrary>], iteration_bounds = array<i64: 1, 2>, scalar_prefetch = 0 : i64, scratch_operands = 1 : i64, tpu.core_type = #tpu.core_type<tc>, window_params = [{transform_indices = @transform_0, window_bounds = array<i64: 128, 1024>}, {transform_indices = @transform_1, window_bounds = array<i64: 1024, 256>}, {pipeline_mode = #tpu.pipeline_mode<synchronous>, transform_indices = @transform_2, window_bounds = array<i64: 1, 256>}, {transform_indices = @transform_3, window_bounds = array<i64: 128, 256>}]} {
    %c0_i32 = arith.constant 0 : i32
    %0 = arith.cmpi eq, %arg1, %c0_i32 : i32
    %1 = arith.extui %0 : i1 to i32
    %c0_i32_0 = arith.constant 0 : i32
    %2 = arith.cmpi ne, %1, %c0_i32_0 : i32
    scf.if %2 {
      %cst_9 = arith.constant 0.000000e+00 : f32
      %12 = vector.broadcast %cst_9 : f32 to vector<128x256xf32>
      %c0_10 = arith.constant 0 : index
      %c0_11 = arith.constant 0 : index
      %13 = vector.load %arg6[%c0_10, %c0_11] : memref<128x256xf32, #tpu.memory_space<vmem>>, vector<128x256xf32>
      tpu.vector_store %arg6[%c0_10, %c0_11], %12 {strides = array<i32>} : memref<128x256xf32, #tpu.memory_space<vmem>>, vector<128x256xf32>,
    } else {
    }
    %c0 = arith.constant 0 : index
    %c0_1 = arith.constant 0 : index
    %3 = vector.load %arg6[%c0, %c0_1] : memref<128x256xf32, #tpu.memory_space<vmem>>, vector<128x256xf32>
    %c0_2 = arith.constant 0 : index
    %c0_3 = arith.constant 0 : index
    %4 = vector.load %arg2[%c0_2, %c0_3] : memref<128x1024xbf16, #tpu.memory_space<vmem>>, vector<128x1024xbf16>
    %c0_4 = arith.constant 0 : index
    %c0_5 = arith.constant 0 : index
    %5 = vector.load %arg3[%c0_4, %c0_5] : memref<1024x256xbf16, #tpu.memory_space<vmem>>, vector<1024x256xbf16>
    %cst = arith.constant dense<0.000000e+00> : vector<128x256xf32>
    %6 = tpu.matmul %4, %5, %cst {dimension_numbers = #tpu.dot_dimension_numbers<[1], [0], [0], [1], [0, 0, 1, 1], [], []>} : vector<128x1024xbf16>, vector<1024x256xbf16>, vector<128x256xf32> -> vector<128x256xf32>
    %7 = arith.addf %3, %6 : vector<128x256xf32>
    %c0_6 = arith.constant 0 : index
    %c0_7 = arith.constant 0 : index
    %8 = vector.load %arg6[%c0_6, %c0_7] : memref<128x256xf32, #tpu.memory_space<vmem>>, vector<128x256xf32>
    tpu.vector_store %arg6[%c0_6, %c0_7], %7 {strides = array<i32>} : memref<128x256xf32, #tpu.memory_space<vmem>>, vector<128x256xf32>,
    %c1_i32 = arith.constant 1 : i32
    %9 = arith.cmpi eq, %arg1, %c1_i32 : i32
    %10 = arith.extui %9 : i1 to i32
    %c0_i32_8 = arith.constant 0 : i32
    %11 = arith.cmpi ne, %10, %c0_i32_8 : i32
    scf.if %11 {
      %c0_9 = arith.constant 0 : index
      %c0_10 = arith.constant 0 : index
      %12 = vector.load %arg6[%c0_9, %c0_10] : memref<128x256xf32, #tpu.memory_space<vmem>>, vector<128x256xf32>
      %c0_11 = arith.constant 0 : index
      %c0_12 = arith.constant 0 : index
      %13 = vector.load %arg4[%c0_11, %c0_12] : memref<1x256xf32, #tpu.memory_space<vmem>>, vector<1x256xf32>
      %14 = vector.broadcast %13 : vector<1x256xf32> to vector<128x256xf32>
      %15 = arith.addf %12, %14 : vector<128x256xf32>
      %cst_13 = arith.constant 0.000000e+00 : f32
      %16 = vector.broadcast %cst_13 : f32 to vector<128x256xf32>
      %17 = arith.cmpf ogt, %15, %16 : vector<128x256xf32>
      %cst_14 = arith.constant 2.000000e-01 : f32
      %18 = vector.broadcast %cst_14 : f32 to vector<128x256xf32>
      %19 = arith.mulf %18, %15 : vector<128x256xf32>
      %20 = arith.select %17, %15, %19 : vector<128x256xi1>, vector<128x256xf32>
      %c0_15 = arith.constant 0 : index
      %c0_16 = arith.constant 0 : index
      %21 = vector.load %arg5[%c0_15, %c0_16] : memref<128x256xf32, #tpu.memory_space<vmem>>, vector<128x256xf32>
      tpu.vector_store %arg5[%c0_15, %c0_16], %20 {strides = array<i32>} : memref<128x256xf32, #tpu.memory_space<vmem>>, vector<128x256xf32>,
    } else {
    }
    return
  }
  func.func @transform_0(%arg0: i32, %arg1: i32) -> (i32, i32) {
    %c0_i32 = arith.constant 0 : i32
    return %arg0, %arg1 : i32, i32
  }
  func.func @transform_1(%arg0: i32, %arg1: i32) -> (i32, i32) {
    %c0_i32 = arith.constant 0 : i32
    %c0_i32_0 = arith.constant 0 : i32
    return %arg1, %c0_i32 : i32, i32
  }
  func.func @transform_2(%arg0: i32, %arg1: i32) -> (i32, i32) {
    %c0_i32 = arith.constant 0 : i32
    %c0_i32_0 = arith.constant 0 : i32
    %c0_i32_1 = arith.constant 0 : i32
    return %c0_i32, %c0_i32_0 : i32, i32
  }
  func.func @transform_3(%arg0: i32, %arg1: i32) -> (i32, i32) {
    %c0_i32 = arith.constant 0 : i32
    %c0_i32_0 = arith.constant 0 : i32
    return %arg0, %c0_i32 : i32, i32
  }
}

module attributes {stable_mosaic.version = 11 : i64} {
  func.func @_conv_mm_kernel(%arg0: i32, %arg1: i32, %arg2: memref<32x1024xbf16, #tpu.memory_space<vmem>>, %arg3: memref<1024x512xbf16, #tpu.memory_space<vmem>>, %arg4: memref<1x512xf32, #tpu.memory_space<vmem>>, %arg5: memref<32x512xf32, #tpu.memory_space<vmem>>, %arg6: memref<32x512xf32, #tpu.memory_space<vmem>>) attributes {dimension_semantics = [#tpu.dimension_semantics<parallel>, #tpu.dimension_semantics<arbitrary>], iteration_bounds = array<i64: 1, 4>, scalar_prefetch = 0 : i64, scratch_operands = 1 : i64, tpu.core_type = #tpu.core_type<tc>, window_params = [{transform_indices = @transform_0, window_bounds = array<i64: 32, 1024>}, {transform_indices = @transform_1, window_bounds = array<i64: 1024, 512>}, {pipeline_mode = #tpu.pipeline_mode<synchronous>, transform_indices = @transform_2, window_bounds = array<i64: 1, 512>}, {transform_indices = @transform_3, window_bounds = array<i64: 32, 512>}]} {
    %c0_i32 = arith.constant 0 : i32
    %0 = arith.cmpi eq, %arg1, %c0_i32 : i32
    %1 = arith.extui %0 : i1 to i32
    %c0_i32_0 = arith.constant 0 : i32
    %2 = arith.cmpi ne, %1, %c0_i32_0 : i32
    scf.if %2 {
      %cst_9 = arith.constant 0.000000e+00 : f32
      %12 = vector.broadcast %cst_9 : f32 to vector<32x512xf32>
      %c0_10 = arith.constant 0 : index
      %c0_11 = arith.constant 0 : index
      %13 = vector.load %arg6[%c0_10, %c0_11] : memref<32x512xf32, #tpu.memory_space<vmem>>, vector<32x512xf32>
      tpu.vector_store %arg6[%c0_10, %c0_11], %12 {strides = array<i32>} : memref<32x512xf32, #tpu.memory_space<vmem>>, vector<32x512xf32>,
    } else {
    }
    %c0 = arith.constant 0 : index
    %c0_1 = arith.constant 0 : index
    %3 = vector.load %arg6[%c0, %c0_1] : memref<32x512xf32, #tpu.memory_space<vmem>>, vector<32x512xf32>
    %c0_2 = arith.constant 0 : index
    %c0_3 = arith.constant 0 : index
    %4 = vector.load %arg2[%c0_2, %c0_3] : memref<32x1024xbf16, #tpu.memory_space<vmem>>, vector<32x1024xbf16>
    %c0_4 = arith.constant 0 : index
    %c0_5 = arith.constant 0 : index
    %5 = vector.load %arg3[%c0_4, %c0_5] : memref<1024x512xbf16, #tpu.memory_space<vmem>>, vector<1024x512xbf16>
    %cst = arith.constant dense<0.000000e+00> : vector<32x512xf32>
    %6 = tpu.matmul %4, %5, %cst {dimension_numbers = #tpu.dot_dimension_numbers<[1], [0], [0], [1], [0, 0, 1, 1], [], []>} : vector<32x1024xbf16>, vector<1024x512xbf16>, vector<32x512xf32> -> vector<32x512xf32>
    %7 = arith.addf %3, %6 : vector<32x512xf32>
    %c0_6 = arith.constant 0 : index
    %c0_7 = arith.constant 0 : index
    %8 = vector.load %arg6[%c0_6, %c0_7] : memref<32x512xf32, #tpu.memory_space<vmem>>, vector<32x512xf32>
    tpu.vector_store %arg6[%c0_6, %c0_7], %7 {strides = array<i32>} : memref<32x512xf32, #tpu.memory_space<vmem>>, vector<32x512xf32>,
    %c3_i32 = arith.constant 3 : i32
    %9 = arith.cmpi eq, %arg1, %c3_i32 : i32
    %10 = arith.extui %9 : i1 to i32
    %c0_i32_8 = arith.constant 0 : i32
    %11 = arith.cmpi ne, %10, %c0_i32_8 : i32
    scf.if %11 {
      %c0_9 = arith.constant 0 : index
      %c0_10 = arith.constant 0 : index
      %12 = vector.load %arg6[%c0_9, %c0_10] : memref<32x512xf32, #tpu.memory_space<vmem>>, vector<32x512xf32>
      %c0_11 = arith.constant 0 : index
      %c0_12 = arith.constant 0 : index
      %13 = vector.load %arg4[%c0_11, %c0_12] : memref<1x512xf32, #tpu.memory_space<vmem>>, vector<1x512xf32>
      %14 = vector.broadcast %13 : vector<1x512xf32> to vector<32x512xf32>
      %15 = arith.addf %12, %14 : vector<32x512xf32>
      %cst_13 = arith.constant 0.000000e+00 : f32
      %16 = vector.broadcast %cst_13 : f32 to vector<32x512xf32>
      %17 = arith.cmpf ogt, %15, %16 : vector<32x512xf32>
      %cst_14 = arith.constant 2.000000e-01 : f32
      %18 = vector.broadcast %cst_14 : f32 to vector<32x512xf32>
      %19 = arith.mulf %18, %15 : vector<32x512xf32>
      %20 = arith.select %17, %15, %19 : vector<32x512xi1>, vector<32x512xf32>
      %c0_15 = arith.constant 0 : index
      %c0_16 = arith.constant 0 : index
      %21 = vector.load %arg5[%c0_15, %c0_16] : memref<32x512xf32, #tpu.memory_space<vmem>>, vector<32x512xf32>
      tpu.vector_store %arg5[%c0_15, %c0_16], %20 {strides = array<i32>} : memref<32x512xf32, #tpu.memory_space<vmem>>, vector<32x512xf32>,
    } else {
    }
    return
  }
  func.func @transform_0(%arg0: i32, %arg1: i32) -> (i32, i32) {
    %c0_i32 = arith.constant 0 : i32
    return %arg0, %arg1 : i32, i32
  }
  func.func @transform_1(%arg0: i32, %arg1: i32) -> (i32, i32) {
    %c0_i32 = arith.constant 0 : i32
    %c0_i32_0 = arith.constant 0 : i32
    return %arg1, %c0_i32 : i32, i32
  }
  func.func @transform_2(%arg0: i32, %arg1: i32) -> (i32, i32) {
    %c0_i32 = arith.constant 0 : i32
    %c0_i32_0 = arith.constant 0 : i32
    %c0_i32_1 = arith.constant 0 : i32
    return %c0_i32, %c0_i32_0 : i32, i32
  }
  func.func @transform_3(%arg0: i32, %arg1: i32) -> (i32, i32) {
    %c0_i32 = arith.constant 0 : i32
    %c0_i32_0 = arith.constant 0 : i32
    return %arg0, %c0_i32 : i32, i32
  }
}

module attributes {stable_mosaic.version = 11 : i64} {
  func.func @_conv_mm_kernel(%arg0: i32, %arg1: i32, %arg2: memref<8x1024xbf16, #tpu.memory_space<vmem>>, %arg3: memref<1024x1xbf16, #tpu.memory_space<vmem>>, %arg4: memref<1x1xf32, #tpu.memory_space<vmem>>, %arg5: memref<8x1xf32, #tpu.memory_space<vmem>>, %arg6: memref<8x1xf32, #tpu.memory_space<vmem>>) attributes {dimension_semantics = [#tpu.dimension_semantics<parallel>, #tpu.dimension_semantics<arbitrary>], iteration_bounds = array<i64: 1, 8>, scalar_prefetch = 0 : i64, scratch_operands = 1 : i64, tpu.core_type = #tpu.core_type<tc>, window_params = [{transform_indices = @transform_0, window_bounds = array<i64: 8, 1024>}, {transform_indices = @transform_1, window_bounds = array<i64: 1024, 1>}, {pipeline_mode = #tpu.pipeline_mode<synchronous>, transform_indices = @transform_2, window_bounds = array<i64: 1, 1>}, {transform_indices = @transform_3, window_bounds = array<i64: 8, 1>}]} {
    %c0_i32 = arith.constant 0 : i32
    %0 = arith.cmpi eq, %arg1, %c0_i32 : i32
    %1 = arith.extui %0 : i1 to i32
    %c0_i32_0 = arith.constant 0 : i32
    %2 = arith.cmpi ne, %1, %c0_i32_0 : i32
    scf.if %2 {
      %cst_9 = arith.constant 0.000000e+00 : f32
      %12 = vector.broadcast %cst_9 : f32 to vector<8x1xf32>
      %c0_10 = arith.constant 0 : index
      %c0_11 = arith.constant 0 : index
      %13 = vector.load %arg6[%c0_10, %c0_11] : memref<8x1xf32, #tpu.memory_space<vmem>>, vector<8x1xf32>
      tpu.vector_store %arg6[%c0_10, %c0_11], %12 {strides = array<i32>} : memref<8x1xf32, #tpu.memory_space<vmem>>, vector<8x1xf32>,
    } else {
    }
    %c0 = arith.constant 0 : index
    %c0_1 = arith.constant 0 : index
    %3 = vector.load %arg6[%c0, %c0_1] : memref<8x1xf32, #tpu.memory_space<vmem>>, vector<8x1xf32>
    %c0_2 = arith.constant 0 : index
    %c0_3 = arith.constant 0 : index
    %4 = vector.load %arg2[%c0_2, %c0_3] : memref<8x1024xbf16, #tpu.memory_space<vmem>>, vector<8x1024xbf16>
    %c0_4 = arith.constant 0 : index
    %c0_5 = arith.constant 0 : index
    %5 = vector.load %arg3[%c0_4, %c0_5] : memref<1024x1xbf16, #tpu.memory_space<vmem>>, vector<1024x1xbf16>
    %cst = arith.constant dense<0.000000e+00> : vector<8x1xf32>
    %6 = tpu.matmul %4, %5, %cst {dimension_numbers = #tpu.dot_dimension_numbers<[1], [0], [0], [1], [0, 0, 1, 1], [], []>} : vector<8x1024xbf16>, vector<1024x1xbf16>, vector<8x1xf32> -> vector<8x1xf32>
    %7 = arith.addf %3, %6 : vector<8x1xf32>
    %c0_6 = arith.constant 0 : index
    %c0_7 = arith.constant 0 : index
    %8 = vector.load %arg6[%c0_6, %c0_7] : memref<8x1xf32, #tpu.memory_space<vmem>>, vector<8x1xf32>
    tpu.vector_store %arg6[%c0_6, %c0_7], %7 {strides = array<i32>} : memref<8x1xf32, #tpu.memory_space<vmem>>, vector<8x1xf32>,
    %c7_i32 = arith.constant 7 : i32
    %9 = arith.cmpi eq, %arg1, %c7_i32 : i32
    %10 = arith.extui %9 : i1 to i32
    %c0_i32_8 = arith.constant 0 : i32
    %11 = arith.cmpi ne, %10, %c0_i32_8 : i32
    scf.if %11 {
      %c0_9 = arith.constant 0 : index
      %c0_10 = arith.constant 0 : index
      %12 = vector.load %arg6[%c0_9, %c0_10] : memref<8x1xf32, #tpu.memory_space<vmem>>, vector<8x1xf32>
      %c0_11 = arith.constant 0 : index
      %c0_12 = arith.constant 0 : index
      %13 = vector.load %arg4[%c0_11, %c0_12] : memref<1x1xf32, #tpu.memory_space<vmem>>, vector<1x1xf32>
      %14 = vector.broadcast %13 : vector<1x1xf32> to vector<8x1xf32>
      %15 = arith.addf %12, %14 : vector<8x1xf32>
      %cst_13 = arith.constant 0.000000e+00 : f32
      %16 = vector.broadcast %cst_13 : f32 to vector<8x1xf32>
      %17 = arith.subf %16, %15 : vector<8x1xf32>
      %18 = math.exp %17 : vector<8x1xf32>
      %cst_14 = arith.constant 1.000000e+00 : f32
      %19 = vector.broadcast %cst_14 : f32 to vector<8x1xf32>
      %20 = arith.addf %19, %18 : vector<8x1xf32>
      %cst_15 = arith.constant 1.000000e+00 : f32
      %21 = vector.broadcast %cst_15 : f32 to vector<8x1xf32>
      %22 = arith.divf %21, %20 : vector<8x1xf32>
      %c0_16 = arith.constant 0 : index
      %c0_17 = arith.constant 0 : index
      %23 = vector.load %arg5[%c0_16, %c0_17] : memref<8x1xf32, #tpu.memory_space<vmem>>, vector<8x1xf32>
      tpu.vector_store %arg5[%c0_16, %c0_17], %22 {strides = array<i32>} : memref<8x1xf32, #tpu.memory_space<vmem>>, vector<8x1xf32>,
    } else {
    }
    return
  }
  func.func @transform_0(%arg0: i32, %arg1: i32) -> (i32, i32) {
    %c0_i32 = arith.constant 0 : i32
    return %arg0, %arg1 : i32, i32
  }
  func.func @transform_1(%arg0: i32, %arg1: i32) -> (i32, i32) {
    %c0_i32 = arith.constant 0 : i32
    %c0_i32_0 = arith.constant 0 : i32
    return %arg1, %c0_i32 : i32, i32
  }
  func.func @transform_2(%arg0: i32, %arg1: i32) -> (i32, i32) {
    %c0_i32 = arith.constant 0 : i32
    %c0_i32_0 = arith.constant 0 : i32
    %c0_i32_1 = arith.constant 0 : i32
    return %c0_i32, %c0_i32_0 : i32, i32
  }
  func.func @transform_3(%arg0: i32, %arg1: i32) -> (i32, i32) {
    %c0_i32 = arith.constant 0 : i32
    %c0_i32_0 = arith.constant 0 : i32
    return %arg0, %c0_i32 : i32, i32
  }
}

</mosaic_0001>

<llo_original>
// kernel: discriminator_forward.5
$region0: #{discriminator_forward.5}
  #allocation0 [shape = 'u32[]', space=smem, size = 0x4, offset = 0x4, fixed_abs, tag = 'smem constant byte address 0x4 - core index']
  #allocation1 [shape = 'u32[144,128]{1,0:T(1,128)}', space=vmem, size = 0x12000, scoped, tag = 'internal scratch']
  #allocation2 [shape = 'f32[256,64]{1,0:T(8,128)}', space=vmem, size = 0x20000, scoped, tag = 'scratch operand']
  %s0 = inlined_call_operand.vmem [shape: bf16[2048,48], index: 0, kind: input, shape index: {}]
  %s1 = inlined_call_operand.vmem [shape: bf16[48,64], index: 1, kind: input, shape index: {}]
  %s2 = inlined_call_operand.vmem [shape: f32[1,64], index: 2, kind: input, shape index: {}]
  %s3 = inlined_call_operand.vmem [shape: f32[2048,64], index: 3, kind: output, shape index: {}]
  %s4 = sld [smem:[#allocation0]]
  $region53: #{discriminator_forward.5} parent=0
    _
  %s6 = ssub.s32 1, %s4
  %s7 = scalar_select 0, %s6, %s4
  loop: start=0, step=1, limit=10
  $region2: #{discriminator_forward.5} parent=0 // loop_pre_header
    _
  $region3: #{discriminator_forward.5} parent=0 // loop_header
    %s9 = sphi 0, %s13
    %p10 = scmp.ge.s32.totalorder %s9, 10
    %s16 = sphi 0, %s28
    %s17 = sphi 0, %s24
    %s18 = sphi 0, %s16
    %s19 = sphi 0, %s17
    %s20 = sphi 0, %s18
    %s21 = sphi 0, %s19
    %s33 = sphi 0, %s35
    %s36 = sphi 0, %s33
    %s37 = sphi 0, %s36
    %s53 = sphi 0, %s37
    %s59 = sphi 0, %s61
    %s62 = sphi 0, %s59
    %s63 = sphi 0, %s62
    %s79 = sphi 0, %s63
    %s83 = sphi 0, %s83
    %s85 = sphi 0, %s83
    %s86 = sphi 0, %s85
    %s100 = sphi 0, %s86
    %s106 = sphi 0, %s108
    %s109 = sphi 0, %s106
    %s110 = sphi 0, %s109
    %s126 = sphi 0, %s110
  $region4: #{discriminator_forward.5} parent=0 // loop_header_branch
    %12 = sbr.rel (%p10) target = $region8
  $region5: #{discriminator_forward.5} parent=0 // loop_body
    %s14 = ssub.s32 %s9, 1
    %s15 = ssub.s32 %s9, 2
    %s22 = sadd.s32 1, %s17
    %p23 = scmp.ge.s32.totalorder %s22, 1
    %s24 = scalar_select %p23, 0, %s22
    %s25 = sadd.s32 1, %s16
    %s26 = scalar_select %p23, %s25, %s16
    %p27 = scmp.ge.s32.totalorder %s26, 8
    %s28 = scalar_select %p27, 0, %s26
    %s29 = ssub.s32 %s16, %s28
    %s30 = ssub.s32 %s17, %s24
    %s31 = sor.u32 %s29, %s30
    %p32 = scmp.eq.s32.totalorder %s31, 0
    %s34 = sadd.s32 %s33, 1
    %s35 = scalar_select %p32, %s33, %s34
    %p38 = pneg %p32
    %p39 = scmp.eq.s32.totalorder %s9, 7
    %p40 = por %p38, %p39
    %p41 = scmp.ne.s32.totalorder %s33, %s36
    %p42 = scmp.eq.s32.totalorder %s9, 0
    %p43 = por %p41, %p42
    %p44 = scmp.ne.s32.totalorder %s33, %s36
    %p45 = scmp.eq.s32.totalorder %s14, 7
    %p46 = por %p44, %p45
    %p47 = scmp.ne.s32.totalorder %s36, %s37
    %p48 = scmp.eq.s32.totalorder %s14, 0
    %p49 = por %p47, %p48
    %p50 = scmp.ne.s32.totalorder %s36, %s37
    %p51 = scmp.eq.s32.totalorder %s15, 7
    %p52 = por %p50, %p51
    %p54 = scmp.ne.s32.totalorder %s37, %s53
    %p55 = scmp.eq.s32.totalorder %s15, 0
    %p56 = por %p54, %p55
    %s57 = ssub.s32 %s17, %s24
    %p58 = scmp.eq.s32.totalorder %s57, 0
    %s60 = sadd.s32 %s59, 1
    %s61 = scalar_select %p58, %s59, %s60
    %p64 = pneg %p58
    %p65 = scmp.eq.s32.totalorder %s9, 7
    %p66 = por %p64, %p65
    %p67 = scmp.ne.s32.totalorder %s59, %s62
    %p68 = scmp.eq.s32.totalorder %s9, 0
    %p69 = por %p67, %p68
    %p70 = scmp.ne.s32.totalorder %s59, %s62
    %p71 = scmp.eq.s32.totalorder %s14, 7
    %p72 = por %p70, %p71
    %p73 = scmp.ne.s32.totalorder %s62, %s63
    %p74 = scmp.eq.s32.totalorder %s14, 0
    %p75 = por %p73, %p74
    %p76 = scmp.ne.s32.totalorder %s62, %s63
    %p77 = scmp.eq.s32.totalorder %s15, 7
    %p78 = por %p76, %p77
    %p80 = scmp.ne.s32.totalorder %s63, %s79
    %p81 = scmp.eq.s32.totalorder %s15, 0
    %p82 = por %p80, %p81
    %s84 = sadd.s32 %s83, 1
    %p87 = scmp.eq.s32.totalorder %s9, 7
    %p88 = scmp.ne.s32.totalorder %s83, %s85
    %p89 = scmp.eq.s32.totalorder %s9, 0
    %p90 = por %p88, %p89
    %p91 = scmp.ne.s32.totalorder %s83, %s85
    %p92 = scmp.eq.s32.totalorder %s14, 7
    %p93 = por %p91, %p92
    %p94 = scmp.ne.s32.totalorder %s85, %s86
    %p95 = scmp.eq.s32.totalorder %s14, 0
    %p96 = por %p94, %p95
    %p97 = scmp.ne.s32.totalorder %s85, %s86
    %p98 = scmp.eq.s32.totalorder %s15, 7
    %p99 = por %p97, %p98
    %p101 = scmp.ne.s32.totalorder %s86, %s100
    %p102 = scmp.eq.s32.totalorder %s15, 0
    %p103 = por %p101, %p102
    %s104 = ssub.s32 %s16, %s28
    %p105 = scmp.eq.s32.totalorder %s104, 0
    %s107 = sadd.s32 %s106, 1
    %s108 = scalar_select %p105, %s106, %s107
    %p111 = pneg %p105
    %p112 = scmp.eq.s32.totalorder %s9, 7
    %p113 = por %p111, %p112
    %p114 = scmp.ne.s32.totalorder %s106, %s109
    %p115 = scmp.eq.s32.totalorder %s9, 0
    %p116 = por %p114, %p115
    %p117 = scmp.ne.s32.totalorder %s106, %s109
    %p118 = scmp.eq.s32.totalorder %s14, 7
    %p119 = por %p117, %p118
    %p120 = scmp.ne.s32.totalorder %s109, %s110
    %p121 = scmp.eq.s32.totalorder %s14, 0
    %p122 = por %p120, %p121
    %p123 = scmp.ne.s32.totalorder %s109, %s110
    %p124 = scmp.eq.s32.totalorder %s15, 7
    %p125 = por %p123, %p124
    %p127 = scmp.ne.s32.totalorder %s110, %s126
    %p128 = scmp.eq.s32.totalorder %s15, 0
    %p129 = por %p127, %p128
    %p130 = scmp.le.s32.totalorder 1, %s9
    %p131 = scmp.lt.s32.totalorder %s9, 9
    %p132 = pnand %p130, %p131
    %p133 = pneg %p132
    // Predicated region
    $region9: #{discriminator_forward.5} parent=5 // pred_check
      _
    $region10: #{discriminator_forward.5} parent=5 // pred_check_branch
      %135 = sbr.rel (%p132) target = $region12
    $region11: #{discriminator_forward.5} parent=5 // pred_region
      %s136 = ssub.s32 %s9, 1
      // Predicated region
      $region13: #{discriminator_forward.5} parent=11 // pred_check
        %p137 = pneg %p75
      $region14: #{discriminator_forward.5} parent=11 // pred_check_branch
        %139 = sbr.rel (%p137) target = $region16
      $region15: #{discriminator_forward.5} parent=11 // pred_region
        %s140 = smul.u32 6, %s19
        %p141 = scmp.lt.s32.totalorder %s140, 5
        %s142 = scalar_select %p141, %s140, 5
        %s143 = smul.addr %s142, 4
        %s144 = scalar_lea.vmem %s1, %s143
        %s145 = smul.u32 6, %s19
      $region16: #{discriminator_forward.5} parent=11 // pred_fallthru
        _
      // Predicated region
      $region17: #{discriminator_forward.5} parent=11 // pred_check
        %p146 = pneg %p96
      $region18: #{discriminator_forward.5} parent=11 // pred_check_branch
        %148 = sbr.rel (%p146) target = $region20
      $region19: #{discriminator_forward.5} parent=11 // pred_region
        _
      $region20: #{discriminator_forward.5} parent=11 // pred_fallthru
        _
    $region12: #{discriminator_forward.5} parent=5 // pred_fallthru
      _
    %p149 = scmp.lt.s32.totalorder %s9, 8
    // Predicated region
    $region21: #{discriminator_forward.5} parent=5 // pred_check
      %p150 = pneg %p149
    $region22: #{discriminator_forward.5} parent=5 // pred_check_branch
      %152 = sbr.rel (%p150) target = $region24
    $region23: #{discriminator_forward.5} parent=5 // pred_region
      // Predicated region
      $region25: #{discriminator_forward.5} parent=23 // pred_check
        %p153 = pneg %p43
      $region26: #{discriminator_forward.5} parent=23 // pred_check_branch
        %155 = sbr.rel (%p153) target = $region28
      $region27: #{discriminator_forward.5} parent=23 // pred_region
        %s156 = smul.u32 32, %s16
        %p157 = scmp.lt.s32.totalorder %s156, 255
        %s158 = scalar_select %p157, %s156, 255
        %p159 = scmp.lt.s32.totalorder %s17, 0
        %s160 = scalar_select %p159, %s17, 0
        %s161 = sadd.s32 %s160, %s158
        %s162 = smul.addr %s161, 4
        %s163 = scalar_lea.vmem %s0, %s162
        %s164 = smul.u32 32, %s16
      $region28: #{discriminator_forward.5} parent=23 // pred_fallthru
        _
    $region24: #{discriminator_forward.5} parent=5 // pred_fallthru
      _
    %p165 = scmp.le.s32.totalorder 1, %s9
    %p166 = scmp.lt.s32.totalorder %s9, 9
    %p167 = pnand %p165, %p166
    %p168 = pneg %p167
    // Predicated region
    $region29: #{discriminator_forward.5} parent=5 // pred_check
      _
    $region30: #{discriminator_forward.5} parent=5 // pred_check_branch
      %170 = sbr.rel (%p167) target = $region32
    $region31: #{discriminator_forward.5} parent=5 // pred_region
      %s171 = ssub.s32 %s9, 1
      %s172 = smul.u32 32, %s18
      %p173 = scmp.lt.s32.totalorder %s172, 255
      %s174 = scalar_select %p173, %s172, 255
      %p175 = scmp.lt.s32.totalorder %s19, 0
      %s176 = scalar_select %p175, %s19, 0
      %s177 = sadd.s32 %s176, %s174
      %s178 = smul.addr %s177, 4
      %s179 = scalar_lea.vmem %s0, %s178
      %p180 = pneg %p49
      %p181 = pneg %p46
      %s182 = smul.u32 6, %s19
      %p183 = scmp.lt.s32.totalorder %s182, 5
      %s184 = scalar_select %p183, %s182, 5
      %s185 = smul.addr %s184, 4
      %s186 = scalar_lea.vmem %s1, %s185
      %p187 = pneg %p75
      %p188 = pneg %p72
      %p189 = pneg %p96
      %p190 = pneg %p93
      %p191 = pneg %p122
      %p192 = pneg %p119
      %s193 = smul.u32 32, %s18
      %p194 = scmp.lt.s32.totalorder %s193, 255
      %s195 = scalar_select %p194, %s193, 255
      %s196 = smul.addr %s195, 8
      %s197 = scalar_lea.vmem %s3, %s196
      %s198 = smul.u32 32, %s18
      %p199 = scmp.lt.s32.totalorder %s198, 255
      %s200 = scalar_select %p199, %s198, 255
      %p201 = scmp.lt.s32.totalorder %s19, 0
      %s202 = scalar_select %p201, %s19, 0
      %s203 = sadd.s32 %s202, %s200
      %s204 = smul.addr %s203, 4
      %s205 = scalar_lea.vmem %s0, %s204
      %s206 = smul.u32 32, %s18
      %s207 = smul.u32 6, %s19
      %p208 = scmp.lt.s32.totalorder %s207, 5
      %s209 = scalar_select %p208, %s207, 5
      %s210 = smul.addr %s209, 4
      %s211 = scalar_lea.vmem %s1, %s210
      %s212 = smul.u32 6, %s19
      %s213 = smul.u32 32, %s18
      %p214 = scmp.lt.s32.totalorder %s213, 255
      %s215 = scalar_select %p214, %s213, 255
      %s216 = smul.addr %s215, 8
      %s217 = scalar_lea.vmem %s3, %s216
      %s218 = smul.u32 32, %s18
      %p220 = scmp.eq.s32.totalorder %s19, 0
      // Predicated region
      $region33: #{discriminator_forward.5} parent=31 // pred_check
        %p221 = pneg %p220
      $region34: #{discriminator_forward.5} parent=31 // pred_check_branch
        %223 = sbr.rel (%p221) target = $region36
      $region35: #{discriminator_forward.5} parent=31 // pred_region
        %vm224 = vcmask 523264
        %225 = vst.msk [vmem:[#allocation2] sm:$0xff] %vm224, 0.0
        %226 = vst.msk [vmem:[#allocation2 + $0x8] sm:$0xff] %vm224, 0.0
        %227 = vst.msk [vmem:[#allocation2 + $0x10] sm:$0xff] %vm224, 0.0
        %228 = vst.msk [vmem:[#allocation2 + $0x18] sm:$0xff] %vm224, 0.0
        %229 = vst.msk [vmem:[#allocation2 + $0x20] sm:$0xff] %vm224, 0.0
        %230 = vst.msk [vmem:[#allocation2 + $0x28] sm:$0xff] %vm224, 0.0
        %231 = vst.msk [vmem:[#allocation2 + $0x30] sm:$0xff] %vm224, 0.0
        %232 = vst.msk [vmem:[#allocation2 + $0x38] sm:$0xff] %vm224, 0.0
        %233 = vst.msk [vmem:[#allocation2 + $0x40] sm:$0xff] %vm224, 0.0
        %234 = vst.msk [vmem:[#allocation2 + $0x48] sm:$0xff] %vm224, 0.0
        %235 = vst.msk [vmem:[#allocation2 + $0x50] sm:$0xff] %vm224, 0.0
        %236 = vst.msk [vmem:[#allocation2 + $0x58] sm:$0xff] %vm224, 0.0
        %237 = vst.msk [vmem:[#allocation2 + $0x60] sm:$0xff] %vm224, 0.0
        %238 = vst.msk [vmem:[#allocation2 + $0x68] sm:$0xff] %vm224, 0.0
        %239 = vst.msk [vmem:[#allocation2 + $0x70] sm:$0xff] %vm224, 0.0
        %240 = vst.msk [vmem:[#allocation2 + $0x78] sm:$0xff] %vm224, 0.0
        %241 = vst.msk [vmem:[#allocation2 + $0x80] sm:$0xff] %vm224, 0.0
        %242 = vst.msk [vmem:[#allocation2 + $0x88] sm:$0xff] %vm224, 0.0
        %243 = vst.msk [vmem:[#allocation2 + $0x90] sm:$0xff] %vm224, 0.0
        %244 = vst.msk [vmem:[#allocation2 + $0x98] sm:$0xff] %vm224, 0.0
        %245 = vst.msk [vmem:[#allocation2 + $0xa0] sm:$0xff] %vm224, 0.0
        %246 = vst.msk [vmem:[#allocation2 + $0xa8] sm:$0xff] %vm224, 0.0
        %247 = vst.msk [vmem:[#allocation2 + $0xb0] sm:$0xff] %vm224, 0.0
        %248 = vst.msk [vmem:[#allocation2 + $0xb8] sm:$0xff] %vm224, 0.0
        %249 = vst.msk [vmem:[#allocation2 + $0xc0] sm:$0xff] %vm224, 0.0
        %250 = vst.msk [vmem:[#allocation2 + $0xc8] sm:$0xff] %vm224, 0.0
        %251 = vst.msk [vmem:[#allocation2 + $0xd0] sm:$0xff] %vm224, 0.0
        %252 = vst.msk [vmem:[#allocation2 + $0xd8] sm:$0xff] %vm224, 0.0
        %253 = vst.msk [vmem:[#allocation2 + $0xe0] sm:$0xff] %vm224, 0.0
        %254 = vst.msk [vmem:[#allocation2 + $0xe8] sm:$0xff] %vm224, 0.0
        %255 = vst.msk [vmem:[#allocation2 + $0xf0] sm:$0xff] %vm224, 0.0
        %256 = vst.msk [vmem:[#allocation2 + $0xf8] sm:$0xff] %vm224, 0.0
      $region36: #{discriminator_forward.5} parent=31 // pred_fallthru
        _
      %v257 = vld [vmem:[#allocation2] sm:$0xff]
      %v258 = vld [vmem:[#allocation2 + $0x8] sm:$0xff]
      %v259 = vld [vmem:[#allocation2 + $0x10] sm:$0xff]
      %v260 = vld [vmem:[#allocation2 + $0x18] sm:$0xff]
      %v261 = vld [vmem:[#allocation2 + $0x20] sm:$0xff]
      %v262 = vld [vmem:[#allocation2 + $0x28] sm:$0xff]
      %v263 = vld [vmem:[#allocation2 + $0x30] sm:$0xff]
      %v264 = vld [vmem:[#allocation2 + $0x38] sm:$0xff]
      %v265 = vld [vmem:[#allocation2 + $0x40] sm:$0xff]
      %v266 = vld [vmem:[#allocation2 + $0x48] sm:$0xff]
      %v267 = vld [vmem:[#allocation2 + $0x50] sm:$0xff]
      %v268 = vld [vmem:[#allocation2 + $0x58] sm:$0xff]
      %v269 = vld [vmem:[#allocation2 + $0x60] sm:$0xff]
      %v270 = vld [vmem:[#allocation2 + $0x68] sm:$0xff]
      %v271 = vld [vmem:[#allocation2 + $0x70] sm:$0xff]
      %v272 = vld [vmem:[#allocation2 + $0x78] sm:$0xff]
      %v273 = vld [vmem:[#allocation2 + $0x80] sm:$0xff]
      %v274 = vld [vmem:[#allocation2 + $0x88] sm:$0xff]
      %v275 = vld [vmem:[#allocation2 + $0x90] sm:$0xff]
      %v276 = vld [vmem:[#allocation2 + $0x98] sm:$0xff]
      %v277 = vld [vmem:[#allocation2 + $0xa0] sm:$0xff]
      %v278 = vld [vmem:[#allocation2 + $0xa8] sm:$0xff]
      %v279 = vld [vmem:[#allocation2 + $0xb0] sm:$0xff]
      %v280 = vld [vmem:[#allocation2 + $0xb8] sm:$0xff]
      %v281 = vld [vmem:[#allocation2 + $0xc0] sm:$0xff]
      %v282 = vld [vmem:[#allocation2 + $0xc8] sm:$0xff]
      %v283 = vld [vmem:[#allocation2 + $0xd0] sm:$0xff]
      %v284 = vld [vmem:[#allocation2 + $0xd8] sm:$0xff]
      %v285 = vld [vmem:[#allocation2 + $0xe0] sm:$0xff]
      %v286 = vld [vmem:[#allocation2 + $0xe8] sm:$0xff]
      %v287 = vld [vmem:[#allocation2 + $0xf0] sm:$0xff]
      %v288 = vld [vmem:[#allocation2 + $0xf8] sm:$0xff]
      %v289 = vld [vmem:[%s205] sm:$0xf]
      %v290 = vld [vmem:[%s205 + $0x4] sm:$0xf]
      %v291 = vld [vmem:[%s205 + $0x8] sm:$0xf]
      %v292 = vld [vmem:[%s205 + $0xc] sm:$0xf]
      %v293 = vld [vmem:[%s205 + $0x10] sm:$0xf]
      %v294 = vld [vmem:[%s205 + $0x14] sm:$0xf]
      %v295 = vld [vmem:[%s205 + $0x18] sm:$0xf]
      %v296 = vld [vmem:[%s205 + $0x1c] sm:$0xf]
      %v297 = vld [vmem:[%s205 + $0x20] sm:$0xf]
      %v298 = vld [vmem:[%s205 + $0x24] sm:$0xf]
      %v299 = vld [vmem:[%s205 + $0x28] sm:$0xf]
      %v300 = vld [vmem:[%s205 + $0x2c] sm:$0xf]
      %v301 = vld [vmem:[%s205 + $0x30] sm:$0xf]
      %v302 = vld [vmem:[%s205 + $0x34] sm:$0xf]
      %v303 = vld [vmem:[%s205 + $0x38] sm:$0xf]
      %v304 = vld [vmem:[%s205 + $0x3c] sm:$0xf]
      %v305 = vld [vmem:[%s205 + $0x40] sm:$0xf]
      %v306 = vld [vmem:[%s205 + $0x44] sm:$0xf]
      %v307 = vld [vmem:[%s205 + $0x48] sm:$0xf]
      %v308 = vld [vmem:[%s205 + $0x4c] sm:$0xf]
      %v309 = vld [vmem:[%s205 + $0x50] sm:$0xf]
      %v310 = vld [vmem:[%s205 + $0x54] sm:$0xf]
      %v311 = vld [vmem:[%s205 + $0x58] sm:$0xf]
      %v312 = vld [vmem:[%s205 + $0x5c] sm:$0xf]
      %v313 = vld [vmem:[%s205 + $0x60] sm:$0xf]
      %v314 = vld [vmem:[%s205 + $0x64] sm:$0xf]
      %v315 = vld [vmem:[%s205 + $0x68] sm:$0xf]
      %v316 = vld [vmem:[%s205 + $0x6c] sm:$0xf]
      %v317 = vld [vmem:[%s205 + $0x70] sm:$0xf]
      %v318 = vld [vmem:[%s205 + $0x74] sm:$0xf]
      %v319 = vld [vmem:[%s205 + $0x78] sm:$0xf]
      %v320 = vld [vmem:[%s205 + $0x7c] sm:$0xf]
      %v321 = vld [vmem:[%s211] sm:$0xf]
      %v322 = vld [vmem:[%s211 + $0x4] sm:$0xf]
      %v323 = vld [vmem:[%s211 + $0x8] sm:$0xf]
      %v324 = vld [vmem:[%s211 + $0xc] sm:$0xf]
      %v325 = vld [vmem:[%s211 + $0x10] sm:$0xf]
      %v326 = vld [vmem:[%s211 + $0x14] sm:$0xf]
      %v359 = vunpack.c.l.b16 %v289
      %v360 = vunpack.c.l.b16 %v290
      %v361 = vunpack.c.l.b16 %v291
      %v362 = vunpack.c.l.b16 %v292
      %v363 = vunpack.c.l.b16 %v293
      %v364 = vunpack.c.l.b16 %v294
      %v365 = vunpack.c.l.b16 %v295
      %v366 = vunpack.c.l.b16 %v296
      %v367 = vunpack.c.l.b16 %v297
      %v368 = vunpack.c.l.b16 %v298
      %v369 = vunpack.c.l.b16 %v299
      %v370 = vunpack.c.l.b16 %v300
      %v371 = vunpack.c.l.b16 %v301
      %v372 = vunpack.c.l.b16 %v302
      %v373 = vunpack.c.l.b16 %v303
      %v374 = vunpack.c.l.b16 %v304
      %v375 = vunpack.c.l.b16 %v305
      %v376 = vunpack.c.l.b16 %v306
      %v377 = vunpack.c.l.b16 %v307
      %v378 = vunpack.c.l.b16 %v308
      %v379 = vunpack.c.l.b16 %v309
      %v380 = vunpack.c.l.b16 %v310
      %v381 = vunpack.c.l.b16 %v311
      %v382 = vunpack.c.l.b16 %v312
      %v383 = vunpack.c.l.b16 %v313
      %v384 = vunpack.c.l.b16 %v314
      %v385 = vunpack.c.l.b16 %v315
      %v386 = vunpack.c.l.b16 %v316
      %v387 = vunpack.c.l.b16 %v317
      %v388 = vunpack.c.l.b16 %v318
      %v389 = vunpack.c.l.b16 %v319
      %v390 = vunpack.c.l.b16 %v320
      %v391 = vpack.c.b16 %v360, %v359
      %v392 = vpack.c.b16 %v362, %v361
      %v393 = vpack.c.b16 %v364, %v363
      %v394 = vpack.c.b16 %v366, %v365
      %v395 = vpack.c.b16 %v368, %v367
      %v396 = vpack.c.b16 %v370, %v369
      %v397 = vpack.c.b16 %v372, %v371
      %v398 = vpack.c.b16 %v374, %v373
      %v399 = vpack.c.b16 %v376, %v375
      %v400 = vpack.c.b16 %v378, %v377
      %v401 = vpack.c.b16 %v380, %v379
      %v402 = vpack.c.b16 %v382, %v381
      %v403 = vpack.c.b16 %v384, %v383
      %v404 = vpack.c.b16 %v386, %v385
      %v405 = vpack.c.b16 %v388, %v387
      %v406 = vpack.c.b16 %v390, %v389
      %v413 = vunpack.c.l.b16 %v321
      %v414 = vunpack.c.l.b16 %v322
      %v415 = vunpack.c.l.b16 %v323
      %v416 = vunpack.c.l.b16 %v324
      %v417 = vunpack.c.l.b16 %v325
      %v418 = vunpack.c.l.b16 %v326
      %v419 = vpack.c.b16 %v414, %v413
      %v420 = vpack.c.b16 %v416, %v415
      %v421 = vpack.c.b16 %v418, %v417
      %vm425 = vcmask 392192
      %v427 = vsel %vm425, %v391, 0
      %v430 = vsel %vm425, %v392, 0
      %v433 = vsel %vm425, %v393, 0
      %v436 = vsel %vm425, %v394, 0
      %v439 = vsel %vm425, %v395, 0
      %v442 = vsel %vm425, %v396, 0
      %v445 = vsel %vm425, %v397, 0
      %v448 = vsel %vm425, %v398, 0
      %v451 = vsel %vm425, %v399, 0
      %v454 = vsel %vm425, %v400, 0
      %v457 = vsel %vm425, %v401, 0
      %v460 = vsel %vm425, %v402, 0
      %v463 = vsel %vm425, %v403, 0
      %v466 = vsel %vm425, %v404, 0
      %v469 = vsel %vm425, %v405, 0
      %v472 = vsel %vm425, %v406, 0
      %474 = vmatprep.subr.bf16.mxu0 0
      %475 = vmatpush1.bf16.msra.mxu0 %v419
      %476 = vmatprep.subr.bf16.mxu0 0
      %477 = vmatpush1.bf16.msra.mxu0 %v420
      %478 = vmatprep.subr.bf16.mxu0 0
      %479 = vmatpush1.bf16.msra.mxu0 %v421
      %480 = vmatprep.subr.bf16.mxu0 0
      %481 = vmatpush1.bf16.msra.mxu0 0
      %482 = vmatprep.subr.bf16.mxu0 0
      %483 = vmatpush1.bf16.msra.mxu0 0
      %484 = vmatprep.subr.bf16.mxu0 0
      %485 = vmatpush1.bf16.msra.mxu0 0
      %486 = vmatprep.subr.bf16.mxu0 0
      %487 = vmatpush1.bf16.msra.mxu0 0
      %488 = vmatprep.subr.bf16.mxu0 0
      %489 = vmatpush1.bf16.msra.mxu0 0
      %490 = vmatprep.subr.bf16.mxu0 0
      %491 = vmatpush1.bf16.msra.mxu0 0
      %492 = vmatprep.subr.bf16.mxu0 0
      %493 = vmatpush1.bf16.msra.mxu0 0
      %494 = vmatprep.subr.bf16.mxu0 0
      %495 = vmatpush1.bf16.msra.mxu0 0
      %496 = vmatprep.subr.bf16.mxu0 0
      %497 = vmatpush1.bf16.msra.mxu0 0
      %498 = vmatprep.subr.bf16.mxu0 0
      %499 = vmatpush1.bf16.msra.mxu0 0
      %500 = vmatprep.subr.bf16.mxu0 0
      %501 = vmatpush1.bf16.msra.mxu0 0
      %502 = vmatprep.subr.bf16.mxu0 0
      %503 = vmatpush1.bf16.msra.mxu0 0
      %504 = vmatprep.subr.bf16.mxu0 0
      %505 = vmatpush1.bf16.msra.mxu0 0
      %506 = vmatprep.mubr.bf16.mxu0 0
      %507 = vmatmul.mubr.bf16.gmra.mrb[0].mxu0 %v427
      %v508 = vpop.f32.mrb[0].mxu0
      %v509 = vadd.f32 0.0, %v508
      %v510 = vpop.f32.mrb[0].mxu0
      %v511 = vpop.f32.mrb[0].mxu0
      %v512 = vadd.f32 0.0, %v511
      %v513 = vpop.f32.mrb[0].mxu0
      %514 = vmatprep.mubr.bf16.mxu0 0
      %515 = vmatmul.mubr.bf16.gmra.mrb[0].mxu0 %v430
      %v516 = vpop.f32.mrb[0].mxu0
      %v517 = vadd.f32 0.0, %v516
      %v518 = vpop.f32.mrb[0].mxu0
      %v519 = vpop.f32.mrb[0].mxu0
      %v520 = vadd.f32 0.0, %v519
      %v521 = vpop.f32.mrb[0].mxu0
      %522 = vmatprep.mubr.bf16.mxu0 0
      %523 = vmatmul.mubr.bf16.gmra.mrb[0].mxu0 %v433
      %v524 = vpop.f32.mrb[0].mxu0
      %v525 = vadd.f32 0.0, %v524
      %v526 = vpop.f32.mrb[0].mxu0
      %v527 = vpop.f32.mrb[0].mxu0
      %v528 = vadd.f32 0.0, %v527
      %v529 = vpop.f32.mrb[0].mxu0
      %530 = vmatprep.mubr.bf16.mxu0 0
      %531 = vmatmul.mubr.bf16.gmra.mrb[0].mxu0 %v436
      %v532 = vpop.f32.mrb[0].mxu0
      %v533 = vadd.f32 0.0, %v532
      %v534 = vpop.f32.mrb[0].mxu0
      %v535 = vpop.f32.mrb[0].mxu0
      %v536 = vadd.f32 0.0, %v535
      %v537 = vpop.f32.mrb[0].mxu0
      %538 = vmatprep.mubr.bf16.mxu0 0
      %539 = vmatmul.mubr.bf16.gmra.mrb[0].mxu0 %v439
      %v540 = vpop.f32.mrb[0].mxu0
      %v541 = vadd.f32 0.0, %v540
      %v542 = vpop.f32.mrb[0].mxu0
      %v543 = vpop.f32.mrb[0].mxu0
      %v544 = vadd.f32 0.0, %v543
      %v545 = vpop.f32.mrb[0].mxu0
      %546 = vmatprep.mubr.bf16.mxu0 0
      %547 = vmatmul.mubr.bf16.gmra.mrb[0].mxu0 %v442
      %v548 = vpop.f32.mrb[0].mxu0
      %v549 = vadd.f32 0.0, %v548
      %v550 = vpop.f32.mrb[0].mxu0
      %v551 = vpop.f32.mrb[0].mxu0
      %v552 = vadd.f32 0.0, %v551
      %v553 = vpop.f32.mrb[0].mxu0
      %554 = vmatprep.mubr.bf16.mxu0 0
      %555 = vmatmul.mubr.bf16.gmra.mrb[0].mxu0 %v445
      %v556 = vpop.f32.mrb[0].mxu0
      %v557 = vadd.f32 0.0, %v556
      %v558 = vpop.f32.mrb[0].mxu0
      %v559 = vpop.f32.mrb[0].mxu0
      %v560 = vadd.f32 0.0, %v559
      %v561 = vpop.f32.mrb[0].mxu0
      %562 = vmatprep.mubr.bf16.mxu0 0
      %563 = vmatmul.mubr.bf16.gmra.mrb[0].mxu0 %v448
      %v564 = vpop.f32.mrb[0].mxu0
      %v565 = vadd.f32 0.0, %v564
      %v566 = vpop.f32.mrb[0].mxu0
      %v567 = vpop.f32.mrb[0].mxu0
      %v568 = vadd.f32 0.0, %v567
      %v569 = vpop.f32.mrb[0].mxu0
      %570 = vmatprep.mubr.bf16.mxu0 0
      %571 = vmatmul.mubr.bf16.gmra.mrb[0].mxu0 %v451
      %v572 = vpop.f32.mrb[0].mxu0
      %v573 = vadd.f32 0.0, %v572
      %v574 = vpop.f32.mrb[0].mxu0
      %v575 = vpop.f32.mrb[0].mxu0
      %v576 = vadd.f32 0.0, %v575
      %v577 = vpop.f32.mrb[0].mxu0
      %578 = vmatprep.mubr.bf16.mxu0 0
      %579 = vmatmul.mubr.bf16.gmra.mrb[0].mxu0 %v454
      %v580 = vpop.f32.mrb[0].mxu0
      %v581 = vadd.f32 0.0, %v580
      %v582 = vpop.f32.mrb[0].mxu0
      %v583 = vpop.f32.mrb[0].mxu0
      %v584 = vadd.f32 0.0, %v583
      %v585 = vpop.f32.mrb[0].mxu0
      %586 = vmatprep.mubr.bf16.mxu0 0
      %587 = vmatmul.mubr.bf16.gmra.mrb[0].mxu0 %v457
      %v588 = vpop.f32.mrb[0].mxu0
      %v589 = vadd.f32 0.0, %v588
      %v590 = vpop.f32.mrb[0].mxu0
      %v591 = vpop.f32.mrb[0].mxu0
      %v592 = vadd.f32 0.0, %v591
      %v593 = vpop.f32.mrb[0].mxu0
      %594 = vmatprep.mubr.bf16.mxu0 0
      %595 = vmatmul.mubr.bf16.gmra.mrb[0].mxu0 %v460
      %v596 = vpop.f32.mrb[0].mxu0
      %v597 = vadd.f32 0.0, %v596
      %v598 = vpop.f32.mrb[0].mxu0
      %v599 = vpop.f32.mrb[0].mxu0
      %v600 = vadd.f32 0.0, %v599
      %v601 = vpop.f32.mrb[0].mxu0
      %602 = vmatprep.mubr.bf16.mxu0 0
      %603 = vmatmul.mubr.bf16.gmra.mrb[0].mxu0 %v463
      %v604 = vpop.f32.mrb[0].mxu0
      %v605 = vadd.f32 0.0, %v604
      %v606 = vpop.f32.mrb[0].mxu0
      %v607 = vpop.f32.mrb[0].mxu0
      %v608 = vadd.f32 0.0, %v607
      %v609 = vpop.f32.mrb[0].mxu0
      %610 = vmatprep.mubr.bf16.mxu0 0
      %611 = vmatmul.mubr.bf16.gmra.mrb[0].mxu0 %v466
      %v612 = vpop.f32.mrb[0].mxu0
      %v613 = vadd.f32 0.0, %v612
      %v614 = vpop.f32.mrb[0].mxu0
      %v615 = vpop.f32.mrb[0].mxu0
      %v616 = vadd.f32 0.0, %v615
      %v617 = vpop.f32.mrb[0].mxu0
      %618 = vmatprep.mubr.bf16.mxu0 0
      %619 = vmatmul.mubr.bf16.gmra.mrb[0].mxu0 %v469
      %v620 = vpop.f32.mrb[0].mxu0
      %v621 = vadd.f32 0.0, %v620
      %v622 = vpop.f32.mrb[0].mxu0
      %v623 = vpop.f32.mrb[0].mxu0
      %v624 = vadd.f32 0.0, %v623
      %v625 = vpop.f32.mrb[0].mxu0
      %626 = vmatprep.mubr.bf16.mxu0 0
      %627 = vmatmul.mubr.bf16.gmra.mrb[0].mxu0 %v472
      %v628 = vpop.f32.mrb[0].mxu0
      %v629 = vadd.f32 0.0, %v628
      %v630 = vpop.f32.mrb[0].mxu0
      %v631 = vpop.f32.mrb[0].mxu0
      %v632 = vadd.f32 0.0, %v631
      %v633 = vpop.f32.mrb[0].mxu0
      %634 = vdwg.mxu0
      %v635 = vadd.f32 %v257, %v509
      %v636 = vadd.f32 %v258, %v512
      %v637 = vadd.f32 %v259, %v517
      %v638 = vadd.f32 %v260, %v520
      %v639 = vadd.f32 %v261, %v525
      %v640 = vadd.f32 %v262, %v528
      %v641 = vadd.f32 %v263, %v533
      %v642 = vadd.f32 %v264, %v536
      %v643 = vadd.f32 %v265, %v541
      %v644 = vadd.f32 %v266, %v544
      %v645 = vadd.f32 %v267, %v549
      %v646 = vadd.f32 %v268, %v552
      %v647 = vadd.f32 %v269, %v557
      %v648 = vadd.f32 %v270, %v560
      %v649 = vadd.f32 %v271, %v565
      %v650 = vadd.f32 %v272, %v568
      %v651 = vadd.f32 %v273, %v573
      %v652 = vadd.f32 %v274, %v576
      %v653 = vadd.f32 %v275, %v581
      %v654 = vadd.f32 %v276, %v584
      %v655 = vadd.f32 %v277, %v589
      %v656 = vadd.f32 %v278, %v592
      %v657 = vadd.f32 %v279, %v597
      %v658 = vadd.f32 %v280, %v600
      %v659 = vadd.f32 %v281, %v605
      %v660 = vadd.f32 %v282, %v608
      %v661 = vadd.f32 %v283, %v613
      %v662 = vadd.f32 %v284, %v616
      %v663 = vadd.f32 %v285, %v621
      %v664 = vadd.f32 %v286, %v624
      %v665 = vadd.f32 %v287, %v629
      %v666 = vadd.f32 %v288, %v632
      %vm667 = vcmask 523264
      %668 = vst.msk [vmem:[#allocation2] sm:$0xff] %vm667, %v635
      %669 = vst.msk [vmem:[#allocation2 + $0x8] sm:$0xff] %vm667, %v636
      %670 = vst.msk [vmem:[#allocation2 + $0x10] sm:$0xff] %vm667, %v637
      %671 = vst.msk [vmem:[#allocation2 + $0x18] sm:$0xff] %vm667, %v638
      %672 = vst.msk [vmem:[#allocation2 + $0x20] sm:$0xff] %vm667, %v639
      %673 = vst.msk [vmem:[#allocation2 + $0x28] sm:$0xff] %vm667, %v640
      %674 = vst.msk [vmem:[#allocation2 + $0x30] sm:$0xff] %vm667, %v641
      %675 = vst.msk [vmem:[#allocation2 + $0x38] sm:$0xff] %vm667, %v642
      %676 = vst.msk [vmem:[#allocation2 + $0x40] sm:$0xff] %vm667, %v643
      %677 = vst.msk [vmem:[#allocation2 + $0x48] sm:$0xff] %vm667, %v644
      %678 = vst.msk [vmem:[#allocation2 + $0x50] sm:$0xff] %vm667, %v645
      %679 = vst.msk [vmem:[#allocation2 + $0x58] sm:$0xff] %vm667, %v646
      %680 = vst.msk [vmem:[#allocation2 + $0x60] sm:$0xff] %vm667, %v647
      %681 = vst.msk [vmem:[#allocation2 + $0x68] sm:$0xff] %vm667, %v648
      %682 = vst.msk [vmem:[#allocation2 + $0x70] sm:$0xff] %vm667, %v649
      %683 = vst.msk [vmem:[#allocation2 + $0x78] sm:$0xff] %vm667, %v650
      %684 = vst.msk [vmem:[#allocation2 + $0x80] sm:$0xff] %vm667, %v651
      %685 = vst.msk [vmem:[#allocation2 + $0x88] sm:$0xff] %vm667, %v652
      %686 = vst.msk [vmem:[#allocation2 + $0x90] sm:$0xff] %vm667, %v653
      %687 = vst.msk [vmem:[#allocation2 + $0x98] sm:$0xff] %vm667, %v654
      %688 = vst.msk [vmem:[#allocation2 + $0xa0] sm:$0xff] %vm667, %v655
      %689 = vst.msk [vmem:[#allocation2 + $0xa8] sm:$0xff] %vm667, %v656
      %690 = vst.msk [vmem:[#allocation2 + $0xb0] sm:$0xff] %vm667, %v657
      %691 = vst.msk [vmem:[#allocation2 + $0xb8] sm:$0xff] %vm667, %v658
      %692 = vst.msk [vmem:[#allocation2 + $0xc0] sm:$0xff] %vm667, %v659
      %693 = vst.msk [vmem:[#allocation2 + $0xc8] sm:$0xff] %vm667, %v660
      %694 = vst.msk [vmem:[#allocation2 + $0xd0] sm:$0xff] %vm667, %v661
      %695 = vst.msk [vmem:[#allocation2 + $0xd8] sm:$0xff] %vm667, %v662
      %696 = vst.msk [vmem:[#allocation2 + $0xe0] sm:$0xff] %vm667, %v663
      %697 = vst.msk [vmem:[#allocation2 + $0xe8] sm:$0xff] %vm667, %v664
      %698 = vst.msk [vmem:[#allocation2 + $0xf0] sm:$0xff] %vm667, %v665
      %699 = vst.msk [vmem:[#allocation2 + $0xf8] sm:$0xff] %vm667, %v666
      // Predicated region
      $region37: #{discriminator_forward.5} parent=31 // pred_check
        %p700 = pneg %p220
      $region38: #{discriminator_forward.5} parent=31 // pred_check_branch
        %702 = sbr.rel (%p700) target = $region40
      $region39: #{discriminator_forward.5} parent=31 // pred_region
        %v703 = vld [vmem:[#allocation2] sm:$0xff]
        %v704 = vld [vmem:[#allocation2 + $0x8] sm:$0xff]
        %v705 = vld [vmem:[#allocation2 + $0x10] sm:$0xff]
        %v706 = vld [vmem:[#allocation2 + $0x18] sm:$0xff]
        %v707 = vld [vmem:[#allocation2 + $0x20] sm:$0xff]
        %v708 = vld [vmem:[#allocation2 + $0x28] sm:$0xff]
        %v709 = vld [vmem:[#allocation2 + $0x30] sm:$0xff]
        %v710 = vld [vmem:[#allocation2 + $0x38] sm:$0xff]
        %v711 = vld [vmem:[#allocation2 + $0x40] sm:$0xff]
        %v712 = vld [vmem:[#allocation2 + $0x48] sm:$0xff]
        %v713 = vld [vmem:[#allocation2 + $0x50] sm:$0xff]
        %v714 = vld [vmem:[#allocation2 + $0x58] sm:$0xff]
        %v715 = vld [vmem:[#allocation2 + $0x60] sm:$0xff]
        %v716 = vld [vmem:[#allocation2 + $0x68] sm:$0xff]
        %v717 = vld [vmem:[#allocation2 + $0x70] sm:$0xff]
        %v718 = vld [vmem:[#allocation2 + $0x78] sm:$0xff]
        %v719 = vld [vmem:[#allocation2 + $0x80] sm:$0xff]
        %v720 = vld [vmem:[#allocation2 + $0x88] sm:$0xff]
        %v721 = vld [vmem:[#allocation2 + $0x90] sm:$0xff]
        %v722 = vld [vmem:[#allocation2 + $0x98] sm:$0xff]
        %v723 = vld [vmem:[#allocation2 + $0xa0] sm:$0xff]
        %v724 = vld [vmem:[#allocation2 + $0xa8] sm:$0xff]
        %v725 = vld [vmem:[#allocation2 + $0xb0] sm:$0xff]
        %v726 = vld [vmem:[#allocation2 + $0xb8] sm:$0xff]
        %v727 = vld [vmem:[#allocation2 + $0xc0] sm:$0xff]
        %v728 = vld [vmem:[#allocation2 + $0xc8] sm:$0xff]
        %v729 = vld [vmem:[#allocation2 + $0xd0] sm:$0xff]
        %v730 = vld [vmem:[#allocation2 + $0xd8] sm:$0xff]
        %v731 = vld [vmem:[#allocation2 + $0xe0] sm:$0xff]
        %v732 = vld [vmem:[#allocation2 + $0xe8] sm:$0xff]
        %v733 = vld [vmem:[#allocation2 + $0xf0] sm:$0xff]
        %v734 = vld [vmem:[#allocation2 + $0xf8] sm:$0xff]
        %v735 = vld [vmem:[%s2] sm:$0x1]
        %v737 = vlaneseq
        %v738 = vshrl.u32 %v737, 7
        %v739 = vsub.s32 0, %v738
        %v740 = vrot.slane %v735, %v739
        %v742 = vadd.f32 %v703, %v740
        %v743 = vadd.f32 %v704, %v740
        %v744 = vadd.f32 %v705, %v740
        %v745 = vadd.f32 %v706, %v740
        %v746 = vadd.f32 %v707, %v740
        %v747 = vadd.f32 %v708, %v740
        %v748 = vadd.f32 %v709, %v740
        %v749 = vadd.f32 %v710, %v740
        %v750 = vadd.f32 %v711, %v740
        %v751 = vadd.f32 %v712, %v740
        %v752 = vadd.f32 %v713, %v740
        %v753 = vadd.f32 %v714, %v740
        %v754 = vadd.f32 %v715, %v740
        %v755 = vadd.f32 %v716, %v740
        %v756 = vadd.f32 %v717, %v740
        %v757 = vadd.f32 %v718, %v740
        %v758 = vadd.f32 %v719, %v740
        %v759 = vadd.f32 %v720, %v740
        %v760 = vadd.f32 %v721, %v740
        %v761 = vadd.f32 %v722, %v740
        %v762 = vadd.f32 %v723, %v740
        %v763 = vadd.f32 %v724, %v740
        %v764 = vadd.f32 %v725, %v740
        %v765 = vadd.f32 %v726, %v740
        %v766 = vadd.f32 %v727, %v740
        %v767 = vadd.f32 %v728, %v740
        %v768 = vadd.f32 %v729, %v740
        %v769 = vadd.f32 %v730, %v740
        %v770 = vadd.f32 %v731, %v740
        %v771 = vadd.f32 %v732, %v740
        %v772 = vadd.f32 %v733, %v740
        %v773 = vadd.f32 %v734, %v740
        %vm774 = vcmp.gt.f32.partialorder %v742, 0.0
        %vm775 = vcmp.gt.f32.partialorder %v743, 0.0
        %vm776 = vcmp.gt.f32.partialorder %v744, 0.0
        %vm777 = vcmp.gt.f32.partialorder %v745, 0.0
        %vm778 = vcmp.gt.f32.partialorder %v746, 0.0
        %vm779 = vcmp.gt.f32.partialorder %v747, 0.0
        %vm780 = vcmp.gt.f32.partialorder %v748, 0.0
        %vm781 = vcmp.gt.f32.partialorder %v749, 0.0
        %vm782 = vcmp.gt.f32.partialorder %v750, 0.0
        %vm783 = vcmp.gt.f32.partialorder %v751, 0.0
        %vm784 = vcmp.gt.f32.partialorder %v752, 0.0
        %vm785 = vcmp.gt.f32.partialorder %v753, 0.0
        %vm786 = vcmp.gt.f32.partialorder %v754, 0.0
        %vm787 = vcmp.gt.f32.partialorder %v755, 0.0
        %vm788 = vcmp.gt.f32.partialorder %v756, 0.0
        %vm789 = vcmp.gt.f32.partialorder %v757, 0.0
        %vm790 = vcmp.gt.f32.partialorder %v758, 0.0
        %vm791 = vcmp.gt.f32.partialorder %v759, 0.0
        %vm792 = vcmp.gt.f32.partialorder %v760, 0.0
        %vm793 = vcmp.gt.f32.partialorder %v761, 0.0
        %vm794 = vcmp.gt.f32.partialorder %v762, 0.0
        %vm795 = vcmp.gt.f32.partialorder %v763, 0.0
        %vm796 = vcmp.gt.f32.partialorder %v764, 0.0
        %vm797 = vcmp.gt.f32.partialorder %v765, 0.0
        %vm798 = vcmp.gt.f32.partialorder %v766, 0.0
        %vm799 = vcmp.gt.f32.partialorder %v767, 0.0
        %vm800 = vcmp.gt.f32.partialorder %v768, 0.0
        %vm801 = vcmp.gt.f32.partialorder %v769, 0.0
        %vm802 = vcmp.gt.f32.partialorder %v770, 0.0
        %vm803 = vcmp.gt.f32.partialorder %v771, 0.0
        %vm804 = vcmp.gt.f32.partialorder %v772, 0.0
        %vm805 = vcmp.gt.f32.partialorder %v773, 0.0
        %v806 = vmul.f32 %v742, 0.2
        %v807 = vmul.f32 %v743, 0.2
        %v808 = vmul.f32 %v744, 0.2
        %v809 = vmul.f32 %v745, 0.2
        %v810 = vmul.f32 %v746, 0.2
        %v811 = vmul.f32 %v747, 0.2
        %v812 = vmul.f32 %v748, 0.2
        %v813 = vmul.f32 %v749, 0.2
        %v814 = vmul.f32 %v750, 0.2
        %v815 = vmul.f32 %v751, 0.2
        %v816 = vmul.f32 %v752, 0.2
        %v817 = vmul.f32 %v753, 0.2
        %v818 = vmul.f32 %v754, 0.2
        %v819 = vmul.f32 %v755, 0.2
        %v820 = vmul.f32 %v756, 0.2
        %v821 = vmul.f32 %v757, 0.2
        %v822 = vmul.f32 %v758, 0.2
        %v823 = vmul.f32 %v759, 0.2
        %v824 = vmul.f32 %v760, 0.2
        %v825 = vmul.f32 %v761, 0.2
        %v826 = vmul.f32 %v762, 0.2
        %v827 = vmul.f32 %v763, 0.2
        %v828 = vmul.f32 %v764, 0.2
        %v829 = vmul.f32 %v765, 0.2
        %v830 = vmul.f32 %v766, 0.2
        %v831 = vmul.f32 %v767, 0.2
        %v832 = vmul.f32 %v768, 0.2
        %v833 = vmul.f32 %v769, 0.2
        %v834 = vmul.f32 %v770, 0.2
        %v835 = vmul.f32 %v771, 0.2
        %v836 = vmul.f32 %v772, 0.2
        %v837 = vmul.f32 %v773, 0.2
        %v838 = vsel %vm774, %v742, %v806
        %v839 = vsel %vm775, %v743, %v807
        %v840 = vsel %vm776, %v744, %v808
        %v841 = vsel %vm777, %v745, %v809
        %v842 = vsel %vm778, %v746, %v810
        %v843 = vsel %vm779, %v747, %v811
        %v844 = vsel %vm780, %v748, %v812
        %v845 = vsel %vm781, %v749, %v813
        %v846 = vsel %vm782, %v750, %v814
        %v847 = vsel %vm783, %v751, %v815
        %v848 = vsel %vm784, %v752, %v816
        %v849 = vsel %vm785, %v753, %v817
        %v850 = vsel %vm786, %v754, %v818
        %v851 = vsel %vm787, %v755, %v819
        %v852 = vsel %vm788, %v756, %v820
        %v853 = vsel %vm789, %v757, %v821
        %v854 = vsel %vm790, %v758, %v822
        %v855 = vsel %vm791, %v759, %v823
        %v856 = vsel %vm792, %v760, %v824
        %v857 = vsel %vm793, %v761, %v825
        %v858 = vsel %vm794, %v762, %v826
        %v859 = vsel %vm795, %v763, %v827
        %v860 = vsel %vm796, %v764, %v828
        %v861 = vsel %vm797, %v765, %v829
        %v862 = vsel %vm798, %v766, %v830
        %v863 = vsel %vm799, %v767, %v831
        %v864 = vsel %vm800, %v768, %v832
        %v865 = vsel %vm801, %v769, %v833
        %v866 = vsel %vm802, %v770, %v834
        %v867 = vsel %vm803, %v771, %v835
        %v868 = vsel %vm804, %v772, %v836
        %v869 = vsel %vm805, %v773, %v837
        %870 = vst.msk [vmem:[%s217] sm:$0xff] %vm667, %v838
        %871 = vst.msk [vmem:[%s217 + $0x8] sm:$0xff] %vm667, %v839
        %872 = vst.msk [vmem:[%s217 + $0x10] sm:$0xff] %vm667, %v840
        %873 = vst.msk [vmem:[%s217 + $0x18] sm:$0xff] %vm667, %v841
        %874 = vst.msk [vmem:[%s217 + $0x20] sm:$0xff] %vm667, %v842
        %875 = vst.msk [vmem:[%s217 + $0x28] sm:$0xff] %vm667, %v843
        %876 = vst.msk [vmem:[%s217 + $0x30] sm:$0xff] %vm667, %v844
        %877 = vst.msk [vmem:[%s217 + $0x38] sm:$0xff] %vm667, %v845
        %878 = vst.msk [vmem:[%s217 + $0x40] sm:$0xff] %vm667, %v846
        %879 = vst.msk [vmem:[%s217 + $0x48] sm:$0xff] %vm667, %v847
        %880 = vst.msk [vmem:[%s217 + $0x50] sm:$0xff] %vm667, %v848
        %881 = vst.msk [vmem:[%s217 + $0x58] sm:$0xff] %vm667, %v849
        %882 = vst.msk [vmem:[%s217 + $0x60] sm:$0xff] %vm667, %v850
        %883 = vst.msk [vmem:[%s217 + $0x68] sm:$0xff] %vm667, %v851
        %884 = vst.msk [vmem:[%s217 + $0x70] sm:$0xff] %vm667, %v852
        %885 = vst.msk [vmem:[%s217 + $0x78] sm:$0xff] %vm667, %v853
        %886 = vst.msk [vmem:[%s217 + $0x80] sm:$0xff] %vm667, %v854
        %887 = vst.msk [vmem:[%s217 + $0x88] sm:$0xff] %vm667, %v855
        %888 = vst.msk [vmem:[%s217 + $0x90] sm:$0xff] %vm667, %v856
        %889 = vst.msk [vmem:[%s217 + $0x98] sm:$0xff] %vm667, %v857
        %890 = vst.msk [vmem:[%s217 + $0xa0] sm:$0xff] %vm667, %v858
        %891 = vst.msk [vmem:[%s217 + $0xa8] sm:$0xff] %vm667, %v859
        %892 = vst.msk [vmem:[%s217 + $0xb0] sm:$0xff] %vm667, %v860
        %893 = vst.msk [vmem:[%s217 + $0xb8] sm:$0xff] %vm667, %v861
        %894 = vst.msk [vmem:[%s217 + $0xc0] sm:$0xff] %vm667, %v862
        %895 = vst.msk [vmem:[%s217 + $0xc8] sm:$0xff] %vm667, %v863
        %896 = vst.msk [vmem:[%s217 + $0xd0] sm:$0xff] %vm667, %v864
        %897 = vst.msk [vmem:[%s217 + $0xd8] sm:$0xff] %vm667, %v865
        %898 = vst.msk [vmem:[%s217 + $0xe0] sm:$0xff] %vm667, %v866
        %899 = vst.msk [vmem:[%s217 + $0xe8] sm:$0xff] %vm667, %v867
        %900 = vst.msk [vmem:[%s217 + $0xf0] sm:$0xff] %vm667, %v868
        %901 = vst.msk [vmem:[%s217 + $0xf8] sm:$0xff] %vm667, %v869
      $region40: #{discriminator_forward.5} parent=31 // pred_fallthru
        _
      %s902 = smul.u32 32, %s18
      %p903 = scmp.lt.s32.totalorder %s902, 255
      %s904 = scalar_select %p903, %s902, 255
      %s905 = smul.addr %s904, 8
      %s906 = scalar_lea.vmem %s3, %s905
      // Predicated region
      $region41: #{discriminator_forward.5} parent=31 // pred_check
        %p907 = pneg %p119
      $region42: #{discriminator_forward.5} parent=31 // pred_check_branch
        %909 = sbr.rel (%p907) target = $region44
      $region43: #{discriminator_forward.5} parent=31 // pred_region
        %s910 = smul.u32 32, %s18
      $region44: #{discriminator_forward.5} parent=31 // pred_fallthru
        _
    $region32: #{discriminator_forward.5} parent=5 // pred_fallthru
      _
    %p911 = scmp.le.s32.totalorder 2, %s9
    // Predicated region
    $region45: #{discriminator_forward.5} parent=5 // pred_check
      %p912 = pneg %p911
    $region46: #{discriminator_forward.5} parent=5 // pred_check_branch
      %914 = sbr.rel (%p912) target = $region48
    $region47: #{discriminator_forward.5} parent=5 // pred_region
      %s915 = ssub.s32 %s9, 2
      // Predicated region
      $region49: #{discriminator_forward.5} parent=47 // pred_check
        %p916 = pneg %p125
      $region50: #{discriminator_forward.5} parent=47 // pred_check_branch
        %918 = sbr.rel (%p916) target = $region52
      $region51: #{discriminator_forward.5} parent=47 // pred_region
        %s919 = smul.u32 32, %s20
        %p920 = scmp.lt.s32.totalorder %s919, 255
        %s921 = scalar_select %p920, %s919, 255
        %s922 = smul.addr %s921, 8
        %s923 = scalar_lea.vmem %s3, %s922
      $region52: #{discriminator_forward.5} parent=47 // pred_fallthru
        _
    $region48: #{discriminator_forward.5} parent=5 // pred_fallthru
      _
  $region6: #{discriminator_forward.5} parent=0 // loop_footer
    %s13 = sadd.s32 1, %s9
  $region7: #{discriminator_forward.5} parent=0 // loop_footer_branch
    %8 = sbr.rel target = $region3
  $region8: #{discriminator_forward.5} parent=0 // loop_exit
    _

// kernel: discriminator_forward.6
$region0: #{discriminator_forward.6}
  #allocation0 [shape = 'u32[]', space=smem, size = 0x4, offset = 0x4, fixed_abs, tag = 'smem constant byte address 0x4 - core index']
  #allocation1 [shape = 'u32[144,128]{1,0:T(1,128)}', space=vmem, size = 0x12000, scoped, tag = 'internal scratch']
  #allocation2 [shape = 'f32[256,128]{1,0:T(8,128)}', space=vmem, size = 0x20000, scoped, tag = 'scratch operand']
  %s0 = inlined_call_operand.vmem [shape: bf16[512,1024], index: 0, kind: input, shape index: {}]
  %s1 = inlined_call_operand.vmem [shape: bf16[1024,128], index: 1, kind: input, shape index: {}]
  %s2 = inlined_call_operand.vmem [shape: f32[1,128], index: 2, kind: input, shape index: {}]
  %s3 = inlined_call_operand.vmem [shape: f32[512,128], index: 3, kind: output, shape index: {}]
  %s4 = sld [smem:[#allocation0]]
  $region53: #{discriminator_forward.6} parent=0
    _
  %s6 = ssub.s32 1, %s4
  %s7 = scalar_select 0, %s6, %s4
  loop: start=0, step=1, limit=4
  $region2: #{discriminator_forward.6} parent=0 // loop_pre_header
    _
  $region3: #{discriminator_forward.6} parent=0 // loop_header
    %s9 = sphi 0, %s13
    %p10 = scmp.ge.s32.totalorder %s9, 4
    %s16 = sphi 0, %s28
    %s17 = sphi 0, %s24
    %s18 = sphi 0, %s16
    %s19 = sphi 0, %s17
    %s20 = sphi 0, %s18
    %s21 = sphi 0, %s19
    %s33 = sphi 0, %s35
    %s36 = sphi 0, %s33
    %s37 = sphi 0, %s36
    %s53 = sphi 0, %s37
    %s59 = sphi 0, %s61
    %s62 = sphi 0, %s59
    %s63 = sphi 0, %s62
    %s79 = sphi 0, %s63
    %s83 = sphi 0, %s83
    %s85 = sphi 0, %s83
    %s86 = sphi 0, %s85
    %s100 = sphi 0, %s86
    %s106 = sphi 0, %s108
    %s109 = sphi 0, %s106
    %s110 = sphi 0, %s109
    %s126 = sphi 0, %s110
  $region4: #{discriminator_forward.6} parent=0 // loop_header_branch
    %12 = sbr.rel (%p10) target = $region8
  $region5: #{discriminator_forward.6} parent=0 // loop_body
    %s14 = ssub.s32 %s9, 1
    %s15 = ssub.s32 %s9, 2
    %s22 = sadd.s32 1, %s17
    %p23 = scmp.ge.s32.totalorder %s22, 1
    %s24 = scalar_select %p23, 0, %s22
    %s25 = sadd.s32 1, %s16
    %s26 = scalar_select %p23, %s25, %s16
    %p27 = scmp.ge.s32.totalorder %s26, 2
    %s28 = scalar_select %p27, 0, %s26
    %s29 = ssub.s32 %s16, %s28
    %s30 = ssub.s32 %s17, %s24
    %s31 = sor.u32 %s29, %s30
    %p32 = scmp.eq.s32.totalorder %s31, 0
    %s34 = sadd.s32 %s33, 1
    %s35 = scalar_select %p32, %s33, %s34
    %p38 = pneg %p32
    %p39 = scmp.eq.s32.totalorder %s9, 1
    %p40 = por %p38, %p39
    %p41 = scmp.ne.s32.totalorder %s33, %s36
    %p42 = scmp.eq.s32.totalorder %s9, 0
    %p43 = por %p41, %p42
    %p44 = scmp.ne.s32.totalorder %s33, %s36
    %p45 = scmp.eq.s32.totalorder %s14, 1
    %p46 = por %p44, %p45
    %p47 = scmp.ne.s32.totalorder %s36, %s37
    %p48 = scmp.eq.s32.totalorder %s14, 0
    %p49 = por %p47, %p48
    %p50 = scmp.ne.s32.totalorder %s36, %s37
    %p51 = scmp.eq.s32.totalorder %s15, 1
    %p52 = por %p50, %p51
    %p54 = scmp.ne.s32.totalorder %s37, %s53
    %p55 = scmp.eq.s32.totalorder %s15, 0
    %p56 = por %p54, %p55
    %s57 = ssub.s32 %s17, %s24
    %p58 = scmp.eq.s32.totalorder %s57, 0
    %s60 = sadd.s32 %s59, 1
    %s61 = scalar_select %p58, %s59, %s60
    %p64 = pneg %p58
    %p65 = scmp.eq.s32.totalorder %s9, 1
    %p66 = por %p64, %p65
    %p67 = scmp.ne.s32.totalorder %s59, %s62
    %p68 = scmp.eq.s32.totalorder %s9, 0
    %p69 = por %p67, %p68
    %p70 = scmp.ne.s32.totalorder %s59, %s62
    %p71 = scmp.eq.s32.totalorder %s14, 1
    %p72 = por %p70, %p71
    %p73 = scmp.ne.s32.totalorder %s62, %s63
    %p74 = scmp.eq.s32.totalorder %s14, 0
    %p75 = por %p73, %p74
    %p76 = scmp.ne.s32.totalorder %s62, %s63
    %p77 = scmp.eq.s32.totalorder %s15, 1
    %p78 = por %p76, %p77
    %p80 = scmp.ne.s32.totalorder %s63, %s79
    %p81 = scmp.eq.s32.totalorder %s15, 0
    %p82 = por %p80, %p81
    %s84 = sadd.s32 %s83, 1
    %p87 = scmp.eq.s32.totalorder %s9, 1
    %p88 = scmp.ne.s32.totalorder %s83, %s85
    %p89 = scmp.eq.s32.totalorder %s9, 0
    %p90 = por %p88, %p89
    %p91 = scmp.ne.s32.totalorder %s83, %s85
    %p92 = scmp.eq.s32.totalorder %s14, 1
    %p93 = por %p91, %p92
    %p94 = scmp.ne.s32.totalorder %s85, %s86
    %p95 = scmp.eq.s32.totalorder %s14, 0
    %p96 = por %p94, %p95
    %p97 = scmp.ne.s32.totalorder %s85, %s86
    %p98 = scmp.eq.s32.totalorder %s15, 1
    %p99 = por %p97, %p98
    %p101 = scmp.ne.s32.totalorder %s86, %s100
    %p102 = scmp.eq.s32.totalorder %s15, 0
    %p103 = por %p101, %p102
    %s104 = ssub.s32 %s16, %s28
    %p105 = scmp.eq.s32.totalorder %s104, 0
    %s107 = sadd.s32 %s106, 1
    %s108 = scalar_select %p105, %s106, %s107
    %p111 = pneg %p105
    %p112 = scmp.eq.s32.totalorder %s9, 1
    %p113 = por %p111, %p112
    %p114 = scmp.ne.s32.totalorder %s106, %s109
    %p115 = scmp.eq.s32.totalorder %s9, 0
    %p116 = por %p114, %p115
    %p117 = scmp.ne.s32.totalorder %s106, %s109
    %p118 = scmp.eq.s32.totalorder %s14, 1
    %p119 = por %p117, %p118
    %p120 = scmp.ne.s32.totalorder %s109, %s110
    %p121 = scmp.eq.s32.totalorder %s14, 0
    %p122 = por %p120, %p121
    %p123 = scmp.ne.s32.totalorder %s109, %s110
    %p124 = scmp.eq.s32.totalorder %s15, 1
    %p125 = por %p123, %p124
    %p127 = scmp.ne.s32.totalorder %s110, %s126
    %p128 = scmp.eq.s32.totalorder %s15, 0
    %p129 = por %p127, %p128
    %p130 = scmp.le.s32.totalorder 1, %s9
    %p131 = scmp.lt.s32.totalorder %s9, 3
    %p132 = pnand %p130, %p131
    %p133 = pneg %p132
    // Predicated region
    $region9: #{discriminator_forward.6} parent=5 // pred_check
      _
    $region10: #{discriminator_forward.6} parent=5 // pred_check_branch
      %135 = sbr.rel (%p132) target = $region12
    $region11: #{discriminator_forward.6} parent=5 // pred_region
      %s136 = ssub.s32 %s9, 1
      // Predicated region
      $region13: #{discriminator_forward.6} parent=11 // pred_check
        %p137 = pneg %p75
      $region14: #{discriminator_forward.6} parent=11 // pred_check_branch
        %139 = sbr.rel (%p137) target = $region16
      $region15: #{discriminator_forward.6} parent=11 // pred_region
        %s140 = smul.u32 128, %s19
        %p141 = scmp.lt.s32.totalorder %s140, 127
        %s142 = scalar_select %p141, %s140, 127
        %s143 = smul.addr %s142, 4
        %s144 = scalar_lea.vmem %s1, %s143
        %s145 = smul.u32 128, %s19
      $region16: #{discriminator_forward.6} parent=11 // pred_fallthru
        _
      // Predicated region
      $region17: #{discriminator_forward.6} parent=11 // pred_check
        %p146 = pneg %p96
      $region18: #{discriminator_forward.6} parent=11 // pred_check_branch
        %148 = sbr.rel (%p146) target = $region20
      $region19: #{discriminator_forward.6} parent=11 // pred_region
        _
      $region20: #{discriminator_forward.6} parent=11 // pred_fallthru
        _
    $region12: #{discriminator_forward.6} parent=5 // pred_fallthru
      _
    %p149 = scmp.lt.s32.totalorder %s9, 2
    // Predicated region
    $region21: #{discriminator_forward.6} parent=5 // pred_check
      %p150 = pneg %p149
    $region22: #{discriminator_forward.6} parent=5 // pred_check_branch
      %152 = sbr.rel (%p150) target = $region24
    $region23: #{discriminator_forward.6} parent=5 // pred_region
      // Predicated region
      $region25: #{discriminator_forward.6} parent=23 // pred_check
        %p153 = pneg %p43
      $region26: #{discriminator_forward.6} parent=23 // pred_check_branch
        %155 = sbr.rel (%p153) target = $region28
      $region27: #{discriminator_forward.6} parent=23 // pred_region
        %s156 = smul.u32 32, %s16
        %s157 = smul.u32 8, %s17
        %p158 = scmp.lt.s32.totalorder %s156, 63
        %s159 = scalar_select %p158, %s156, 63
        %p160 = scmp.lt.s32.totalorder %s157, 7
        %s161 = scalar_select %p160, %s157, 7
        %s162 = smul.addr %s159, 8
        %s163 = sadd.s32 %s161, %s162
        %s164 = smul.addr %s163, 4
        %s165 = scalar_lea.vmem %s0, %s164
        %s166 = smul.u32 32, %s16
        %s167 = smul.u32 8, %s17
      $region28: #{discriminator_forward.6} parent=23 // pred_fallthru
        _
    $region24: #{discriminator_forward.6} parent=5 // pred_fallthru
      _
    %p168 = scmp.le.s32.totalorder 1, %s9
    %p169 = scmp.lt.s32.totalorder %s9, 3
    %p170 = pnand %p168, %p169
    %p171 = pneg %p170
    // Predicated region
    $region29: #{discriminator_forward.6} parent=5 // pred_check
      _
    $region30: #{discriminator_forward.6} parent=5 // pred_check_branch
      %173 = sbr.rel (%p170) target = $region32
    $region31: #{discriminator_forward.6} parent=5 // pred_region
      %s174 = ssub.s32 %s9, 1
      %s175 = smul.u32 32, %s18
      %s176 = smul.u32 8, %s19
      %p177 = scmp.lt.s32.totalorder %s175, 63
      %s178 = scalar_select %p177, %s175, 63
      %p179 = scmp.lt.s32.totalorder %s176, 7
      %s180 = scalar_select %p179, %s176, 7
      %s181 = smul.addr %s178, 8
      %s182 = sadd.s32 %s180, %s181
      %s183 = smul.addr %s182, 4
      %s184 = scalar_lea.vmem %s0, %s183
      %p185 = pneg %p49
      %p186 = pneg %p46
      %s187 = smul.u32 128, %s19
      %p188 = scmp.lt.s32.totalorder %s187, 127
      %s189 = scalar_select %p188, %s187, 127
      %s190 = smul.addr %s189, 4
      %s191 = scalar_lea.vmem %s1, %s190
      %p192 = pneg %p75
      %p193 = pneg %p72
      %p194 = pneg %p96
      %p195 = pneg %p93
      %p196 = pneg %p122
      %p197 = pneg %p119
      %s198 = smul.u32 32, %s18
      %p199 = scmp.lt.s32.totalorder %s198, 63
      %s200 = scalar_select %p199, %s198, 63
      %s201 = smul.addr %s200, 8
      %s202 = scalar_lea.vmem %s3, %s201
      %s203 = smul.u32 32, %s18
      %s204 = smul.u32 8, %s19
      %p205 = scmp.lt.s32.totalorder %s203, 63
      %s206 = scalar_select %p205, %s203, 63
      %p207 = scmp.lt.s32.totalorder %s204, 7
      %s208 = scalar_select %p207, %s204, 7
      %s209 = smul.addr %s206, 8
      %s210 = sadd.s32 %s208, %s209
      %s211 = smul.addr %s210, 4
      %s212 = scalar_lea.vmem %s0, %s211
      %s213 = smul.u32 32, %s18
      %s214 = smul.u32 8, %s19
      %s215 = smul.u32 128, %s19
      %p216 = scmp.lt.s32.totalorder %s215, 127
      %s217 = scalar_select %p216, %s215, 127
      %s218 = smul.addr %s217, 4
      %s219 = scalar_lea.vmem %s1, %s218
      %s220 = smul.u32 128, %s19
      %s221 = smul.u32 32, %s18
      %p222 = scmp.lt.s32.totalorder %s221, 63
      %s223 = scalar_select %p222, %s221, 63
      %s224 = smul.addr %s223, 8
      %s225 = scalar_lea.vmem %s3, %s224
      %s226 = smul.u32 32, %s18
      %p228 = scmp.eq.s32.totalorder %s19, 0
      // Predicated region
      $region33: #{discriminator_forward.6} parent=31 // pred_check
        %p229 = pneg %p228
      $region34: #{discriminator_forward.6} parent=31 // pred_check_branch
        %231 = sbr.rel (%p229) target = $region36
      $region35: #{discriminator_forward.6} parent=31 // pred_region
        %232 = vst [vmem:[#allocation2] sm:$0xff] 0.0
        %233 = vst [vmem:[#allocation2 + $0x8] sm:$0xff] 0.0
        %234 = vst [vmem:[#allocation2 + $0x10] sm:$0xff] 0.0
        %235 = vst [vmem:[#allocation2 + $0x18] sm:$0xff] 0.0
        %236 = vst [vmem:[#allocation2 + $0x20] sm:$0xff] 0.0
        %237 = vst [vmem:[#allocation2 + $0x28] sm:$0xff] 0.0
        %238 = vst [vmem:[#allocation2 + $0x30] sm:$0xff] 0.0
        %239 = vst [vmem:[#allocation2 + $0x38] sm:$0xff] 0.0
        %240 = vst [vmem:[#allocation2 + $0x40] sm:$0xff] 0.0
        %241 = vst [vmem:[#allocation2 + $0x48] sm:$0xff] 0.0
        %242 = vst [vmem:[#allocation2 + $0x50] sm:$0xff] 0.0
        %243 = vst [vmem:[#allocation2 + $0x58] sm:$0xff] 0.0
        %244 = vst [vmem:[#allocation2 + $0x60] sm:$0xff] 0.0
        %245 = vst [vmem:[#allocation2 + $0x68] sm:$0xff] 0.0
        %246 = vst [vmem:[#allocation2 + $0x70] sm:$0xff] 0.0
        %247 = vst [vmem:[#allocation2 + $0x78] sm:$0xff] 0.0
        %248 = vst [vmem:[#allocation2 + $0x80] sm:$0xff] 0.0
        %249 = vst [vmem:[#allocation2 + $0x88] sm:$0xff] 0.0
        %250 = vst [vmem:[#allocation2 + $0x90] sm:$0xff] 0.0
        %251 = vst [vmem:[#allocation2 + $0x98] sm:$0xff] 0.0
        %252 = vst [vmem:[#allocation2 + $0xa0] sm:$0xff] 0.0
        %253 = vst [vmem:[#allocation2 + $0xa8] sm:$0xff] 0.0
        %254 = vst [vmem:[#allocation2 + $0xb0] sm:$0xff] 0.0
        %255 = vst [vmem:[#allocation2 + $0xb8] sm:$0xff] 0.0
        %256 = vst [vmem:[#allocation2 + $0xc0] sm:$0xff] 0.0
        %257 = vst [vmem:[#allocation2 + $0xc8] sm:$0xff] 0.0
        %258 = vst [vmem:[#allocation2 + $0xd0] sm:$0xff] 0.0
        %259 = vst [vmem:[#allocation2 + $0xd8] sm:$0xff] 0.0
        %260 = vst [vmem:[#allocation2 + $0xe0] sm:$0xff] 0.0
        %261 = vst [vmem:[#allocation2 + $0xe8] sm:$0xff] 0.0
        %262 = vst [vmem:[#allocation2 + $0xf0] sm:$0xff] 0.0
        %263 = vst [vmem:[#allocation2 + $0xf8] sm:$0xff] 0.0
      $region36: #{discriminator_forward.6} parent=31 // pred_fallthru
        _
      %v264 = vld [vmem:[#allocation2] sm:$0xff]
      %v265 = vld [vmem:[#allocation2 + $0x8] sm:$0xff]
      %v266 = vld [vmem:[#allocation2 + $0x10] sm:$0xff]
      %v267 = vld [vmem:[#allocation2 + $0x18] sm:$0xff]
      %v268 = vld [vmem:[#allocation2 + $0x20] sm:$0xff]
      %v269 = vld [vmem:[#allocation2 + $0x28] sm:$0xff]
      %v270 = vld [vmem:[#allocation2 + $0x30] sm:$0xff]
      %v271 = vld [vmem:[#allocation2 + $0x38] sm:$0xff]
      %v272 = vld [vmem:[#allocation2 + $0x40] sm:$0xff]
      %v273 = vld [vmem:[#allocation2 + $0x48] sm:$0xff]
      %v274 = vld [vmem:[#allocation2 + $0x50] sm:$0xff]
      %v275 = vld [vmem:[#allocation2 + $0x58] sm:$0xff]
      %v276 = vld [vmem:[#allocation2 + $0x60] sm:$0xff]
      %v277 = vld [vmem:[#allocation2 + $0x68] sm:$0xff]
      %v278 = vld [vmem:[#allocation2 + $0x70] sm:$0xff]
      %v279 = vld [vmem:[#allocation2 + $0x78] sm:$0xff]
      %v280 = vld [vmem:[#allocation2 + $0x80] sm:$0xff]
      %v281 = vld [vmem:[#allocation2 + $0x88] sm:$0xff]
      %v282 = vld [vmem:[#allocation2 + $0x90] sm:$0xff]
      %v283 = vld [vmem:[#allocation2 + $0x98] sm:$0xff]
      %v284 = vld [vmem:[#allocation2 + $0xa0] sm:$0xff]
      %v285 = vld [vmem:[#allocation2 + $0xa8] sm:$0xff]
      %v286 = vld [vmem:[#allocation2 + $0xb0] sm:$0xff]
      %v287 = vld [vmem:[#allocation2 + $0xb8] sm:$0xff]
      %v288 = vld [vmem:[#allocation2 + $0xc0] sm:$0xff]
      %v289 = vld [vmem:[#allocation2 + $0xc8] sm:$0xff]
      %v290 = vld [vmem:[#allocation2 + $0xd0] sm:$0xff]
      %v291 = vld [vmem:[#allocation2 + $0xd8] sm:$0xff]
      %v292 = vld [vmem:[#allocation2 + $0xe0] sm:$0xff]
      %v293 = vld [vmem:[#allocation2 + $0xe8] sm:$0xff]
      %v294 = vld [vmem:[#allocation2 + $0xf0] sm:$0xff]
      %v295 = vld [vmem:[#allocation2 + $0xf8] sm:$0xff]
      %v296 = vld [vmem:[%s212] sm:$0xff]
      %v297 = vld [vmem:[%s212 + $0x8] sm:$0xff]
      %v298 = vld [vmem:[%s212 + $0x10] sm:$0xff]
      %v299 = vld [vmem:[%s212 + $0x18] sm:$0xff]
      %v300 = vld [vmem:[%s212 + $0x20] sm:$0xff]
      %v301 = vld [vmem:[%s212 + $0x28] sm:$0xff]
      %v302 = vld [vmem:[%s212 + $0x30] sm:$0xff]
      %v303 = vld [vmem:[%s212 + $0x38] sm:$0xff]
      %v304 = vld [vmem:[%s212 + $0x40] sm:$0xff]
      %v305 = vld [vmem:[%s212 + $0x48] sm:$0xff]
      %v306 = vld [vmem:[%s212 + $0x50] sm:$0xff]
      %v307 = vld [vmem:[%s212 + $0x58] sm:$0xff]
      %v308 = vld [vmem:[%s212 + $0x60] sm:$0xff]
      %v309 = vld [vmem:[%s212 + $0x68] sm:$0xff]
      %v310 = vld [vmem:[%s212 + $0x70] sm:$0xff]
      %v311 = vld [vmem:[%s212 + $0x78] sm:$0xff]
      %v312 = vld [vmem:[%s212 + $0x80] sm:$0xff]
      %v313 = vld [vmem:[%s212 + $0x88] sm:$0xff]
      %v314 = vld [vmem:[%s212 + $0x90] sm:$0xff]
      %v315 = vld [vmem:[%s212 + $0x98] sm:$0xff]
      %v316 = vld [vmem:[%s212 + $0xa0] sm:$0xff]
      %v317 = vld [vmem:[%s212 + $0xa8] sm:$0xff]
      %v318 = vld [vmem:[%s212 + $0xb0] sm:$0xff]
      %v319 = vld [vmem:[%s212 + $0xb8] sm:$0xff]
      %v320 = vld [vmem:[%s212 + $0xc0] sm:$0xff]
      %v321 = vld [vmem:[%s212 + $0xc8] sm:$0xff]
      %v322 = vld [vmem:[%s212 + $0xd0] sm:$0xff]
      %v323 = vld [vmem:[%s212 + $0xd8] sm:$0xff]
      %v324 = vld [vmem:[%s212 + $0xe0] sm:$0xff]
      %v325 = vld [vmem:[%s212 + $0xe8] sm:$0xff]
      %v326 = vld [vmem:[%s212 + $0xf0] sm:$0xff]
      %v327 = vld [vmem:[%s212 + $0xf8] sm:$0xff]
      %v328 = vld [vmem:[%s212 + $0x100] sm:$0xff]
      %v329 = vld [vmem:[%s212 + $0x108] sm:$0xff]
      %v330 = vld [vmem:[%s212 + $0x110] sm:$0xff]
      %v331 = vld [vmem:[%s212 + $0x118] sm:$0xff]
      %v332 = vld [vmem:[%s212 + $0x120] sm:$0xff]
      %v333 = vld [vmem:[%s212 + $0x128] sm:$0xff]
      %v334 = vld [vmem:[%s212 + $0x130] sm:$0xff]
      %v335 = vld [vmem:[%s212 + $0x138] sm:$0xff]
      %v336 = vld [vmem:[%s212 + $0x140] sm:$0xff]
      %v337 = vld [vmem:[%s212 + $0x148] sm:$0xff]
      %v338 = vld [vmem:[%s212 + $0x150] sm:$0xff]
      %v339 = vld [vmem:[%s212 + $0x158] sm:$0xff]
      %v340 = vld [vmem:[%s212 + $0x160] sm:$0xff]
      %v341 = vld [vmem:[%s212 + $0x168] sm:$0xff]
      %v342 = vld [vmem:[%s212 + $0x170] sm:$0xff]
      %v343 = vld [vmem:[%s212 + $0x178] sm:$0xff]
      %v344 = vld [vmem:[%s212 + $0x180] sm:$0xff]
      %v345 = vld [vmem:[%s212 + $0x188] sm:$0xff]
      %v346 = vld [vmem:[%s212 + $0x190] sm:$0xff]
      %v347 = vld [vmem:[%s212 + $0x198] sm:$0xff]
      %v348 = vld [vmem:[%s212 + $0x1a0] sm:$0xff]
      %v349 = vld [vmem:[%s212 + $0x1a8] sm:$0xff]
      %v350 = vld [vmem:[%s212 + $0x1b0] sm:$0xff]
      %v351 = vld [vmem:[%s212 + $0x1b8] sm:$0xff]
      %v352 = vld [vmem:[%s212 + $0x1c0] sm:$0xff]
      %v353 = vld [vmem:[%s212 + $0x1c8] sm:$0xff]
      %v354 = vld [vmem:[%s212 + $0x1d0] sm:$0xff]
      %v355 = vld [vmem:[%s212 + $0x1d8] sm:$0xff]
      %v356 = vld [vmem:[%s212 + $0x1e0] sm:$0xff]
      %v357 = vld [vmem:[%s212 + $0x1e8] sm:$0xff]
      %v358 = vld [vmem:[%s212 + $0x1f0] sm:$0xff]
      %v359 = vld [vmem:[%s212 + $0x1f8] sm:$0xff]
      %v360 = vld [vmem:[%s212 + $0x200] sm:$0xff]
      %v361 = vld [vmem:[%s212 + $0x208] sm:$0xff]
      %v362 = vld [vmem:[%s212 + $0x210] sm:$0xff]
      %v363 = vld [vmem:[%s212 + $0x218] sm:$0xff]
      %v364 = vld [vmem:[%s212 + $0x220] sm:$0xff]
      %v365 = vld [vmem:[%s212 + $0x228] sm:$0xff]
      %v366 = vld [vmem:[%s212 + $0x230] sm:$0xff]
      %v367 = vld [vmem:[%s212 + $0x238] sm:$0xff]
      %v368 = vld [vmem:[%s212 + $0x240] sm:$0xff]
      %v369 = vld [vmem:[%s212 + $0x248] sm:$0xff]
      %v370 = vld [vmem:[%s212 + $0x250] sm:$0xff]
      %v371 = vld [vmem:[%s212 + $0x258] sm:$0xff]
      %v372 = vld [vmem:[%s212 + $0x260] sm:$0xff]
      %v373 = vld [vmem:[%s212 + $0x268] sm:$0xff]
      %v374 = vld [vmem:[%s212 + $0x270] sm:$0xff]
      %v375 = vld [vmem:[%s212 + $0x278] sm:$0xff]
      %v376 = vld [vmem:[%s212 + $0x280] sm:$0xff]
      %v377 = vld [vmem:[%s212 + $0x288] sm:$0xff]
      %v378 = vld [vmem:[%s212 + $0x290] sm:$0xff]
      %v379 = vld [vmem:[%s212 + $0x298] sm:$0xff]
      %v380 = vld [vmem:[%s212 + $0x2a0] sm:$0xff]
      %v381 = vld [vmem:[%s212 + $0x2a8] sm:$0xff]
      %v382 = vld [vmem:[%s212 + $0x2b0] sm:$0xff]
      %v383 = vld [vmem:[%s212 + $0x2b8] sm:$0xff]
      %v384 = vld [vmem:[%s212 + $0x2c0] sm:$0xff]
      %v385 = vld [vmem:[%s212 + $0x2c8] sm:$0xff]
      %v386 = vld [vmem:[%s212 + $0x2d0] sm:$0xff]
      %v387 = vld [vmem:[%s212 + $0x2d8] sm:$0xff]
      %v388 = vld [vmem:[%s212 + $0x2e0] sm:$0xff]
      %v389 = vld [vmem:[%s212 + $0x2e8] sm:$0xff]
      %v390 = vld [vmem:[%s212 + $0x2f0] sm:$0xff]
      %v391 = vld [vmem:[%s212 + $0x2f8] sm:$0xff]
      %v392 = vld [vmem:[%s212 + $0x300] sm:$0xff]
      %v393 = vld [vmem:[%s212 + $0x308] sm:$0xff]
      %v394 = vld [vmem:[%s212 + $0x310] sm:$0xff]
      %v395 = vld [vmem:[%s212 + $0x318] sm:$0xff]
      %v396 = vld [vmem:[%s212 + $0x320] sm:$0xff]
      %v397 = vld [vmem:[%s212 + $0x328] sm:$0xff]
      %v398 = vld [vmem:[%s212 + $0x330] sm:$0xff]
      %v399 = vld [vmem:[%s212 + $0x338] sm:$0xff]
      %v400 = vld [vmem:[%s212 + $0x340] sm:$0xff]
      %v401 = vld [vmem:[%s212 + $0x348] sm:$0xff]
      %v402 = vld [vmem:[%s212 + $0x350] sm:$0xff]
      %v403 = vld [vmem:[%s212 + $0x358] sm:$0xff]
      %v404 = vld [vmem:[%s212 + $0x360] sm:$0xff]
      %v405 = vld [vmem:[%s212 + $0x368] sm:$0xff]
      %v406 = vld [vmem:[%s212 + $0x370] sm:$0xff]
      %v407 = vld [vmem:[%s212 + $0x378] sm:$0xff]
      %v408 = vld [vmem:[%s212 + $0x380] sm:$0xff]
      %v409 = vld [vmem:[%s212 + $0x388] sm:$0xff]
      %v410 = vld [vmem:[%s212 + $0x390] sm:$0xff]
      %v411 = vld [vmem:[%s212 + $0x398] sm:$0xff]
      %v412 = vld [vmem:[%s212 + $0x3a0] sm:$0xff]
      %v413 = vld [vmem:[%s212 + $0x3a8] sm:$0xff]
      %v414 = vld [vmem:[%s212 + $0x3b0] sm:$0xff]
      %v415 = vld [vmem:[%s212 + $0x3b8] sm:$0xff]
      %v416 = vld [vmem:[%s212 + $0x3c0] sm:$0xff]
      %v417 = vld [vmem:[%s212 + $0x3c8] sm:$0xff]
      %v418 = vld [vmem:[%s212 + $0x3d0] sm:$0xff]
      %v419 = vld [vmem:[%s212 + $0x3d8] sm:$0xff]
      %v420 = vld [vmem:[%s212 + $0x3e0] sm:$0xff]
      %v421 = vld [vmem:[%s212 + $0x3e8] sm:$0xff]
      %v422 = vld [vmem:[%s212 + $0x3f0] sm:$0xff]
      %v423 = vld [vmem:[%s212 + $0x3f8] sm:$0xff]
      %v424 = vld [vmem:[%s219] sm:$0xf]
      %v425 = vld [vmem:[%s219 + $0x4] sm:$0xf]
      %v426 = vld [vmem:[%s219 + $0x8] sm:$0xf]
      %v427 = vld [vmem:[%s219 + $0xc] sm:$0xf]
      %v428 = vld [vmem:[%s219 + $0x10] sm:$0xf]
      %v429 = vld [vmem:[%s219 + $0x14] sm:$0xf]
      %v430 = vld [vmem:[%s219 + $0x18] sm:$0xf]
      %v431 = vld [vmem:[%s219 + $0x1c] sm:$0xf]
      %v432 = vld [vmem:[%s219 + $0x20] sm:$0xf]
      %v433 = vld [vmem:[%s219 + $0x24] sm:$0xf]
      %v434 = vld [vmem:[%s219 + $0x28] sm:$0xf]
      %v435 = vld [vmem:[%s219 + $0x2c] sm:$0xf]
      %v436 = vld [vmem:[%s219 + $0x30] sm:$0xf]
      %v437 = vld [vmem:[%s219 + $0x34] sm:$0xf]
      %v438 = vld [vmem:[%s219 + $0x38] sm:$0xf]
      %v439 = vld [vmem:[%s219 + $0x3c] sm:$0xf]
      %v440 = vld [vmem:[%s219 + $0x40] sm:$0xf]
      %v441 = vld [vmem:[%s219 + $0x44] sm:$0xf]
      %v442 = vld [vmem:[%s219 + $0x48] sm:$0xf]
      %v443 = vld [vmem:[%s219 + $0x4c] sm:$0xf]
      %v444 = vld [vmem:[%s219 + $0x50] sm:$0xf]
      %v445 = vld [vmem:[%s219 + $0x54] sm:$0xf]
      %v446 = vld [vmem:[%s219 + $0x58] sm:$0xf]
      %v447 = vld [vmem:[%s219 + $0x5c] sm:$0xf]
      %v448 = vld [vmem:[%s219 + $0x60] sm:$0xf]
      %v449 = vld [vmem:[%s219 + $0x64] sm:$0xf]
      %v450 = vld [vmem:[%s219 + $0x68] sm:$0xf]
      %v451 = vld [vmem:[%s219 + $0x6c] sm:$0xf]
      %v452 = vld [vmem:[%s219 + $0x70] sm:$0xf]
      %v453 = vld [vmem:[%s219 + $0x74] sm:$0xf]
      %v454 = vld [vmem:[%s219 + $0x78] sm:$0xf]
      %v455 = vld [vmem:[%s219 + $0x7c] sm:$0xf]
      %v456 = vld [vmem:[%s219 + $0x80] sm:$0xf]
      %v457 = vld [vmem:[%s219 + $0x84] sm:$0xf]
      %v458 = vld [vmem:[%s219 + $0x88] sm:$0xf]
      %v459 = vld [vmem:[%s219 + $0x8c] sm:$0xf]
      %v460 = vld [vmem:[%s219 + $0x90] sm:$0xf]
      %v461 = vld [vmem:[%s219 + $0x94] sm:$0xf]
      %v462 = vld [vmem:[%s219 + $0x98] sm:$0xf]
      %v463 = vld [vmem:[%s219 + $0x9c] sm:$0xf]
      %v464 = vld [vmem:[%s219 + $0xa0] sm:$0xf]
      %v465 = vld [vmem:[%s219 + $0xa4] sm:$0xf]
      %v466 = vld [vmem:[%s219 + $0xa8] sm:$0xf]
      %v467 = vld [vmem:[%s219 + $0xac] sm:$0xf]
      %v468 = vld [vmem:[%s219 + $0xb0] sm:$0xf]
      %v469 = vld [vmem:[%s219 + $0xb4] sm:$0xf]
      %v470 = vld [vmem:[%s219 + $0xb8] sm:$0xf]
      %v471 = vld [vmem:[%s219 + $0xbc] sm:$0xf]
      %v472 = vld [vmem:[%s219 + $0xc0] sm:$0xf]
      %v473 = vld [vmem:[%s219 + $0xc4] sm:$0xf]
      %v474 = vld [vmem:[%s219 + $0xc8] sm:$0xf]
      %v475 = vld [vmem:[%s219 + $0xcc] sm:$0xf]
      %v476 = vld [vmem:[%s219 + $0xd0] sm:$0xf]
      %v477 = vld [vmem:[%s219 + $0xd4] sm:$0xf]
      %v478 = vld [vmem:[%s219 + $0xd8] sm:$0xf]
      %v479 = vld [vmem:[%s219 + $0xdc] sm:$0xf]
      %v480 = vld [vmem:[%s219 + $0xe0] sm:$0xf]
      %v481 = vld [vmem:[%s219 + $0xe4] sm:$0xf]
      %v482 = vld [vmem:[%s219 + $0xe8] sm:$0xf]
      %v483 = vld [vmem:[%s219 + $0xec] sm:$0xf]
      %v484 = vld [vmem:[%s219 + $0xf0] sm:$0xf]
      %v485 = vld [vmem:[%s219 + $0xf4] sm:$0xf]
      %v486 = vld [vmem:[%s219 + $0xf8] sm:$0xf]
      %v487 = vld [vmem:[%s219 + $0xfc] sm:$0xf]
      %v488 = vld [vmem:[%s219 + $0x100] sm:$0xf]
      %v489 = vld [vmem:[%s219 + $0x104] sm:$0xf]
      %v490 = vld [vmem:[%s219 + $0x108] sm:$0xf]
      %v491 = vld [vmem:[%s219 + $0x10c] sm:$0xf]
      %v492 = vld [vmem:[%s219 + $0x110] sm:$0xf]
      %v493 = vld [vmem:[%s219 + $0x114] sm:$0xf]
      %v494 = vld [vmem:[%s219 + $0x118] sm:$0xf]
      %v495 = vld [vmem:[%s219 + $0x11c] sm:$0xf]
      %v496 = vld [vmem:[%s219 + $0x120] sm:$0xf]
      %v497 = vld [vmem:[%s219 + $0x124] sm:$0xf]
      %v498 = vld [vmem:[%s219 + $0x128] sm:$0xf]
      %v499 = vld [vmem:[%s219 + $0x12c] sm:$0xf]
      %v500 = vld [vmem:[%s219 + $0x130] sm:$0xf]
      %v501 = vld [vmem:[%s219 + $0x134] sm:$0xf]
      %v502 = vld [vmem:[%s219 + $0x138] sm:$0xf]
      %v503 = vld [vmem:[%s219 + $0x13c] sm:$0xf]
      %v504 = vld [vmem:[%s219 + $0x140] sm:$0xf]
      %v505 = vld [vmem:[%s219 + $0x144] sm:$0xf]
      %v506 = vld [vmem:[%s219 + $0x148] sm:$0xf]
      %v507 = vld [vmem:[%s219 + $0x14c] sm:$0xf]
      %v508 = vld [vmem:[%s219 + $0x150] sm:$0xf]
      %v509 = vld [vmem:[%s219 + $0x154] sm:$0xf]
      %v510 = vld [vmem:[%s219 + $0x158] sm:$0xf]
      %v511 = vld [vmem:[%s219 + $0x15c] sm:$0xf]
      %v512 = vld [vmem:[%s219 + $0x160] sm:$0xf]
      %v513 = vld [vmem:[%s219 + $0x164] sm:$0xf]
      %v514 = vld [vmem:[%s219 + $0x168] sm:$0xf]
      %v515 = vld [vmem:[%s219 + $0x16c] sm:$0xf]
      %v516 = vld [vmem:[%s219 + $0x170] sm:$0xf]
      %v517 = vld [vmem:[%s219 + $0x174] sm:$0xf]
      %v518 = vld [vmem:[%s219 + $0x178] sm:$0xf]
      %v519 = vld [vmem:[%s219 + $0x17c] sm:$0xf]
      %v520 = vld [vmem:[%s219 + $0x180] sm:$0xf]
      %v521 = vld [vmem:[%s219 + $0x184] sm:$0xf]
      %v522 = vld [vmem:[%s219 + $0x188] sm:$0xf]
      %v523 = vld [vmem:[%s219 + $0x18c] sm:$0xf]
      %v524 = vld [vmem:[%s219 + $0x190] sm:$0xf]
      %v525 = vld [vmem:[%s219 + $0x194] sm:$0xf]
      %v526 = vld [vmem:[%s219 + $0x198] sm:$0xf]
      %v527 = vld [vmem:[%s219 + $0x19c] sm:$0xf]
      %v528 = vld [vmem:[%s219 + $0x1a0] sm:$0xf]
      %v529 = vld [vmem:[%s219 + $0x1a4] sm:$0xf]
      %v530 = vld [vmem:[%s219 + $0x1a8] sm:$0xf]
      %v531 = vld [vmem:[%s219 + $0x1ac] sm:$0xf]
      %v532 = vld [vmem:[%s219 + $0x1b0] sm:$0xf]
      %v533 = vld [vmem:[%s219 + $0x1b4] sm:$0xf]
      %v534 = vld [vmem:[%s219 + $0x1b8] sm:$0xf]
      %v535 = vld [vmem:[%s219 + $0x1bc] sm:$0xf]
      %v536 = vld [vmem:[%s219 + $0x1c0] sm:$0xf]
      %v537 = vld [vmem:[%s219 + $0x1c4] sm:$0xf]
      %v538 = vld [vmem:[%s219 + $0x1c8] sm:$0xf]
      %v539 = vld [vmem:[%s219 + $0x1cc] sm:$0xf]
      %v540 = vld [vmem:[%s219 + $0x1d0] sm:$0xf]
      %v541 = vld [vmem:[%s219 + $0x1d4] sm:$0xf]
      %v542 = vld [vmem:[%s219 + $0x1d8] sm:$0xf]
      %v543 = vld [vmem:[%s219 + $0x1dc] sm:$0xf]
      %v544 = vld [vmem:[%s219 + $0x1e0] sm:$0xf]
      %v545 = vld [vmem:[%s219 + $0x1e4] sm:$0xf]
      %v546 = vld [vmem:[%s219 + $0x1e8] sm:$0xf]
      %v547 = vld [vmem:[%s219 + $0x1ec] sm:$0xf]
      %v548 = vld [vmem:[%s219 + $0x1f0] sm:$0xf]
      %v549 = vld [vmem:[%s219 + $0x1f4] sm:$0xf]
      %v550 = vld [vmem:[%s219 + $0x1f8] sm:$0xf]
      %v551 = vld [vmem:[%s219 + $0x1fc] sm:$0xf]
      %v680 = vunpack.c.l.b16 %v296
      %v681 = vunpack.c.h.b16 %v296
      %v682 = vunpack.c.l.b16 %v297
      %v683 = vunpack.c.h.b16 %v297
      %v684 = vunpack.c.l.b16 %v298
      %v685 = vunpack.c.h.b16 %v298
      %v686 = vunpack.c.l.b16 %v299
      %v687 = vunpack.c.h.b16 %v299
      %v688 = vunpack.c.l.b16 %v300
      %v689 = vunpack.c.h.b16 %v300
      %v690 = vunpack.c.l.b16 %v301
      %v691 = vunpack.c.h.b16 %v301
      %v692 = vunpack.c.l.b16 %v302
      %v693 = vunpack.c.h.b16 %v302
      %v694 = vunpack.c.l.b16 %v303
      %v695 = vunpack.c.h.b16 %v303
      %v696 = vunpack.c.l.b16 %v304
      %v697 = vunpack.c.h.b16 %v304
      %v698 = vunpack.c.l.b16 %v305
      %v699 = vunpack.c.h.b16 %v305
      %v700 = vunpack.c.l.b16 %v306
      %v701 = vunpack.c.h.b16 %v306
      %v702 = vunpack.c.l.b16 %v307
      %v703 = vunpack.c.h.b16 %v307
      %v704 = vunpack.c.l.b16 %v308
      %v705 = vunpack.c.h.b16 %v308
      %v706 = vunpack.c.l.b16 %v309
      %v707 = vunpack.c.h.b16 %v309
      %v708 = vunpack.c.l.b16 %v310
      %v709 = vunpack.c.h.b16 %v310
      %v710 = vunpack.c.l.b16 %v311
      %v711 = vunpack.c.h.b16 %v311
      %v712 = vunpack.c.l.b16 %v312
      %v713 = vunpack.c.h.b16 %v312
      %v714 = vunpack.c.l.b16 %v313
      %v715 = vunpack.c.h.b16 %v313
      %v716 = vunpack.c.l.b16 %v314
      %v717 = vunpack.c.h.b16 %v314
      %v718 = vunpack.c.l.b16 %v315
      %v719 = vunpack.c.h.b16 %v315
      %v720 = vunpack.c.l.b16 %v316
      %v721 = vunpack.c.h.b16 %v316
      %v722 = vunpack.c.l.b16 %v317
      %v723 = vunpack.c.h.b16 %v317
      %v724 = vunpack.c.l.b16 %v318
      %v725 = vunpack.c.h.b16 %v318
      %v726 = vunpack.c.l.b16 %v319
      %v727 = vunpack.c.h.b16 %v319
      %v728 = vunpack.c.l.b16 %v320
      %v729 = vunpack.c.h.b16 %v320
      %v730 = vunpack.c.l.b16 %v321
      %v731 = vunpack.c.h.b16 %v321
      %v732 = vunpack.c.l.b16 %v322
      %v733 = vunpack.c.h.b16 %v322
      %v734 = vunpack.c.l.b16 %v323
      %v735 = vunpack.c.h.b16 %v323
      %v736 = vunpack.c.l.b16 %v324
      %v737 = vunpack.c.h.b16 %v324
      %v738 = vunpack.c.l.b16 %v325
      %v739 = vunpack.c.h.b16 %v325
      %v740 = vunpack.c.l.b16 %v326
      %v741 = vunpack.c.h.b16 %v326
      %v742 = vunpack.c.l.b16 %v327
      %v743 = vunpack.c.h.b16 %v327
      %v744 = vunpack.c.l.b16 %v328
      %v745 = vunpack.c.h.b16 %v328
      %v746 = vunpack.c.l.b16 %v329
      %v747 = vunpack.c.h.b16 %v329
      %v748 = vunpack.c.l.b16 %v330
      %v749 = vunpack.c.h.b16 %v330
      %v750 = vunpack.c.l.b16 %v331
      %v751 = vunpack.c.h.b16 %v331
      %v752 = vunpack.c.l.b16 %v332
      %v753 = vunpack.c.h.b16 %v332
      %v754 = vunpack.c.l.b16 %v333
      %v755 = vunpack.c.h.b16 %v333
      %v756 = vunpack.c.l.b16 %v334
      %v757 = vunpack.c.h.b16 %v334
      %v758 = vunpack.c.l.b16 %v335
      %v759 = vunpack.c.h.b16 %v335
      %v760 = vunpack.c.l.b16 %v336
      %v761 = vunpack.c.h.b16 %v336
      %v762 = vunpack.c.l.b16 %v337
      %v763 = vunpack.c.h.b16 %v337
      %v764 = vunpack.c.l.b16 %v338
      %v765 = vunpack.c.h.b16 %v338
      %v766 = vunpack.c.l.b16 %v339
      %v767 = vunpack.c.h.b16 %v339
      %v768 = vunpack.c.l.b16 %v340
      %v769 = vunpack.c.h.b16 %v340
      %v770 = vunpack.c.l.b16 %v341
      %v771 = vunpack.c.h.b16 %v341
      %v772 = vunpack.c.l.b16 %v342
      %v773 = vunpack.c.h.b16 %v342
      %v774 = vunpack.c.l.b16 %v343
      %v775 = vunpack.c.h.b16 %v343
      %v776 = vunpack.c.l.b16 %v344
      %v777 = vunpack.c.h.b16 %v344
      %v778 = vunpack.c.l.b16 %v345
      %v779 = vunpack.c.h.b16 %v345
      %v780 = vunpack.c.l.b16 %v346
      %v781 = vunpack.c.h.b16 %v346
      %v782 = vunpack.c.l.b16 %v347
      %v783 = vunpack.c.h.b16 %v347
      %v784 = vunpack.c.l.b16 %v348
      %v785 = vunpack.c.h.b16 %v348
      %v786 = vunpack.c.l.b16 %v349
      %v787 = vunpack.c.h.b16 %v349
      %v788 = vunpack.c.l.b16 %v350
      %v789 = vunpack.c.h.b16 %v350
      %v790 = vunpack.c.l.b16 %v351
      %v791 = vunpack.c.h.b16 %v351
      %v792 = vunpack.c.l.b16 %v352
      %v793 = vunpack.c.h.b16 %v352
      %v794 = vunpack.c.l.b16 %v353
      %v795 = vunpack.c.h.b16 %v353
      %v796 = vunpack.c.l.b16 %v354
      %v797 = vunpack.c.h.b16 %v354
      %v798 = vunpack.c.l.b16 %v355
      %v799 = vunpack.c.h.b16 %v355
      %v800 = vunpack.c.l.b16 %v356
      %v801 = vunpack.c.h.b16 %v356
      %v802 = vunpack.c.l.b16 %v357
      %v803 = vunpack.c.h.b16 %v357
      %v804 = vunpack.c.l.b16 %v358
      %v805 = vunpack.c.h.b16 %v358
      %v806 = vunpack.c.l.b16 %v359
      %v807 = vunpack.c.h.b16 %v359
      %v808 = vunpack.c.l.b16 %v360
      %v809 = vunpack.c.h.b16 %v360
      %v810 = vunpack.c.l.b16 %v361
      %v811 = vunpack.c.h.b16 %v361
      %v812 = vunpack.c.l.b16 %v362
      %v813 = vunpack.c.h.b16 %v362
      %v814 = vunpack.c.l.b16 %v363
      %v815 = vunpack.c.h.b16 %v363
      %v816 = vunpack.c.l.b16 %v364
      %v817 = vunpack.c.h.b16 %v364
      %v818 = vunpack.c.l.b16 %v365
      %v819 = vunpack.c.h.b16 %v365
      %v820 = vunpack.c.l.b16 %v366
      %v821 = vunpack.c.h.b16 %v366
      %v822 = vunpack.c.l.b16 %v367
      %v823 = vunpack.c.h.b16 %v367
      %v824 = vunpack.c.l.b16 %v368
      %v825 = vunpack.c.h.b16 %v368
      %v826 = vunpack.c.l.b16 %v369
      %v827 = vunpack.c.h.b16 %v369
      %v828 = vunpack.c.l.b16 %v370
      %v829 = vunpack.c.h.b16 %v370
      %v830 = vunpack.c.l.b16 %v371
      %v831 = vunpack.c.h.b16 %v371
      %v832 = vunpack.c.l.b16 %v372
      %v833 = vunpack.c.h.b16 %v372
      %v834 = vunpack.c.l.b16 %v373
      %v835 = vunpack.c.h.b16 %v373
      %v836 = vunpack.c.l.b16 %v374
      %v837 = vunpack.c.h.b16 %v374
      %v838 = vunpack.c.l.b16 %v375
      %v839 = vunpack.c.h.b16 %v375
      %v840 = vunpack.c.l.b16 %v376
      %v841 = vunpack.c.h.b16 %v376
      %v842 = vunpack.c.l.b16 %v377
      %v843 = vunpack.c.h.b16 %v377
      %v844 = vunpack.c.l.b16 %v378
      %v845 = vunpack.c.h.b16 %v378
      %v846 = vunpack.c.l.b16 %v379
      %v847 = vunpack.c.h.b16 %v379
      %v848 = vunpack.c.l.b16 %v380
      %v849 = vunpack.c.h.b16 %v380
      %v850 = vunpack.c.l.b16 %v381
      %v851 = vunpack.c.h.b16 %v381
      %v852 = vunpack.c.l.b16 %v382
      %v853 = vunpack.c.h.b16 %v382
      %v854 = vunpack.c.l.b16 %v383
      %v855 = vunpack.c.h.b16 %v383
      %v856 = vunpack.c.l.b16 %v384
      %v857 = vunpack.c.h.b16 %v384
      %v858 = vunpack.c.l.b16 %v385
      %v859 = vunpack.c.h.b16 %v385
      %v860 = vunpack.c.l.b16 %v386
      %v861 = vunpack.c.h.b16 %v386
      %v862 = vunpack.c.l.b16 %v387
      %v863 = vunpack.c.h.b16 %v387
      %v864 = vunpack.c.l.b16 %v388
      %v865 = vunpack.c.h.b16 %v388
      %v866 = vunpack.c.l.b16 %v389
      %v867 = vunpack.c.h.b16 %v389
      %v868 = vunpack.c.l.b16 %v390
      %v869 = vunpack.c.h.b16 %v390
      %v870 = vunpack.c.l.b16 %v391
      %v871 = vunpack.c.h.b16 %v391
      %v872 = vunpack.c.l.b16 %v392
      %v873 = vunpack.c.h.b16 %v392
      %v874 = vunpack.c.l.b16 %v393
      %v875 = vunpack.c.h.b16 %v393
      %v876 = vunpack.c.l.b16 %v394
      %v877 = vunpack.c.h.b16 %v394
      %v878 = vunpack.c.l.b16 %v395
      %v879 = vunpack.c.h.b16 %v395
      %v880 = vunpack.c.l.b16 %v396
      %v881 = vunpack.c.h.b16 %v396
      %v882 = vunpack.c.l.b16 %v397
      %v883 = vunpack.c.h.b16 %v397
      %v884 = vunpack.c.l.b16 %v398
      %v885 = vunpack.c.h.b16 %v398
      %v886 = vunpack.c.l.b16 %v399
      %v887 = vunpack.c.h.b16 %v399
      %v888 = vunpack.c.l.b16 %v400
      %v889 = vunpack.c.h.b16 %v400
      %v890 = vunpack.c.l.b16 %v401
      %v891 = vunpack.c.h.b16 %v401
      %v892 = vunpack.c.l.b16 %v402
      %v893 = vunpack.c.h.b16 %v402
      %v894 = vunpack.c.l.b16 %v403
      %v895 = vunpack.c.h.b16 %v403
      %v896 = vunpack.c.l.b16 %v404
      %v897 = vunpack.c.h.b16 %v404
      %v898 = vunpack.c.l.b16 %v405
      %v899 = vunpack.c.h.b16 %v405
      %v900 = vunpack.c.l.b16 %v406
      %v901 = vunpack.c.h.b16 %v406
      %v902 = vunpack.c.l.b16 %v407
      %v903 = vunpack.c.h.b16 %v407
      %v904 = vunpack.c.l.b16 %v408
      %v905 = vunpack.c.h.b16 %v408
      %v906 = vunpack.c.l.b16 %v409
      %v907 = vunpack.c.h.b16 %v409
      %v908 = vunpack.c.l.b16 %v410
      %v909 = vunpack.c.h.b16 %v410
      %v910 = vunpack.c.l.b16 %v411
      %v911 = vunpack.c.h.b16 %v411
      %v912 = vunpack.c.l.b16 %v412
      %v913 = vunpack.c.h.b16 %v412
      %v914 = vunpack.c.l.b16 %v413
      %v915 = vunpack.c.h.b16 %v413
      %v916 = vunpack.c.l.b16 %v414
      %v917 = vunpack.c.h.b16 %v414
      %v918 = vunpack.c.l.b16 %v415
      %v919 = vunpack.c.h.b16 %v415
      %v920 = vunpack.c.l.b16 %v416
      %v921 = vunpack.c.h.b16 %v416
      %v922 = vunpack.c.l.b16 %v417
      %v923 = vunpack.c.h.b16 %v417
      %v924 = vunpack.c.l.b16 %v418
      %v925 = vunpack.c.h.b16 %v418
      %v926 = vunpack.c.l.b16 %v419
      %v927 = vunpack.c.h.b16 %v419
      %v928 = vunpack.c.l.b16 %v420
      %v929 = vunpack.c.h.b16 %v420
      %v930 = vunpack.c.l.b16 %v421
      %v931 = vunpack.c.h.b16 %v421
      %v932 = vunpack.c.l.b16 %v422
      %v933 = vunpack.c.h.b16 %v422
      %v934 = vunpack.c.l.b16 %v423
      %v935 = vunpack.c.h.b16 %v423
      %v936 = vpack.c.b16 %v688, %v680
      %v937 = vpack.c.b16 %v689, %v681
      %v938 = vpack.c.b16 %v690, %v682
      %v939 = vpack.c.b16 %v691, %v683
      %v940 = vpack.c.b16 %v692, %v684
      %v941 = vpack.c.b16 %v693, %v685
      %v942 = vpack.c.b16 %v694, %v686
      %v943 = vpack.c.b16 %v695, %v687
      %v944 = vpack.c.b16 %v704, %v696
      %v945 = vpack.c.b16 %v705, %v697
      %v946 = vpack.c.b16 %v706, %v698
      %v947 = vpack.c.b16 %v707, %v699
      %v948 = vpack.c.b16 %v708, %v700
      %v949 = vpack.c.b16 %v709, %v701
      %v950 = vpack.c.b16 %v710, %v702
      %v951 = vpack.c.b16 %v711, %v703
      %v952 = vpack.c.b16 %v720, %v712
      %v953 = vpack.c.b16 %v721, %v713
      %v954 = vpack.c.b16 %v722, %v714
      %v955 = vpack.c.b16 %v723, %v715
      %v956 = vpack.c.b16 %v724, %v716
      %v957 = vpack.c.b16 %v725, %v717
      %v958 = vpack.c.b16 %v726, %v718
      %v959 = vpack.c.b16 %v727, %v719
      %v960 = vpack.c.b16 %v736, %v728
      %v961 = vpack.c.b16 %v737, %v729
      %v962 = vpack.c.b16 %v738, %v730
      %v963 = vpack.c.b16 %v739, %v731
      %v964 = vpack.c.b16 %v740, %v732
      %v965 = vpack.c.b16 %v741, %v733
      %v966 = vpack.c.b16 %v742, %v734
      %v967 = vpack.c.b16 %v743, %v735
      %v968 = vpack.c.b16 %v752, %v744
      %v969 = vpack.c.b16 %v753, %v745
      %v970 = vpack.c.b16 %v754, %v746
      %v971 = vpack.c.b16 %v755, %v747
      %v972 = vpack.c.b16 %v756, %v748
      %v973 = vpack.c.b16 %v757, %v749
      %v974 = vpack.c.b16 %v758, %v750
      %v975 = vpack.c.b16 %v759, %v751
      %v976 = vpack.c.b16 %v768, %v760
      %v977 = vpack.c.b16 %v769, %v761
      %v978 = vpack.c.b16 %v770, %v762
      %v979 = vpack.c.b16 %v771, %v763
      %v980 = vpack.c.b16 %v772, %v764
      %v981 = vpack.c.b16 %v773, %v765
      %v982 = vpack.c.b16 %v774, %v766
      %v983 = vpack.c.b16 %v775, %v767
      %v984 = vpack.c.b16 %v784, %v776
      %v985 = vpack.c.b16 %v785, %v777
      %v986 = vpack.c.b16 %v786, %v778
      %v987 = vpack.c.b16 %v787, %v779
      %v988 = vpack.c.b16 %v788, %v780
      %v989 = vpack.c.b16 %v789, %v781
      %v990 = vpack.c.b16 %v790, %v782
      %v991 = vpack.c.b16 %v791, %v783
      %v992 = vpack.c.b16 %v800, %v792
      %v993 = vpack.c.b16 %v801, %v793
      %v994 = vpack.c.b16 %v802, %v794
      %v995 = vpack.c.b16 %v803, %v795
      %v996 = vpack.c.b16 %v804, %v796
      %v997 = vpack.c.b16 %v805, %v797
      %v998 = vpack.c.b16 %v806, %v798
      %v999 = vpack.c.b16 %v807, %v799
      %v1000 = vpack.c.b16 %v816, %v808
      %v1001 = vpack.c.b16 %v817, %v809
      %v1002 = vpack.c.b16 %v818, %v810
      %v1003 = vpack.c.b16 %v819, %v811
      %v1004 = vpack.c.b16 %v820, %v812
      %v1005 = vpack.c.b16 %v821, %v813
      %v1006 = vpack.c.b16 %v822, %v814
      %v1007 = vpack.c.b16 %v823, %v815
      %v1008 = vpack.c.b16 %v832, %v824
      %v1009 = vpack.c.b16 %v833, %v825
      %v1010 = vpack.c.b16 %v834, %v826
      %v1011 = vpack.c.b16 %v835, %v827
      %v1012 = vpack.c.b16 %v836, %v828
      %v1013 = vpack.c.b16 %v837, %v829
      %v1014 = vpack.c.b16 %v838, %v830
      %v1015 = vpack.c.b16 %v839, %v831
      %v1016 = vpack.c.b16 %v848, %v840
      %v1017 = vpack.c.b16 %v849, %v841
      %v1018 = vpack.c.b16 %v850, %v842
      %v1019 = vpack.c.b16 %v851, %v843
      %v1020 = vpack.c.b16 %v852, %v844
      %v1021 = vpack.c.b16 %v853, %v845
      %v1022 = vpack.c.b16 %v854, %v846
      %v1023 = vpack.c.b16 %v855, %v847
      %v1024 = vpack.c.b16 %v864, %v856
      %v1025 = vpack.c.b16 %v865, %v857
      %v1026 = vpack.c.b16 %v866, %v858
      %v1027 = vpack.c.b16 %v867, %v859
      %v1028 = vpack.c.b16 %v868, %v860
      %v1029 = vpack.c.b16 %v869, %v861
      %v1030 = vpack.c.b16 %v870, %v862
      %v1031 = vpack.c.b16 %v871, %v863
      %v1032 = vpack.c.b16 %v880, %v872
      %v1033 = vpack.c.b16 %v881, %v873
      %v1034 = vpack.c.b16 %v882, %v874
      %v1035 = vpack.c.b16 %v883, %v875
      %v1036 = vpack.c.b16 %v884, %v876
      %v1037 = vpack.c.b16 %v885, %v877
      %v1038 = vpack.c.b16 %v886, %v878
      %v1039 = vpack.c.b16 %v887, %v879
      %v1040 = vpack.c.b16 %v896, %v888
      %v1041 = vpack.c.b16 %v897, %v889
      %v1042 = vpack.c.b16 %v898, %v890
      %v1043 = vpack.c.b16 %v899, %v891
      %v1044 = vpack.c.b16 %v900, %v892
      %v1045 = vpack.c.b16 %v901, %v893
      %v1046 = vpack.c.b16 %v902, %v894
      %v1047 = vpack.c.b16 %v903, %v895
      %v1048 = vpack.c.b16 %v912, %v904
      %v1049 = vpack.c.b16 %v913, %v905
      %v1050 = vpack.c.b16 %v914, %v906
      %v1051 = vpack.c.b16 %v915, %v907
      %v1052 = vpack.c.b16 %v916, %v908
      %v1053 = vpack.c.b16 %v917, %v909
      %v1054 = vpack.c.b16 %v918, %v910
      %v1055 = vpack.c.b16 %v919, %v911
      %v1056 = vpack.c.b16 %v928, %v920
      %v1057 = vpack.c.b16 %v929, %v921
      %v1058 = vpack.c.b16 %v930, %v922
      %v1059 = vpack.c.b16 %v931, %v923
      %v1060 = vpack.c.b16 %v932, %v924
      %v1061 = vpack.c.b16 %v933, %v925
      %v1062 = vpack.c.b16 %v934, %v926
      %v1063 = vpack.c.b16 %v935, %v927
      %v1320 = vunpack.c.l.b16 %v424
      %v1321 = vunpack.c.l.b16 %v425
      %v1322 = vunpack.c.l.b16 %v426
      %v1323 = vunpack.c.l.b16 %v427
      %v1324 = vunpack.c.l.b16 %v428
      %v1325 = vunpack.c.l.b16 %v429
      %v1326 = vunpack.c.l.b16 %v430
      %v1327 = vunpack.c.l.b16 %v431
      %v1328 = vunpack.c.l.b16 %v432
      %v1329 = vunpack.c.l.b16 %v433
      %v1330 = vunpack.c.l.b16 %v434
      %v1331 = vunpack.c.l.b16 %v435
      %v1332 = vunpack.c.l.b16 %v436
      %v1333 = vunpack.c.l.b16 %v437
      %v1334 = vunpack.c.l.b16 %v438
      %v1335 = vunpack.c.l.b16 %v439
      %v1336 = vunpack.c.l.b16 %v440
      %v1337 = vunpack.c.l.b16 %v441
      %v1338 = vunpack.c.l.b16 %v442
      %v1339 = vunpack.c.l.b16 %v443
      %v1340 = vunpack.c.l.b16 %v444
      %v1341 = vunpack.c.l.b16 %v445
      %v1342 = vunpack.c.l.b16 %v446
      %v1343 = vunpack.c.l.b16 %v447
      %v1344 = vunpack.c.l.b16 %v448
      %v1345 = vunpack.c.l.b16 %v449
      %v1346 = vunpack.c.l.b16 %v450
      %v1347 = vunpack.c.l.b16 %v451
      %v1348 = vunpack.c.l.b16 %v452
      %v1349 = vunpack.c.l.b16 %v453
      %v1350 = vunpack.c.l.b16 %v454
      %v1351 = vunpack.c.l.b16 %v455
      %v1352 = vunpack.c.l.b16 %v456
      %v1353 = vunpack.c.l.b16 %v457
      %v1354 = vunpack.c.l.b16 %v458
      %v1355 = vunpack.c.l.b16 %v459
      %v1356 = vunpack.c.l.b16 %v460
      %v1357 = vunpack.c.l.b16 %v461
      %v1358 = vunpack.c.l.b16 %v462
      %v1359 = vunpack.c.l.b16 %v463
      %v1360 = vunpack.c.l.b16 %v464
      %v1361 = vunpack.c.l.b16 %v465
      %v1362 = vunpack.c.l.b16 %v466
      %v1363 = vunpack.c.l.b16 %v467
      %v1364 = vunpack.c.l.b16 %v468
      %v1365 = vunpack.c.l.b16 %v469
      %v1366 = vunpack.c.l.b16 %v470
      %v1367 = vunpack.c.l.b16 %v471
      %v1368 = vunpack.c.l.b16 %v472
      %v1369 = vunpack.c.l.b16 %v473
      %v1370 = vunpack.c.l.b16 %v474
      %v1371 = vunpack.c.l.b16 %v475
      %v1372 = vunpack.c.l.b16 %v476
      %v1373 = vunpack.c.l.b16 %v477
      %v1374 = vunpack.c.l.b16 %v478
      %v1375 = vunpack.c.l.b16 %v479
      %v1376 = vunpack.c.l.b16 %v480
      %v1377 = vunpack.c.l.b16 %v481
      %v1378 = vunpack.c.l.b16 %v482
      %v1379 = vunpack.c.l.b16 %v483
      %v1380 = vunpack.c.l.b16 %v484
      %v1381 = vunpack.c.l.b16 %v485
      %v1382 = vunpack.c.l.b16 %v486
      %v1383 = vunpack.c.l.b16 %v487
      %v1384 = vunpack.c.l.b16 %v488
      %v1385 = vunpack.c.l.b16 %v489
      %v1386 = vunpack.c.l.b16 %v490
      %v1387 = vunpack.c.l.b16 %v491
      %v1388 = vunpack.c.l.b16 %v492
      %v1389 = vunpack.c.l.b16 %v493
      %v1390 = vunpack.c.l.b16 %v494
      %v1391 = vunpack.c.l.b16 %v495
      %v1392 = vunpack.c.l.b16 %v496
      %v1393 = vunpack.c.l.b16 %v497
      %v1394 = vunpack.c.l.b16 %v498
      %v1395 = vunpack.c.l.b16 %v499
      %v1396 = vunpack.c.l.b16 %v500
      %v1397 = vunpack.c.l.b16 %v501
      %v1398 = vunpack.c.l.b16 %v502
      %v1399 = vunpack.c.l.b16 %v503
      %v1400 = vunpack.c.l.b16 %v504
      %v1401 = vunpack.c.l.b16 %v505
      %v1402 = vunpack.c.l.b16 %v506
      %v1403 = vunpack.c.l.b16 %v507
      %v1404 = vunpack.c.l.b16 %v508
      %v1405 = vunpack.c.l.b16 %v509
      %v1406 = vunpack.c.l.b16 %v510
      %v1407 = vunpack.c.l.b16 %v511
      %v1408 = vunpack.c.l.b16 %v512
      %v1409 = vunpack.c.l.b16 %v513
      %v1410 = vunpack.c.l.b16 %v514
      %v1411 = vunpack.c.l.b16 %v515
      %v1412 = vunpack.c.l.b16 %v516
      %v1413 = vunpack.c.l.b16 %v517
      %v1414 = vunpack.c.l.b16 %v518
      %v1415 = vunpack.c.l.b16 %v519
      %v1416 = vunpack.c.l.b16 %v520
      %v1417 = vunpack.c.l.b16 %v521
      %v1418 = vunpack.c.l.b16 %v522
      %v1419 = vunpack.c.l.b16 %v523
      %v1420 = vunpack.c.l.b16 %v524
      %v1421 = vunpack.c.l.b16 %v525
      %v1422 = vunpack.c.l.b16 %v526
      %v1423 = vunpack.c.l.b16 %v527
      %v1424 = vunpack.c.l.b16 %v528
      %v1425 = vunpack.c.l.b16 %v529
      %v1426 = vunpack.c.l.b16 %v530
      %v1427 = vunpack.c.l.b16 %v531
      %v1428 = vunpack.c.l.b16 %v532
      %v1429 = vunpack.c.l.b16 %v533
      %v1430 = vunpack.c.l.b16 %v534
      %v1431 = vunpack.c.l.b16 %v535
      %v1432 = vunpack.c.l.b16 %v536
      %v1433 = vunpack.c.l.b16 %v537
      %v1434 = vunpack.c.l.b16 %v538
      %v1435 = vunpack.c.l.b16 %v539
      %v1436 = vunpack.c.l.b16 %v540
      %v1437 = vunpack.c.l.b16 %v541
      %v1438 = vunpack.c.l.b16 %v542
      %v1439 = vunpack.c.l.b16 %v543
      %v1440 = vunpack.c.l.b16 %v544
      %v1441 = vunpack.c.l.b16 %v545
      %v1442 = vunpack.c.l.b16 %v546
      %v1443 = vunpack.c.l.b16 %v547
      %v1444 = vunpack.c.l.b16 %v548
      %v1445 = vunpack.c.l.b16 %v549
      %v1446 = vunpack.c.l.b16 %v550
      %v1447 = vunpack.c.l.b16 %v551
      %v1448 = vpack.c.b16 %v1321, %v1320
      %v1449 = vpack.c.b16 %v1323, %v1322
      %v1450 = vpack.c.b16 %v1325, %v1324
      %v1451 = vpack.c.b16 %v1327, %v1326
      %v1452 = vpack.c.b16 %v1329, %v1328
      %v1453 = vpack.c.b16 %v1331, %v1330
      %v1454 = vpack.c.b16 %v1333, %v1332
      %v1455 = vpack.c.b16 %v1335, %v1334
      %v1456 = vpack.c.b16 %v1337, %v1336
      %v1457 = vpack.c.b16 %v1339, %v1338
      %v1458 = vpack.c.b16 %v1341, %v1340
      %v1459 = vpack.c.b16 %v1343, %v1342
      %v1460 = vpack.c.b16 %v1345, %v1344
      %v1461 = vpack.c.b16 %v1347, %v1346
      %v1462 = vpack.c.b16 %v1349, %v1348
      %v1463 = vpack.c.b16 %v1351, %v1350
      %v1464 = vpack.c.b16 %v1353, %v1352
      %v1465 = vpack.c.b16 %v1355, %v1354
      %v1466 = vpack.c.b16 %v1357, %v1356
      %v1467 = vpack.c.b16 %v1359, %v1358
      %v1468 = vpack.c.b16 %v1361, %v1360
      %v1469 = vpack.c.b16 %v1363, %v1362
      %v1470 = vpack.c.b16 %v1365, %v1364
      %v1471 = vpack.c.b16 %v1367, %v1366
      %v1472 = vpack.c.b16 %v1369, %v1368
      %v1473 = vpack.c.b16 %v1371, %v1370
      %v1474 = vpack.c.b16 %v1373, %v1372
      %v1475 = vpack.c.b16 %v1375, %v1374
      %v1476 = vpack.c.b16 %v1377, %v1376
      %v1477 = vpack.c.b16 %v1379, %v1378
      %v1478 = vpack.c.b16 %v1381, %v1380
      %v1479 = vpack.c.b16 %v1383, %v1382
      %v1480 = vpack.c.b16 %v1385, %v1384
      %v1481 = vpack.c.b16 %v1387, %v1386
      %v1482 = vpack.c.b16 %v1389, %v1388
      %v1483 = vpack.c.b16 %v1391, %v1390
      %v1484 = vpack.c.b16 %v1393, %v1392
      %v1485 = vpack.c.b16 %v1395, %v1394
      %v1486 = vpack.c.b16 %v1397, %v1396
      %v1487 = vpack.c.b16 %v1399, %v1398
      %v1488 = vpack.c.b16 %v1401, %v1400
      %v1489 = vpack.c.b16 %v1403, %v1402
      %v1490 = vpack.c.b16 %v1405, %v1404
      %v1491 = vpack.c.b16 %v1407, %v1406
      %v1492 = vpack.c.b16 %v1409, %v1408
      %v1493 = vpack.c.b16 %v1411, %v1410
      %v1494 = vpack.c.b16 %v1413, %v1412
      %v1495 = vpack.c.b16 %v1415, %v1414
      %v1496 = vpack.c.b16 %v1417, %v1416
      %v1497 = vpack.c.b16 %v1419, %v1418
      %v1498 = vpack.c.b16 %v1421, %v1420
      %v1499 = vpack.c.b16 %v1423, %v1422
      %v1500 = vpack.c.b16 %v1425, %v1424
      %v1501 = vpack.c.b16 %v1427, %v1426
      %v1502 = vpack.c.b16 %v1429, %v1428
      %v1503 = vpack.c.b16 %v1431, %v1430
      %v1504 = vpack.c.b16 %v1433, %v1432
      %v1505 = vpack.c.b16 %v1435, %v1434
      %v1506 = vpack.c.b16 %v1437, %v1436
      %v1507 = vpack.c.b16 %v1439, %v1438
      %v1508 = vpack.c.b16 %v1441, %v1440
      %v1509 = vpack.c.b16 %v1443, %v1442
      %v1510 = vpack.c.b16 %v1445, %v1444
      %v1511 = vpack.c.b16 %v1447, %v1446
      %1576 = vmatprep.subr.bf16.mxu0 0
      %1577 = vmatpush1.bf16.msra.mxu0 %v1448
      %1578 = vmatprep.subr.bf16.mxu0 0
      %1579 = vmatpush1.bf16.msra.mxu0 %v1449
      %1580 = vmatprep.subr.bf16.mxu0 0
      %1581 = vmatpush1.bf16.msra.mxu0 %v1450
      %1582 = vmatprep.subr.bf16.mxu0 0
      %1583 = vmatpush1.bf16.msra.mxu0 %v1451
      %1584 = vmatprep.subr.bf16.mxu0 0
      %1585 = vmatpush1.bf16.msra.mxu0 %v1452
      %1586 = vmatprep.subr.bf16.mxu0 0
      %1587 = vmatpush1.bf16.msra.mxu0 %v1453
      %1588 = vmatprep.subr.bf16.mxu0 0
      %1589 = vmatpush1.bf16.msra.mxu0 %v1454
      %1590 = vmatprep.subr.bf16.mxu0 0
      %1591 = vmatpush1.bf16.msra.mxu0 %v1455
      %1592 = vmatprep.subr.bf16.mxu0 0
      %1593 = vmatpush1.bf16.msra.mxu0 %v1456
      %1594 = vmatprep.subr.bf16.mxu0 0
      %1595 = vmatpush1.bf16.msra.mxu0 %v1457
      %1596 = vmatprep.subr.bf16.mxu0 0
      %1597 = vmatpush1.bf16.msra.mxu0 %v1458
      %1598 = vmatprep.subr.bf16.mxu0 0
      %1599 = vmatpush1.bf16.msra.mxu0 %v1459
      %1600 = vmatprep.subr.bf16.mxu0 0
      %1601 = vmatpush1.bf16.msra.mxu0 %v1460
      %1602 = vmatprep.subr.bf16.mxu0 0
      %1603 = vmatpush1.bf16.msra.mxu0 %v1461
      %1604 = vmatprep.subr.bf16.mxu0 0
      %1605 = vmatpush1.bf16.msra.mxu0 %v1462
      %1606 = vmatprep.subr.bf16.mxu0 0
      %1607 = vmatpush1.bf16.msra.mxu0 %v1463
      %1608 = vmatprep.mubr.bf16.mxu0 %v937
      %1609 = vmatmul.mubr.bf16.gmra.mrb[0].mxu0 %v936
      %v1610 = vpop.f32.mrb[0].mxu0
      %v1611 = vadd.f32 0.0, %v1610
      %v1612 = vpop.f32.mrb[0].mxu0
      %v1613 = vpop.f32.mrb[0].mxu0
      %v1614 = vadd.f32 0.0, %v1613
      %v1615 = vpop.f32.mrb[0].mxu0
      %1616 = vmatprep.mubr.bf16.mxu0 %v945
      %1617 = vmatmul.mubr.bf16.gmra.mrb[0].mxu0 %v944
      %v1618 = vpop.f32.mrb[0].mxu0
      %v1619 = vadd.f32 0.0, %v1618
      %v1620 = vpop.f32.mrb[0].mxu0
      %v1621 = vpop.f32.mrb[0].mxu0
      %v1622 = vadd.f32 0.0, %v1621
      %v1623 = vpop.f32.mrb[0].mxu0
      %1624 = vmatprep.mubr.bf16.mxu0 %v953
      %1625 = vmatmul.mubr.bf16.gmra.mrb[0].mxu0 %v952
      %v1626 = vpop.f32.mrb[0].mxu0
      %v1627 = vadd.f32 0.0, %v1626
      %v1628 = vpop.f32.mrb[0].mxu0
      %v1629 = vpop.f32.mrb[0].mxu0
      %v1630 = vadd.f32 0.0, %v1629
      %v1631 = vpop.f32.mrb[0].mxu0
      %1632 = vmatprep.mubr.bf16.mxu0 %v961
      %1633 = vmatmul.mubr.bf16.gmra.mrb[0].mxu0 %v960
      %v1634 = vpop.f32.mrb[0].mxu0
      %v1635 = vadd.f32 0.0, %v1634
      %v1636 = vpop.f32.mrb[0].mxu0
      %v1637 = vpop.f32.mrb[0].mxu0
      %v1638 = vadd.f32 0.0, %v1637
      %v1639 = vpop.f32.mrb[0].mxu0
      %1640 = vmatprep.mubr.bf16.mxu0 %v969
      %1641 = vmatmul.mubr.bf16.gmra.mrb[0].mxu0 %v968
      %v1642 = vpop.f32.mrb[0].mxu0
      %v1643 = vadd.f32 0.0, %v1642
      %v1644 = vpop.f32.mrb[0].mxu0
      %v1645 = vpop.f32.mrb[0].mxu0
      %v1646 = vadd.f32 0.0, %v1645
      %v1647 = vpop.f32.mrb[0].mxu0
      %1648 = vmatprep.mubr.bf16.mxu0 %v977
      %1649 = vmatmul.mubr.bf16.gmra.mrb[0].mxu0 %v976
      %v1650 = vpop.f32.mrb[0].mxu0
      %v1651 = vadd.f32 0.0, %v1650
      %v1652 = vpop.f32.mrb[0].mxu0
      %v1653 = vpop.f32.mrb[0].mxu0
      %v1654 = vadd.f32 0.0, %v1653
      %v1655 = vpop.f32.mrb[0].mxu0
      %1656 = vmatprep.mubr.bf16.mxu0 %v985
      %1657 = vmatmul.mubr.bf16.gmra.mrb[0].mxu0 %v984
      %v1658 = vpop.f32.mrb[0].mxu0
      %v1659 = vadd.f32 0.0, %v1658
      %v1660 = vpop.f32.mrb[0].mxu0
      %v1661 = vpop.f32.mrb[0].mxu0
      %v1662 = vadd.f32 0.0, %v1661
      %v1663 = vpop.f32.mrb[0].mxu0
      %1664 = vmatprep.mubr.bf16.mxu0 %v993
      %1665 = vmatmul.mubr.bf16.gmra.mrb[0].mxu0 %v992
      %v1666 = vpop.f32.mrb[0].mxu0
      %v1667 = vadd.f32 0.0, %v1666
      %v1668 = vpop.f32.mrb[0].mxu0
      %v1669 = vpop.f32.mrb[0].mxu0
      %v1670 = vadd.f32 0.0, %v1669
      %v1671 = vpop.f32.mrb[0].mxu0
      %1672 = vmatprep.mubr.bf16.mxu0 %v1001
      %1673 = vmatmul.mubr.bf16.gmra.mrb[0].mxu0 %v1000
      %v1674 = vpop.f32.mrb[0].mxu0
      %v1675 = vadd.f32 0.0, %v1674
      %v1676 = vpop.f32.mrb[0].mxu0
      %v1677 = vpop.f32.mrb[0].mxu0
      %v1678 = vadd.f32 0.0, %v1677
      %v1679 = vpop.f32.mrb[0].mxu0
      %1680 = vmatprep.mubr.bf16.mxu0 %v1009
      %1681 = vmatmul.mubr.bf16.gmra.mrb[0].mxu0 %v1008
      %v1682 = vpop.f32.mrb[0].mxu0
      %v1683 = vadd.f32 0.0, %v1682
      %v1684 = vpop.f32.mrb[0].mxu0
      %v1685 = vpop.f32.mrb[0].mxu0
      %v1686 = vadd.f32 0.0, %v1685
      %v1687 = vpop.f32.mrb[0].mxu0
      %1688 = vmatprep.mubr.bf16.mxu0 %v1017
      %1689 = vmatmul.mubr.bf16.gmra.mrb[0].mxu0 %v1016
      %v1690 = vpop.f32.mrb[0].mxu0
      %v1691 = vadd.f32 0.0, %v1690
      %v1692 = vpop.f32.mrb[0].mxu0
      %v1693 = vpop.f32.mrb[0].mxu0
      %v1694 = vadd.f32 0.0, %v1693
      %v1695 = vpop.f32.mrb[0].mxu0
      %1696 = vmatprep.mubr.bf16.mxu0 %v1025
      %1697 = vmatmul.mubr.bf16.gmra.mrb[0].mxu0 %v1024
      %v1698 = vpop.f32.mrb[0].mxu0
      %v1699 = vadd.f32 0.0, %v1698
      %v1700 = vpop.f32.mrb[0].mxu0
      %v1701 = vpop.f32.mrb[0].mxu0
      %v1702 = vadd.f32 0.0, %v1701
      %v1703 = vpop.f32.mrb[0].mxu0
      %1704 = vmatprep.mubr.bf16.mxu0 %v1033
      %1705 = vmatmul.mubr.bf16.gmra.mrb[0].mxu0 %v1032
      %v1706 = vpop.f32.mrb[0].mxu0
      %v1707 = vadd.f32 0.0, %v1706
      %v1708 = vpop.f32.mrb[0].mxu0
      %v1709 = vpop.f32.mrb[0].mxu0
      %v1710 = vadd.f32 0.0, %v1709
      %v1711 = vpop.f32.mrb[0].mxu0
      %1712 = vmatprep.mubr.bf16.mxu0 %v1041
      %1713 = vmatmul.mubr.bf16.gmra.mrb[0].mxu0 %v1040
      %v1714 = vpop.f32.mrb[0].mxu0
      %v1715 = vadd.f32 0.0, %v1714
      %v1716 = vpop.f32.mrb[0].mxu0
      %v1717 = vpop.f32.mrb[0].mxu0
      %v1718 = vadd.f32 0.0, %v1717
      %v1719 = vpop.f32.mrb[0].mxu0
      %1720 = vmatprep.mubr.bf16.mxu0 %v1049
      %1721 = vmatmul.mubr.bf16.gmra.mrb[0].mxu0 %v1048
      %v1722 = vpop.f32.mrb[0].mxu0
      %v1723 = vadd.f32 0.0, %v1722
      %v1724 = vpop.f32.mrb[0].mxu0
      %v1725 = vpop.f32.mrb[0].mxu0
      %v1726 = vadd.f32 0.0, %v1725
      %v1727 = vpop.f32.mrb[0].mxu0
      %1728 = vmatprep.mubr.bf16.mxu0 %v1057
      %1729 = vmatmul.mubr.bf16.gmra.mrb[0].mxu0 %v1056
      %v1730 = vpop.f32.mrb[0].mxu0
      %v1731 = vadd.f32 0.0, %v1730
      %v1732 = vpop.f32.mrb[0].mxu0
      %v1733 = vpop.f32.mrb[0].mxu0
      %v1734 = vadd.f32 0.0, %v1733
      %v1735 = vpop.f32.mrb[0].mxu0
      %1736 = vdwg.mxu0
      %1737 = vmatprep.subr.bf16.mxu0 0
      %1738 = vmatpush1.bf16.msra.mxu0 %v1464
      %1739 = vmatprep.subr.bf16.mxu0 0
      %1740 = vmatpush1.bf16.msra.mxu0 %v1465
      %1741 = vmatprep.subr.bf16.mxu0 0
      %1742 = vmatpush1.bf16.msra.mxu0 %v1466
      %1743 = vmatprep.subr.bf16.mxu0 0
      %1744 = vmatpush1.bf16.msra.mxu0 %v1467
      %1745 = vmatprep.subr.bf16.mxu0 0
      %1746 = vmatpush1.bf16.msra.mxu0 %v1468
      %1747 = vmatprep.subr.bf16.mxu0 0
      %1748 = vmatpush1.bf16.msra.mxu0 %v1469
      %1749 = vmatprep.subr.bf16.mxu0 0
      %1750 = vmatpush1.bf16.msra.mxu0 %v1470
      %1751 = vmatprep.subr.bf16.mxu0 0
      %1752 = vmatpush1.bf16.msra.mxu0 %v1471
      %1753 = vmatprep.subr.bf16.mxu0 0
      %1754 = vmatpush1.bf16.msra.mxu0 %v1472
      %1755 = vmatprep.subr.bf16.mxu0 0
      %1756 = vmatpush1.bf16.msra.mxu0 %v1473
      %1757 = vmatprep.subr.bf16.mxu0 0
      %1758 = vmatpush1.bf16.msra.mxu0 %v1474
      %1759 = vmatprep.subr.bf16.mxu0 0
      %1760 = vmatpush1.bf16.msra.mxu0 %v1475
      %1761 = vmatprep.subr.bf16.mxu0 0
      %1762 = vmatpush1.bf16.msra.mxu0 %v1476
      %1763 = vmatprep.subr.bf16.mxu0 0
      %1764 = vmatpush1.bf16.msra.mxu0 %v1477
      %1765 = vmatprep.subr.bf16.mxu0 0
      %1766 = vmatpush1.bf16.msra.mxu0 %v1478
      %1767 = vmatprep.subr.bf16.mxu0 0
      %1768 = vmatpush1.bf16.msra.mxu0 %v1479
      %1769 = vmatprep.mubr.bf16.mxu0 %v939
      %1770 = vmatmul.mubr.bf16.gmra.mrb[0].mxu0 %v938
      %v1771 = vpop.f32.mrb[0].mxu0
      %v1772 = vadd.f32 %v1611, %v1771
      %v1773 = vpop.f32.mrb[0].mxu0
      %v1774 = vpop.f32.mrb[0].mxu0
      %v1775 = vadd.f32 %v1614, %v1774
      %v1776 = vpop.f32.mrb[0].mxu0
      %1777 = vmatprep.mubr.bf16.mxu0 %v947
      %1778 = vmatmul.mubr.bf16.gmra.mrb[0].mxu0 %v946
      %v1779 = vpop.f32.mrb[0].mxu0
      %v1780 = vadd.f32 %v1619, %v1779
      %v1781 = vpop.f32.mrb[0].mxu0
      %v1782 = vpop.f32.mrb[0].mxu0
      %v1783 = vadd.f32 %v1622, %v1782
      %v1784 = vpop.f32.mrb[0].mxu0
      %1785 = vmatprep.mubr.bf16.mxu0 %v955
      %1786 = vmatmul.mubr.bf16.gmra.mrb[0].mxu0 %v954
      %v1787 = vpop.f32.mrb[0].mxu0
      %v1788 = vadd.f32 %v1627, %v1787
      %v1789 = vpop.f32.mrb[0].mxu0
      %v1790 = vpop.f32.mrb[0].mxu0
      %v1791 = vadd.f32 %v1630, %v1790
      %v1792 = vpop.f32.mrb[0].mxu0
      %1793 = vmatprep.mubr.bf16.mxu0 %v963
      %1794 = vmatmul.mubr.bf16.gmra.mrb[0].mxu0 %v962
      %v1795 = vpop.f32.mrb[0].mxu0
      %v1796 = vadd.f32 %v1635, %v1795
      %v1797 = vpop.f32.mrb[0].mxu0
      %v1798 = vpop.f32.mrb[0].mxu0
      %v1799 = vadd.f32 %v1638, %v1798
      %v1800 = vpop.f32.mrb[0].mxu0
      %1801 = vmatprep.mubr.bf16.mxu0 %v971
      %1802 = vmatmul.mubr.bf16.gmra.mrb[0].mxu0 %v970
      %v1803 = vpop.f32.mrb[0].mxu0
      %v1804 = vadd.f32 %v1643, %v1803
      %v1805 = vpop.f32.mrb[0].mxu0
      %v1806 = vpop.f32.mrb[0].mxu0
      %v1807 = vadd.f32 %v1646, %v1806
      %v1808 = vpop.f32.mrb[0].mxu0
      %1809 = vmatprep.mubr.bf16.mxu0 %v979
      %1810 = vmatmul.mubr.bf16.gmra.mrb[0].mxu0 %v978
      %v1811 = vpop.f32.mrb[0].mxu0
      %v1812 = vadd.f32 %v1651, %v1811
      %v1813 = vpop.f32.mrb[0].mxu0
      %v1814 = vpop.f32.mrb[0].mxu0
      %v1815 = vadd.f32 %v1654, %v1814
      %v1816 = vpop.f32.mrb[0].mxu0
      %1817 = vmatprep.mubr.bf16.mxu0 %v987
      %1818 = vmatmul.mubr.bf16.gmra.mrb[0].mxu0 %v986
      %v1819 = vpop.f32.mrb[0].mxu0
      %v1820 = vadd.f32 %v1659, %v1819
      %v1821 = vpop.f32.mrb[0].mxu0
      %v1822 = vpop.f32.mrb[0].mxu0
      %v1823 = vadd.f32 %v1662, %v1822
      %v1824 = vpop.f32.mrb[0].mxu0
      %1825 = vmatprep.mubr.bf16.mxu0 %v995
      %1826 = vmatmul.mubr.bf16.gmra.mrb[0].mxu0 %v994
      %v1827 = vpop.f32.mrb[0].mxu0
      %v1828 = vadd.f32 %v1667, %v1827
      %v1829 = vpop.f32.mrb[0].mxu0
      %v1830 = vpop.f32.mrb[0].mxu0
      %v1831 = vadd.f32 %v1670, %v1830
      %v1832 = vpop.f32.mrb[0].mxu0
      %1833 = vmatprep.mubr.bf16.mxu0 %v1003
      %1834 = vmatmul.mubr.bf16.gmra.mrb[0].mxu0 %v1002
      %v1835 = vpop.f32.mrb[0].mxu0
      %v1836 = vadd.f32 %v1675, %v1835
      %v1837 = vpop.f32.mrb[0].mxu0
      %v1838 = vpop.f32.mrb[0].mxu0
      %v1839 = vadd.f32 %v1678, %v1838
      %v1840 = vpop.f32.mrb[0].mxu0
      %1841 = vmatprep.mubr.bf16.mxu0 %v1011
      %1842 = vmatmul.mubr.bf16.gmra.mrb[0].mxu0 %v1010
      %v1843 = vpop.f32.mrb[0].mxu0
      %v1844 = vadd.f32 %v1683, %v1843
      %v1845 = vpop.f32.mrb[0].mxu0
      %v1846 = vpop.f32.mrb[0].mxu0
      %v1847 = vadd.f32 %v1686, %v1846
      %v1848 = vpop.f32.mrb[0].mxu0
      %1849 = vmatprep.mubr.bf16.mxu0 %v1019
      %1850 = vmatmul.mubr.bf16.gmra.mrb[0].mxu0 %v1018
      %v1851 = vpop.f32.mrb[0].mxu0
      %v1852 = vadd.f32 %v1691, %v1851
      %v1853 = vpop.f32.mrb[0].mxu0
      %v1854 = vpop.f32.mrb[0].mxu0
      %v1855 = vadd.f32 %v1694, %v1854
      %v1856 = vpop.f32.mrb[0].mxu0
      %1857 = vmatprep.mubr.bf16.mxu0 %v1027
      %1858 = vmatmul.mubr.bf16.gmra.mrb[0].mxu0 %v1026
      %v1859 = vpop.f32.mrb[0].mxu0
      %v1860 = vadd.f32 %v1699, %v1859
      %v1861 = vpop.f32.mrb[0].mxu0
      %v1862 = vpop.f32.mrb[0].mxu0
      %v1863 = vadd.f32 %v1702, %v1862
      %v1864 = vpop.f32.mrb[0].mxu0
      %1865 = vmatprep.mubr.bf16.mxu0 %v1035
      %1866 = vmatmul.mubr.bf16.gmra.mrb[0].mxu0 %v1034
      %v1867 = vpop.f32.mrb[0].mxu0
      %v1868 = vadd.f32 %v1707, %v1867
      %v1869 = vpop.f32.mrb[0].mxu0
      %v1870 = vpop.f32.mrb[0].mxu0
      %v1871 = vadd.f32 %v1710, %v1870
      %v1872 = vpop.f32.mrb[0].mxu0
      %1873 = vmatprep.mubr.bf16.mxu0 %v1043
      %1874 = vmatmul.mubr.bf16.gmra.mrb[0].mxu0 %v1042
      %v1875 = vpop.f32.mrb[0].mxu0
      %v1876 = vadd.f32 %v1715, %v1875
      %v1877 = vpop.f32.mrb[0].mxu0
      %v1878 = vpop.f32.mrb[0].mxu0
      %v1879 = vadd.f32 %v1718, %v1878
      %v1880 = vpop.f32.mrb[0].mxu0
      %1881 = vmatprep.mubr.bf16.mxu0 %v1051
      %1882 = vmatmul.mubr.bf16.gmra.mrb[0].mxu0 %v1050
      %v1883 = vpop.f32.mrb[0].mxu0
      %v1884 = vadd.f32 %v1723, %v1883
      %v1885 = vpop.f32.mrb[0].mxu0
      %v1886 = vpop.f32.mrb[0].mxu0
      %v1887 = vadd.f32 %v1726, %v1886
      %v1888 = vpop.f32.mrb[0].mxu0
      %1889 = vmatprep.mubr.bf16.mxu0 %v1059
      %1890 = vmatmul.mubr.bf16.gmra.mrb[0].mxu0 %v1058
      %v1891 = vpop.f32.mrb[0].mxu0
      %v1892 = vadd.f32 %v1731, %v1891
      %v1893 = vpop.f32.mrb[0].mxu0
      %v1894 = vpop.f32.mrb[0].mxu0
      %v1895 = vadd.f32 %v1734, %v1894
      %v1896 = vpop.f32.mrb[0].mxu0
      %1897 = vdwg.mxu0
      %1898 = vmatprep.subr.bf16.mxu0 0
      %1899 = vmatpush1.bf16.msra.mxu0 %v1480
      %1900 = vmatprep.subr.bf16.mxu0 0
      %1901 = vmatpush1.bf16.msra.mxu0 %v1481
      %1902 = vmatprep.subr.bf16.mxu0 0
      %1903 = vmatpush1.bf16.msra.mxu0 %v1482
      %1904 = vmatprep.subr.bf16.mxu0 0
      %1905 = vmatpush1.bf16.msra.mxu0 %v1483
      %1906 = vmatprep.subr.bf16.mxu0 0
      %1907 = vmatpush1.bf16.msra.mxu0 %v1484
      %1908 = vmatprep.subr.bf16.mxu0 0
      %1909 = vmatpush1.bf16.msra.mxu0 %v1485
      %1910 = vmatprep.subr.bf16.mxu0 0
      %1911 = vmatpush1.bf16.msra.mxu0 %v1486
      %1912 = vmatprep.subr.bf16.mxu0 0
      %1913 = vmatpush1.bf16.msra.mxu0 %v1487
      %1914 = vmatprep.subr.bf16.mxu0 0
      %1915 = vmatpush1.bf16.msra.mxu0 %v1488
      %1916 = vmatprep.subr.bf16.mxu0 0
      %1917 = vmatpush1.bf16.msra.mxu0 %v1489
      %1918 = vmatprep.subr.bf16.mxu0 0
      %1919 = vmatpush1.bf16.msra.mxu0 %v1490
      %1920 = vmatprep.subr.bf16.mxu0 0
      %1921 = vmatpush1.bf16.msra.mxu0 %v1491
      %1922 = vmatprep.subr.bf16.mxu0 0
      %1923 = vmatpush1.bf16.msra.mxu0 %v1492
      %1924 = vmatprep.subr.bf16.mxu0 0
      %1925 = vmatpush1.bf16.msra.mxu0 %v1493
      %1926 = vmatprep.subr.bf16.mxu0 0
      %1927 = vmatpush1.bf16.msra.mxu0 %v1494
      %1928 = vmatprep.subr.bf16.mxu0 0
      %1929 = vmatpush1.bf16.msra.mxu0 %v1495
      %1930 = vmatprep.mubr.bf16.mxu0 %v941
      %1931 = vmatmul.mubr.bf16.gmra.mrb[0].mxu0 %v940
      %v1932 = vpop.f32.mrb[0].mxu0
      %v1933 = vadd.f32 %v1772, %v1932
      %v1934 = vpop.f32.mrb[0].mxu0
      %v1935 = vpop.f32.mrb[0].mxu0
      %v1936 = vadd.f32 %v1775, %v1935
      %v1937 = vpop.f32.mrb[0].mxu0
      %1938 = vmatprep.mubr.bf16.mxu0 %v949
      %1939 = vmatmul.mubr.bf16.gmra.mrb[0].mxu0 %v948
      %v1940 = vpop.f32.mrb[0].mxu0
      %v1941 = vadd.f32 %v1780, %v1940
      %v1942 = vpop.f32.mrb[0].mxu0
      %v1943 = vpop.f32.mrb[0].mxu0
      %v1944 = vadd.f32 %v1783, %v1943
      %v1945 = vpop.f32.mrb[0].mxu0
      %1946 = vmatprep.mubr.bf16.mxu0 %v957
      %1947 = vmatmul.mubr.bf16.gmra.mrb[0].mxu0 %v956
      %v1948 = vpop.f32.mrb[0].mxu0
      %v1949 = vadd.f32 %v1788, %v1948
      %v1950 = vpop.f32.mrb[0].mxu0
      %v1951 = vpop.f32.mrb[0].mxu0
      %v1952 = vadd.f32 %v1791, %v1951
      %v1953 = vpop.f32.mrb[0].mxu0
      %1954 = vmatprep.mubr.bf16.mxu0 %v965
      %1955 = vmatmul.mubr.bf16.gmra.mrb[0].mxu0 %v964
      %v1956 = vpop.f32.mrb[0].mxu0
      %v1957 = vadd.f32 %v1796, %v1956
      %v1958 = vpop.f32.mrb[0].mxu0
      %v1959 = vpop.f32.mrb[0].mxu0
      %v1960 = vadd.f32 %v1799, %v1959
      %v1961 = vpop.f32.mrb[0].mxu0
      %1962 = vmatprep.mubr.bf16.mxu0 %v973
      %1963 = vmatmul.mubr.bf16.gmra.mrb[0].mxu0 %v972
      %v1964 = vpop.f32.mrb[0].mxu0
      %v1965 = vadd.f32 %v1804, %v1964
      %v1966 = vpop.f32.mrb[0].mxu0
      %v1967 = vpop.f32.mrb[0].mxu0
      %v1968 = vadd.f32 %v1807, %v1967
      %v1969 = vpop.f32.mrb[0].mxu0
      %1970 = vmatprep.mubr.bf16.mxu0 %v981
      %1971 = vmatmul.mubr.bf16.gmra.mrb[0].mxu0 %v980
      %v1972 = vpop.f32.mrb[0].mxu0
      %v1973 = vadd.f32 %v1812, %v1972
      %v1974 = vpop.f32.mrb[0].mxu0
      %v1975 = vpop.f32.mrb[0].mxu0
      %v1976 = vadd.f32 %v1815, %v1975
      %v1977 = vpop.f32.mrb[0].mxu0
      %1978 = vmatprep.mubr.bf16.mxu0 %v989
      %1979 = vmatmul.mubr.bf16.gmra.mrb[0].mxu0 %v988
      %v1980 = vpop.f32.mrb[0].mxu0
      %v1981 = vadd.f32 %v1820, %v1980
      %v1982 = vpop.f32.mrb[0].mxu0
      %v1983 = vpop.f32.mrb[0].mxu0
      %v1984 = vadd.f32 %v1823, %v1983
      %v1985 = vpop.f32.mrb[0].mxu0
      %1986 = vmatprep.mubr.bf16.mxu0 %v997
      %1987 = vmatmul.mubr.bf16.gmra.mrb[0].mxu0 %v996
      %v1988 = vpop.f32.mrb[0].mxu0
      %v1989 = vadd.f32 %v1828, %v1988
      %v1990 = vpop.f32.mrb[0].mxu0
      %v1991 = vpop.f32.mrb[0].mxu0
      %v1992 = vadd.f32 %v1831, %v1991
      %v1993 = vpop.f32.mrb[0].mxu0
      %1994 = vmatprep.mubr.bf16.mxu0 %v1005
      %1995 = vmatmul.mubr.bf16.gmra.mrb[0].mxu0 %v1004
      %v1996 = vpop.f32.mrb[0].mxu0
      %v1997 = vadd.f32 %v1836, %v1996
      %v1998 = vpop.f32.mrb[0].mxu0
      %v1999 = vpop.f32.mrb[0].mxu0
      %v2000 = vadd.f32 %v1839, %v1999
      %v2001 = vpop.f32.mrb[0].mxu0
      %2002 = vmatprep.mubr.bf16.mxu0 %v1013
      %2003 = vmatmul.mubr.bf16.gmra.mrb[0].mxu0 %v1012
      %v2004 = vpop.f32.mrb[0].mxu0
      %v2005 = vadd.f32 %v1844, %v2004
      %v2006 = vpop.f32.mrb[0].mxu0
      %v2007 = vpop.f32.mrb[0].mxu0
      %v2008 = vadd.f32 %v1847, %v2007
      %v2009 = vpop.f32.mrb[0].mxu0
      %2010 = vmatprep.mubr.bf16.mxu0 %v1021
      %2011 = vmatmul.mubr.bf16.gmra.mrb[0].mxu0 %v1020
      %v2012 = vpop.f32.mrb[0].mxu0
      %v2013 = vadd.f32 %v1852, %v2012
      %v2014 = vpop.f32.mrb[0].mxu0
      %v2015 = vpop.f32.mrb[0].mxu0
      %v2016 = vadd.f32 %v1855, %v2015
      %v2017 = vpop.f32.mrb[0].mxu0
      %2018 = vmatprep.mubr.bf16.mxu0 %v1029
      %2019 = vmatmul.mubr.bf16.gmra.mrb[0].mxu0 %v1028
      %v2020 = vpop.f32.mrb[0].mxu0
      %v2021 = vadd.f32 %v1860, %v2020
      %v2022 = vpop.f32.mrb[0].mxu0
      %v2023 = vpop.f32.mrb[0].mxu0
      %v2024 = vadd.f32 %v1863, %v2023
      %v2025 = vpop.f32.mrb[0].mxu0
      %2026 = vmatprep.mubr.bf16.mxu0 %v1037
      %2027 = vmatmul.mubr.bf16.gmra.mrb[0].mxu0 %v1036
      %v2028 = vpop.f32.mrb[0].mxu0
      %v2029 = vadd.f32 %v1868, %v2028
      %v2030 = vpop.f32.mrb[0].mxu0
      %v2031 = vpop.f32.mrb[0].mxu0
      %v2032 = vadd.f32 %v1871, %v2031
      %v2033 = vpop.f32.mrb[0].mxu0
      %2034 = vmatprep.mubr.bf16.mxu0 %v1045
      %2035 = vmatmul.mubr.bf16.gmra.mrb[0].mxu0 %v1044
      %v2036 = vpop.f32.mrb[0].mxu0
      %v2037 = vadd.f32 %v1876, %v2036
      %v2038 = vpop.f32.mrb[0].mxu0
      %v2039 = vpop.f32.mrb[0].mxu0
      %v2040 = vadd.f32 %v1879, %v2039
      %v2041 = vpop.f32.mrb[0].mxu0
      %2042 = vmatprep.mubr.bf16.mxu0 %v1053
      %2043 = vmatmul.mubr.bf16.gmra.mrb[0].mxu0 %v1052
      %v2044 = vpop.f32.mrb[0].mxu0
      %v2045 = vadd.f32 %v1884, %v2044
      %v2046 = vpop.f32.mrb[0].mxu0
      %v2047 = vpop.f32.mrb[0].mxu0
      %v2048 = vadd.f32 %v1887, %v2047
      %v2049 = vpop.f32.mrb[0].mxu0
      %2050 = vmatprep.mubr.bf16.mxu0 %v1061
      %2051 = vmatmul.mubr.bf16.gmra.mrb[0].mxu0 %v1060
      %v2052 = vpop.f32.mrb[0].mxu0
      %v2053 = vadd.f32 %v1892, %v2052
      %v2054 = vpop.f32.mrb[0].mxu0
      %v2055 = vpop.f32.mrb[0].mxu0
      %v2056 = vadd.f32 %v1895, %v2055
      %v2057 = vpop.f32.mrb[0].mxu0
      %2058 = vdwg.mxu0
      %2059 = vmatprep.subr.bf16.mxu0 0
      %2060 = vmatpush1.bf16.msra.mxu0 %v1496
      %2061 = vmatprep.subr.bf16.mxu0 0
      %2062 = vmatpush1.bf16.msra.mxu0 %v1497
      %2063 = vmatprep.subr.bf16.mxu0 0
      %2064 = vmatpush1.bf16.msra.mxu0 %v1498
      %2065 = vmatprep.subr.bf16.mxu0 0
      %2066 = vmatpush1.bf16.msra.mxu0 %v1499
      %2067 = vmatprep.subr.bf16.mxu0 0
      %2068 = vmatpush1.bf16.msra.mxu0 %v1500
      %2069 = vmatprep.subr.bf16.mxu0 0
      %2070 = vmatpush1.bf16.msra.mxu0 %v1501
      %2071 = vmatprep.subr.bf16.mxu0 0
      %2072 = vmatpush1.bf16.msra.mxu0 %v1502
      %2073 = vmatprep.subr.bf16.mxu0 0
      %2074 = vmatpush1.bf16.msra.mxu0 %v1503
      %2075 = vmatprep.subr.bf16.mxu0 0
      %2076 = vmatpush1.bf16.msra.mxu0 %v1504
      %2077 = vmatprep.subr.bf16.mxu0 0
      %2078 = vmatpush1.bf16.msra.mxu0 %v1505
      %2079 = vmatprep.subr.bf16.mxu0 0
      %2080 = vmatpush1.bf16.msra.mxu0 %v1506
      %2081 = vmatprep.subr.bf16.mxu0 0
      %2082 = vmatpush1.bf16.msra.mxu0 %v1507
      %2083 = vmatprep.subr.bf16.mxu0 0
      %2084 = vmatpush1.bf16.msra.mxu0 %v1508
      %2085 = vmatprep.subr.bf16.mxu0 0
      %2086 = vmatpush1.bf16.msra.mxu0 %v1509
      %2087 = vmatprep.subr.bf16.mxu0 0
      %2088 = vmatpush1.bf16.msra.mxu0 %v1510
      %2089 = vmatprep.subr.bf16.mxu0 0
      %2090 = vmatpush1.bf16.msra.mxu0 %v1511
      %2091 = vmatprep.mubr.bf16.mxu0 %v943
      %2092 = vmatmul.mubr.bf16.gmra.mrb[0].mxu0 %v942
      %v2093 = vpop.f32.mrb[0].mxu0
      %v2094 = vadd.f32 %v1933, %v2093
      %v2095 = vpop.f32.mrb[0].mxu0
      %v2096 = vpop.f32.mrb[0].mxu0
      %v2097 = vadd.f32 %v1936, %v2096
      %v2098 = vpop.f32.mrb[0].mxu0
      %2099 = vmatprep.mubr.bf16.mxu0 %v951
      %2100 = vmatmul.mubr.bf16.gmra.mrb[0].mxu0 %v950
      %v2101 = vpop.f32.mrb[0].mxu0
      %v2102 = vadd.f32 %v1941, %v2101
      %v2103 = vpop.f32.mrb[0].mxu0
      %v2104 = vpop.f32.mrb[0].mxu0
      %v2105 = vadd.f32 %v1944, %v2104
      %v2106 = vpop.f32.mrb[0].mxu0
      %2107 = vmatprep.mubr.bf16.mxu0 %v959
      %2108 = vmatmul.mubr.bf16.gmra.mrb[0].mxu0 %v958
      %v2109 = vpop.f32.mrb[0].mxu0
      %v2110 = vadd.f32 %v1949, %v2109
      %v2111 = vpop.f32.mrb[0].mxu0
      %v2112 = vpop.f32.mrb[0].mxu0
      %v2113 = vadd.f32 %v1952, %v2112
      %v2114 = vpop.f32.mrb[0].mxu0
      %2115 = vmatprep.mubr.bf16.mxu0 %v967
      %2116 = vmatmul.mubr.bf16.gmra.mrb[0].mxu0 %v966
      %v2117 = vpop.f32.mrb[0].mxu0
      %v2118 = vadd.f32 %v1957, %v2117
      %v2119 = vpop.f32.mrb[0].mxu0
      %v2120 = vpop.f32.mrb[0].mxu0
      %v2121 = vadd.f32 %v1960, %v2120
      %v2122 = vpop.f32.mrb[0].mxu0
      %2123 = vmatprep.mubr.bf16.mxu0 %v975
      %2124 = vmatmul.mubr.bf16.gmra.mrb[0].mxu0 %v974
      %v2125 = vpop.f32.mrb[0].mxu0
      %v2126 = vadd.f32 %v1965, %v2125
      %v2127 = vpop.f32.mrb[0].mxu0
      %v2128 = vpop.f32.mrb[0].mxu0
      %v2129 = vadd.f32 %v1968, %v2128
      %v2130 = vpop.f32.mrb[0].mxu0
      %2131 = vmatprep.mubr.bf16.mxu0 %v983
      %2132 = vmatmul.mubr.bf16.gmra.mrb[0].mxu0 %v982
      %v2133 = vpop.f32.mrb[0].mxu0
      %v2134 = vadd.f32 %v1973, %v2133
      %v2135 = vpop.f32.mrb[0].mxu0
      %v2136 = vpop.f32.mrb[0].mxu0
      %v2137 = vadd.f32 %v1976, %v2136
      %v2138 = vpop.f32.mrb[0].mxu0
      %2139 = vmatprep.mubr.bf16.mxu0 %v991
      %2140 = vmatmul.mubr.bf16.gmra.mrb[0].mxu0 %v990
      %v2141 = vpop.f32.mrb[0].mxu0
      %v2142 = vadd.f32 %v1981, %v2141
      %v2143 = vpop.f32.mrb[0].mxu0
      %v2144 = vpop.f32.mrb[0].mxu0
      %v2145 = vadd.f32 %v1984, %v2144
      %v2146 = vpop.f32.mrb[0].mxu0
      %2147 = vmatprep.mubr.bf16.mxu0 %v999
      %2148 = vmatmul.mubr.bf16.gmra.mrb[0].mxu0 %v998
      %v2149 = vpop.f32.mrb[0].mxu0
      %v2150 = vadd.f32 %v1989, %v2149
      %v2151 = vpop.f32.mrb[0].mxu0
      %v2152 = vpop.f32.mrb[0].mxu0
      %v2153 = vadd.f32 %v1992, %v2152
      %v2154 = vpop.f32.mrb[0].mxu0
      %2155 = vmatprep.mubr.bf16.mxu0 %v1007
      %2156 = vmatmul.mubr.bf16.gmra.mrb[0].mxu0 %v1006
      %v2157 = vpop.f32.mrb[0].mxu0
      %v2158 = vadd.f32 %v1997, %v2157
      %v2159 = vpop.f32.mrb[0].mxu0
      %v2160 = vpop.f32.mrb[0].mxu0
      %v2161 = vadd.f32 %v2000, %v2160
      %v2162 = vpop.f32.mrb[0].mxu0
      %2163 = vmatprep.mubr.bf16.mxu0 %v1015
      %2164 = vmatmul.mubr.bf16.gmra.mrb[0].mxu0 %v1014
      %v2165 = vpop.f32.mrb[0].mxu0
      %v2166 = vadd.f32 %v2005, %v2165
      %v2167 = vpop.f32.mrb[0].mxu0
      %v2168 = vpop.f32.mrb[0].mxu0
      %v2169 = vadd.f32 %v2008, %v2168
      %v2170 = vpop.f32.mrb[0].mxu0
      %2171 = vmatprep.mubr.bf16.mxu0 %v1023
      %2172 = vmatmul.mubr.bf16.gmra.mrb[0].mxu0 %v1022
      %v2173 = vpop.f32.mrb[0].mxu0
      %v2174 = vadd.f32 %v2013, %v2173
      %v2175 = vpop.f32.mrb[0].mxu0
      %v2176 = vpop.f32.mrb[0].mxu0
      %v2177 = vadd.f32 %v2016, %v2176
      %v2178 = vpop.f32.mrb[0].mxu0
      %2179 = vmatprep.mubr.bf16.mxu0 %v1031
      %2180 = vmatmul.mubr.bf16.gmra.mrb[0].mxu0 %v1030
      %v2181 = vpop.f32.mrb[0].mxu0
      %v2182 = vadd.f32 %v2021, %v2181
      %v2183 = vpop.f32.mrb[0].mxu0
      %v2184 = vpop.f32.mrb[0].mxu0
      %v2185 = vadd.f32 %v2024, %v2184
      %v2186 = vpop.f32.mrb[0].mxu0
      %2187 = vmatprep.mubr.bf16.mxu0 %v1039
      %2188 = vmatmul.mubr.bf16.gmra.mrb[0].mxu0 %v1038
      %v2189 = vpop.f32.mrb[0].mxu0
      %v2190 = vadd.f32 %v2029, %v2189
      %v2191 = vpop.f32.mrb[0].mxu0
      %v2192 = vpop.f32.mrb[0].mxu0
      %v2193 = vadd.f32 %v2032, %v2192
      %v2194 = vpop.f32.mrb[0].mxu0
      %2195 = vmatprep.mubr.bf16.mxu0 %v1047
      %2196 = vmatmul.mubr.bf16.gmra.mrb[0].mxu0 %v1046
      %v2197 = vpop.f32.mrb[0].mxu0
      %v2198 = vadd.f32 %v2037, %v2197
      %v2199 = vpop.f32.mrb[0].mxu0
      %v2200 = vpop.f32.mrb[0].mxu0
      %v2201 = vadd.f32 %v2040, %v2200
      %v2202 = vpop.f32.mrb[0].mxu0
      %2203 = vmatprep.mubr.bf16.mxu0 %v1055
      %2204 = vmatmul.mubr.bf16.gmra.mrb[0].mxu0 %v1054
      %v2205 = vpop.f32.mrb[0].mxu0
      %v2206 = vadd.f32 %v2045, %v2205
      %v2207 = vpop.f32.mrb[0].mxu0
      %v2208 = vpop.f32.mrb[0].mxu0
      %v2209 = vadd.f32 %v2048, %v2208
      %v2210 = vpop.f32.mrb[0].mxu0
      %2211 = vmatprep.mubr.bf16.mxu0 %v1063
      %2212 = vmatmul.mubr.bf16.gmra.mrb[0].mxu0 %v1062
      %v2213 = vpop.f32.mrb[0].mxu0
      %v2214 = vadd.f32 %v2053, %v2213
      %v2215 = vpop.f32.mrb[0].mxu0
      %v2216 = vpop.f32.mrb[0].mxu0
      %v2217 = vadd.f32 %v2056, %v2216
      %v2218 = vpop.f32.mrb[0].mxu0
      %2219 = vdwg.mxu0
      %v2220 = vadd.f32 %v264, %v2094
      %v2221 = vadd.f32 %v265, %v2097
      %v2222 = vadd.f32 %v266, %v2102
      %v2223 = vadd.f32 %v267, %v2105
      %v2224 = vadd.f32 %v268, %v2110
      %v2225 = vadd.f32 %v269, %v2113
      %v2226 = vadd.f32 %v270, %v2118
      %v2227 = vadd.f32 %v271, %v2121
      %v2228 = vadd.f32 %v272, %v2126
      %v2229 = vadd.f32 %v273, %v2129
      %v2230 = vadd.f32 %v274, %v2134
      %v2231 = vadd.f32 %v275, %v2137
      %v2232 = vadd.f32 %v276, %v2142
      %v2233 = vadd.f32 %v277, %v2145
      %v2234 = vadd.f32 %v278, %v2150
      %v2235 = vadd.f32 %v279, %v2153
      %v2236 = vadd.f32 %v280, %v2158
      %v2237 = vadd.f32 %v281, %v2161
      %v2238 = vadd.f32 %v282, %v2166
      %v2239 = vadd.f32 %v283, %v2169
      %v2240 = vadd.f32 %v284, %v2174
      %v2241 = vadd.f32 %v285, %v2177
      %v2242 = vadd.f32 %v286, %v2182
      %v2243 = vadd.f32 %v287, %v2185
      %v2244 = vadd.f32 %v288, %v2190
      %v2245 = vadd.f32 %v289, %v2193
      %v2246 = vadd.f32 %v290, %v2198
      %v2247 = vadd.f32 %v291, %v2201
      %v2248 = vadd.f32 %v292, %v2206
      %v2249 = vadd.f32 %v293, %v2209
      %v2250 = vadd.f32 %v294, %v2214
      %v2251 = vadd.f32 %v295, %v2217
      %2252 = vst [vmem:[#allocation2] sm:$0xff] %v2220
      %2253 = vst [vmem:[#allocation2 + $0x8] sm:$0xff] %v2221
      %2254 = vst [vmem:[#allocation2 + $0x10] sm:$0xff] %v2222
      %2255 = vst [vmem:[#allocation2 + $0x18] sm:$0xff] %v2223
      %2256 = vst [vmem:[#allocation2 + $0x20] sm:$0xff] %v2224
      %2257 = vst [vmem:[#allocation2 + $0x28] sm:$0xff] %v2225
      %2258 = vst [vmem:[#allocation2 + $0x30] sm:$0xff] %v2226
      %2259 = vst [vmem:[#allocation2 + $0x38] sm:$0xff] %v2227
      %2260 = vst [vmem:[#allocation2 + $0x40] sm:$0xff] %v2228
      %2261 = vst [vmem:[#allocation2 + $0x48] sm:$0xff] %v2229
      %2262 = vst [vmem:[#allocation2 + $0x50] sm:$0xff] %v2230
      %2263 = vst [vmem:[#allocation2 + $0x58] sm:$0xff] %v2231
      %2264 = vst [vmem:[#allocation2 + $0x60] sm:$0xff] %v2232
      %2265 = vst [vmem:[#allocation2 + $0x68] sm:$0xff] %v2233
      %2266 = vst [vmem:[#allocation2 + $0x70] sm:$0xff] %v2234
      %2267 = vst [vmem:[#allocation2 + $0x78] sm:$0xff] %v2235
      %2268 = vst [vmem:[#allocation2 + $0x80] sm:$0xff] %v2236
      %2269 = vst [vmem:[#allocation2 + $0x88] sm:$0xff] %v2237
      %2270 = vst [vmem:[#allocation2 + $0x90] sm:$0xff] %v2238
      %2271 = vst [vmem:[#allocation2 + $0x98] sm:$0xff] %v2239
      %2272 = vst [vmem:[#allocation2 + $0xa0] sm:$0xff] %v2240
      %2273 = vst [vmem:[#allocation2 + $0xa8] sm:$0xff] %v2241
      %2274 = vst [vmem:[#allocation2 + $0xb0] sm:$0xff] %v2242
      %2275 = vst [vmem:[#allocation2 + $0xb8] sm:$0xff] %v2243
      %2276 = vst [vmem:[#allocation2 + $0xc0] sm:$0xff] %v2244
      %2277 = vst [vmem:[#allocation2 + $0xc8] sm:$0xff] %v2245
      %2278 = vst [vmem:[#allocation2 + $0xd0] sm:$0xff] %v2246
      %2279 = vst [vmem:[#allocation2 + $0xd8] sm:$0xff] %v2247
      %2280 = vst [vmem:[#allocation2 + $0xe0] sm:$0xff] %v2248
      %2281 = vst [vmem:[#allocation2 + $0xe8] sm:$0xff] %v2249
      %2282 = vst [vmem:[#allocation2 + $0xf0] sm:$0xff] %v2250
      %2283 = vst [vmem:[#allocation2 + $0xf8] sm:$0xff] %v2251
      // Predicated region
      $region37: #{discriminator_forward.6} parent=31 // pred_check
        %p2284 = pneg %p228
      $region38: #{discriminator_forward.6} parent=31 // pred_check_branch
        %2286 = sbr.rel (%p2284) target = $region40
      $region39: #{discriminator_forward.6} parent=31 // pred_region
        %v2287 = vld [vmem:[#allocation2] sm:$0xff]
        %v2288 = vld [vmem:[#allocation2 + $0x8] sm:$0xff]
        %v2289 = vld [vmem:[#allocation2 + $0x10] sm:$0xff]
        %v2290 = vld [vmem:[#allocation2 + $0x18] sm:$0xff]
        %v2291 = vld [vmem:[#allocation2 + $0x20] sm:$0xff]
        %v2292 = vld [vmem:[#allocation2 + $0x28] sm:$0xff]
        %v2293 = vld [vmem:[#allocation2 + $0x30] sm:$0xff]
        %v2294 = vld [vmem:[#allocation2 + $0x38] sm:$0xff]
        %v2295 = vld [vmem:[#allocation2 + $0x40] sm:$0xff]
        %v2296 = vld [vmem:[#allocation2 + $0x48] sm:$0xff]
        %v2297 = vld [vmem:[#allocation2 + $0x50] sm:$0xff]
        %v2298 = vld [vmem:[#allocation2 + $0x58] sm:$0xff]
        %v2299 = vld [vmem:[#allocation2 + $0x60] sm:$0xff]
        %v2300 = vld [vmem:[#allocation2 + $0x68] sm:$0xff]
        %v2301 = vld [vmem:[#allocation2 + $0x70] sm:$0xff]
        %v2302 = vld [vmem:[#allocation2 + $0x78] sm:$0xff]
        %v2303 = vld [vmem:[#allocation2 + $0x80] sm:$0xff]
        %v2304 = vld [vmem:[#allocation2 + $0x88] sm:$0xff]
        %v2305 = vld [vmem:[#allocation2 + $0x90] sm:$0xff]
        %v2306 = vld [vmem:[#allocation2 + $0x98] sm:$0xff]
        %v2307 = vld [vmem:[#allocation2 + $0xa0] sm:$0xff]
        %v2308 = vld [vmem:[#allocation2 + $0xa8] sm:$0xff]
        %v2309 = vld [vmem:[#allocation2 + $0xb0] sm:$0xff]
        %v2310 = vld [vmem:[#allocation2 + $0xb8] sm:$0xff]
        %v2311 = vld [vmem:[#allocation2 + $0xc0] sm:$0xff]
        %v2312 = vld [vmem:[#allocation2 + $0xc8] sm:$0xff]
        %v2313 = vld [vmem:[#allocation2 + $0xd0] sm:$0xff]
        %v2314 = vld [vmem:[#allocation2 + $0xd8] sm:$0xff]
        %v2315 = vld [vmem:[#allocation2 + $0xe0] sm:$0xff]
        %v2316 = vld [vmem:[#allocation2 + $0xe8] sm:$0xff]
        %v2317 = vld [vmem:[#allocation2 + $0xf0] sm:$0xff]
        %v2318 = vld [vmem:[#allocation2 + $0xf8] sm:$0xff]
        %v2319 = vld [vmem:[%s2] sm:$0x1]
        %v2321 = vlaneseq
        %v2322 = vshrl.u32 %v2321, 7
        %v2323 = vsub.s32 0, %v2322
        %v2324 = vrot.slane %v2319, %v2323
        %v2326 = vadd.f32 %v2287, %v2324
        %v2327 = vadd.f32 %v2288, %v2324
        %v2328 = vadd.f32 %v2289, %v2324
        %v2329 = vadd.f32 %v2290, %v2324
        %v2330 = vadd.f32 %v2291, %v2324
        %v2331 = vadd.f32 %v2292, %v2324
        %v2332 = vadd.f32 %v2293, %v2324
        %v2333 = vadd.f32 %v2294, %v2324
        %v2334 = vadd.f32 %v2295, %v2324
        %v2335 = vadd.f32 %v2296, %v2324
        %v2336 = vadd.f32 %v2297, %v2324
        %v2337 = vadd.f32 %v2298, %v2324
        %v2338 = vadd.f32 %v2299, %v2324
        %v2339 = vadd.f32 %v2300, %v2324
        %v2340 = vadd.f32 %v2301, %v2324
        %v2341 = vadd.f32 %v2302, %v2324
        %v2342 = vadd.f32 %v2303, %v2324
        %v2343 = vadd.f32 %v2304, %v2324
        %v2344 = vadd.f32 %v2305, %v2324
        %v2345 = vadd.f32 %v2306, %v2324
        %v2346 = vadd.f32 %v2307, %v2324
        %v2347 = vadd.f32 %v2308, %v2324
        %v2348 = vadd.f32 %v2309, %v2324
        %v2349 = vadd.f32 %v2310, %v2324
        %v2350 = vadd.f32 %v2311, %v2324
        %v2351 = vadd.f32 %v2312, %v2324
        %v2352 = vadd.f32 %v2313, %v2324
        %v2353 = vadd.f32 %v2314, %v2324
        %v2354 = vadd.f32 %v2315, %v2324
        %v2355 = vadd.f32 %v2316, %v2324
        %v2356 = vadd.f32 %v2317, %v2324
        %v2357 = vadd.f32 %v2318, %v2324
        %vm2358 = vcmp.gt.f32.partialorder %v2326, 0.0
        %vm2359 = vcmp.gt.f32.partialorder %v2327, 0.0
        %vm2360 = vcmp.gt.f32.partialorder %v2328, 0.0
        %vm2361 = vcmp.gt.f32.partialorder %v2329, 0.0
        %vm2362 = vcmp.gt.f32.partialorder %v2330, 0.0
        %vm2363 = vcmp.gt.f32.partialorder %v2331, 0.0
        %vm2364 = vcmp.gt.f32.partialorder %v2332, 0.0
        %vm2365 = vcmp.gt.f32.partialorder %v2333, 0.0
        %vm2366 = vcmp.gt.f32.partialorder %v2334, 0.0
        %vm2367 = vcmp.gt.f32.partialorder %v2335, 0.0
        %vm2368 = vcmp.gt.f32.partialorder %v2336, 0.0
        %vm2369 = vcmp.gt.f32.partialorder %v2337, 0.0
        %vm2370 = vcmp.gt.f32.partialorder %v2338, 0.0
        %vm2371 = vcmp.gt.f32.partialorder %v2339, 0.0
        %vm2372 = vcmp.gt.f32.partialorder %v2340, 0.0
        %vm2373 = vcmp.gt.f32.partialorder %v2341, 0.0
        %vm2374 = vcmp.gt.f32.partialorder %v2342, 0.0
        %vm2375 = vcmp.gt.f32.partialorder %v2343, 0.0
        %vm2376 = vcmp.gt.f32.partialorder %v2344, 0.0
        %vm2377 = vcmp.gt.f32.partialorder %v2345, 0.0
        %vm2378 = vcmp.gt.f32.partialorder %v2346, 0.0
        %vm2379 = vcmp.gt.f32.partialorder %v2347, 0.0
        %vm2380 = vcmp.gt.f32.partialorder %v2348, 0.0
        %vm2381 = vcmp.gt.f32.partialorder %v2349, 0.0
        %vm2382 = vcmp.gt.f32.partialorder %v2350, 0.0
        %vm2383 = vcmp.gt.f32.partialorder %v2351, 0.0
        %vm2384 = vcmp.gt.f32.partialorder %v2352, 0.0
        %vm2385 = vcmp.gt.f32.partialorder %v2353, 0.0
        %vm2386 = vcmp.gt.f32.partialorder %v2354, 0.0
        %vm2387 = vcmp.gt.f32.partialorder %v2355, 0.0
        %vm2388 = vcmp.gt.f32.partialorder %v2356, 0.0
        %vm2389 = vcmp.gt.f32.partialorder %v2357, 0.0
        %v2390 = vmul.f32 %v2326, 0.2
        %v2391 = vmul.f32 %v2327, 0.2
        %v2392 = vmul.f32 %v2328, 0.2
        %v2393 = vmul.f32 %v2329, 0.2
        %v2394 = vmul.f32 %v2330, 0.2
        %v2395 = vmul.f32 %v2331, 0.2
        %v2396 = vmul.f32 %v2332, 0.2
        %v2397 = vmul.f32 %v2333, 0.2
        %v2398 = vmul.f32 %v2334, 0.2
        %v2399 = vmul.f32 %v2335, 0.2
        %v2400 = vmul.f32 %v2336, 0.2
        %v2401 = vmul.f32 %v2337, 0.2
        %v2402 = vmul.f32 %v2338, 0.2
        %v2403 = vmul.f32 %v2339, 0.2
        %v2404 = vmul.f32 %v2340, 0.2
        %v2405 = vmul.f32 %v2341, 0.2
        %v2406 = vmul.f32 %v2342, 0.2
        %v2407 = vmul.f32 %v2343, 0.2
        %v2408 = vmul.f32 %v2344, 0.2
        %v2409 = vmul.f32 %v2345, 0.2
        %v2410 = vmul.f32 %v2346, 0.2
        %v2411 = vmul.f32 %v2347, 0.2
        %v2412 = vmul.f32 %v2348, 0.2
        %v2413 = vmul.f32 %v2349, 0.2
        %v2414 = vmul.f32 %v2350, 0.2
        %v2415 = vmul.f32 %v2351, 0.2
        %v2416 = vmul.f32 %v2352, 0.2
        %v2417 = vmul.f32 %v2353, 0.2
        %v2418 = vmul.f32 %v2354, 0.2
        %v2419 = vmul.f32 %v2355, 0.2
        %v2420 = vmul.f32 %v2356, 0.2
        %v2421 = vmul.f32 %v2357, 0.2
        %v2422 = vsel %vm2358, %v2326, %v2390
        %v2423 = vsel %vm2359, %v2327, %v2391
        %v2424 = vsel %vm2360, %v2328, %v2392
        %v2425 = vsel %vm2361, %v2329, %v2393
        %v2426 = vsel %vm2362, %v2330, %v2394
        %v2427 = vsel %vm2363, %v2331, %v2395
        %v2428 = vsel %vm2364, %v2332, %v2396
        %v2429 = vsel %vm2365, %v2333, %v2397
        %v2430 = vsel %vm2366, %v2334, %v2398
        %v2431 = vsel %vm2367, %v2335, %v2399
        %v2432 = vsel %vm2368, %v2336, %v2400
        %v2433 = vsel %vm2369, %v2337, %v2401
        %v2434 = vsel %vm2370, %v2338, %v2402
        %v2435 = vsel %vm2371, %v2339, %v2403
        %v2436 = vsel %vm2372, %v2340, %v2404
        %v2437 = vsel %vm2373, %v2341, %v2405
        %v2438 = vsel %vm2374, %v2342, %v2406
        %v2439 = vsel %vm2375, %v2343, %v2407
        %v2440 = vsel %vm2376, %v2344, %v2408
        %v2441 = vsel %vm2377, %v2345, %v2409
        %v2442 = vsel %vm2378, %v2346, %v2410
        %v2443 = vsel %vm2379, %v2347, %v2411
        %v2444 = vsel %vm2380, %v2348, %v2412
        %v2445 = vsel %vm2381, %v2349, %v2413
        %v2446 = vsel %vm2382, %v2350, %v2414
        %v2447 = vsel %vm2383, %v2351, %v2415
        %v2448 = vsel %vm2384, %v2352, %v2416
        %v2449 = vsel %vm2385, %v2353, %v2417
        %v2450 = vsel %vm2386, %v2354, %v2418
        %v2451 = vsel %vm2387, %v2355, %v2419
        %v2452 = vsel %vm2388, %v2356, %v2420
        %v2453 = vsel %vm2389, %v2357, %v2421
        %2454 = vst [vmem:[%s225] sm:$0xff] %v2422
        %2455 = vst [vmem:[%s225 + $0x8] sm:$0xff] %v2423
        %2456 = vst [vmem:[%s225 + $0x10] sm:$0xff] %v2424
        %2457 = vst [vmem:[%s225 + $0x18] sm:$0xff] %v2425
        %2458 = vst [vmem:[%s225 + $0x20] sm:$0xff] %v2426
        %2459 = vst [vmem:[%s225 + $0x28] sm:$0xff] %v2427
        %2460 = vst [vmem:[%s225 + $0x30] sm:$0xff] %v2428
        %2461 = vst [vmem:[%s225 + $0x38] sm:$0xff] %v2429
        %2462 = vst [vmem:[%s225 + $0x40] sm:$0xff] %v2430
        %2463 = vst [vmem:[%s225 + $0x48] sm:$0xff] %v2431
        %2464 = vst [vmem:[%s225 + $0x50] sm:$0xff] %v2432
        %2465 = vst [vmem:[%s225 + $0x58] sm:$0xff] %v2433
        %2466 = vst [vmem:[%s225 + $0x60] sm:$0xff] %v2434
        %2467 = vst [vmem:[%s225 + $0x68] sm:$0xff] %v2435
        %2468 = vst [vmem:[%s225 + $0x70] sm:$0xff] %v2436
        %2469 = vst [vmem:[%s225 + $0x78] sm:$0xff] %v2437
        %2470 = vst [vmem:[%s225 + $0x80] sm:$0xff] %v2438
        %2471 = vst [vmem:[%s225 + $0x88] sm:$0xff] %v2439
        %2472 = vst [vmem:[%s225 + $0x90] sm:$0xff] %v2440
        %2473 = vst [vmem:[%s225 + $0x98] sm:$0xff] %v2441
        %2474 = vst [vmem:[%s225 + $0xa0] sm:$0xff] %v2442
        %2475 = vst [vmem:[%s225 + $0xa8] sm:$0xff] %v2443
        %2476 = vst [vmem:[%s225 + $0xb0] sm:$0xff] %v2444
        %2477 = vst [vmem:[%s225 + $0xb8] sm:$0xff] %v2445
        %2478 = vst [vmem:[%s225 + $0xc0] sm:$0xff] %v2446
        %2479 = vst [vmem:[%s225 + $0xc8] sm:$0xff] %v2447
        %2480 = vst [vmem:[%s225 + $0xd0] sm:$0xff] %v2448
        %2481 = vst [vmem:[%s225 + $0xd8] sm:$0xff] %v2449
        %2482 = vst [vmem:[%s225 + $0xe0] sm:$0xff] %v2450
        %2483 = vst [vmem:[%s225 + $0xe8] sm:$0xff] %v2451
        %2484 = vst [vmem:[%s225 + $0xf0] sm:$0xff] %v2452
        %2485 = vst [vmem:[%s225 + $0xf8] sm:$0xff] %v2453
      $region40: #{discriminator_forward.6} parent=31 // pred_fallthru
        _
      %s2486 = smul.u32 32, %s18
      %p2487 = scmp.lt.s32.totalorder %s2486, 63
      %s2488 = scalar_select %p2487, %s2486, 63
      %s2489 = smul.addr %s2488, 8
      %s2490 = scalar_lea.vmem %s3, %s2489
      // Predicated region
      $region41: #{discriminator_forward.6} parent=31 // pred_check
        %p2491 = pneg %p119
      $region42: #{discriminator_forward.6} parent=31 // pred_check_branch
        %2493 = sbr.rel (%p2491) target = $region44
      $region43: #{discriminator_forward.6} parent=31 // pred_region
        %s2494 = smul.u32 32, %s18
      $region44: #{discriminator_forward.6} parent=31 // pred_fallthru
        _
    $region32: #{discriminator_forward.6} parent=5 // pred_fallthru
      _
    %p2495 = scmp.le.s32.totalorder 2, %s9
    // Predicated region
    $region45: #{discriminator_forward.6} parent=5 // pred_check
      %p2496 = pneg %p2495
    $region46: #{discriminator_forward.6} parent=5 // pred_check_branch
      %2498 = sbr.rel (%p2496) target = $region48
    $region47: #{discriminator_forward.6} parent=5 // pred_region
      %s2499 = ssub.s32 %s9, 2
      // Predicated region
      $region49: #{discriminator_forward.6} parent=47 // pred_check
        %p2500 = pneg %p125
      $region50: #{discriminator_forward.6} parent=47 // pred_check_branch
        %2502 = sbr.rel (%p2500) target = $region52
      $region51: #{discriminator_forward.6} parent=47 // pred_region
        %s2503 = smul.u32 32, %s20
        %p2504 = scmp.lt.s32.totalorder %s2503, 63
        %s2505 = scalar_select %p2504, %s2503, 63
        %s2506 = smul.addr %s2505, 8
        %s2507 = scalar_lea.vmem %s3, %s2506
      $region52: #{discriminator_forward.6} parent=47 // pred_fallthru
        _
    $region48: #{discriminator_forward.6} parent=5 // pred_fallthru
      _
  $region6: #{discriminator_forward.6} parent=0 // loop_footer
    %s13 = sadd.s32 1, %s9
  $region7: #{discriminator_forward.6} parent=0 // loop_footer_branch
    %8 = sbr.rel target = $region3
  $region8: #{discriminator_forward.6} parent=0 // loop_exit
    _

// kernel: discriminator_forward.7
$region0: #{discriminator_forward.7}
  #allocation0 [shape = 'u32[]', space=smem, size = 0x4, offset = 0x4, fixed_abs, tag = 'smem constant byte address 0x4 - core index']
  #allocation1 [shape = 'u32[144,128]{1,0:T(1,128)}', space=vmem, size = 0x12000, scoped, tag = 'internal scratch']
  #allocation2 [shape = 'f32[128,256]{1,0:T(8,128)}', space=vmem, size = 0x20000, scoped, tag = 'scratch operand']
  %s0 = inlined_call_operand.vmem [shape: bf16[128,2048], index: 0, kind: input, shape index: {}]
  %s1 = inlined_call_operand.vmem [shape: bf16[2048,256], index: 1, kind: input, shape index: {}]
  %s2 = inlined_call_operand.vmem [shape: f32[1,256], index: 2, kind: input, shape index: {}]
  %s3 = inlined_call_operand.vmem [shape: f32[128,256], index: 3, kind: output, shape index: {}]
  %s4 = sld [smem:[#allocation0]]
  $region76: #{discriminator_forward.7} parent=0
    _
  %s6 = ssub.s32 1, %s4
  %s7 = scalar_select 0, %s6, %s4
  $region1: #{discriminator_forward.7} parent=0
    #allocation3 [shape = 'u8[524288]{0}', space=vmem, size = 0x80000, scoped, tag = 'input window, operand 0']
    loop: start=0, step=1, limit=4
    $region2: #{discriminator_forward.7} parent=1 // loop_pre_header
      _
    $region3: #{discriminator_forward.7} parent=1 // loop_header
      %s9 = sphi 0, %s13
      %p10 = scmp.ge.s32.totalorder %s9, 4
      %s16 = sphi 0, %s28
      %s17 = sphi 0, %s24
      %s18 = sphi 0, %s16
      %s19 = sphi 0, %s17
      %s20 = sphi 0, %s18
      %s21 = sphi 0, %s19
      %s33 = sphi 0, %s35
      %s36 = sphi 0, %s33
      %s37 = sphi 0, %s36
      %s53 = sphi 0, %s37
      %s59 = sphi 0, %s61
      %s62 = sphi 0, %s59
      %s63 = sphi 0, %s62
      %s79 = sphi 0, %s63
      %s83 = sphi 0, %s83
      %s85 = sphi 0, %s83
      %s86 = sphi 0, %s85
      %s100 = sphi 0, %s86
      %s106 = sphi 0, %s108
      %s109 = sphi 0, %s106
      %s110 = sphi 0, %s109
      %s126 = sphi 0, %s110
    $region4: #{discriminator_forward.7} parent=1 // loop_header_branch
      %12 = sbr.rel (%p10) target = $region8
    $region5: #{discriminator_forward.7} parent=1 // loop_body
      %s14 = ssub.s32 %s9, 1
      %s15 = ssub.s32 %s9, 2
      %s22 = sadd.s32 1, %s17
      %p23 = scmp.ge.s32.totalorder %s22, 2
      %s24 = scalar_select %p23, 0, %s22
      %s25 = sadd.s32 1, %s16
      %s26 = scalar_select %p23, %s25, %s16
      %p27 = scmp.ge.s32.totalorder %s26, 1
      %s28 = scalar_select %p27, 0, %s26
      %s29 = ssub.s32 %s16, %s28
      %s30 = ssub.s32 %s17, %s24
      %s31 = sor.u32 %s29, %s30
      %p32 = scmp.eq.s32.totalorder %s31, 0
      %s34 = sadd.s32 %s33, 1
      %s35 = scalar_select %p32, %s33, %s34
      %p38 = pneg %p32
      %p39 = scmp.eq.s32.totalorder %s9, 1
      %p40 = por %p38, %p39
      %p41 = scmp.ne.s32.totalorder %s33, %s36
      %p42 = scmp.eq.s32.totalorder %s9, 0
      %p43 = por %p41, %p42
      %p44 = scmp.ne.s32.totalorder %s33, %s36
      %p45 = scmp.eq.s32.totalorder %s14, 1
      %p46 = por %p44, %p45
      %p47 = scmp.ne.s32.totalorder %s36, %s37
      %p48 = scmp.eq.s32.totalorder %s14, 0
      %p49 = por %p47, %p48
      %p50 = scmp.ne.s32.totalorder %s36, %s37
      %p51 = scmp.eq.s32.totalorder %s15, 1
      %p52 = por %p50, %p51
      %p54 = scmp.ne.s32.totalorder %s37, %s53
      %p55 = scmp.eq.s32.totalorder %s15, 0
      %p56 = por %p54, %p55
      %s57 = ssub.s32 %s17, %s24
      %p58 = scmp.eq.s32.totalorder %s57, 0
      %s60 = sadd.s32 %s59, 1
      %s61 = scalar_select %p58, %s59, %s60
      %p64 = pneg %p58
      %p65 = scmp.eq.s32.totalorder %s9, 1
      %p66 = por %p64, %p65
      %p67 = scmp.ne.s32.totalorder %s59, %s62
      %p68 = scmp.eq.s32.totalorder %s9, 0
      %p69 = por %p67, %p68
      %p70 = scmp.ne.s32.totalorder %s59, %s62
      %p71 = scmp.eq.s32.totalorder %s14, 1
      %p72 = por %p70, %p71
      %p73 = scmp.ne.s32.totalorder %s62, %s63
      %p74 = scmp.eq.s32.totalorder %s14, 0
      %p75 = por %p73, %p74
      %p76 = scmp.ne.s32.totalorder %s62, %s63
      %p77 = scmp.eq.s32.totalorder %s15, 1
      %p78 = por %p76, %p77
      %p80 = scmp.ne.s32.totalorder %s63, %s79
      %p81 = scmp.eq.s32.totalorder %s15, 0
      %p82 = por %p80, %p81
      %s84 = sadd.s32 %s83, 1
      %p87 = scmp.eq.s32.totalorder %s9, 1
      %p88 = scmp.ne.s32.totalorder %s83, %s85
      %p89 = scmp.eq.s32.totalorder %s9, 0
      %p90 = por %p88, %p89
      %p91 = scmp.ne.s32.totalorder %s83, %s85
      %p92 = scmp.eq.s32.totalorder %s14, 1
      %p93 = por %p91, %p92
      %p94 = scmp.ne.s32.totalorder %s85, %s86
      %p95 = scmp.eq.s32.totalorder %s14, 0
      %p96 = por %p94, %p95
      %p97 = scmp.ne.s32.totalorder %s85, %s86
      %p98 = scmp.eq.s32.totalorder %s15, 1
      %p99 = por %p97, %p98
      %p101 = scmp.ne.s32.totalorder %s86, %s100
      %p102 = scmp.eq.s32.totalorder %s15, 0
      %p103 = por %p101, %p102
      %s104 = ssub.s32 %s16, %s28
      %p105 = scmp.eq.s32.totalorder %s104, 0
      %s107 = sadd.s32 %s106, 1
      %s108 = scalar_select %p105, %s106, %s107
      %p111 = pneg %p105
      %p112 = scmp.eq.s32.totalorder %s9, 1
      %p113 = por %p111, %p112
      %p114 = scmp.ne.s32.totalorder %s106, %s109
      %p115 = scmp.eq.s32.totalorder %s9, 0
      %p116 = por %p114, %p115
      %p117 = scmp.ne.s32.totalorder %s106, %s109
      %p118 = scmp.eq.s32.totalorder %s14, 1
      %p119 = por %p117, %p118
      %p120 = scmp.ne.s32.totalorder %s109, %s110
      %p121 = scmp.eq.s32.totalorder %s14, 0
      %p122 = por %p120, %p121
      %p123 = scmp.ne.s32.totalorder %s109, %s110
      %p124 = scmp.eq.s32.totalorder %s15, 1
      %p125 = por %p123, %p124
      %p127 = scmp.ne.s32.totalorder %s110, %s126
      %p128 = scmp.eq.s32.totalorder %s15, 0
      %p129 = por %p127, %p128
      %p130 = scmp.le.s32.totalorder 1, %s9
      %p131 = scmp.lt.s32.totalorder %s9, 3
      %p132 = pnand %p130, %p131
      %p133 = pneg %p132
      // Predicated region
      $region9: #{discriminator_forward.7} parent=5 // pred_check
        _
      $region10: #{discriminator_forward.7} parent=5 // pred_check_branch
        %135 = sbr.rel (%p132) target = $region12
      $region11: #{discriminator_forward.7} parent=5 // pred_region
        %s136 = ssub.s32 %s9, 1
        // Predicated region
        $region13: #{discriminator_forward.7} parent=11 // pred_check
          %p137 = pneg %p96
        $region14: #{discriminator_forward.7} parent=11 // pred_check_branch
          %139 = sbr.rel (%p137) target = $region16
        $region15: #{discriminator_forward.7} parent=11 // pred_region
          _
        $region16: #{discriminator_forward.7} parent=11 // pred_fallthru
          _
      $region12: #{discriminator_forward.7} parent=5 // pred_fallthru
        _
      %p140 = scmp.lt.s32.totalorder %s9, 2
      // Predicated region
      $region17: #{discriminator_forward.7} parent=5 // pred_check
        %p141 = pneg %p140
      $region18: #{discriminator_forward.7} parent=5 // pred_check_branch
        %143 = sbr.rel (%p141) target = $region20
      $region19: #{discriminator_forward.7} parent=5 // pred_region
        // Predicated region
        $region21: #{discriminator_forward.7} parent=19 // pred_check
          %p144 = pneg %p43
        $region22: #{discriminator_forward.7} parent=19 // pred_check_branch
          %146 = sbr.rel (%p144) target = $region24
        $region23: #{discriminator_forward.7} parent=19 // pred_region
          %s147 = sand.u32 %s33, 1
          %s148 = sand.u32 %s33, 1
          %s149 = smul.addr %s148, 512
          %s150 = scalar_lea.vmem [#allocation3], %s149
          %s151 = smul.u32 16, %s16
          %s152 = smul.u32 8, %s17
          %s153 = smul.addr %s151, 16
          %s154 = sadd.s32 %s152, %s153
          %s155 = smul.addr %s154, 4
          %s156 = scalar_lea.vmem %s0, %s155
          // Predicated region
          $region25: #{discriminator_forward.7} parent=23 // pred_check
            _
          $region26: #{discriminator_forward.7} parent=23 // pred_check_branch
            %158 = sbr.rel (0) target = $region28
          $region27: #{discriminator_forward.7} parent=23 // pred_region
            // Predicated region
            $region29: #{discriminator_forward.7} parent=27 // pred_check
              _
            $region30: #{discriminator_forward.7} parent=27 // pred_check_branch
              %160 = sbr.rel (0) target = $region32
            $region31: #{discriminator_forward.7} parent=27 // pred_region
              loop: start=0, step=1, limit=1
              $region33: #{discriminator_forward.7} parent=31 // loop_pre_header
                _
              $region34: #{discriminator_forward.7} parent=31 // loop_header
                %s162 = sphi 0, %s166
                %p163 = scmp.ge.s32.totalorder %s162, 1
                %s167 = sphi %s156, %s156
                %s168 = sphi %s150, %s150
              $region35: #{discriminator_forward.7} parent=31 // loop_header_branch
                %165 = sbr.rel (%p163) target = $region39
              $region36: #{discriminator_forward.7} parent=31 // loop_body
                %v169 = vld [vmem:[%s167] sm:$0xff]
                %170 = vst [vmem:[%s168] sm:$0xff] %v169
                %v171 = vld [vmem:[%s167 + $0x8] sm:$0xff]
                %172 = vst [vmem:[%s168 + $0x8] sm:$0xff] %v171
                %v173 = vld [vmem:[%s167 + $0x10] sm:$0xff]
                %174 = vst [vmem:[%s168 + $0x10] sm:$0xff] %v173
                %v175 = vld [vmem:[%s167 + $0x18] sm:$0xff]
                %176 = vst [vmem:[%s168 + $0x18] sm:$0xff] %v175
                %v177 = vld [vmem:[%s167 + $0x40] sm:$0xff]
                %178 = vst [vmem:[%s168 + $0x20] sm:$0xff] %v177
                %v179 = vld [vmem:[%s167 + $0x48] sm:$0xff]
                %180 = vst [vmem:[%s168 + $0x28] sm:$0xff] %v179
                %v181 = vld [vmem:[%s167 + $0x50] sm:$0xff]
                %182 = vst [vmem:[%s168 + $0x30] sm:$0xff] %v181
                %v183 = vld [vmem:[%s167 + $0x58] sm:$0xff]
                %184 = vst [vmem:[%s168 + $0x38] sm:$0xff] %v183
                %v185 = vld [vmem:[%s167 + $0x80] sm:$0xff]
                %186 = vst [vmem:[%s168 + $0x40] sm:$0xff] %v185
                %v187 = vld [vmem:[%s167 + $0x88] sm:$0xff]
                %188 = vst [vmem:[%s168 + $0x48] sm:$0xff] %v187
                %v189 = vld [vmem:[%s167 + $0x90] sm:$0xff]
                %190 = vst [vmem:[%s168 + $0x50] sm:$0xff] %v189
                %v191 = vld [vmem:[%s167 + $0x98] sm:$0xff]
                %192 = vst [vmem:[%s168 + $0x58] sm:$0xff] %v191
                %v193 = vld [vmem:[%s167 + $0xc0] sm:$0xff]
                %194 = vst [vmem:[%s168 + $0x60] sm:$0xff] %v193
                %v195 = vld [vmem:[%s167 + $0xc8] sm:$0xff]
                %196 = vst [vmem:[%s168 + $0x68] sm:$0xff] %v195
                %v197 = vld [vmem:[%s167 + $0xd0] sm:$0xff]
                %198 = vst [vmem:[%s168 + $0x70] sm:$0xff] %v197
                %v199 = vld [vmem:[%s167 + $0xd8] sm:$0xff]
                %200 = vst [vmem:[%s168 + $0x78] sm:$0xff] %v199
                %v201 = vld [vmem:[%s167 + $0x100] sm:$0xff]
                %202 = vst [vmem:[%s168 + $0x80] sm:$0xff] %v201
                %v203 = vld [vmem:[%s167 + $0x108] sm:$0xff]
                %204 = vst [vmem:[%s168 + $0x88] sm:$0xff] %v203
                %v205 = vld [vmem:[%s167 + $0x110] sm:$0xff]
                %206 = vst [vmem:[%s168 + $0x90] sm:$0xff] %v205
                %v207 = vld [vmem:[%s167 + $0x118] sm:$0xff]
                %208 = vst [vmem:[%s168 + $0x98] sm:$0xff] %v207
                %v209 = vld [vmem:[%s167 + $0x140] sm:$0xff]
                %210 = vst [vmem:[%s168 + $0xa0] sm:$0xff] %v209
                %v211 = vld [vmem:[%s167 + $0x148] sm:$0xff]
                %212 = vst [vmem:[%s168 + $0xa8] sm:$0xff] %v211
                %v213 = vld [vmem:[%s167 + $0x150] sm:$0xff]
                %214 = vst [vmem:[%s168 + $0xb0] sm:$0xff] %v213
                %v215 = vld [vmem:[%s167 + $0x158] sm:$0xff]
                %216 = vst [vmem:[%s168 + $0xb8] sm:$0xff] %v215
                %v217 = vld [vmem:[%s167 + $0x180] sm:$0xff]
                %218 = vst [vmem:[%s168 + $0xc0] sm:$0xff] %v217
                %v219 = vld [vmem:[%s167 + $0x188] sm:$0xff]
                %220 = vst [vmem:[%s168 + $0xc8] sm:$0xff] %v219
                %v221 = vld [vmem:[%s167 + $0x190] sm:$0xff]
                %222 = vst [vmem:[%s168 + $0xd0] sm:$0xff] %v221
                %v223 = vld [vmem:[%s167 + $0x198] sm:$0xff]
                %224 = vst [vmem:[%s168 + $0xd8] sm:$0xff] %v223
                %v225 = vld [vmem:[%s167 + $0x1c0] sm:$0xff]
                %226 = vst [vmem:[%s168 + $0xe0] sm:$0xff] %v225
                %v227 = vld [vmem:[%s167 + $0x1c8] sm:$0xff]
                %228 = vst [vmem:[%s168 + $0xe8] sm:$0xff] %v227
                %v229 = vld [vmem:[%s167 + $0x1d0] sm:$0xff]
                %230 = vst [vmem:[%s168 + $0xf0] sm:$0xff] %v229
                %v231 = vld [vmem:[%s167 + $0x1d8] sm:$0xff]
                %232 = vst [vmem:[%s168 + $0xf8] sm:$0xff] %v231
                %v233 = vld [vmem:[%s167 + $0x200] sm:$0xff]
                %234 = vst [vmem:[%s168 + $0x100] sm:$0xff] %v233
                %v235 = vld [vmem:[%s167 + $0x208] sm:$0xff]
                %236 = vst [vmem:[%s168 + $0x108] sm:$0xff] %v235
                %v237 = vld [vmem:[%s167 + $0x210] sm:$0xff]
                %238 = vst [vmem:[%s168 + $0x110] sm:$0xff] %v237
                %v239 = vld [vmem:[%s167 + $0x218] sm:$0xff]
                %240 = vst [vmem:[%s168 + $0x118] sm:$0xff] %v239
                %v241 = vld [vmem:[%s167 + $0x240] sm:$0xff]
                %242 = vst [vmem:[%s168 + $0x120] sm:$0xff] %v241
                %v243 = vld [vmem:[%s167 + $0x248] sm:$0xff]
                %244 = vst [vmem:[%s168 + $0x128] sm:$0xff] %v243
                %v245 = vld [vmem:[%s167 + $0x250] sm:$0xff]
                %246 = vst [vmem:[%s168 + $0x130] sm:$0xff] %v245
                %v247 = vld [vmem:[%s167 + $0x258] sm:$0xff]
                %248 = vst [vmem:[%s168 + $0x138] sm:$0xff] %v247
                %v249 = vld [vmem:[%s167 + $0x280] sm:$0xff]
                %250 = vst [vmem:[%s168 + $0x140] sm:$0xff] %v249
                %v251 = vld [vmem:[%s167 + $0x288] sm:$0xff]
                %252 = vst [vmem:[%s168 + $0x148] sm:$0xff] %v251
                %v253 = vld [vmem:[%s167 + $0x290] sm:$0xff]
                %254 = vst [vmem:[%s168 + $0x150] sm:$0xff] %v253
                %v255 = vld [vmem:[%s167 + $0x298] sm:$0xff]
                %256 = vst [vmem:[%s168 + $0x158] sm:$0xff] %v255
                %v257 = vld [vmem:[%s167 + $0x2c0] sm:$0xff]
                %258 = vst [vmem:[%s168 + $0x160] sm:$0xff] %v257
                %v259 = vld [vmem:[%s167 + $0x2c8] sm:$0xff]
                %260 = vst [vmem:[%s168 + $0x168] sm:$0xff] %v259
                %v261 = vld [vmem:[%s167 + $0x2d0] sm:$0xff]
                %262 = vst [vmem:[%s168 + $0x170] sm:$0xff] %v261
                %v263 = vld [vmem:[%s167 + $0x2d8] sm:$0xff]
                %264 = vst [vmem:[%s168 + $0x178] sm:$0xff] %v263
                %v265 = vld [vmem:[%s167 + $0x300] sm:$0xff]
                %266 = vst [vmem:[%s168 + $0x180] sm:$0xff] %v265
                %v267 = vld [vmem:[%s167 + $0x308] sm:$0xff]
                %268 = vst [vmem:[%s168 + $0x188] sm:$0xff] %v267
                %v269 = vld [vmem:[%s167 + $0x310] sm:$0xff]
                %270 = vst [vmem:[%s168 + $0x190] sm:$0xff] %v269
                %v271 = vld [vmem:[%s167 + $0x318] sm:$0xff]
                %272 = vst [vmem:[%s168 + $0x198] sm:$0xff] %v271
                %v273 = vld [vmem:[%s167 + $0x340] sm:$0xff]
                %274 = vst [vmem:[%s168 + $0x1a0] sm:$0xff] %v273
                %v275 = vld [vmem:[%s167 + $0x348] sm:$0xff]
                %276 = vst [vmem:[%s168 + $0x1a8] sm:$0xff] %v275
                %v277 = vld [vmem:[%s167 + $0x350] sm:$0xff]
                %278 = vst [vmem:[%s168 + $0x1b0] sm:$0xff] %v277
                %v279 = vld [vmem:[%s167 + $0x358] sm:$0xff]
                %280 = vst [vmem:[%s168 + $0x1b8] sm:$0xff] %v279
                %v281 = vld [vmem:[%s167 + $0x380] sm:$0xff]
                %282 = vst [vmem:[%s168 + $0x1c0] sm:$0xff] %v281
                %v283 = vld [vmem:[%s167 + $0x388] sm:$0xff]
                %284 = vst [vmem:[%s168 + $0x1c8] sm:$0xff] %v283
                %v285 = vld [vmem:[%s167 + $0x390] sm:$0xff]
                %286 = vst [vmem:[%s168 + $0x1d0] sm:$0xff] %v285
                %v287 = vld [vmem:[%s167 + $0x398] sm:$0xff]
                %288 = vst [vmem:[%s168 + $0x1d8] sm:$0xff] %v287
                %v289 = vld [vmem:[%s167 + $0x3c0] sm:$0xff]
                %290 = vst [vmem:[%s168 + $0x1e0] sm:$0xff] %v289
                %v291 = vld [vmem:[%s167 + $0x3c8] sm:$0xff]
                %292 = vst [vmem:[%s168 + $0x1e8] sm:$0xff] %v291
                %v293 = vld [vmem:[%s167 + $0x3d0] sm:$0xff]
                %294 = vst [vmem:[%s168 + $0x1f0] sm:$0xff] %v293
                %v295 = vld [vmem:[%s167 + $0x3d8] sm:$0xff]
                %296 = vst [vmem:[%s168 + $0x1f8] sm:$0xff] %v295
              $region37: #{discriminator_forward.7} parent=31 // loop_footer
                %s166 = sadd.s32 1, %s162
              $region38: #{discriminator_forward.7} parent=31 // loop_footer_branch
                %161 = sbr.rel target = $region34
              $region39: #{discriminator_forward.7} parent=31 // loop_exit
                _
            $region32: #{discriminator_forward.7} parent=27 // pred_fallthru
              _
            // Predicated region
            $region40: #{discriminator_forward.7} parent=27 // pred_check
              _
            $region41: #{discriminator_forward.7} parent=27 // pred_check_branch
              %298 = sbr.rel target = $region43
            $region42: #{discriminator_forward.7} parent=27 // pred_region
              _
            $region43: #{discriminator_forward.7} parent=27 // pred_fallthru
              _
          $region28: #{discriminator_forward.7} parent=23 // pred_fallthru
            _
          %299 = vnop
        $region24: #{discriminator_forward.7} parent=19 // pred_fallthru
          _
        // Predicated region
        $region44: #{discriminator_forward.7} parent=19 // pred_check
          %p300 = pneg %p69
        $region45: #{discriminator_forward.7} parent=19 // pred_check_branch
          %302 = sbr.rel (%p300) target = $region47
        $region46: #{discriminator_forward.7} parent=19 // pred_region
          %s303 = smul.u32 128, %s17
          %p304 = scmp.lt.s32.totalorder %s303, 255
          %s305 = scalar_select %p304, %s303, 255
          %s306 = smul.addr %s305, 2
          %s307 = smul.addr %s306, 4
          %s308 = scalar_lea.vmem %s1, %s307
          %s309 = smul.u32 128, %s17
        $region47: #{discriminator_forward.7} parent=19 // pred_fallthru
          _
      $region20: #{discriminator_forward.7} parent=5 // pred_fallthru
        _
      %p310 = scmp.le.s32.totalorder 1, %s9
      %p311 = scmp.lt.s32.totalorder %s9, 3
      %p312 = pnand %p310, %p311
      %p313 = pneg %p312
      // Predicated region
      $region48: #{discriminator_forward.7} parent=5 // pred_check
        _
      $region49: #{discriminator_forward.7} parent=5 // pred_check_branch
        %315 = sbr.rel (%p312) target = $region51
      $region50: #{discriminator_forward.7} parent=5 // pred_region
        %s316 = ssub.s32 %s9, 1
        %s317 = sand.u32 %s36, 1
        %s318 = sand.u32 %s36, 1
        %s319 = smul.addr %s318, 512
        %s320 = scalar_lea.vmem [#allocation3], %s319
        // Predicated region
        $region52: #{discriminator_forward.7} parent=50 // pred_check
          %p321 = pneg %p49
        $region53: #{discriminator_forward.7} parent=50 // pred_check_branch
          %323 = sbr.rel (%p321) target = $region55
        $region54: #{discriminator_forward.7} parent=50 // pred_region
          _
        $region55: #{discriminator_forward.7} parent=50 // pred_fallthru
          _
        %s324 = sand.u32 %s36, 1
        %s325 = sand.u32 %s36, 1
        %s326 = smul.addr %s325, 512
        %s327 = scalar_lea.vmem [#allocation3], %s326
        %p328 = pneg %p49
        %p329 = pneg %p46
        %s330 = smul.u32 128, %s19
        %p331 = scmp.lt.s32.totalorder %s330, 255
        %s332 = scalar_select %p331, %s330, 255
        %s333 = smul.addr %s332, 2
        %s334 = smul.addr %s333, 4
        %s335 = scalar_lea.vmem %s1, %s334
        %p336 = pneg %p75
        %p337 = pneg %p72
        %p338 = pneg %p96
        %p339 = pneg %p93
        %p340 = pneg %p122
        %p341 = pneg %p119
        %s342 = smul.u32 16, %s18
        %p343 = scmp.lt.s32.totalorder %s342, 15
        %s344 = scalar_select %p343, %s342, 15
        %s345 = smul.addr %s344, 2
        %s346 = smul.addr %s345, 8
        %s347 = scalar_lea.vmem %s3, %s346
        %s348 = smul.u32 16, %s18
        %s349 = smul.u32 8, %s19
        %s350 = smul.u32 128, %s19
        %p351 = scmp.lt.s32.totalorder %s350, 255
        %s352 = scalar_select %p351, %s350, 255
        %s353 = smul.addr %s352, 2
        %s354 = smul.addr %s353, 4
        %s355 = scalar_lea.vmem %s1, %s354
        %s356 = smul.u32 128, %s19
        %s357 = smul.u32 16, %s18
        %p358 = scmp.lt.s32.totalorder %s357, 15
        %s359 = scalar_select %p358, %s357, 15
        %s360 = smul.addr %s359, 2
        %s361 = smul.addr %s360, 8
        %s362 = scalar_lea.vmem %s3, %s361
        %s363 = smul.u32 16, %s18
        %p364 = scmp.eq.s32.totalorder %s19, 0
        // Predicated region
        $region56: #{discriminator_forward.7} parent=50 // pred_check
          %p365 = pneg %p364
        $region57: #{discriminator_forward.7} parent=50 // pred_check_branch
          %367 = sbr.rel (%p365) target = $region59
        $region58: #{discriminator_forward.7} parent=50 // pred_region
          %368 = vst [vmem:[#allocation2] sm:$0xff] 0.0
          %369 = vst [vmem:[#allocation2 + $0x8] sm:$0xff] 0.0
          %370 = vst [vmem:[#allocation2 + $0x10] sm:$0xff] 0.0
          %371 = vst [vmem:[#allocation2 + $0x18] sm:$0xff] 0.0
          %372 = vst [vmem:[#allocation2 + $0x20] sm:$0xff] 0.0
          %373 = vst [vmem:[#allocation2 + $0x28] sm:$0xff] 0.0
          %374 = vst [vmem:[#allocation2 + $0x30] sm:$0xff] 0.0
          %375 = vst [vmem:[#allocation2 + $0x38] sm:$0xff] 0.0
          %376 = vst [vmem:[#allocation2 + $0x40] sm:$0xff] 0.0
          %377 = vst [vmem:[#allocation2 + $0x48] sm:$0xff] 0.0
          %378 = vst [vmem:[#allocation2 + $0x50] sm:$0xff] 0.0
          %379 = vst [vmem:[#allocation2 + $0x58] sm:$0xff] 0.0
          %380 = vst [vmem:[#allocation2 + $0x60] sm:$0xff] 0.0
          %381 = vst [vmem:[#allocation2 + $0x68] sm:$0xff] 0.0
          %382 = vst [vmem:[#allocation2 + $0x70] sm:$0xff] 0.0
          %383 = vst [vmem:[#allocation2 + $0x78] sm:$0xff] 0.0
          %384 = vst [vmem:[#allocation2 + $0x80] sm:$0xff] 0.0
          %385 = vst [vmem:[#allocation2 + $0x88] sm:$0xff] 0.0
          %386 = vst [vmem:[#allocation2 + $0x90] sm:$0xff] 0.0
          %387 = vst [vmem:[#allocation2 + $0x98] sm:$0xff] 0.0
          %388 = vst [vmem:[#allocation2 + $0xa0] sm:$0xff] 0.0
          %389 = vst [vmem:[#allocation2 + $0xa8] sm:$0xff] 0.0
          %390 = vst [vmem:[#allocation2 + $0xb0] sm:$0xff] 0.0
          %391 = vst [vmem:[#allocation2 + $0xb8] sm:$0xff] 0.0
          %392 = vst [vmem:[#allocation2 + $0xc0] sm:$0xff] 0.0
          %393 = vst [vmem:[#allocation2 + $0xc8] sm:$0xff] 0.0
          %394 = vst [vmem:[#allocation2 + $0xd0] sm:$0xff] 0.0
          %395 = vst [vmem:[#allocation2 + $0xd8] sm:$0xff] 0.0
          %396 = vst [vmem:[#allocation2 + $0xe0] sm:$0xff] 0.0
          %397 = vst [vmem:[#allocation2 + $0xe8] sm:$0xff] 0.0
          %398 = vst [vmem:[#allocation2 + $0xf0] sm:$0xff] 0.0
          %399 = vst [vmem:[#allocation2 + $0xf8] sm:$0xff] 0.0
        $region59: #{discriminator_forward.7} parent=50 // pred_fallthru
          _
        %v400 = vld [vmem:[#allocation2] sm:$0xff]
        %v401 = vld [vmem:[#allocation2 + $0x8] sm:$0xff]
        %v402 = vld [vmem:[#allocation2 + $0x10] sm:$0xff]
        %v403 = vld [vmem:[#allocation2 + $0x18] sm:$0xff]
        %v404 = vld [vmem:[#allocation2 + $0x20] sm:$0xff]
        %v405 = vld [vmem:[#allocation2 + $0x28] sm:$0xff]
        %v406 = vld [vmem:[#allocation2 + $0x30] sm:$0xff]
        %v407 = vld [vmem:[#allocation2 + $0x38] sm:$0xff]
        %v408 = vld [vmem:[#allocation2 + $0x40] sm:$0xff]
        %v409 = vld [vmem:[#allocation2 + $0x48] sm:$0xff]
        %v410 = vld [vmem:[#allocation2 + $0x50] sm:$0xff]
        %v411 = vld [vmem:[#allocation2 + $0x58] sm:$0xff]
        %v412 = vld [vmem:[#allocation2 + $0x60] sm:$0xff]
        %v413 = vld [vmem:[#allocation2 + $0x68] sm:$0xff]
        %v414 = vld [vmem:[#allocation2 + $0x70] sm:$0xff]
        %v415 = vld [vmem:[#allocation2 + $0x78] sm:$0xff]
        %v416 = vld [vmem:[#allocation2 + $0x80] sm:$0xff]
        %v417 = vld [vmem:[#allocation2 + $0x88] sm:$0xff]
        %v418 = vld [vmem:[#allocation2 + $0x90] sm:$0xff]
        %v419 = vld [vmem:[#allocation2 + $0x98] sm:$0xff]
        %v420 = vld [vmem:[#allocation2 + $0xa0] sm:$0xff]
        %v421 = vld [vmem:[#allocation2 + $0xa8] sm:$0xff]
        %v422 = vld [vmem:[#allocation2 + $0xb0] sm:$0xff]
        %v423 = vld [vmem:[#allocation2 + $0xb8] sm:$0xff]
        %v424 = vld [vmem:[#allocation2 + $0xc0] sm:$0xff]
        %v425 = vld [vmem:[#allocation2 + $0xc8] sm:$0xff]
        %v426 = vld [vmem:[#allocation2 + $0xd0] sm:$0xff]
        %v427 = vld [vmem:[#allocation2 + $0xd8] sm:$0xff]
        %v428 = vld [vmem:[#allocation2 + $0xe0] sm:$0xff]
        %v429 = vld [vmem:[#allocation2 + $0xe8] sm:$0xff]
        %v430 = vld [vmem:[#allocation2 + $0xf0] sm:$0xff]
        %v431 = vld [vmem:[#allocation2 + $0xf8] sm:$0xff]
        %v432 = vld [vmem:[%s320] sm:$0xff]
        %v433 = vld [vmem:[%s320 + $0x8] sm:$0xff]
        %v434 = vld [vmem:[%s320 + $0x10] sm:$0xff]
        %v435 = vld [vmem:[%s320 + $0x18] sm:$0xff]
        %v436 = vld [vmem:[%s320 + $0x20] sm:$0xff]
        %v437 = vld [vmem:[%s320 + $0x28] sm:$0xff]
        %v438 = vld [vmem:[%s320 + $0x30] sm:$0xff]
        %v439 = vld [vmem:[%s320 + $0x38] sm:$0xff]
        %v440 = vld [vmem:[%s320 + $0x40] sm:$0xff]
        %v441 = vld [vmem:[%s320 + $0x48] sm:$0xff]
        %v442 = vld [vmem:[%s320 + $0x50] sm:$0xff]
        %v443 = vld [vmem:[%s320 + $0x58] sm:$0xff]
        %v444 = vld [vmem:[%s320 + $0x60] sm:$0xff]
        %v445 = vld [vmem:[%s320 + $0x68] sm:$0xff]
        %v446 = vld [vmem:[%s320 + $0x70] sm:$0xff]
        %v447 = vld [vmem:[%s320 + $0x78] sm:$0xff]
        %v448 = vld [vmem:[%s320 + $0x80] sm:$0xff]
        %v449 = vld [vmem:[%s320 + $0x88] sm:$0xff]
        %v450 = vld [vmem:[%s320 + $0x90] sm:$0xff]
        %v451 = vld [vmem:[%s320 + $0x98] sm:$0xff]
        %v452 = vld [vmem:[%s320 + $0xa0] sm:$0xff]
        %v453 = vld [vmem:[%s320 + $0xa8] sm:$0xff]
        %v454 = vld [vmem:[%s320 + $0xb0] sm:$0xff]
        %v455 = vld [vmem:[%s320 + $0xb8] sm:$0xff]
        %v456 = vld [vmem:[%s320 + $0xc0] sm:$0xff]
        %v457 = vld [vmem:[%s320 + $0xc8] sm:$0xff]
        %v458 = vld [vmem:[%s320 + $0xd0] sm:$0xff]
        %v459 = vld [vmem:[%s320 + $0xd8] sm:$0xff]
        %v460 = vld [vmem:[%s320 + $0xe0] sm:$0xff]
        %v461 = vld [vmem:[%s320 + $0xe8] sm:$0xff]
        %v462 = vld [vmem:[%s320 + $0xf0] sm:$0xff]
        %v463 = vld [vmem:[%s320 + $0xf8] sm:$0xff]
        %v464 = vld [vmem:[%s320 + $0x100] sm:$0xff]
        %v465 = vld [vmem:[%s320 + $0x108] sm:$0xff]
        %v466 = vld [vmem:[%s320 + $0x110] sm:$0xff]
        %v467 = vld [vmem:[%s320 + $0x118] sm:$0xff]
        %v468 = vld [vmem:[%s320 + $0x120] sm:$0xff]
        %v469 = vld [vmem:[%s320 + $0x128] sm:$0xff]
        %v470 = vld [vmem:[%s320 + $0x130] sm:$0xff]
        %v471 = vld [vmem:[%s320 + $0x138] sm:$0xff]
        %v472 = vld [vmem:[%s320 + $0x140] sm:$0xff]
        %v473 = vld [vmem:[%s320 + $0x148] sm:$0xff]
        %v474 = vld [vmem:[%s320 + $0x150] sm:$0xff]
        %v475 = vld [vmem:[%s320 + $0x158] sm:$0xff]
        %v476 = vld [vmem:[%s320 + $0x160] sm:$0xff]
        %v477 = vld [vmem:[%s320 + $0x168] sm:$0xff]
        %v478 = vld [vmem:[%s320 + $0x170] sm:$0xff]
        %v479 = vld [vmem:[%s320 + $0x178] sm:$0xff]
        %v480 = vld [vmem:[%s320 + $0x180] sm:$0xff]
        %v481 = vld [vmem:[%s320 + $0x188] sm:$0xff]
        %v482 = vld [vmem:[%s320 + $0x190] sm:$0xff]
        %v483 = vld [vmem:[%s320 + $0x198] sm:$0xff]
        %v484 = vld [vmem:[%s320 + $0x1a0] sm:$0xff]
        %v485 = vld [vmem:[%s320 + $0x1a8] sm:$0xff]
        %v486 = vld [vmem:[%s320 + $0x1b0] sm:$0xff]
        %v487 = vld [vmem:[%s320 + $0x1b8] sm:$0xff]
        %v488 = vld [vmem:[%s320 + $0x1c0] sm:$0xff]
        %v489 = vld [vmem:[%s320 + $0x1c8] sm:$0xff]
        %v490 = vld [vmem:[%s320 + $0x1d0] sm:$0xff]
        %v491 = vld [vmem:[%s320 + $0x1d8] sm:$0xff]
        %v492 = vld [vmem:[%s320 + $0x1e0] sm:$0xff]
        %v493 = vld [vmem:[%s320 + $0x1e8] sm:$0xff]
        %v494 = vld [vmem:[%s320 + $0x1f0] sm:$0xff]
        %v495 = vld [vmem:[%s320 + $0x1f8] sm:$0xff]
        %v496 = vld [vmem:[%s355] sm:$0xff]
        %v497 = vld [vmem:[%s355 + $0x8] sm:$0xff]
        %v498 = vld [vmem:[%s355 + $0x10] sm:$0xff]
        %v499 = vld [vmem:[%s355 + $0x18] sm:$0xff]
        %v500 = vld [vmem:[%s355 + $0x20] sm:$0xff]
        %v501 = vld [vmem:[%s355 + $0x28] sm:$0xff]
        %v502 = vld [vmem:[%s355 + $0x30] sm:$0xff]
        %v503 = vld [vmem:[%s355 + $0x38] sm:$0xff]
        %v504 = vld [vmem:[%s355 + $0x40] sm:$0xff]
        %v505 = vld [vmem:[%s355 + $0x48] sm:$0xff]
        %v506 = vld [vmem:[%s355 + $0x50] sm:$0xff]
        %v507 = vld [vmem:[%s355 + $0x58] sm:$0xff]
        %v508 = vld [vmem:[%s355 + $0x60] sm:$0xff]
        %v509 = vld [vmem:[%s355 + $0x68] sm:$0xff]
        %v510 = vld [vmem:[%s355 + $0x70] sm:$0xff]
        %v511 = vld [vmem:[%s355 + $0x78] sm:$0xff]
        %v512 = vld [vmem:[%s355 + $0x80] sm:$0xff]
        %v513 = vld [vmem:[%s355 + $0x88] sm:$0xff]
        %v514 = vld [vmem:[%s355 + $0x90] sm:$0xff]
        %v515 = vld [vmem:[%s355 + $0x98] sm:$0xff]
        %v516 = vld [vmem:[%s355 + $0xa0] sm:$0xff]
        %v517 = vld [vmem:[%s355 + $0xa8] sm:$0xff]
        %v518 = vld [vmem:[%s355 + $0xb0] sm:$0xff]
        %v519 = vld [vmem:[%s355 + $0xb8] sm:$0xff]
        %v520 = vld [vmem:[%s355 + $0xc0] sm:$0xff]
        %v521 = vld [vmem:[%s355 + $0xc8] sm:$0xff]
        %v522 = vld [vmem:[%s355 + $0xd0] sm:$0xff]
        %v523 = vld [vmem:[%s355 + $0xd8] sm:$0xff]
        %v524 = vld [vmem:[%s355 + $0xe0] sm:$0xff]
        %v525 = vld [vmem:[%s355 + $0xe8] sm:$0xff]
        %v526 = vld [vmem:[%s355 + $0xf0] sm:$0xff]
        %v527 = vld [vmem:[%s355 + $0xf8] sm:$0xff]
        %v528 = vld [vmem:[%s355 + $0x100] sm:$0xff]
        %v529 = vld [vmem:[%s355 + $0x108] sm:$0xff]
        %v530 = vld [vmem:[%s355 + $0x110] sm:$0xff]
        %v531 = vld [vmem:[%s355 + $0x118] sm:$0xff]
        %v532 = vld [vmem:[%s355 + $0x120] sm:$0xff]
        %v533 = vld [vmem:[%s355 + $0x128] sm:$0xff]
        %v534 = vld [vmem:[%s355 + $0x130] sm:$0xff]
        %v535 = vld [vmem:[%s355 + $0x138] sm:$0xff]
        %v536 = vld [vmem:[%s355 + $0x140] sm:$0xff]
        %v537 = vld [vmem:[%s355 + $0x148] sm:$0xff]
        %v538 = vld [vmem:[%s355 + $0x150] sm:$0xff]
        %v539 = vld [vmem:[%s355 + $0x158] sm:$0xff]
        %v540 = vld [vmem:[%s355 + $0x160] sm:$0xff]
        %v541 = vld [vmem:[%s355 + $0x168] sm:$0xff]
        %v542 = vld [vmem:[%s355 + $0x170] sm:$0xff]
        %v543 = vld [vmem:[%s355 + $0x178] sm:$0xff]
        %v544 = vld [vmem:[%s355 + $0x180] sm:$0xff]
        %v545 = vld [vmem:[%s355 + $0x188] sm:$0xff]
        %v546 = vld [vmem:[%s355 + $0x190] sm:$0xff]
        %v547 = vld [vmem:[%s355 + $0x198] sm:$0xff]
        %v548 = vld [vmem:[%s355 + $0x1a0] sm:$0xff]
        %v549 = vld [vmem:[%s355 + $0x1a8] sm:$0xff]
        %v550 = vld [vmem:[%s355 + $0x1b0] sm:$0xff]
        %v551 = vld [vmem:[%s355 + $0x1b8] sm:$0xff]
        %v552 = vld [vmem:[%s355 + $0x1c0] sm:$0xff]
        %v553 = vld [vmem:[%s355 + $0x1c8] sm:$0xff]
        %v554 = vld [vmem:[%s355 + $0x1d0] sm:$0xff]
        %v555 = vld [vmem:[%s355 + $0x1d8] sm:$0xff]
        %v556 = vld [vmem:[%s355 + $0x1e0] sm:$0xff]
        %v557 = vld [vmem:[%s355 + $0x1e8] sm:$0xff]
        %v558 = vld [vmem:[%s355 + $0x1f0] sm:$0xff]
        %v559 = vld [vmem:[%s355 + $0x1f8] sm:$0xff]
        %v560 = vld [vmem:[%s355 + $0x200] sm:$0xff]
        %v561 = vld [vmem:[%s355 + $0x208] sm:$0xff]
        %v562 = vld [vmem:[%s355 + $0x210] sm:$0xff]
        %v563 = vld [vmem:[%s355 + $0x218] sm:$0xff]
        %v564 = vld [vmem:[%s355 + $0x220] sm:$0xff]
        %v565 = vld [vmem:[%s355 + $0x228] sm:$0xff]
        %v566 = vld [vmem:[%s355 + $0x230] sm:$0xff]
        %v567 = vld [vmem:[%s355 + $0x238] sm:$0xff]
        %v568 = vld [vmem:[%s355 + $0x240] sm:$0xff]
        %v569 = vld [vmem:[%s355 + $0x248] sm:$0xff]
        %v570 = vld [vmem:[%s355 + $0x250] sm:$0xff]
        %v571 = vld [vmem:[%s355 + $0x258] sm:$0xff]
        %v572 = vld [vmem:[%s355 + $0x260] sm:$0xff]
        %v573 = vld [vmem:[%s355 + $0x268] sm:$0xff]
        %v574 = vld [vmem:[%s355 + $0x270] sm:$0xff]
        %v575 = vld [vmem:[%s355 + $0x278] sm:$0xff]
        %v576 = vld [vmem:[%s355 + $0x280] sm:$0xff]
        %v577 = vld [vmem:[%s355 + $0x288] sm:$0xff]
        %v578 = vld [vmem:[%s355 + $0x290] sm:$0xff]
        %v579 = vld [vmem:[%s355 + $0x298] sm:$0xff]
        %v580 = vld [vmem:[%s355 + $0x2a0] sm:$0xff]
        %v581 = vld [vmem:[%s355 + $0x2a8] sm:$0xff]
        %v582 = vld [vmem:[%s355 + $0x2b0] sm:$0xff]
        %v583 = vld [vmem:[%s355 + $0x2b8] sm:$0xff]
        %v584 = vld [vmem:[%s355 + $0x2c0] sm:$0xff]
        %v585 = vld [vmem:[%s355 + $0x2c8] sm:$0xff]
        %v586 = vld [vmem:[%s355 + $0x2d0] sm:$0xff]
        %v587 = vld [vmem:[%s355 + $0x2d8] sm:$0xff]
        %v588 = vld [vmem:[%s355 + $0x2e0] sm:$0xff]
        %v589 = vld [vmem:[%s355 + $0x2e8] sm:$0xff]
        %v590 = vld [vmem:[%s355 + $0x2f0] sm:$0xff]
        %v591 = vld [vmem:[%s355 + $0x2f8] sm:$0xff]
        %v592 = vld [vmem:[%s355 + $0x300] sm:$0xff]
        %v593 = vld [vmem:[%s355 + $0x308] sm:$0xff]
        %v594 = vld [vmem:[%s355 + $0x310] sm:$0xff]
        %v595 = vld [vmem:[%s355 + $0x318] sm:$0xff]
        %v596 = vld [vmem:[%s355 + $0x320] sm:$0xff]
        %v597 = vld [vmem:[%s355 + $0x328] sm:$0xff]
        %v598 = vld [vmem:[%s355 + $0x330] sm:$0xff]
        %v599 = vld [vmem:[%s355 + $0x338] sm:$0xff]
        %v600 = vld [vmem:[%s355 + $0x340] sm:$0xff]
        %v601 = vld [vmem:[%s355 + $0x348] sm:$0xff]
        %v602 = vld [vmem:[%s355 + $0x350] sm:$0xff]
        %v603 = vld [vmem:[%s355 + $0x358] sm:$0xff]
        %v604 = vld [vmem:[%s355 + $0x360] sm:$0xff]
        %v605 = vld [vmem:[%s355 + $0x368] sm:$0xff]
        %v606 = vld [vmem:[%s355 + $0x370] sm:$0xff]
        %v607 = vld [vmem:[%s355 + $0x378] sm:$0xff]
        %v608 = vld [vmem:[%s355 + $0x380] sm:$0xff]
        %v609 = vld [vmem:[%s355 + $0x388] sm:$0xff]
        %v610 = vld [vmem:[%s355 + $0x390] sm:$0xff]
        %v611 = vld [vmem:[%s355 + $0x398] sm:$0xff]
        %v612 = vld [vmem:[%s355 + $0x3a0] sm:$0xff]
        %v613 = vld [vmem:[%s355 + $0x3a8] sm:$0xff]
        %v614 = vld [vmem:[%s355 + $0x3b0] sm:$0xff]
        %v615 = vld [vmem:[%s355 + $0x3b8] sm:$0xff]
        %v616 = vld [vmem:[%s355 + $0x3c0] sm:$0xff]
        %v617 = vld [vmem:[%s355 + $0x3c8] sm:$0xff]
        %v618 = vld [vmem:[%s355 + $0x3d0] sm:$0xff]
        %v619 = vld [vmem:[%s355 + $0x3d8] sm:$0xff]
        %v620 = vld [vmem:[%s355 + $0x3e0] sm:$0xff]
        %v621 = vld [vmem:[%s355 + $0x3e8] sm:$0xff]
        %v622 = vld [vmem:[%s355 + $0x3f0] sm:$0xff]
        %v623 = vld [vmem:[%s355 + $0x3f8] sm:$0xff]
        %v688 = vunpack.c.l.b16 %v432
        %v689 = vunpack.c.h.b16 %v432
        %v690 = vunpack.c.l.b16 %v433
        %v691 = vunpack.c.h.b16 %v433
        %v692 = vunpack.c.l.b16 %v434
        %v693 = vunpack.c.h.b16 %v434
        %v694 = vunpack.c.l.b16 %v435
        %v695 = vunpack.c.h.b16 %v435
        %v696 = vunpack.c.l.b16 %v436
        %v697 = vunpack.c.h.b16 %v436
        %v698 = vunpack.c.l.b16 %v437
        %v699 = vunpack.c.h.b16 %v437
        %v700 = vunpack.c.l.b16 %v438
        %v701 = vunpack.c.h.b16 %v438
        %v702 = vunpack.c.l.b16 %v439
        %v703 = vunpack.c.h.b16 %v439
        %v704 = vunpack.c.l.b16 %v440
        %v705 = vunpack.c.h.b16 %v440
        %v706 = vunpack.c.l.b16 %v441
        %v707 = vunpack.c.h.b16 %v441
        %v708 = vunpack.c.l.b16 %v442
        %v709 = vunpack.c.h.b16 %v442
        %v710 = vunpack.c.l.b16 %v443
        %v711 = vunpack.c.h.b16 %v443
        %v712 = vunpack.c.l.b16 %v444
        %v713 = vunpack.c.h.b16 %v444
        %v714 = vunpack.c.l.b16 %v445
        %v715 = vunpack.c.h.b16 %v445
        %v716 = vunpack.c.l.b16 %v446
        %v717 = vunpack.c.h.b16 %v446
        %v718 = vunpack.c.l.b16 %v447
        %v719 = vunpack.c.h.b16 %v447
        %v720 = vunpack.c.l.b16 %v448
        %v721 = vunpack.c.h.b16 %v448
        %v722 = vunpack.c.l.b16 %v449
        %v723 = vunpack.c.h.b16 %v449
        %v724 = vunpack.c.l.b16 %v450
        %v725 = vunpack.c.h.b16 %v450
        %v726 = vunpack.c.l.b16 %v451
        %v727 = vunpack.c.h.b16 %v451
        %v728 = vunpack.c.l.b16 %v452
        %v729 = vunpack.c.h.b16 %v452
        %v730 = vunpack.c.l.b16 %v453
        %v731 = vunpack.c.h.b16 %v453
        %v732 = vunpack.c.l.b16 %v454
        %v733 = vunpack.c.h.b16 %v454
        %v734 = vunpack.c.l.b16 %v455
        %v735 = vunpack.c.h.b16 %v455
        %v736 = vunpack.c.l.b16 %v456
        %v737 = vunpack.c.h.b16 %v456
        %v738 = vunpack.c.l.b16 %v457
        %v739 = vunpack.c.h.b16 %v457
        %v740 = vunpack.c.l.b16 %v458
        %v741 = vunpack.c.h.b16 %v458
        %v742 = vunpack.c.l.b16 %v459
        %v743 = vunpack.c.h.b16 %v459
        %v744 = vunpack.c.l.b16 %v460
        %v745 = vunpack.c.h.b16 %v460
        %v746 = vunpack.c.l.b16 %v461
        %v747 = vunpack.c.h.b16 %v461
        %v748 = vunpack.c.l.b16 %v462
        %v749 = vunpack.c.h.b16 %v462
        %v750 = vunpack.c.l.b16 %v463
        %v751 = vunpack.c.h.b16 %v463
        %v752 = vunpack.c.l.b16 %v464
        %v753 = vunpack.c.h.b16 %v464
        %v754 = vunpack.c.l.b16 %v465
        %v755 = vunpack.c.h.b16 %v465
        %v756 = vunpack.c.l.b16 %v466
        %v757 = vunpack.c.h.b16 %v466
        %v758 = vunpack.c.l.b16 %v467
        %v759 = vunpack.c.h.b16 %v467
        %v760 = vunpack.c.l.b16 %v468
        %v761 = vunpack.c.h.b16 %v468
        %v762 = vunpack.c.l.b16 %v469
        %v763 = vunpack.c.h.b16 %v469
        %v764 = vunpack.c.l.b16 %v470
        %v765 = vunpack.c.h.b16 %v470
        %v766 = vunpack.c.l.b16 %v471
        %v767 = vunpack.c.h.b16 %v471
        %v768 = vunpack.c.l.b16 %v472
        %v769 = vunpack.c.h.b16 %v472
        %v770 = vunpack.c.l.b16 %v473
        %v771 = vunpack.c.h.b16 %v473
        %v772 = vunpack.c.l.b16 %v474
        %v773 = vunpack.c.h.b16 %v474
        %v774 = vunpack.c.l.b16 %v475
        %v775 = vunpack.c.h.b16 %v475
        %v776 = vunpack.c.l.b16 %v476
        %v777 = vunpack.c.h.b16 %v476
        %v778 = vunpack.c.l.b16 %v477
        %v779 = vunpack.c.h.b16 %v477
        %v780 = vunpack.c.l.b16 %v478
        %v781 = vunpack.c.h.b16 %v478
        %v782 = vunpack.c.l.b16 %v479
        %v783 = vunpack.c.h.b16 %v479
        %v784 = vunpack.c.l.b16 %v480
        %v785 = vunpack.c.h.b16 %v480
        %v786 = vunpack.c.l.b16 %v481
        %v787 = vunpack.c.h.b16 %v481
        %v788 = vunpack.c.l.b16 %v482
        %v789 = vunpack.c.h.b16 %v482
        %v790 = vunpack.c.l.b16 %v483
        %v791 = vunpack.c.h.b16 %v483
        %v792 = vunpack.c.l.b16 %v484
        %v793 = vunpack.c.h.b16 %v484
        %v794 = vunpack.c.l.b16 %v485
        %v795 = vunpack.c.h.b16 %v485
        %v796 = vunpack.c.l.b16 %v486
        %v797 = vunpack.c.h.b16 %v486
        %v798 = vunpack.c.l.b16 %v487
        %v799 = vunpack.c.h.b16 %v487
        %v800 = vunpack.c.l.b16 %v488
        %v801 = vunpack.c.h.b16 %v488
        %v802 = vunpack.c.l.b16 %v489
        %v803 = vunpack.c.h.b16 %v489
        %v804 = vunpack.c.l.b16 %v490
        %v805 = vunpack.c.h.b16 %v490
        %v806 = vunpack.c.l.b16 %v491
        %v807 = vunpack.c.h.b16 %v491
        %v808 = vunpack.c.l.b16 %v492
        %v809 = vunpack.c.h.b16 %v492
        %v810 = vunpack.c.l.b16 %v493
        %v811 = vunpack.c.h.b16 %v493
        %v812 = vunpack.c.l.b16 %v494
        %v813 = vunpack.c.h.b16 %v494
        %v814 = vunpack.c.l.b16 %v495
        %v815 = vunpack.c.h.b16 %v495
        %v816 = vpack.c.b16 %v696, %v688
        %v817 = vpack.c.b16 %v697, %v689
        %v818 = vpack.c.b16 %v698, %v690
        %v819 = vpack.c.b16 %v699, %v691
        %v820 = vpack.c.b16 %v700, %v692
        %v821 = vpack.c.b16 %v701, %v693
        %v822 = vpack.c.b16 %v702, %v694
        %v823 = vpack.c.b16 %v703, %v695
        %v824 = vpack.c.b16 %v712, %v704
        %v825 = vpack.c.b16 %v713, %v705
        %v826 = vpack.c.b16 %v714, %v706
        %v827 = vpack.c.b16 %v715, %v707
        %v828 = vpack.c.b16 %v716, %v708
        %v829 = vpack.c.b16 %v717, %v709
        %v830 = vpack.c.b16 %v718, %v710
        %v831 = vpack.c.b16 %v719, %v711
        %v832 = vpack.c.b16 %v728, %v720
        %v833 = vpack.c.b16 %v729, %v721
        %v834 = vpack.c.b16 %v730, %v722
        %v835 = vpack.c.b16 %v731, %v723
        %v836 = vpack.c.b16 %v732, %v724
        %v837 = vpack.c.b16 %v733, %v725
        %v838 = vpack.c.b16 %v734, %v726
        %v839 = vpack.c.b16 %v735, %v727
        %v840 = vpack.c.b16 %v744, %v736
        %v841 = vpack.c.b16 %v745, %v737
        %v842 = vpack.c.b16 %v746, %v738
        %v843 = vpack.c.b16 %v747, %v739
        %v844 = vpack.c.b16 %v748, %v740
        %v845 = vpack.c.b16 %v749, %v741
        %v846 = vpack.c.b16 %v750, %v742
        %v847 = vpack.c.b16 %v751, %v743
        %v848 = vpack.c.b16 %v760, %v752
        %v849 = vpack.c.b16 %v761, %v753
        %v850 = vpack.c.b16 %v762, %v754
        %v851 = vpack.c.b16 %v763, %v755
        %v852 = vpack.c.b16 %v764, %v756
        %v853 = vpack.c.b16 %v765, %v757
        %v854 = vpack.c.b16 %v766, %v758
        %v855 = vpack.c.b16 %v767, %v759
        %v856 = vpack.c.b16 %v776, %v768
        %v857 = vpack.c.b16 %v777, %v769
        %v858 = vpack.c.b16 %v778, %v770
        %v859 = vpack.c.b16 %v779, %v771
        %v860 = vpack.c.b16 %v780, %v772
        %v861 = vpack.c.b16 %v781, %v773
        %v862 = vpack.c.b16 %v782, %v774
        %v863 = vpack.c.b16 %v783, %v775
        %v864 = vpack.c.b16 %v792, %v784
        %v865 = vpack.c.b16 %v793, %v785
        %v866 = vpack.c.b16 %v794, %v786
        %v867 = vpack.c.b16 %v795, %v787
        %v868 = vpack.c.b16 %v796, %v788
        %v869 = vpack.c.b16 %v797, %v789
        %v870 = vpack.c.b16 %v798, %v790
        %v871 = vpack.c.b16 %v799, %v791
        %v872 = vpack.c.b16 %v808, %v800
        %v873 = vpack.c.b16 %v809, %v801
        %v874 = vpack.c.b16 %v810, %v802
        %v875 = vpack.c.b16 %v811, %v803
        %v876 = vpack.c.b16 %v812, %v804
        %v877 = vpack.c.b16 %v813, %v805
        %v878 = vpack.c.b16 %v814, %v806
        %v879 = vpack.c.b16 %v815, %v807
        %v1072 = vunpack.c.l.b16 %v496
        %v1073 = vunpack.c.h.b16 %v496
        %v1074 = vunpack.c.l.b16 %v497
        %v1075 = vunpack.c.h.b16 %v497
        %v1076 = vunpack.c.l.b16 %v498
        %v1077 = vunpack.c.h.b16 %v498
        %v1078 = vunpack.c.l.b16 %v499
        %v1079 = vunpack.c.h.b16 %v499
        %v1080 = vunpack.c.l.b16 %v500
        %v1081 = vunpack.c.h.b16 %v500
        %v1082 = vunpack.c.l.b16 %v501
        %v1083 = vunpack.c.h.b16 %v501
        %v1084 = vunpack.c.l.b16 %v502
        %v1085 = vunpack.c.h.b16 %v502
        %v1086 = vunpack.c.l.b16 %v503
        %v1087 = vunpack.c.h.b16 %v503
        %v1088 = vunpack.c.l.b16 %v504
        %v1089 = vunpack.c.h.b16 %v504
        %v1090 = vunpack.c.l.b16 %v505
        %v1091 = vunpack.c.h.b16 %v505
        %v1092 = vunpack.c.l.b16 %v506
        %v1093 = vunpack.c.h.b16 %v506
        %v1094 = vunpack.c.l.b16 %v507
        %v1095 = vunpack.c.h.b16 %v507
        %v1096 = vunpack.c.l.b16 %v508
        %v1097 = vunpack.c.h.b16 %v508
        %v1098 = vunpack.c.l.b16 %v509
        %v1099 = vunpack.c.h.b16 %v509
        %v1100 = vunpack.c.l.b16 %v510
        %v1101 = vunpack.c.h.b16 %v510
        %v1102 = vunpack.c.l.b16 %v511
        %v1103 = vunpack.c.h.b16 %v511
        %v1104 = vunpack.c.l.b16 %v512
        %v1105 = vunpack.c.h.b16 %v512
        %v1106 = vunpack.c.l.b16 %v513
        %v1107 = vunpack.c.h.b16 %v513
        %v1108 = vunpack.c.l.b16 %v514
        %v1109 = vunpack.c.h.b16 %v514
        %v1110 = vunpack.c.l.b16 %v515
        %v1111 = vunpack.c.h.b16 %v515
        %v1112 = vunpack.c.l.b16 %v516
        %v1113 = vunpack.c.h.b16 %v516
        %v1114 = vunpack.c.l.b16 %v517
        %v1115 = vunpack.c.h.b16 %v517
        %v1116 = vunpack.c.l.b16 %v518
        %v1117 = vunpack.c.h.b16 %v518
        %v1118 = vunpack.c.l.b16 %v519
        %v1119 = vunpack.c.h.b16 %v519
        %v1120 = vunpack.c.l.b16 %v520
        %v1121 = vunpack.c.h.b16 %v520
        %v1122 = vunpack.c.l.b16 %v521
        %v1123 = vunpack.c.h.b16 %v521
        %v1124 = vunpack.c.l.b16 %v522
        %v1125 = vunpack.c.h.b16 %v522
        %v1126 = vunpack.c.l.b16 %v523
        %v1127 = vunpack.c.h.b16 %v523
        %v1128 = vunpack.c.l.b16 %v524
        %v1129 = vunpack.c.h.b16 %v524
        %v1130 = vunpack.c.l.b16 %v525
        %v1131 = vunpack.c.h.b16 %v525
        %v1132 = vunpack.c.l.b16 %v526
        %v1133 = vunpack.c.h.b16 %v526
        %v1134 = vunpack.c.l.b16 %v527
        %v1135 = vunpack.c.h.b16 %v527
        %v1136 = vunpack.c.l.b16 %v528
        %v1137 = vunpack.c.h.b16 %v528
        %v1138 = vunpack.c.l.b16 %v529
        %v1139 = vunpack.c.h.b16 %v529
        %v1140 = vunpack.c.l.b16 %v530
        %v1141 = vunpack.c.h.b16 %v530
        %v1142 = vunpack.c.l.b16 %v531
        %v1143 = vunpack.c.h.b16 %v531
        %v1144 = vunpack.c.l.b16 %v532
        %v1145 = vunpack.c.h.b16 %v532
        %v1146 = vunpack.c.l.b16 %v533
        %v1147 = vunpack.c.h.b16 %v533
        %v1148 = vunpack.c.l.b16 %v534
        %v1149 = vunpack.c.h.b16 %v534
        %v1150 = vunpack.c.l.b16 %v535
        %v1151 = vunpack.c.h.b16 %v535
        %v1152 = vunpack.c.l.b16 %v536
        %v1153 = vunpack.c.h.b16 %v536
        %v1154 = vunpack.c.l.b16 %v537
        %v1155 = vunpack.c.h.b16 %v537
        %v1156 = vunpack.c.l.b16 %v538
        %v1157 = vunpack.c.h.b16 %v538
        %v1158 = vunpack.c.l.b16 %v539
        %v1159 = vunpack.c.h.b16 %v539
        %v1160 = vunpack.c.l.b16 %v540
        %v1161 = vunpack.c.h.b16 %v540
        %v1162 = vunpack.c.l.b16 %v541
        %v1163 = vunpack.c.h.b16 %v541
        %v1164 = vunpack.c.l.b16 %v542
        %v1165 = vunpack.c.h.b16 %v542
        %v1166 = vunpack.c.l.b16 %v543
        %v1167 = vunpack.c.h.b16 %v543
        %v1168 = vunpack.c.l.b16 %v544
        %v1169 = vunpack.c.h.b16 %v544
        %v1170 = vunpack.c.l.b16 %v545
        %v1171 = vunpack.c.h.b16 %v545
        %v1172 = vunpack.c.l.b16 %v546
        %v1173 = vunpack.c.h.b16 %v546
        %v1174 = vunpack.c.l.b16 %v547
        %v1175 = vunpack.c.h.b16 %v547
        %v1176 = vunpack.c.l.b16 %v548
        %v1177 = vunpack.c.h.b16 %v548
        %v1178 = vunpack.c.l.b16 %v549
        %v1179 = vunpack.c.h.b16 %v549
        %v1180 = vunpack.c.l.b16 %v550
        %v1181 = vunpack.c.h.b16 %v550
        %v1182 = vunpack.c.l.b16 %v551
        %v1183 = vunpack.c.h.b16 %v551
        %v1184 = vunpack.c.l.b16 %v552
        %v1185 = vunpack.c.h.b16 %v552
        %v1186 = vunpack.c.l.b16 %v553
        %v1187 = vunpack.c.h.b16 %v553
        %v1188 = vunpack.c.l.b16 %v554
        %v1189 = vunpack.c.h.b16 %v554
        %v1190 = vunpack.c.l.b16 %v555
        %v1191 = vunpack.c.h.b16 %v555
        %v1192 = vunpack.c.l.b16 %v556
        %v1193 = vunpack.c.h.b16 %v556
        %v1194 = vunpack.c.l.b16 %v557
        %v1195 = vunpack.c.h.b16 %v557
        %v1196 = vunpack.c.l.b16 %v558
        %v1197 = vunpack.c.h.b16 %v558
        %v1198 = vunpack.c.l.b16 %v559
        %v1199 = vunpack.c.h.b16 %v559
        %v1200 = vunpack.c.l.b16 %v560
        %v1201 = vunpack.c.h.b16 %v560
        %v1202 = vunpack.c.l.b16 %v561
        %v1203 = vunpack.c.h.b16 %v561
        %v1204 = vunpack.c.l.b16 %v562
        %v1205 = vunpack.c.h.b16 %v562
        %v1206 = vunpack.c.l.b16 %v563
        %v1207 = vunpack.c.h.b16 %v563
        %v1208 = vunpack.c.l.b16 %v564
        %v1209 = vunpack.c.h.b16 %v564
        %v1210 = vunpack.c.l.b16 %v565
        %v1211 = vunpack.c.h.b16 %v565
        %v1212 = vunpack.c.l.b16 %v566
        %v1213 = vunpack.c.h.b16 %v566
        %v1214 = vunpack.c.l.b16 %v567
        %v1215 = vunpack.c.h.b16 %v567
        %v1216 = vunpack.c.l.b16 %v568
        %v1217 = vunpack.c.h.b16 %v568
        %v1218 = vunpack.c.l.b16 %v569
        %v1219 = vunpack.c.h.b16 %v569
        %v1220 = vunpack.c.l.b16 %v570
        %v1221 = vunpack.c.h.b16 %v570
        %v1222 = vunpack.c.l.b16 %v571
        %v1223 = vunpack.c.h.b16 %v571
        %v1224 = vunpack.c.l.b16 %v572
        %v1225 = vunpack.c.h.b16 %v572
        %v1226 = vunpack.c.l.b16 %v573
        %v1227 = vunpack.c.h.b16 %v573
        %v1228 = vunpack.c.l.b16 %v574
        %v1229 = vunpack.c.h.b16 %v574
        %v1230 = vunpack.c.l.b16 %v575
        %v1231 = vunpack.c.h.b16 %v575
        %v1232 = vunpack.c.l.b16 %v576
        %v1233 = vunpack.c.h.b16 %v576
        %v1234 = vunpack.c.l.b16 %v577
        %v1235 = vunpack.c.h.b16 %v577
        %v1236 = vunpack.c.l.b16 %v578
        %v1237 = vunpack.c.h.b16 %v578
        %v1238 = vunpack.c.l.b16 %v579
        %v1239 = vunpack.c.h.b16 %v579
        %v1240 = vunpack.c.l.b16 %v580
        %v1241 = vunpack.c.h.b16 %v580
        %v1242 = vunpack.c.l.b16 %v581
        %v1243 = vunpack.c.h.b16 %v581
        %v1244 = vunpack.c.l.b16 %v582
        %v1245 = vunpack.c.h.b16 %v582
        %v1246 = vunpack.c.l.b16 %v583
        %v1247 = vunpack.c.h.b16 %v583
        %v1248 = vunpack.c.l.b16 %v584
        %v1249 = vunpack.c.h.b16 %v584
        %v1250 = vunpack.c.l.b16 %v585
        %v1251 = vunpack.c.h.b16 %v585
        %v1252 = vunpack.c.l.b16 %v586
        %v1253 = vunpack.c.h.b16 %v586
        %v1254 = vunpack.c.l.b16 %v587
        %v1255 = vunpack.c.h.b16 %v587
        %v1256 = vunpack.c.l.b16 %v588
        %v1257 = vunpack.c.h.b16 %v588
        %v1258 = vunpack.c.l.b16 %v589
        %v1259 = vunpack.c.h.b16 %v589
        %v1260 = vunpack.c.l.b16 %v590
        %v1261 = vunpack.c.h.b16 %v590
        %v1262 = vunpack.c.l.b16 %v591
        %v1263 = vunpack.c.h.b16 %v591
        %v1264 = vunpack.c.l.b16 %v592
        %v1265 = vunpack.c.h.b16 %v592
        %v1266 = vunpack.c.l.b16 %v593
        %v1267 = vunpack.c.h.b16 %v593
        %v1268 = vunpack.c.l.b16 %v594
        %v1269 = vunpack.c.h.b16 %v594
        %v1270 = vunpack.c.l.b16 %v595
        %v1271 = vunpack.c.h.b16 %v595
        %v1272 = vunpack.c.l.b16 %v596
        %v1273 = vunpack.c.h.b16 %v596
        %v1274 = vunpack.c.l.b16 %v597
        %v1275 = vunpack.c.h.b16 %v597
        %v1276 = vunpack.c.l.b16 %v598
        %v1277 = vunpack.c.h.b16 %v598
        %v1278 = vunpack.c.l.b16 %v599
        %v1279 = vunpack.c.h.b16 %v599
        %v1280 = vunpack.c.l.b16 %v600
        %v1281 = vunpack.c.h.b16 %v600
        %v1282 = vunpack.c.l.b16 %v601
        %v1283 = vunpack.c.h.b16 %v601
        %v1284 = vunpack.c.l.b16 %v602
        %v1285 = vunpack.c.h.b16 %v602
        %v1286 = vunpack.c.l.b16 %v603
        %v1287 = vunpack.c.h.b16 %v603
        %v1288 = vunpack.c.l.b16 %v604
        %v1289 = vunpack.c.h.b16 %v604
        %v1290 = vunpack.c.l.b16 %v605
        %v1291 = vunpack.c.h.b16 %v605
        %v1292 = vunpack.c.l.b16 %v606
        %v1293 = vunpack.c.h.b16 %v606
        %v1294 = vunpack.c.l.b16 %v607
        %v1295 = vunpack.c.h.b16 %v607
        %v1296 = vunpack.c.l.b16 %v608
        %v1297 = vunpack.c.h.b16 %v608
        %v1298 = vunpack.c.l.b16 %v609
        %v1299 = vunpack.c.h.b16 %v609
        %v1300 = vunpack.c.l.b16 %v610
        %v1301 = vunpack.c.h.b16 %v610
        %v1302 = vunpack.c.l.b16 %v611
        %v1303 = vunpack.c.h.b16 %v611
        %v1304 = vunpack.c.l.b16 %v612
        %v1305 = vunpack.c.h.b16 %v612
        %v1306 = vunpack.c.l.b16 %v613
        %v1307 = vunpack.c.h.b16 %v613
        %v1308 = vunpack.c.l.b16 %v614
        %v1309 = vunpack.c.h.b16 %v614
        %v1310 = vunpack.c.l.b16 %v615
        %v1311 = vunpack.c.h.b16 %v615
        %v1312 = vunpack.c.l.b16 %v616
        %v1313 = vunpack.c.h.b16 %v616
        %v1314 = vunpack.c.l.b16 %v617
        %v1315 = vunpack.c.h.b16 %v617
        %v1316 = vunpack.c.l.b16 %v618
        %v1317 = vunpack.c.h.b16 %v618
        %v1318 = vunpack.c.l.b16 %v619
        %v1319 = vunpack.c.h.b16 %v619
        %v1320 = vunpack.c.l.b16 %v620
        %v1321 = vunpack.c.h.b16 %v620
        %v1322 = vunpack.c.l.b16 %v621
        %v1323 = vunpack.c.h.b16 %v621
        %v1324 = vunpack.c.l.b16 %v622
        %v1325 = vunpack.c.h.b16 %v622
        %v1326 = vunpack.c.l.b16 %v623
        %v1327 = vunpack.c.h.b16 %v623
        %v1328 = vpack.c.b16 %v1074, %v1072
        %v1329 = vpack.c.b16 %v1075, %v1073
        %v1330 = vpack.c.b16 %v1078, %v1076
        %v1331 = vpack.c.b16 %v1079, %v1077
        %v1332 = vpack.c.b16 %v1082, %v1080
        %v1333 = vpack.c.b16 %v1083, %v1081
        %v1334 = vpack.c.b16 %v1086, %v1084
        %v1335 = vpack.c.b16 %v1087, %v1085
        %v1336 = vpack.c.b16 %v1090, %v1088
        %v1337 = vpack.c.b16 %v1091, %v1089
        %v1338 = vpack.c.b16 %v1094, %v1092
        %v1339 = vpack.c.b16 %v1095, %v1093
        %v1340 = vpack.c.b16 %v1098, %v1096
        %v1341 = vpack.c.b16 %v1099, %v1097
        %v1342 = vpack.c.b16 %v1102, %v1100
        %v1343 = vpack.c.b16 %v1103, %v1101
        %v1344 = vpack.c.b16 %v1106, %v1104
        %v1345 = vpack.c.b16 %v1107, %v1105
        %v1346 = vpack.c.b16 %v1110, %v1108
        %v1347 = vpack.c.b16 %v1111, %v1109
        %v1348 = vpack.c.b16 %v1114, %v1112
        %v1349 = vpack.c.b16 %v1115, %v1113
        %v1350 = vpack.c.b16 %v1118, %v1116
        %v1351 = vpack.c.b16 %v1119, %v1117
        %v1352 = vpack.c.b16 %v1122, %v1120
        %v1353 = vpack.c.b16 %v1123, %v1121
        %v1354 = vpack.c.b16 %v1126, %v1124
        %v1355 = vpack.c.b16 %v1127, %v1125
        %v1356 = vpack.c.b16 %v1130, %v1128
        %v1357 = vpack.c.b16 %v1131, %v1129
        %v1358 = vpack.c.b16 %v1134, %v1132
        %v1359 = vpack.c.b16 %v1135, %v1133
        %v1360 = vpack.c.b16 %v1138, %v1136
        %v1361 = vpack.c.b16 %v1139, %v1137
        %v1362 = vpack.c.b16 %v1142, %v1140
        %v1363 = vpack.c.b16 %v1143, %v1141
        %v1364 = vpack.c.b16 %v1146, %v1144
        %v1365 = vpack.c.b16 %v1147, %v1145
        %v1366 = vpack.c.b16 %v1150, %v1148
        %v1367 = vpack.c.b16 %v1151, %v1149
        %v1368 = vpack.c.b16 %v1154, %v1152
        %v1369 = vpack.c.b16 %v1155, %v1153
        %v1370 = vpack.c.b16 %v1158, %v1156
        %v1371 = vpack.c.b16 %v1159, %v1157
        %v1372 = vpack.c.b16 %v1162, %v1160
        %v1373 = vpack.c.b16 %v1163, %v1161
        %v1374 = vpack.c.b16 %v1166, %v1164
        %v1375 = vpack.c.b16 %v1167, %v1165
        %v1376 = vpack.c.b16 %v1170, %v1168
        %v1377 = vpack.c.b16 %v1171, %v1169
        %v1378 = vpack.c.b16 %v1174, %v1172
        %v1379 = vpack.c.b16 %v1175, %v1173
        %v1380 = vpack.c.b16 %v1178, %v1176
        %v1381 = vpack.c.b16 %v1179, %v1177
        %v1382 = vpack.c.b16 %v1182, %v1180
        %v1383 = vpack.c.b16 %v1183, %v1181
        %v1384 = vpack.c.b16 %v1186, %v1184
        %v1385 = vpack.c.b16 %v1187, %v1185
        %v1386 = vpack.c.b16 %v1190, %v1188
        %v1387 = vpack.c.b16 %v1191, %v1189
        %v1388 = vpack.c.b16 %v1194, %v1192
        %v1389 = vpack.c.b16 %v1195, %v1193
        %v1390 = vpack.c.b16 %v1198, %v1196
        %v1391 = vpack.c.b16 %v1199, %v1197
        %v1392 = vpack.c.b16 %v1202, %v1200
        %v1393 = vpack.c.b16 %v1203, %v1201
        %v1394 = vpack.c.b16 %v1206, %v1204
        %v1395 = vpack.c.b16 %v1207, %v1205
        %v1396 = vpack.c.b16 %v1210, %v1208
        %v1397 = vpack.c.b16 %v1211, %v1209
        %v1398 = vpack.c.b16 %v1214, %v1212
        %v1399 = vpack.c.b16 %v1215, %v1213
        %v1400 = vpack.c.b16 %v1218, %v1216
        %v1401 = vpack.c.b16 %v1219, %v1217
        %v1402 = vpack.c.b16 %v1222, %v1220
        %v1403 = vpack.c.b16 %v1223, %v1221
        %v1404 = vpack.c.b16 %v1226, %v1224
        %v1405 = vpack.c.b16 %v1227, %v1225
        %v1406 = vpack.c.b16 %v1230, %v1228
        %v1407 = vpack.c.b16 %v1231, %v1229
        %v1408 = vpack.c.b16 %v1234, %v1232
        %v1409 = vpack.c.b16 %v1235, %v1233
        %v1410 = vpack.c.b16 %v1238, %v1236
        %v1411 = vpack.c.b16 %v1239, %v1237
        %v1412 = vpack.c.b16 %v1242, %v1240
        %v1413 = vpack.c.b16 %v1243, %v1241
        %v1414 = vpack.c.b16 %v1246, %v1244
        %v1415 = vpack.c.b16 %v1247, %v1245
        %v1416 = vpack.c.b16 %v1250, %v1248
        %v1417 = vpack.c.b16 %v1251, %v1249
        %v1418 = vpack.c.b16 %v1254, %v1252
        %v1419 = vpack.c.b16 %v1255, %v1253
        %v1420 = vpack.c.b16 %v1258, %v1256
        %v1421 = vpack.c.b16 %v1259, %v1257
        %v1422 = vpack.c.b16 %v1262, %v1260
        %v1423 = vpack.c.b16 %v1263, %v1261
        %v1424 = vpack.c.b16 %v1266, %v1264
        %v1425 = vpack.c.b16 %v1267, %v1265
        %v1426 = vpack.c.b16 %v1270, %v1268
        %v1427 = vpack.c.b16 %v1271, %v1269
        %v1428 = vpack.c.b16 %v1274, %v1272
        %v1429 = vpack.c.b16 %v1275, %v1273
        %v1430 = vpack.c.b16 %v1278, %v1276
        %v1431 = vpack.c.b16 %v1279, %v1277
        %v1432 = vpack.c.b16 %v1282, %v1280
        %v1433 = vpack.c.b16 %v1283, %v1281
        %v1434 = vpack.c.b16 %v1286, %v1284
        %v1435 = vpack.c.b16 %v1287, %v1285
        %v1436 = vpack.c.b16 %v1290, %v1288
        %v1437 = vpack.c.b16 %v1291, %v1289
        %v1438 = vpack.c.b16 %v1294, %v1292
        %v1439 = vpack.c.b16 %v1295, %v1293
        %v1440 = vpack.c.b16 %v1298, %v1296
        %v1441 = vpack.c.b16 %v1299, %v1297
        %v1442 = vpack.c.b16 %v1302, %v1300
        %v1443 = vpack.c.b16 %v1303, %v1301
        %v1444 = vpack.c.b16 %v1306, %v1304
        %v1445 = vpack.c.b16 %v1307, %v1305
        %v1446 = vpack.c.b16 %v1310, %v1308
        %v1447 = vpack.c.b16 %v1311, %v1309
        %v1448 = vpack.c.b16 %v1314, %v1312
        %v1449 = vpack.c.b16 %v1315, %v1313
        %v1450 = vpack.c.b16 %v1318, %v1316
        %v1451 = vpack.c.b16 %v1319, %v1317
        %v1452 = vpack.c.b16 %v1322, %v1320
        %v1453 = vpack.c.b16 %v1323, %v1321
        %v1454 = vpack.c.b16 %v1326, %v1324
        %v1455 = vpack.c.b16 %v1327, %v1325
        %1584 = vmatprep.subr.bf16.mxu0 %v1329
        %1585 = vmatpush1.bf16.msra.mxu0 %v1328
        %1586 = vmatprep.subr.bf16.mxu0 %v1331
        %1587 = vmatpush1.bf16.msra.mxu0 %v1330
        %1588 = vmatprep.subr.bf16.mxu0 %v1333
        %1589 = vmatpush1.bf16.msra.mxu0 %v1332
        %1590 = vmatprep.subr.bf16.mxu0 %v1335
        %1591 = vmatpush1.bf16.msra.mxu0 %v1334
        %1592 = vmatprep.subr.bf16.mxu0 %v1337
        %1593 = vmatpush1.bf16.msra.mxu0 %v1336
        %1594 = vmatprep.subr.bf16.mxu0 %v1339
        %1595 = vmatpush1.bf16.msra.mxu0 %v1338
        %1596 = vmatprep.subr.bf16.mxu0 %v1341
        %1597 = vmatpush1.bf16.msra.mxu0 %v1340
        %1598 = vmatprep.subr.bf16.mxu0 %v1343
        %1599 = vmatpush1.bf16.msra.mxu0 %v1342
        %1600 = vmatprep.subr.bf16.mxu0 %v1345
        %1601 = vmatpush1.bf16.msra.mxu0 %v1344
        %1602 = vmatprep.subr.bf16.mxu0 %v1347
        %1603 = vmatpush1.bf16.msra.mxu0 %v1346
        %1604 = vmatprep.subr.bf16.mxu0 %v1349
        %1605 = vmatpush1.bf16.msra.mxu0 %v1348
        %1606 = vmatprep.subr.bf16.mxu0 %v1351
        %1607 = vmatpush1.bf16.msra.mxu0 %v1350
        %1608 = vmatprep.subr.bf16.mxu0 %v1353
        %1609 = vmatpush1.bf16.msra.mxu0 %v1352
        %1610 = vmatprep.subr.bf16.mxu0 %v1355
        %1611 = vmatpush1.bf16.msra.mxu0 %v1354
        %1612 = vmatprep.subr.bf16.mxu0 %v1357
        %1613 = vmatpush1.bf16.msra.mxu0 %v1356
        %1614 = vmatprep.subr.bf16.mxu0 %v1359
        %1615 = vmatpush1.bf16.msra.mxu0 %v1358
        %1616 = vmatprep.mubr.bf16.mxu0 %v817
        %1617 = vmatmul.mubr.bf16.gmra.mrb[0].mxu0 %v816
        %v1618 = vpop.f32.mrb[0].mxu0
        %v1619 = vadd.f32 0.0, %v1618
        %v1620 = vpop.f32.mrb[0].mxu0
        %v1621 = vadd.f32 0.0, %v1620
        %v1622 = vpop.f32.mrb[0].mxu0
        %v1623 = vadd.f32 0.0, %v1622
        %v1624 = vpop.f32.mrb[0].mxu0
        %v1625 = vadd.f32 0.0, %v1624
        %1626 = vmatprep.mubr.bf16.mxu0 %v825
        %1627 = vmatmul.mubr.bf16.gmra.mrb[0].mxu0 %v824
        %v1628 = vpop.f32.mrb[0].mxu0
        %v1629 = vadd.f32 0.0, %v1628
        %v1630 = vpop.f32.mrb[0].mxu0
        %v1631 = vadd.f32 0.0, %v1630
        %v1632 = vpop.f32.mrb[0].mxu0
        %v1633 = vadd.f32 0.0, %v1632
        %v1634 = vpop.f32.mrb[0].mxu0
        %v1635 = vadd.f32 0.0, %v1634
        %1636 = vmatprep.mubr.bf16.mxu0 %v833
        %1637 = vmatmul.mubr.bf16.gmra.mrb[0].mxu0 %v832
        %v1638 = vpop.f32.mrb[0].mxu0
        %v1639 = vadd.f32 0.0, %v1638
        %v1640 = vpop.f32.mrb[0].mxu0
        %v1641 = vadd.f32 0.0, %v1640
        %v1642 = vpop.f32.mrb[0].mxu0
        %v1643 = vadd.f32 0.0, %v1642
        %v1644 = vpop.f32.mrb[0].mxu0
        %v1645 = vadd.f32 0.0, %v1644
        %1646 = vmatprep.mubr.bf16.mxu0 %v841
        %1647 = vmatmul.mubr.bf16.gmra.mrb[0].mxu0 %v840
        %v1648 = vpop.f32.mrb[0].mxu0
        %v1649 = vadd.f32 0.0, %v1648
        %v1650 = vpop.f32.mrb[0].mxu0
        %v1651 = vadd.f32 0.0, %v1650
        %v1652 = vpop.f32.mrb[0].mxu0
        %v1653 = vadd.f32 0.0, %v1652
        %v1654 = vpop.f32.mrb[0].mxu0
        %v1655 = vadd.f32 0.0, %v1654
        %1656 = vmatprep.mubr.bf16.mxu0 %v849
        %1657 = vmatmul.mubr.bf16.gmra.mrb[0].mxu0 %v848
        %v1658 = vpop.f32.mrb[0].mxu0
        %v1659 = vadd.f32 0.0, %v1658
        %v1660 = vpop.f32.mrb[0].mxu0
        %v1661 = vadd.f32 0.0, %v1660
        %v1662 = vpop.f32.mrb[0].mxu0
        %v1663 = vadd.f32 0.0, %v1662
        %v1664 = vpop.f32.mrb[0].mxu0
        %v1665 = vadd.f32 0.0, %v1664
        %1666 = vmatprep.mubr.bf16.mxu0 %v857
        %1667 = vmatmul.mubr.bf16.gmra.mrb[0].mxu0 %v856
        %v1668 = vpop.f32.mrb[0].mxu0
        %v1669 = vadd.f32 0.0, %v1668
        %v1670 = vpop.f32.mrb[0].mxu0
        %v1671 = vadd.f32 0.0, %v1670
        %v1672 = vpop.f32.mrb[0].mxu0
        %v1673 = vadd.f32 0.0, %v1672
        %v1674 = vpop.f32.mrb[0].mxu0
        %v1675 = vadd.f32 0.0, %v1674
        %1676 = vmatprep.mubr.bf16.mxu0 %v865
        %1677 = vmatmul.mubr.bf16.gmra.mrb[0].mxu0 %v864
        %v1678 = vpop.f32.mrb[0].mxu0
        %v1679 = vadd.f32 0.0, %v1678
        %v1680 = vpop.f32.mrb[0].mxu0
        %v1681 = vadd.f32 0.0, %v1680
        %v1682 = vpop.f32.mrb[0].mxu0
        %v1683 = vadd.f32 0.0, %v1682
        %v1684 = vpop.f32.mrb[0].mxu0
        %v1685 = vadd.f32 0.0, %v1684
        %1686 = vmatprep.mubr.bf16.mxu0 %v873
        %1687 = vmatmul.mubr.bf16.gmra.mrb[0].mxu0 %v872
        %v1688 = vpop.f32.mrb[0].mxu0
        %v1689 = vadd.f32 0.0, %v1688
        %v1690 = vpop.f32.mrb[0].mxu0
        %v1691 = vadd.f32 0.0, %v1690
        %v1692 = vpop.f32.mrb[0].mxu0
        %v1693 = vadd.f32 0.0, %v1692
        %v1694 = vpop.f32.mrb[0].mxu0
        %v1695 = vadd.f32 0.0, %v1694
        %1696 = vdwg.mxu0
        %1697 = vmatprep.subr.bf16.mxu0 %v1361
        %1698 = vmatpush1.bf16.msra.mxu0 %v1360
        %1699 = vmatprep.subr.bf16.mxu0 %v1363
        %1700 = vmatpush1.bf16.msra.mxu0 %v1362
        %1701 = vmatprep.subr.bf16.mxu0 %v1365
        %1702 = vmatpush1.bf16.msra.mxu0 %v1364
        %1703 = vmatprep.subr.bf16.mxu0 %v1367
        %1704 = vmatpush1.bf16.msra.mxu0 %v1366
        %1705 = vmatprep.subr.bf16.mxu0 %v1369
        %1706 = vmatpush1.bf16.msra.mxu0 %v1368
        %1707 = vmatprep.subr.bf16.mxu0 %v1371
        %1708 = vmatpush1.bf16.msra.mxu0 %v1370
        %1709 = vmatprep.subr.bf16.mxu0 %v1373
        %1710 = vmatpush1.bf16.msra.mxu0 %v1372
        %1711 = vmatprep.subr.bf16.mxu0 %v1375
        %1712 = vmatpush1.bf16.msra.mxu0 %v1374
        %1713 = vmatprep.subr.bf16.mxu0 %v1377
        %1714 = vmatpush1.bf16.msra.mxu0 %v1376
        %1715 = vmatprep.subr.bf16.mxu0 %v1379
        %1716 = vmatpush1.bf16.msra.mxu0 %v1378
        %1717 = vmatprep.subr.bf16.mxu0 %v1381
        %1718 = vmatpush1.bf16.msra.mxu0 %v1380
        %1719 = vmatprep.subr.bf16.mxu0 %v1383
        %1720 = vmatpush1.bf16.msra.mxu0 %v1382
        %1721 = vmatprep.subr.bf16.mxu0 %v1385
        %1722 = vmatpush1.bf16.msra.mxu0 %v1384
        %1723 = vmatprep.subr.bf16.mxu0 %v1387
        %1724 = vmatpush1.bf16.msra.mxu0 %v1386
        %1725 = vmatprep.subr.bf16.mxu0 %v1389
        %1726 = vmatpush1.bf16.msra.mxu0 %v1388
        %1727 = vmatprep.subr.bf16.mxu0 %v1391
        %1728 = vmatpush1.bf16.msra.mxu0 %v1390
        %1729 = vmatprep.mubr.bf16.mxu0 %v819
        %1730 = vmatmul.mubr.bf16.gmra.mrb[0].mxu0 %v818
        %v1731 = vpop.f32.mrb[0].mxu0
        %v1732 = vadd.f32 %v1619, %v1731
        %v1733 = vpop.f32.mrb[0].mxu0
        %v1734 = vadd.f32 %v1621, %v1733
        %v1735 = vpop.f32.mrb[0].mxu0
        %v1736 = vadd.f32 %v1623, %v1735
        %v1737 = vpop.f32.mrb[0].mxu0
        %v1738 = vadd.f32 %v1625, %v1737
        %1739 = vmatprep.mubr.bf16.mxu0 %v827
        %1740 = vmatmul.mubr.bf16.gmra.mrb[0].mxu0 %v826
        %v1741 = vpop.f32.mrb[0].mxu0
        %v1742 = vadd.f32 %v1629, %v1741
        %v1743 = vpop.f32.mrb[0].mxu0
        %v1744 = vadd.f32 %v1631, %v1743
        %v1745 = vpop.f32.mrb[0].mxu0
        %v1746 = vadd.f32 %v1633, %v1745
        %v1747 = vpop.f32.mrb[0].mxu0
        %v1748 = vadd.f32 %v1635, %v1747
        %1749 = vmatprep.mubr.bf16.mxu0 %v835
        %1750 = vmatmul.mubr.bf16.gmra.mrb[0].mxu0 %v834
        %v1751 = vpop.f32.mrb[0].mxu0
        %v1752 = vadd.f32 %v1639, %v1751
        %v1753 = vpop.f32.mrb[0].mxu0
        %v1754 = vadd.f32 %v1641, %v1753
        %v1755 = vpop.f32.mrb[0].mxu0
        %v1756 = vadd.f32 %v1643, %v1755
        %v1757 = vpop.f32.mrb[0].mxu0
        %v1758 = vadd.f32 %v1645, %v1757
        %1759 = vmatprep.mubr.bf16.mxu0 %v843
        %1760 = vmatmul.mubr.bf16.gmra.mrb[0].mxu0 %v842
        %v1761 = vpop.f32.mrb[0].mxu0
        %v1762 = vadd.f32 %v1649, %v1761
        %v1763 = vpop.f32.mrb[0].mxu0
        %v1764 = vadd.f32 %v1651, %v1763
        %v1765 = vpop.f32.mrb[0].mxu0
        %v1766 = vadd.f32 %v1653, %v1765
        %v1767 = vpop.f32.mrb[0].mxu0
        %v1768 = vadd.f32 %v1655, %v1767
        %1769 = vmatprep.mubr.bf16.mxu0 %v851
        %1770 = vmatmul.mubr.bf16.gmra.mrb[0].mxu0 %v850
        %v1771 = vpop.f32.mrb[0].mxu0
        %v1772 = vadd.f32 %v1659, %v1771
        %v1773 = vpop.f32.mrb[0].mxu0
        %v1774 = vadd.f32 %v1661, %v1773
        %v1775 = vpop.f32.mrb[0].mxu0
        %v1776 = vadd.f32 %v1663, %v1775
        %v1777 = vpop.f32.mrb[0].mxu0
        %v1778 = vadd.f32 %v1665, %v1777
        %1779 = vmatprep.mubr.bf16.mxu0 %v859
        %1780 = vmatmul.mubr.bf16.gmra.mrb[0].mxu0 %v858
        %v1781 = vpop.f32.mrb[0].mxu0
        %v1782 = vadd.f32 %v1669, %v1781
        %v1783 = vpop.f32.mrb[0].mxu0
        %v1784 = vadd.f32 %v1671, %v1783
        %v1785 = vpop.f32.mrb[0].mxu0
        %v1786 = vadd.f32 %v1673, %v1785
        %v1787 = vpop.f32.mrb[0].mxu0
        %v1788 = vadd.f32 %v1675, %v1787
        %1789 = vmatprep.mubr.bf16.mxu0 %v867
        %1790 = vmatmul.mubr.bf16.gmra.mrb[0].mxu0 %v866
        %v1791 = vpop.f32.mrb[0].mxu0
        %v1792 = vadd.f32 %v1679, %v1791
        %v1793 = vpop.f32.mrb[0].mxu0
        %v1794 = vadd.f32 %v1681, %v1793
        %v1795 = vpop.f32.mrb[0].mxu0
        %v1796 = vadd.f32 %v1683, %v1795
        %v1797 = vpop.f32.mrb[0].mxu0
        %v1798 = vadd.f32 %v1685, %v1797
        %1799 = vmatprep.mubr.bf16.mxu0 %v875
        %1800 = vmatmul.mubr.bf16.gmra.mrb[0].mxu0 %v874
        %v1801 = vpop.f32.mrb[0].mxu0
        %v1802 = vadd.f32 %v1689, %v1801
        %v1803 = vpop.f32.mrb[0].mxu0
        %v1804 = vadd.f32 %v1691, %v1803
        %v1805 = vpop.f32.mrb[0].mxu0
        %v1806 = vadd.f32 %v1693, %v1805
        %v1807 = vpop.f32.mrb[0].mxu0
        %v1808 = vadd.f32 %v1695, %v1807
        %1809 = vdwg.mxu0
        %1810 = vmatprep.subr.bf16.mxu0 %v1393
        %1811 = vmatpush1.bf16.msra.mxu0 %v1392
        %1812 = vmatprep.subr.bf16.mxu0 %v1395
        %1813 = vmatpush1.bf16.msra.mxu0 %v1394
        %1814 = vmatprep.subr.bf16.mxu0 %v1397
        %1815 = vmatpush1.bf16.msra.mxu0 %v1396
        %1816 = vmatprep.subr.bf16.mxu0 %v1399
        %1817 = vmatpush1.bf16.msra.mxu0 %v1398
        %1818 = vmatprep.subr.bf16.mxu0 %v1401
        %1819 = vmatpush1.bf16.msra.mxu0 %v1400
        %1820 = vmatprep.subr.bf16.mxu0 %v1403
        %1821 = vmatpush1.bf16.msra.mxu0 %v1402
        %1822 = vmatprep.subr.bf16.mxu0 %v1405
        %1823 = vmatpush1.bf16.msra.mxu0 %v1404
        %1824 = vmatprep.subr.bf16.mxu0 %v1407
        %1825 = vmatpush1.bf16.msra.mxu0 %v1406
        %1826 = vmatprep.subr.bf16.mxu0 %v1409
        %1827 = vmatpush1.bf16.msra.mxu0 %v1408
        %1828 = vmatprep.subr.bf16.mxu0 %v1411
        %1829 = vmatpush1.bf16.msra.mxu0 %v1410
        %1830 = vmatprep.subr.bf16.mxu0 %v1413
        %1831 = vmatpush1.bf16.msra.mxu0 %v1412
        %1832 = vmatprep.subr.bf16.mxu0 %v1415
        %1833 = vmatpush1.bf16.msra.mxu0 %v1414
        %1834 = vmatprep.subr.bf16.mxu0 %v1417
        %1835 = vmatpush1.bf16.msra.mxu0 %v1416
        %1836 = vmatprep.subr.bf16.mxu0 %v1419
        %1837 = vmatpush1.bf16.msra.mxu0 %v1418
        %1838 = vmatprep.subr.bf16.mxu0 %v1421
        %1839 = vmatpush1.bf16.msra.mxu0 %v1420
        %1840 = vmatprep.subr.bf16.mxu0 %v1423
        %1841 = vmatpush1.bf16.msra.mxu0 %v1422
        %1842 = vmatprep.mubr.bf16.mxu0 %v821
        %1843 = vmatmul.mubr.bf16.gmra.mrb[0].mxu0 %v820
        %v1844 = vpop.f32.mrb[0].mxu0
        %v1845 = vadd.f32 %v1732, %v1844
        %v1846 = vpop.f32.mrb[0].mxu0
        %v1847 = vadd.f32 %v1734, %v1846
        %v1848 = vpop.f32.mrb[0].mxu0
        %v1849 = vadd.f32 %v1736, %v1848
        %v1850 = vpop.f32.mrb[0].mxu0
        %v1851 = vadd.f32 %v1738, %v1850
        %1852 = vmatprep.mubr.bf16.mxu0 %v829
        %1853 = vmatmul.mubr.bf16.gmra.mrb[0].mxu0 %v828
        %v1854 = vpop.f32.mrb[0].mxu0
        %v1855 = vadd.f32 %v1742, %v1854
        %v1856 = vpop.f32.mrb[0].mxu0
        %v1857 = vadd.f32 %v1744, %v1856
        %v1858 = vpop.f32.mrb[0].mxu0
        %v1859 = vadd.f32 %v1746, %v1858
        %v1860 = vpop.f32.mrb[0].mxu0
        %v1861 = vadd.f32 %v1748, %v1860
        %1862 = vmatprep.mubr.bf16.mxu0 %v837
        %1863 = vmatmul.mubr.bf16.gmra.mrb[0].mxu0 %v836
        %v1864 = vpop.f32.mrb[0].mxu0
        %v1865 = vadd.f32 %v1752, %v1864
        %v1866 = vpop.f32.mrb[0].mxu0
        %v1867 = vadd.f32 %v1754, %v1866
        %v1868 = vpop.f32.mrb[0].mxu0
        %v1869 = vadd.f32 %v1756, %v1868
        %v1870 = vpop.f32.mrb[0].mxu0
        %v1871 = vadd.f32 %v1758, %v1870
        %1872 = vmatprep.mubr.bf16.mxu0 %v845
        %1873 = vmatmul.mubr.bf16.gmra.mrb[0].mxu0 %v844
        %v1874 = vpop.f32.mrb[0].mxu0
        %v1875 = vadd.f32 %v1762, %v1874
        %v1876 = vpop.f32.mrb[0].mxu0
        %v1877 = vadd.f32 %v1764, %v1876
        %v1878 = vpop.f32.mrb[0].mxu0
        %v1879 = vadd.f32 %v1766, %v1878
        %v1880 = vpop.f32.mrb[0].mxu0
        %v1881 = vadd.f32 %v1768, %v1880
        %1882 = vmatprep.mubr.bf16.mxu0 %v853
        %1883 = vmatmul.mubr.bf16.gmra.mrb[0].mxu0 %v852
        %v1884 = vpop.f32.mrb[0].mxu0
        %v1885 = vadd.f32 %v1772, %v1884
        %v1886 = vpop.f32.mrb[0].mxu0
        %v1887 = vadd.f32 %v1774, %v1886
        %v1888 = vpop.f32.mrb[0].mxu0
        %v1889 = vadd.f32 %v1776, %v1888
        %v1890 = vpop.f32.mrb[0].mxu0
        %v1891 = vadd.f32 %v1778, %v1890
        %1892 = vmatprep.mubr.bf16.mxu0 %v861
        %1893 = vmatmul.mubr.bf16.gmra.mrb[0].mxu0 %v860
        %v1894 = vpop.f32.mrb[0].mxu0
        %v1895 = vadd.f32 %v1782, %v1894
        %v1896 = vpop.f32.mrb[0].mxu0
        %v1897 = vadd.f32 %v1784, %v1896
        %v1898 = vpop.f32.mrb[0].mxu0
        %v1899 = vadd.f32 %v1786, %v1898
        %v1900 = vpop.f32.mrb[0].mxu0
        %v1901 = vadd.f32 %v1788, %v1900
        %1902 = vmatprep.mubr.bf16.mxu0 %v869
        %1903 = vmatmul.mubr.bf16.gmra.mrb[0].mxu0 %v868
        %v1904 = vpop.f32.mrb[0].mxu0
        %v1905 = vadd.f32 %v1792, %v1904
        %v1906 = vpop.f32.mrb[0].mxu0
        %v1907 = vadd.f32 %v1794, %v1906
        %v1908 = vpop.f32.mrb[0].mxu0
        %v1909 = vadd.f32 %v1796, %v1908
        %v1910 = vpop.f32.mrb[0].mxu0
        %v1911 = vadd.f32 %v1798, %v1910
        %1912 = vmatprep.mubr.bf16.mxu0 %v877
        %1913 = vmatmul.mubr.bf16.gmra.mrb[0].mxu0 %v876
        %v1914 = vpop.f32.mrb[0].mxu0
        %v1915 = vadd.f32 %v1802, %v1914
        %v1916 = vpop.f32.mrb[0].mxu0
        %v1917 = vadd.f32 %v1804, %v1916
        %v1918 = vpop.f32.mrb[0].mxu0
        %v1919 = vadd.f32 %v1806, %v1918
        %v1920 = vpop.f32.mrb[0].mxu0
        %v1921 = vadd.f32 %v1808, %v1920
        %1922 = vdwg.mxu0
        %1923 = vmatprep.subr.bf16.mxu0 %v1425
        %1924 = vmatpush1.bf16.msra.mxu0 %v1424
        %1925 = vmatprep.subr.bf16.mxu0 %v1427
        %1926 = vmatpush1.bf16.msra.mxu0 %v1426
        %1927 = vmatprep.subr.bf16.mxu0 %v1429
        %1928 = vmatpush1.bf16.msra.mxu0 %v1428
        %1929 = vmatprep.subr.bf16.mxu0 %v1431
        %1930 = vmatpush1.bf16.msra.mxu0 %v1430
        %1931 = vmatprep.subr.bf16.mxu0 %v1433
        %1932 = vmatpush1.bf16.msra.mxu0 %v1432
        %1933 = vmatprep.subr.bf16.mxu0 %v1435
        %1934 = vmatpush1.bf16.msra.mxu0 %v1434
        %1935 = vmatprep.subr.bf16.mxu0 %v1437
        %1936 = vmatpush1.bf16.msra.mxu0 %v1436
        %1937 = vmatprep.subr.bf16.mxu0 %v1439
        %1938 = vmatpush1.bf16.msra.mxu0 %v1438
        %1939 = vmatprep.subr.bf16.mxu0 %v1441
        %1940 = vmatpush1.bf16.msra.mxu0 %v1440
        %1941 = vmatprep.subr.bf16.mxu0 %v1443
        %1942 = vmatpush1.bf16.msra.mxu0 %v1442
        %1943 = vmatprep.subr.bf16.mxu0 %v1445
        %1944 = vmatpush1.bf16.msra.mxu0 %v1444
        %1945 = vmatprep.subr.bf16.mxu0 %v1447
        %1946 = vmatpush1.bf16.msra.mxu0 %v1446
        %1947 = vmatprep.subr.bf16.mxu0 %v1449
        %1948 = vmatpush1.bf16.msra.mxu0 %v1448
        %1949 = vmatprep.subr.bf16.mxu0 %v1451
        %1950 = vmatpush1.bf16.msra.mxu0 %v1450
        %1951 = vmatprep.subr.bf16.mxu0 %v1453
        %1952 = vmatpush1.bf16.msra.mxu0 %v1452
        %1953 = vmatprep.subr.bf16.mxu0 %v1455
        %1954 = vmatpush1.bf16.msra.mxu0 %v1454
        %1955 = vmatprep.mubr.bf16.mxu0 %v823
        %1956 = vmatmul.mubr.bf16.gmra.mrb[0].mxu0 %v822
        %v1957 = vpop.f32.mrb[0].mxu0
        %v1958 = vadd.f32 %v1845, %v1957
        %v1959 = vpop.f32.mrb[0].mxu0
        %v1960 = vadd.f32 %v1847, %v1959
        %v1961 = vpop.f32.mrb[0].mxu0
        %v1962 = vadd.f32 %v1849, %v1961
        %v1963 = vpop.f32.mrb[0].mxu0
        %v1964 = vadd.f32 %v1851, %v1963
        %1965 = vmatprep.mubr.bf16.mxu0 %v831
        %1966 = vmatmul.mubr.bf16.gmra.mrb[0].mxu0 %v830
        %v1967 = vpop.f32.mrb[0].mxu0
        %v1968 = vadd.f32 %v1855, %v1967
        %v1969 = vpop.f32.mrb[0].mxu0
        %v1970 = vadd.f32 %v1857, %v1969
        %v1971 = vpop.f32.mrb[0].mxu0
        %v1972 = vadd.f32 %v1859, %v1971
        %v1973 = vpop.f32.mrb[0].mxu0
        %v1974 = vadd.f32 %v1861, %v1973
        %1975 = vmatprep.mubr.bf16.mxu0 %v839
        %1976 = vmatmul.mubr.bf16.gmra.mrb[0].mxu0 %v838
        %v1977 = vpop.f32.mrb[0].mxu0
        %v1978 = vadd.f32 %v1865, %v1977
        %v1979 = vpop.f32.mrb[0].mxu0
        %v1980 = vadd.f32 %v1867, %v1979
        %v1981 = vpop.f32.mrb[0].mxu0
        %v1982 = vadd.f32 %v1869, %v1981
        %v1983 = vpop.f32.mrb[0].mxu0
        %v1984 = vadd.f32 %v1871, %v1983
        %1985 = vmatprep.mubr.bf16.mxu0 %v847
        %1986 = vmatmul.mubr.bf16.gmra.mrb[0].mxu0 %v846
        %v1987 = vpop.f32.mrb[0].mxu0
        %v1988 = vadd.f32 %v1875, %v1987
        %v1989 = vpop.f32.mrb[0].mxu0
        %v1990 = vadd.f32 %v1877, %v1989
        %v1991 = vpop.f32.mrb[0].mxu0
        %v1992 = vadd.f32 %v1879, %v1991
        %v1993 = vpop.f32.mrb[0].mxu0
        %v1994 = vadd.f32 %v1881, %v1993
        %1995 = vmatprep.mubr.bf16.mxu0 %v855
        %1996 = vmatmul.mubr.bf16.gmra.mrb[0].mxu0 %v854
        %v1997 = vpop.f32.mrb[0].mxu0
        %v1998 = vadd.f32 %v1885, %v1997
        %v1999 = vpop.f32.mrb[0].mxu0
        %v2000 = vadd.f32 %v1887, %v1999
        %v2001 = vpop.f32.mrb[0].mxu0
        %v2002 = vadd.f32 %v1889, %v2001
        %v2003 = vpop.f32.mrb[0].mxu0
        %v2004 = vadd.f32 %v1891, %v2003
        %2005 = vmatprep.mubr.bf16.mxu0 %v863
        %2006 = vmatmul.mubr.bf16.gmra.mrb[0].mxu0 %v862
        %v2007 = vpop.f32.mrb[0].mxu0
        %v2008 = vadd.f32 %v1895, %v2007
        %v2009 = vpop.f32.mrb[0].mxu0
        %v2010 = vadd.f32 %v1897, %v2009
        %v2011 = vpop.f32.mrb[0].mxu0
        %v2012 = vadd.f32 %v1899, %v2011
        %v2013 = vpop.f32.mrb[0].mxu0
        %v2014 = vadd.f32 %v1901, %v2013
        %2015 = vmatprep.mubr.bf16.mxu0 %v871
        %2016 = vmatmul.mubr.bf16.gmra.mrb[0].mxu0 %v870
        %v2017 = vpop.f32.mrb[0].mxu0
        %v2018 = vadd.f32 %v1905, %v2017
        %v2019 = vpop.f32.mrb[0].mxu0
        %v2020 = vadd.f32 %v1907, %v2019
        %v2021 = vpop.f32.mrb[0].mxu0
        %v2022 = vadd.f32 %v1909, %v2021
        %v2023 = vpop.f32.mrb[0].mxu0
        %v2024 = vadd.f32 %v1911, %v2023
        %2025 = vmatprep.mubr.bf16.mxu0 %v879
        %2026 = vmatmul.mubr.bf16.gmra.mrb[0].mxu0 %v878
        %v2027 = vpop.f32.mrb[0].mxu0
        %v2028 = vadd.f32 %v1915, %v2027
        %v2029 = vpop.f32.mrb[0].mxu0
        %v2030 = vadd.f32 %v1917, %v2029
        %v2031 = vpop.f32.mrb[0].mxu0
        %v2032 = vadd.f32 %v1919, %v2031
        %v2033 = vpop.f32.mrb[0].mxu0
        %v2034 = vadd.f32 %v1921, %v2033
        %2035 = vdwg.mxu0
        %v2036 = vadd.f32 %v400, %v1958
        %v2037 = vadd.f32 %v401, %v1960
        %v2038 = vadd.f32 %v402, %v1962
        %v2039 = vadd.f32 %v403, %v1964
        %v2040 = vadd.f32 %v404, %v1968
        %v2041 = vadd.f32 %v405, %v1970
        %v2042 = vadd.f32 %v406, %v1972
        %v2043 = vadd.f32 %v407, %v1974
        %v2044 = vadd.f32 %v408, %v1978
        %v2045 = vadd.f32 %v409, %v1980
        %v2046 = vadd.f32 %v410, %v1982
        %v2047 = vadd.f32 %v411, %v1984
        %v2048 = vadd.f32 %v412, %v1988
        %v2049 = vadd.f32 %v413, %v1990
        %v2050 = vadd.f32 %v414, %v1992
        %v2051 = vadd.f32 %v415, %v1994
        %v2052 = vadd.f32 %v416, %v1998
        %v2053 = vadd.f32 %v417, %v2000
        %v2054 = vadd.f32 %v418, %v2002
        %v2055 = vadd.f32 %v419, %v2004
        %v2056 = vadd.f32 %v420, %v2008
        %v2057 = vadd.f32 %v421, %v2010
        %v2058 = vadd.f32 %v422, %v2012
        %v2059 = vadd.f32 %v423, %v2014
        %v2060 = vadd.f32 %v424, %v2018
        %v2061 = vadd.f32 %v425, %v2020
        %v2062 = vadd.f32 %v426, %v2022
        %v2063 = vadd.f32 %v427, %v2024
        %v2064 = vadd.f32 %v428, %v2028
        %v2065 = vadd.f32 %v429, %v2030
        %v2066 = vadd.f32 %v430, %v2032
        %v2067 = vadd.f32 %v431, %v2034
        %2068 = vst [vmem:[#allocation2] sm:$0xff] %v2036
        %2069 = vst [vmem:[#allocation2 + $0x8] sm:$0xff] %v2037
        %2070 = vst [vmem:[#allocation2 + $0x10] sm:$0xff] %v2038
        %2071 = vst [vmem:[#allocation2 + $0x18] sm:$0xff] %v2039
        %2072 = vst [vmem:[#allocation2 + $0x20] sm:$0xff] %v2040
        %2073 = vst [vmem:[#allocation2 + $0x28] sm:$0xff] %v2041
        %2074 = vst [vmem:[#allocation2 + $0x30] sm:$0xff] %v2042
        %2075 = vst [vmem:[#allocation2 + $0x38] sm:$0xff] %v2043
        %2076 = vst [vmem:[#allocation2 + $0x40] sm:$0xff] %v2044
        %2077 = vst [vmem:[#allocation2 + $0x48] sm:$0xff] %v2045
        %2078 = vst [vmem:[#allocation2 + $0x50] sm:$0xff] %v2046
        %2079 = vst [vmem:[#allocation2 + $0x58] sm:$0xff] %v2047
        %2080 = vst [vmem:[#allocation2 + $0x60] sm:$0xff] %v2048
        %2081 = vst [vmem:[#allocation2 + $0x68] sm:$0xff] %v2049
        %2082 = vst [vmem:[#allocation2 + $0x70] sm:$0xff] %v2050
        %2083 = vst [vmem:[#allocation2 + $0x78] sm:$0xff] %v2051
        %2084 = vst [vmem:[#allocation2 + $0x80] sm:$0xff] %v2052
        %2085 = vst [vmem:[#allocation2 + $0x88] sm:$0xff] %v2053
        %2086 = vst [vmem:[#allocation2 + $0x90] sm:$0xff] %v2054
        %2087 = vst [vmem:[#allocation2 + $0x98] sm:$0xff] %v2055
        %2088 = vst [vmem:[#allocation2 + $0xa0] sm:$0xff] %v2056
        %2089 = vst [vmem:[#allocation2 + $0xa8] sm:$0xff] %v2057
        %2090 = vst [vmem:[#allocation2 + $0xb0] sm:$0xff] %v2058
        %2091 = vst [vmem:[#allocation2 + $0xb8] sm:$0xff] %v2059
        %2092 = vst [vmem:[#allocation2 + $0xc0] sm:$0xff] %v2060
        %2093 = vst [vmem:[#allocation2 + $0xc8] sm:$0xff] %v2061
        %2094 = vst [vmem:[#allocation2 + $0xd0] sm:$0xff] %v2062
        %2095 = vst [vmem:[#allocation2 + $0xd8] sm:$0xff] %v2063
        %2096 = vst [vmem:[#allocation2 + $0xe0] sm:$0xff] %v2064
        %2097 = vst [vmem:[#allocation2 + $0xe8] sm:$0xff] %v2065
        %2098 = vst [vmem:[#allocation2 + $0xf0] sm:$0xff] %v2066
        %2099 = vst [vmem:[#allocation2 + $0xf8] sm:$0xff] %v2067
        %p2100 = scmp.eq.s32.totalorder %s19, 1
        // Predicated region
        $region60: #{discriminator_forward.7} parent=50 // pred_check
          %p2101 = pneg %p2100
        $region61: #{discriminator_forward.7} parent=50 // pred_check_branch
          %2103 = sbr.rel (%p2101) target = $region63
        $region62: #{discriminator_forward.7} parent=50 // pred_region
          %v2104 = vld [vmem:[#allocation2] sm:$0xff]
          %v2105 = vld [vmem:[#allocation2 + $0x8] sm:$0xff]
          %v2106 = vld [vmem:[#allocation2 + $0x10] sm:$0xff]
          %v2107 = vld [vmem:[#allocation2 + $0x18] sm:$0xff]
          %v2108 = vld [vmem:[#allocation2 + $0x20] sm:$0xff]
          %v2109 = vld [vmem:[#allocation2 + $0x28] sm:$0xff]
          %v2110 = vld [vmem:[#allocation2 + $0x30] sm:$0xff]
          %v2111 = vld [vmem:[#allocation2 + $0x38] sm:$0xff]
          %v2112 = vld [vmem:[#allocation2 + $0x40] sm:$0xff]
          %v2113 = vld [vmem:[#allocation2 + $0x48] sm:$0xff]
          %v2114 = vld [vmem:[#allocation2 + $0x50] sm:$0xff]
          %v2115 = vld [vmem:[#allocation2 + $0x58] sm:$0xff]
          %v2116 = vld [vmem:[#allocation2 + $0x60] sm:$0xff]
          %v2117 = vld [vmem:[#allocation2 + $0x68] sm:$0xff]
          %v2118 = vld [vmem:[#allocation2 + $0x70] sm:$0xff]
          %v2119 = vld [vmem:[#allocation2 + $0x78] sm:$0xff]
          %v2120 = vld [vmem:[#allocation2 + $0x80] sm:$0xff]
          %v2121 = vld [vmem:[#allocation2 + $0x88] sm:$0xff]
          %v2122 = vld [vmem:[#allocation2 + $0x90] sm:$0xff]
          %v2123 = vld [vmem:[#allocation2 + $0x98] sm:$0xff]
          %v2124 = vld [vmem:[#allocation2 + $0xa0] sm:$0xff]
          %v2125 = vld [vmem:[#allocation2 + $0xa8] sm:$0xff]
          %v2126 = vld [vmem:[#allocation2 + $0xb0] sm:$0xff]
          %v2127 = vld [vmem:[#allocation2 + $0xb8] sm:$0xff]
          %v2128 = vld [vmem:[#allocation2 + $0xc0] sm:$0xff]
          %v2129 = vld [vmem:[#allocation2 + $0xc8] sm:$0xff]
          %v2130 = vld [vmem:[#allocation2 + $0xd0] sm:$0xff]
          %v2131 = vld [vmem:[#allocation2 + $0xd8] sm:$0xff]
          %v2132 = vld [vmem:[#allocation2 + $0xe0] sm:$0xff]
          %v2133 = vld [vmem:[#allocation2 + $0xe8] sm:$0xff]
          %v2134 = vld [vmem:[#allocation2 + $0xf0] sm:$0xff]
          %v2135 = vld [vmem:[#allocation2 + $0xf8] sm:$0xff]
          %v2136 = vld [vmem:[%s2] sm:$0x3]
          %v2138 = vlaneseq
          %v2139 = vshrl.u32 %v2138, 7
          %v2140 = vsub.s32 0, %v2139
          %v2141 = vrot.slane %v2136, %v2140
          %v2142 = vlaneseq
          %v2143 = vshrl.u32 %v2142, 7
          %v2144 = vsub.s32 1, %v2143
          %v2145 = vrot.slane %v2136, %v2144
          %v2148 = vadd.f32 %v2104, %v2141
          %v2149 = vadd.f32 %v2105, %v2145
          %v2150 = vadd.f32 %v2106, %v2141
          %v2151 = vadd.f32 %v2107, %v2145
          %v2152 = vadd.f32 %v2108, %v2141
          %v2153 = vadd.f32 %v2109, %v2145
          %v2154 = vadd.f32 %v2110, %v2141
          %v2155 = vadd.f32 %v2111, %v2145
          %v2156 = vadd.f32 %v2112, %v2141
          %v2157 = vadd.f32 %v2113, %v2145
          %v2158 = vadd.f32 %v2114, %v2141
          %v2159 = vadd.f32 %v2115, %v2145
          %v2160 = vadd.f32 %v2116, %v2141
          %v2161 = vadd.f32 %v2117, %v2145
          %v2162 = vadd.f32 %v2118, %v2141
          %v2163 = vadd.f32 %v2119, %v2145
          %v2164 = vadd.f32 %v2120, %v2141
          %v2165 = vadd.f32 %v2121, %v2145
          %v2166 = vadd.f32 %v2122, %v2141
          %v2167 = vadd.f32 %v2123, %v2145
          %v2168 = vadd.f32 %v2124, %v2141
          %v2169 = vadd.f32 %v2125, %v2145
          %v2170 = vadd.f32 %v2126, %v2141
          %v2171 = vadd.f32 %v2127, %v2145
          %v2172 = vadd.f32 %v2128, %v2141
          %v2173 = vadd.f32 %v2129, %v2145
          %v2174 = vadd.f32 %v2130, %v2141
          %v2175 = vadd.f32 %v2131, %v2145
          %v2176 = vadd.f32 %v2132, %v2141
          %v2177 = vadd.f32 %v2133, %v2145
          %v2178 = vadd.f32 %v2134, %v2141
          %v2179 = vadd.f32 %v2135, %v2145
          %vm2180 = vcmp.gt.f32.partialorder %v2148, 0.0
          %vm2181 = vcmp.gt.f32.partialorder %v2149, 0.0
          %vm2182 = vcmp.gt.f32.partialorder %v2150, 0.0
          %vm2183 = vcmp.gt.f32.partialorder %v2151, 0.0
          %vm2184 = vcmp.gt.f32.partialorder %v2152, 0.0
          %vm2185 = vcmp.gt.f32.partialorder %v2153, 0.0
          %vm2186 = vcmp.gt.f32.partialorder %v2154, 0.0
          %vm2187 = vcmp.gt.f32.partialorder %v2155, 0.0
          %vm2188 = vcmp.gt.f32.partialorder %v2156, 0.0
          %vm2189 = vcmp.gt.f32.partialorder %v2157, 0.0
          %vm2190 = vcmp.gt.f32.partialorder %v2158, 0.0
          %vm2191 = vcmp.gt.f32.partialorder %v2159, 0.0
          %vm2192 = vcmp.gt.f32.partialorder %v2160, 0.0
          %vm2193 = vcmp.gt.f32.partialorder %v2161, 0.0
          %vm2194 = vcmp.gt.f32.partialorder %v2162, 0.0
          %vm2195 = vcmp.gt.f32.partialorder %v2163, 0.0
          %vm2196 = vcmp.gt.f32.partialorder %v2164, 0.0
          %vm2197 = vcmp.gt.f32.partialorder %v2165, 0.0
          %vm2198 = vcmp.gt.f32.partialorder %v2166, 0.0
          %vm2199 = vcmp.gt.f32.partialorder %v2167, 0.0
          %vm2200 = vcmp.gt.f32.partialorder %v2168, 0.0
          %vm2201 = vcmp.gt.f32.partialorder %v2169, 0.0
          %vm2202 = vcmp.gt.f32.partialorder %v2170, 0.0
          %vm2203 = vcmp.gt.f32.partialorder %v2171, 0.0
          %vm2204 = vcmp.gt.f32.partialorder %v2172, 0.0
          %vm2205 = vcmp.gt.f32.partialorder %v2173, 0.0
          %vm2206 = vcmp.gt.f32.partialorder %v2174, 0.0
          %vm2207 = vcmp.gt.f32.partialorder %v2175, 0.0
          %vm2208 = vcmp.gt.f32.partialorder %v2176, 0.0
          %vm2209 = vcmp.gt.f32.partialorder %v2177, 0.0
          %vm2210 = vcmp.gt.f32.partialorder %v2178, 0.0
          %vm2211 = vcmp.gt.f32.partialorder %v2179, 0.0
          %v2212 = vmul.f32 %v2148, 0.2
          %v2213 = vmul.f32 %v2149, 0.2
          %v2214 = vmul.f32 %v2150, 0.2
          %v2215 = vmul.f32 %v2151, 0.2
          %v2216 = vmul.f32 %v2152, 0.2
          %v2217 = vmul.f32 %v2153, 0.2
          %v2218 = vmul.f32 %v2154, 0.2
          %v2219 = vmul.f32 %v2155, 0.2
          %v2220 = vmul.f32 %v2156, 0.2
          %v2221 = vmul.f32 %v2157, 0.2
          %v2222 = vmul.f32 %v2158, 0.2
          %v2223 = vmul.f32 %v2159, 0.2
          %v2224 = vmul.f32 %v2160, 0.2
          %v2225 = vmul.f32 %v2161, 0.2
          %v2226 = vmul.f32 %v2162, 0.2
          %v2227 = vmul.f32 %v2163, 0.2
          %v2228 = vmul.f32 %v2164, 0.2
          %v2229 = vmul.f32 %v2165, 0.2
          %v2230 = vmul.f32 %v2166, 0.2
          %v2231 = vmul.f32 %v2167, 0.2
          %v2232 = vmul.f32 %v2168, 0.2
          %v2233 = vmul.f32 %v2169, 0.2
          %v2234 = vmul.f32 %v2170, 0.2
          %v2235 = vmul.f32 %v2171, 0.2
          %v2236 = vmul.f32 %v2172, 0.2
          %v2237 = vmul.f32 %v2173, 0.2
          %v2238 = vmul.f32 %v2174, 0.2
          %v2239 = vmul.f32 %v2175, 0.2
          %v2240 = vmul.f32 %v2176, 0.2
          %v2241 = vmul.f32 %v2177, 0.2
          %v2242 = vmul.f32 %v2178, 0.2
          %v2243 = vmul.f32 %v2179, 0.2
          %v2244 = vsel %vm2180, %v2148, %v2212
          %v2245 = vsel %vm2181, %v2149, %v2213
          %v2246 = vsel %vm2182, %v2150, %v2214
          %v2247 = vsel %vm2183, %v2151, %v2215
          %v2248 = vsel %vm2184, %v2152, %v2216
          %v2249 = vsel %vm2185, %v2153, %v2217
          %v2250 = vsel %vm2186, %v2154, %v2218
          %v2251 = vsel %vm2187, %v2155, %v2219
          %v2252 = vsel %vm2188, %v2156, %v2220
          %v2253 = vsel %vm2189, %v2157, %v2221
          %v2254 = vsel %vm2190, %v2158, %v2222
          %v2255 = vsel %vm2191, %v2159, %v2223
          %v2256 = vsel %vm2192, %v2160, %v2224
          %v2257 = vsel %vm2193, %v2161, %v2225
          %v2258 = vsel %vm2194, %v2162, %v2226
          %v2259 = vsel %vm2195, %v2163, %v2227
          %v2260 = vsel %vm2196, %v2164, %v2228
          %v2261 = vsel %vm2197, %v2165, %v2229
          %v2262 = vsel %vm2198, %v2166, %v2230
          %v2263 = vsel %vm2199, %v2167, %v2231
          %v2264 = vsel %vm2200, %v2168, %v2232
          %v2265 = vsel %vm2201, %v2169, %v2233
          %v2266 = vsel %vm2202, %v2170, %v2234
          %v2267 = vsel %vm2203, %v2171, %v2235
          %v2268 = vsel %vm2204, %v2172, %v2236
          %v2269 = vsel %vm2205, %v2173, %v2237
          %v2270 = vsel %vm2206, %v2174, %v2238
          %v2271 = vsel %vm2207, %v2175, %v2239
          %v2272 = vsel %vm2208, %v2176, %v2240
          %v2273 = vsel %vm2209, %v2177, %v2241
          %v2274 = vsel %vm2210, %v2178, %v2242
          %v2275 = vsel %vm2211, %v2179, %v2243
          %2276 = vst [vmem:[%s362] sm:$0xff] %v2244
          %2277 = vst [vmem:[%s362 + $0x8] sm:$0xff] %v2245
          %2278 = vst [vmem:[%s362 + $0x10] sm:$0xff] %v2246
          %2279 = vst [vmem:[%s362 + $0x18] sm:$0xff] %v2247
          %2280 = vst [vmem:[%s362 + $0x20] sm:$0xff] %v2248
          %2281 = vst [vmem:[%s362 + $0x28] sm:$0xff] %v2249
          %2282 = vst [vmem:[%s362 + $0x30] sm:$0xff] %v2250
          %2283 = vst [vmem:[%s362 + $0x38] sm:$0xff] %v2251
          %2284 = vst [vmem:[%s362 + $0x40] sm:$0xff] %v2252
          %2285 = vst [vmem:[%s362 + $0x48] sm:$0xff] %v2253
          %2286 = vst [vmem:[%s362 + $0x50] sm:$0xff] %v2254
          %2287 = vst [vmem:[%s362 + $0x58] sm:$0xff] %v2255
          %2288 = vst [vmem:[%s362 + $0x60] sm:$0xff] %v2256
          %2289 = vst [vmem:[%s362 + $0x68] sm:$0xff] %v2257
          %2290 = vst [vmem:[%s362 + $0x70] sm:$0xff] %v2258
          %2291 = vst [vmem:[%s362 + $0x78] sm:$0xff] %v2259
          %2292 = vst [vmem:[%s362 + $0x80] sm:$0xff] %v2260
          %2293 = vst [vmem:[%s362 + $0x88] sm:$0xff] %v2261
          %2294 = vst [vmem:[%s362 + $0x90] sm:$0xff] %v2262
          %2295 = vst [vmem:[%s362 + $0x98] sm:$0xff] %v2263
          %2296 = vst [vmem:[%s362 + $0xa0] sm:$0xff] %v2264
          %2297 = vst [vmem:[%s362 + $0xa8] sm:$0xff] %v2265
          %2298 = vst [vmem:[%s362 + $0xb0] sm:$0xff] %v2266
          %2299 = vst [vmem:[%s362 + $0xb8] sm:$0xff] %v2267
          %2300 = vst [vmem:[%s362 + $0xc0] sm:$0xff] %v2268
          %2301 = vst [vmem:[%s362 + $0xc8] sm:$0xff] %v2269
          %2302 = vst [vmem:[%s362 + $0xd0] sm:$0xff] %v2270
          %2303 = vst [vmem:[%s362 + $0xd8] sm:$0xff] %v2271
          %2304 = vst [vmem:[%s362 + $0xe0] sm:$0xff] %v2272
          %2305 = vst [vmem:[%s362 + $0xe8] sm:$0xff] %v2273
          %2306 = vst [vmem:[%s362 + $0xf0] sm:$0xff] %v2274
          %2307 = vst [vmem:[%s362 + $0xf8] sm:$0xff] %v2275
        $region63: #{discriminator_forward.7} parent=50 // pred_fallthru
          _
        %s2308 = smul.u32 16, %s18
        %p2309 = scmp.lt.s32.totalorder %s2308, 15
        %s2310 = scalar_select %p2309, %s2308, 15
        %s2311 = smul.addr %s2310, 2
        %s2312 = smul.addr %s2311, 8
        %s2313 = scalar_lea.vmem %s3, %s2312
        // Predicated region
        $region64: #{discriminator_forward.7} parent=50 // pred_check
          %p2314 = pneg %p119
        $region65: #{discriminator_forward.7} parent=50 // pred_check_branch
          %2316 = sbr.rel (%p2314) target = $region67
        $region66: #{discriminator_forward.7} parent=50 // pred_region
          %s2317 = smul.u32 16, %s18
        $region67: #{discriminator_forward.7} parent=50 // pred_fallthru
          _
        // Predicated region
        $region68: #{discriminator_forward.7} parent=50 // pred_check
          %p2318 = pneg %p119
        $region69: #{discriminator_forward.7} parent=50 // pred_check_branch
          %2320 = sbr.rel (%p2318) target = $region71
        $region70: #{discriminator_forward.7} parent=50 // pred_region
          %s2321 = smul.u32 16, %s18
          %p2322 = scmp.lt.s32.totalorder %s2321, 15
          %s2323 = scalar_select %p2322, %s2321, 15
          %s2324 = smul.addr %s2323, 2
          %s2325 = smul.addr %s2324, 8
          %s2326 = scalar_lea.vmem %s3, %s2325
        $region71: #{discriminator_forward.7} parent=50 // pred_fallthru
          _
      $region51: #{discriminator_forward.7} parent=5 // pred_fallthru
        _
      %p2327 = scmp.le.s32.totalorder 2, %s9
      // Predicated region
      $region72: #{discriminator_forward.7} parent=5 // pred_check
        %p2328 = pneg %p2327
      $region73: #{discriminator_forward.7} parent=5 // pred_check_branch
        %2330 = sbr.rel (%p2328) target = $region75
      $region74: #{discriminator_forward.7} parent=5 // pred_region
        %s2331 = ssub.s32 %s9, 2
      $region75: #{discriminator_forward.7} parent=5 // pred_fallthru
        _
    $region6: #{discriminator_forward.7} parent=1 // loop_footer
      %s13 = sadd.s32 1, %s9
    $region7: #{discriminator_forward.7} parent=1 // loop_footer_branch
      %8 = sbr.rel target = $region3
    $region8: #{discriminator_forward.7} parent=1 // loop_exit
      _

// kernel: discriminator_forward.8
$region0: #{discriminator_forward.8}
  #allocation0 [shape = 'u32[]', space=smem, size = 0x4, offset = 0x4, fixed_abs, tag = 'smem constant byte address 0x4 - core index']
  #allocation1 [shape = 'u32[144,128]{1,0:T(1,128)}', space=vmem, size = 0x12000, scoped, tag = 'internal scratch']
  #allocation2 [shape = 'f32[32,512]{1,0:T(8,128)}', space=vmem, size = 0x10000, scoped, tag = 'scratch operand']
  %s0 = inlined_call_operand.vmem [shape: bf16[32,4096], index: 0, kind: input, shape index: {}]
  %s1 = inlined_call_operand.vmem [shape: bf16[4096,512], index: 1, kind: input, shape index: {}]
  %s2 = inlined_call_operand.vmem [shape: f32[1,512], index: 2, kind: input, shape index: {}]
  %s3 = inlined_call_operand.vmem [shape: f32[32,512], index: 3, kind: output, shape index: {}]
  %s4 = sld [smem:[#allocation0]]
  $region76: #{discriminator_forward.8} parent=0
    _
  %s6 = ssub.s32 1, %s4
  %s7 = scalar_select 0, %s6, %s4
  $region1: #{discriminator_forward.8} parent=0
    #allocation3 [shape = 'u8[131072]{0}', space=vmem, size = 0x20000, scoped, tag = 'input window, operand 0']
    loop: start=0, step=1, limit=6
    $region2: #{discriminator_forward.8} parent=1 // loop_pre_header
      _
    $region3: #{discriminator_forward.8} parent=1 // loop_header
      %s9 = sphi 0, %s13
      %p10 = scmp.ge.s32.totalorder %s9, 6
      %s16 = sphi 0, %s28
      %s17 = sphi 0, %s24
      %s18 = sphi 0, %s16
      %s19 = sphi 0, %s17
      %s20 = sphi 0, %s18
      %s21 = sphi 0, %s19
      %s33 = sphi 0, %s35
      %s36 = sphi 0, %s33
      %s37 = sphi 0, %s36
      %s53 = sphi 0, %s37
      %s59 = sphi 0, %s61
      %s62 = sphi 0, %s59
      %s63 = sphi 0, %s62
      %s79 = sphi 0, %s63
      %s83 = sphi 0, %s83
      %s85 = sphi 0, %s83
      %s86 = sphi 0, %s85
      %s100 = sphi 0, %s86
      %s106 = sphi 0, %s108
      %s109 = sphi 0, %s106
      %s110 = sphi 0, %s109
      %s126 = sphi 0, %s110
    $region4: #{discriminator_forward.8} parent=1 // loop_header_branch
      %12 = sbr.rel (%p10) target = $region8
    $region5: #{discriminator_forward.8} parent=1 // loop_body
      %s14 = ssub.s32 %s9, 1
      %s15 = ssub.s32 %s9, 2
      %s22 = sadd.s32 1, %s17
      %p23 = scmp.ge.s32.totalorder %s22, 4
      %s24 = scalar_select %p23, 0, %s22
      %s25 = sadd.s32 1, %s16
      %s26 = scalar_select %p23, %s25, %s16
      %p27 = scmp.ge.s32.totalorder %s26, 1
      %s28 = scalar_select %p27, 0, %s26
      %s29 = ssub.s32 %s16, %s28
      %s30 = ssub.s32 %s17, %s24
      %s31 = sor.u32 %s29, %s30
      %p32 = scmp.eq.s32.totalorder %s31, 0
      %s34 = sadd.s32 %s33, 1
      %s35 = scalar_select %p32, %s33, %s34
      %p38 = pneg %p32
      %p39 = scmp.eq.s32.totalorder %s9, 3
      %p40 = por %p38, %p39
      %p41 = scmp.ne.s32.totalorder %s33, %s36
      %p42 = scmp.eq.s32.totalorder %s9, 0
      %p43 = por %p41, %p42
      %p44 = scmp.ne.s32.totalorder %s33, %s36
      %p45 = scmp.eq.s32.totalorder %s14, 3
      %p46 = por %p44, %p45
      %p47 = scmp.ne.s32.totalorder %s36, %s37
      %p48 = scmp.eq.s32.totalorder %s14, 0
      %p49 = por %p47, %p48
      %p50 = scmp.ne.s32.totalorder %s36, %s37
      %p51 = scmp.eq.s32.totalorder %s15, 3
      %p52 = por %p50, %p51
      %p54 = scmp.ne.s32.totalorder %s37, %s53
      %p55 = scmp.eq.s32.totalorder %s15, 0
      %p56 = por %p54, %p55
      %s57 = ssub.s32 %s17, %s24
      %p58 = scmp.eq.s32.totalorder %s57, 0
      %s60 = sadd.s32 %s59, 1
      %s61 = scalar_select %p58, %s59, %s60
      %p64 = pneg %p58
      %p65 = scmp.eq.s32.totalorder %s9, 3
      %p66 = por %p64, %p65
      %p67 = scmp.ne.s32.totalorder %s59, %s62
      %p68 = scmp.eq.s32.totalorder %s9, 0
      %p69 = por %p67, %p68
      %p70 = scmp.ne.s32.totalorder %s59, %s62
      %p71 = scmp.eq.s32.totalorder %s14, 3
      %p72 = por %p70, %p71
      %p73 = scmp.ne.s32.totalorder %s62, %s63
      %p74 = scmp.eq.s32.totalorder %s14, 0
      %p75 = por %p73, %p74
      %p76 = scmp.ne.s32.totalorder %s62, %s63
      %p77 = scmp.eq.s32.totalorder %s15, 3
      %p78 = por %p76, %p77
      %p80 = scmp.ne.s32.totalorder %s63, %s79
      %p81 = scmp.eq.s32.totalorder %s15, 0
      %p82 = por %p80, %p81
      %s84 = sadd.s32 %s83, 1
      %p87 = scmp.eq.s32.totalorder %s9, 3
      %p88 = scmp.ne.s32.totalorder %s83, %s85
      %p89 = scmp.eq.s32.totalorder %s9, 0
      %p90 = por %p88, %p89
      %p91 = scmp.ne.s32.totalorder %s83, %s85
      %p92 = scmp.eq.s32.totalorder %s14, 3
      %p93 = por %p91, %p92
      %p94 = scmp.ne.s32.totalorder %s85, %s86
      %p95 = scmp.eq.s32.totalorder %s14, 0
      %p96 = por %p94, %p95
      %p97 = scmp.ne.s32.totalorder %s85, %s86
      %p98 = scmp.eq.s32.totalorder %s15, 3
      %p99 = por %p97, %p98
      %p101 = scmp.ne.s32.totalorder %s86, %s100
      %p102 = scmp.eq.s32.totalorder %s15, 0
      %p103 = por %p101, %p102
      %s104 = ssub.s32 %s16, %s28
      %p105 = scmp.eq.s32.totalorder %s104, 0
      %s107 = sadd.s32 %s106, 1
      %s108 = scalar_select %p105, %s106, %s107
      %p111 = pneg %p105
      %p112 = scmp.eq.s32.totalorder %s9, 3
      %p113 = por %p111, %p112
      %p114 = scmp.ne.s32.totalorder %s106, %s109
      %p115 = scmp.eq.s32.totalorder %s9, 0
      %p116 = por %p114, %p115
      %p117 = scmp.ne.s32.totalorder %s106, %s109
      %p118 = scmp.eq.s32.totalorder %s14, 3
      %p119 = por %p117, %p118
      %p120 = scmp.ne.s32.totalorder %s109, %s110
      %p121 = scmp.eq.s32.totalorder %s14, 0
      %p122 = por %p120, %p121
      %p123 = scmp.ne.s32.totalorder %s109, %s110
      %p124 = scmp.eq.s32.totalorder %s15, 3
      %p125 = por %p123, %p124
      %p127 = scmp.ne.s32.totalorder %s110, %s126
      %p128 = scmp.eq.s32.totalorder %s15, 0
      %p129 = por %p127, %p128
      %p130 = scmp.le.s32.totalorder 1, %s9
      %p131 = scmp.lt.s32.totalorder %s9, 5
      %p132 = pnand %p130, %p131
      %p133 = pneg %p132
      // Predicated region
      $region9: #{discriminator_forward.8} parent=5 // pred_check
        _
      $region10: #{discriminator_forward.8} parent=5 // pred_check_branch
        %135 = sbr.rel (%p132) target = $region12
      $region11: #{discriminator_forward.8} parent=5 // pred_region
        %s136 = ssub.s32 %s9, 1
        // Predicated region
        $region13: #{discriminator_forward.8} parent=11 // pred_check
          %p137 = pneg %p96
        $region14: #{discriminator_forward.8} parent=11 // pred_check_branch
          %139 = sbr.rel (%p137) target = $region16
        $region15: #{discriminator_forward.8} parent=11 // pred_region
          _
        $region16: #{discriminator_forward.8} parent=11 // pred_fallthru
          _
      $region12: #{discriminator_forward.8} parent=5 // pred_fallthru
        _
      %p140 = scmp.lt.s32.totalorder %s9, 4
      // Predicated region
      $region17: #{discriminator_forward.8} parent=5 // pred_check
        %p141 = pneg %p140
      $region18: #{discriminator_forward.8} parent=5 // pred_check_branch
        %143 = sbr.rel (%p141) target = $region20
      $region19: #{discriminator_forward.8} parent=5 // pred_region
        // Predicated region
        $region21: #{discriminator_forward.8} parent=19 // pred_check
          %p144 = pneg %p43
        $region22: #{discriminator_forward.8} parent=19 // pred_check_branch
          %146 = sbr.rel (%p144) target = $region24
        $region23: #{discriminator_forward.8} parent=19 // pred_region
          %s147 = sand.u32 %s33, 1
          %s148 = sand.u32 %s33, 1
          %s149 = smul.addr %s148, 128
          %s150 = scalar_lea.vmem [#allocation3], %s149
          %s151 = smul.u32 4, %s16
          %s152 = smul.u32 8, %s17
          %s153 = smul.addr %s151, 32
          %s154 = sadd.s32 %s152, %s153
          %s155 = smul.addr %s154, 4
          %s156 = scalar_lea.vmem %s0, %s155
          // Predicated region
          $region25: #{discriminator_forward.8} parent=23 // pred_check
            _
          $region26: #{discriminator_forward.8} parent=23 // pred_check_branch
            %158 = sbr.rel (0) target = $region28
          $region27: #{discriminator_forward.8} parent=23 // pred_region
            // Predicated region
            $region29: #{discriminator_forward.8} parent=27 // pred_check
              _
            $region30: #{discriminator_forward.8} parent=27 // pred_check_branch
              %160 = sbr.rel (0) target = $region32
            $region31: #{discriminator_forward.8} parent=27 // pred_region
              loop: start=0, step=1, limit=1
              $region33: #{discriminator_forward.8} parent=31 // loop_pre_header
                _
              $region34: #{discriminator_forward.8} parent=31 // loop_header
                %s162 = sphi 0, %s166
                %p163 = scmp.ge.s32.totalorder %s162, 1
                %s167 = sphi %s156, %s156
                %s168 = sphi %s150, %s150
              $region35: #{discriminator_forward.8} parent=31 // loop_header_branch
                %165 = sbr.rel (%p163) target = $region39
              $region36: #{discriminator_forward.8} parent=31 // loop_body
                %v169 = vld [vmem:[%s167] sm:$0xff]
                %170 = vst [vmem:[%s168] sm:$0xff] %v169
                %v171 = vld [vmem:[%s167 + $0x8] sm:$0xff]
                %172 = vst [vmem:[%s168 + $0x8] sm:$0xff] %v171
                %v173 = vld [vmem:[%s167 + $0x10] sm:$0xff]
                %174 = vst [vmem:[%s168 + $0x10] sm:$0xff] %v173
                %v175 = vld [vmem:[%s167 + $0x18] sm:$0xff]
                %176 = vst [vmem:[%s168 + $0x18] sm:$0xff] %v175
                %v177 = vld [vmem:[%s167 + $0x80] sm:$0xff]
                %178 = vst [vmem:[%s168 + $0x20] sm:$0xff] %v177
                %v179 = vld [vmem:[%s167 + $0x88] sm:$0xff]
                %180 = vst [vmem:[%s168 + $0x28] sm:$0xff] %v179
                %v181 = vld [vmem:[%s167 + $0x90] sm:$0xff]
                %182 = vst [vmem:[%s168 + $0x30] sm:$0xff] %v181
                %v183 = vld [vmem:[%s167 + $0x98] sm:$0xff]
                %184 = vst [vmem:[%s168 + $0x38] sm:$0xff] %v183
                %v185 = vld [vmem:[%s167 + $0x100] sm:$0xff]
                %186 = vst [vmem:[%s168 + $0x40] sm:$0xff] %v185
                %v187 = vld [vmem:[%s167 + $0x108] sm:$0xff]
                %188 = vst [vmem:[%s168 + $0x48] sm:$0xff] %v187
                %v189 = vld [vmem:[%s167 + $0x110] sm:$0xff]
                %190 = vst [vmem:[%s168 + $0x50] sm:$0xff] %v189
                %v191 = vld [vmem:[%s167 + $0x118] sm:$0xff]
                %192 = vst [vmem:[%s168 + $0x58] sm:$0xff] %v191
                %v193 = vld [vmem:[%s167 + $0x180] sm:$0xff]
                %194 = vst [vmem:[%s168 + $0x60] sm:$0xff] %v193
                %v195 = vld [vmem:[%s167 + $0x188] sm:$0xff]
                %196 = vst [vmem:[%s168 + $0x68] sm:$0xff] %v195
                %v197 = vld [vmem:[%s167 + $0x190] sm:$0xff]
                %198 = vst [vmem:[%s168 + $0x70] sm:$0xff] %v197
                %v199 = vld [vmem:[%s167 + $0x198] sm:$0xff]
                %200 = vst [vmem:[%s168 + $0x78] sm:$0xff] %v199
              $region37: #{discriminator_forward.8} parent=31 // loop_footer
                %s166 = sadd.s32 1, %s162
              $region38: #{discriminator_forward.8} parent=31 // loop_footer_branch
                %161 = sbr.rel target = $region34
              $region39: #{discriminator_forward.8} parent=31 // loop_exit
                _
            $region32: #{discriminator_forward.8} parent=27 // pred_fallthru
              _
            // Predicated region
            $region40: #{discriminator_forward.8} parent=27 // pred_check
              _
            $region41: #{discriminator_forward.8} parent=27 // pred_check_branch
              %202 = sbr.rel target = $region43
            $region42: #{discriminator_forward.8} parent=27 // pred_region
              _
            $region43: #{discriminator_forward.8} parent=27 // pred_fallthru
              _
          $region28: #{discriminator_forward.8} parent=23 // pred_fallthru
            _
          %203 = vnop
        $region24: #{discriminator_forward.8} parent=19 // pred_fallthru
          _
        // Predicated region
        $region44: #{discriminator_forward.8} parent=19 // pred_check
          %p204 = pneg %p69
        $region45: #{discriminator_forward.8} parent=19 // pred_check_branch
          %206 = sbr.rel (%p204) target = $region47
        $region46: #{discriminator_forward.8} parent=19 // pred_region
          %s207 = smul.u32 128, %s17
          %p208 = scmp.lt.s32.totalorder %s207, 511
          %s209 = scalar_select %p208, %s207, 511
          %s210 = smul.addr %s209, 4
          %s211 = smul.addr %s210, 4
          %s212 = scalar_lea.vmem %s1, %s211
          %s213 = smul.u32 128, %s17
        $region47: #{discriminator_forward.8} parent=19 // pred_fallthru
          _
      $region20: #{discriminator_forward.8} parent=5 // pred_fallthru
        _
      %p214 = scmp.le.s32.totalorder 1, %s9
      %p215 = scmp.lt.s32.totalorder %s9, 5
      %p216 = pnand %p214, %p215
      %p217 = pneg %p216
      // Predicated region
      $region48: #{discriminator_forward.8} parent=5 // pred_check
        _
      $region49: #{discriminator_forward.8} parent=5 // pred_check_branch
        %219 = sbr.rel (%p216) target = $region51
      $region50: #{discriminator_forward.8} parent=5 // pred_region
        %s220 = ssub.s32 %s9, 1
        %s221 = sand.u32 %s36, 1
        %s222 = sand.u32 %s36, 1
        %s223 = smul.addr %s222, 128
        %s224 = scalar_lea.vmem [#allocation3], %s223
        // Predicated region
        $region52: #{discriminator_forward.8} parent=50 // pred_check
          %p225 = pneg %p49
        $region53: #{discriminator_forward.8} parent=50 // pred_check_branch
          %227 = sbr.rel (%p225) target = $region55
        $region54: #{discriminator_forward.8} parent=50 // pred_region
          _
        $region55: #{discriminator_forward.8} parent=50 // pred_fallthru
          _
        %s228 = sand.u32 %s36, 1
        %s229 = sand.u32 %s36, 1
        %s230 = smul.addr %s229, 128
        %s231 = scalar_lea.vmem [#allocation3], %s230
        %p232 = pneg %p49
        %p233 = pneg %p46
        %s234 = smul.u32 128, %s19
        %p235 = scmp.lt.s32.totalorder %s234, 511
        %s236 = scalar_select %p235, %s234, 511
        %s237 = smul.addr %s236, 4
        %s238 = smul.addr %s237, 4
        %s239 = scalar_lea.vmem %s1, %s238
        %p240 = pneg %p75
        %p241 = pneg %p72
        %p242 = pneg %p96
        %p243 = pneg %p93
        %p244 = pneg %p122
        %p245 = pneg %p119
        %s246 = smul.u32 4, %s18
        %p247 = scmp.lt.s32.totalorder %s246, 3
        %s248 = scalar_select %p247, %s246, 3
        %s249 = smul.addr %s248, 4
        %s250 = smul.addr %s249, 8
        %s251 = scalar_lea.vmem %s3, %s250
        %s252 = smul.u32 4, %s18
        %s253 = smul.u32 8, %s19
        %s254 = smul.u32 128, %s19
        %p255 = scmp.lt.s32.totalorder %s254, 511
        %s256 = scalar_select %p255, %s254, 511
        %s257 = smul.addr %s256, 4
        %s258 = smul.addr %s257, 4
        %s259 = scalar_lea.vmem %s1, %s258
        %s260 = smul.u32 128, %s19
        %s261 = smul.u32 4, %s18
        %p262 = scmp.lt.s32.totalorder %s261, 3
        %s263 = scalar_select %p262, %s261, 3
        %s264 = smul.addr %s263, 4
        %s265 = smul.addr %s264, 8
        %s266 = scalar_lea.vmem %s3, %s265
        %s267 = smul.u32 4, %s18
        %p268 = scmp.eq.s32.totalorder %s19, 0
        // Predicated region
        $region56: #{discriminator_forward.8} parent=50 // pred_check
          %p269 = pneg %p268
        $region57: #{discriminator_forward.8} parent=50 // pred_check_branch
          %271 = sbr.rel (%p269) target = $region59
        $region58: #{discriminator_forward.8} parent=50 // pred_region
          %272 = vst [vmem:[#allocation2] sm:$0xff] 0.0
          %273 = vst [vmem:[#allocation2 + $0x8] sm:$0xff] 0.0
          %274 = vst [vmem:[#allocation2 + $0x10] sm:$0xff] 0.0
          %275 = vst [vmem:[#allocation2 + $0x18] sm:$0xff] 0.0
          %276 = vst [vmem:[#allocation2 + $0x20] sm:$0xff] 0.0
          %277 = vst [vmem:[#allocation2 + $0x28] sm:$0xff] 0.0
          %278 = vst [vmem:[#allocation2 + $0x30] sm:$0xff] 0.0
          %279 = vst [vmem:[#allocation2 + $0x38] sm:$0xff] 0.0
          %280 = vst [vmem:[#allocation2 + $0x40] sm:$0xff] 0.0
          %281 = vst [vmem:[#allocation2 + $0x48] sm:$0xff] 0.0
          %282 = vst [vmem:[#allocation2 + $0x50] sm:$0xff] 0.0
          %283 = vst [vmem:[#allocation2 + $0x58] sm:$0xff] 0.0
          %284 = vst [vmem:[#allocation2 + $0x60] sm:$0xff] 0.0
          %285 = vst [vmem:[#allocation2 + $0x68] sm:$0xff] 0.0
          %286 = vst [vmem:[#allocation2 + $0x70] sm:$0xff] 0.0
          %287 = vst [vmem:[#allocation2 + $0x78] sm:$0xff] 0.0
        $region59: #{discriminator_forward.8} parent=50 // pred_fallthru
          _
        %v288 = vld [vmem:[#allocation2] sm:$0xff]
        %v289 = vld [vmem:[#allocation2 + $0x8] sm:$0xff]
        %v290 = vld [vmem:[#allocation2 + $0x10] sm:$0xff]
        %v291 = vld [vmem:[#allocation2 + $0x18] sm:$0xff]
        %v292 = vld [vmem:[#allocation2 + $0x20] sm:$0xff]
        %v293 = vld [vmem:[#allocation2 + $0x28] sm:$0xff]
        %v294 = vld [vmem:[#allocation2 + $0x30] sm:$0xff]
        %v295 = vld [vmem:[#allocation2 + $0x38] sm:$0xff]
        %v296 = vld [vmem:[#allocation2 + $0x40] sm:$0xff]
        %v297 = vld [vmem:[#allocation2 + $0x48] sm:$0xff]
        %v298 = vld [vmem:[#allocation2 + $0x50] sm:$0xff]
        %v299 = vld [vmem:[#allocation2 + $0x58] sm:$0xff]
        %v300 = vld [vmem:[#allocation2 + $0x60] sm:$0xff]
        %v301 = vld [vmem:[#allocation2 + $0x68] sm:$0xff]
        %v302 = vld [vmem:[#allocation2 + $0x70] sm:$0xff]
        %v303 = vld [vmem:[#allocation2 + $0x78] sm:$0xff]
        %v304 = vld [vmem:[%s224] sm:$0xff]
        %v305 = vld [vmem:[%s224 + $0x8] sm:$0xff]
        %v306 = vld [vmem:[%s224 + $0x10] sm:$0xff]
        %v307 = vld [vmem:[%s224 + $0x18] sm:$0xff]
        %v308 = vld [vmem:[%s224 + $0x20] sm:$0xff]
        %v309 = vld [vmem:[%s224 + $0x28] sm:$0xff]
        %v310 = vld [vmem:[%s224 + $0x30] sm:$0xff]
        %v311 = vld [vmem:[%s224 + $0x38] sm:$0xff]
        %v312 = vld [vmem:[%s224 + $0x40] sm:$0xff]
        %v313 = vld [vmem:[%s224 + $0x48] sm:$0xff]
        %v314 = vld [vmem:[%s224 + $0x50] sm:$0xff]
        %v315 = vld [vmem:[%s224 + $0x58] sm:$0xff]
        %v316 = vld [vmem:[%s224 + $0x60] sm:$0xff]
        %v317 = vld [vmem:[%s224 + $0x68] sm:$0xff]
        %v318 = vld [vmem:[%s224 + $0x70] sm:$0xff]
        %v319 = vld [vmem:[%s224 + $0x78] sm:$0xff]
        %v320 = vld [vmem:[%s259] sm:$0xff]
        %v321 = vld [vmem:[%s259 + $0x8] sm:$0xff]
        %v322 = vld [vmem:[%s259 + $0x10] sm:$0xff]
        %v323 = vld [vmem:[%s259 + $0x18] sm:$0xff]
        %v324 = vld [vmem:[%s259 + $0x20] sm:$0xff]
        %v325 = vld [vmem:[%s259 + $0x28] sm:$0xff]
        %v326 = vld [vmem:[%s259 + $0x30] sm:$0xff]
        %v327 = vld [vmem:[%s259 + $0x38] sm:$0xff]
        %v328 = vld [vmem:[%s259 + $0x40] sm:$0xff]
        %v329 = vld [vmem:[%s259 + $0x48] sm:$0xff]
        %v330 = vld [vmem:[%s259 + $0x50] sm:$0xff]
        %v331 = vld [vmem:[%s259 + $0x58] sm:$0xff]
        %v332 = vld [vmem:[%s259 + $0x60] sm:$0xff]
        %v333 = vld [vmem:[%s259 + $0x68] sm:$0xff]
        %v334 = vld [vmem:[%s259 + $0x70] sm:$0xff]
        %v335 = vld [vmem:[%s259 + $0x78] sm:$0xff]
        %v336 = vld [vmem:[%s259 + $0x80] sm:$0xff]
        %v337 = vld [vmem:[%s259 + $0x88] sm:$0xff]
        %v338 = vld [vmem:[%s259 + $0x90] sm:$0xff]
        %v339 = vld [vmem:[%s259 + $0x98] sm:$0xff]
        %v340 = vld [vmem:[%s259 + $0xa0] sm:$0xff]
        %v341 = vld [vmem:[%s259 + $0xa8] sm:$0xff]
        %v342 = vld [vmem:[%s259 + $0xb0] sm:$0xff]
        %v343 = vld [vmem:[%s259 + $0xb8] sm:$0xff]
        %v344 = vld [vmem:[%s259 + $0xc0] sm:$0xff]
        %v345 = vld [vmem:[%s259 + $0xc8] sm:$0xff]
        %v346 = vld [vmem:[%s259 + $0xd0] sm:$0xff]
        %v347 = vld [vmem:[%s259 + $0xd8] sm:$0xff]
        %v348 = vld [vmem:[%s259 + $0xe0] sm:$0xff]
        %v349 = vld [vmem:[%s259 + $0xe8] sm:$0xff]
        %v350 = vld [vmem:[%s259 + $0xf0] sm:$0xff]
        %v351 = vld [vmem:[%s259 + $0xf8] sm:$0xff]
        %v352 = vld [vmem:[%s259 + $0x100] sm:$0xff]
        %v353 = vld [vmem:[%s259 + $0x108] sm:$0xff]
        %v354 = vld [vmem:[%s259 + $0x110] sm:$0xff]
        %v355 = vld [vmem:[%s259 + $0x118] sm:$0xff]
        %v356 = vld [vmem:[%s259 + $0x120] sm:$0xff]
        %v357 = vld [vmem:[%s259 + $0x128] sm:$0xff]
        %v358 = vld [vmem:[%s259 + $0x130] sm:$0xff]
        %v359 = vld [vmem:[%s259 + $0x138] sm:$0xff]
        %v360 = vld [vmem:[%s259 + $0x140] sm:$0xff]
        %v361 = vld [vmem:[%s259 + $0x148] sm:$0xff]
        %v362 = vld [vmem:[%s259 + $0x150] sm:$0xff]
        %v363 = vld [vmem:[%s259 + $0x158] sm:$0xff]
        %v364 = vld [vmem:[%s259 + $0x160] sm:$0xff]
        %v365 = vld [vmem:[%s259 + $0x168] sm:$0xff]
        %v366 = vld [vmem:[%s259 + $0x170] sm:$0xff]
        %v367 = vld [vmem:[%s259 + $0x178] sm:$0xff]
        %v368 = vld [vmem:[%s259 + $0x180] sm:$0xff]
        %v369 = vld [vmem:[%s259 + $0x188] sm:$0xff]
        %v370 = vld [vmem:[%s259 + $0x190] sm:$0xff]
        %v371 = vld [vmem:[%s259 + $0x198] sm:$0xff]
        %v372 = vld [vmem:[%s259 + $0x1a0] sm:$0xff]
        %v373 = vld [vmem:[%s259 + $0x1a8] sm:$0xff]
        %v374 = vld [vmem:[%s259 + $0x1b0] sm:$0xff]
        %v375 = vld [vmem:[%s259 + $0x1b8] sm:$0xff]
        %v376 = vld [vmem:[%s259 + $0x1c0] sm:$0xff]
        %v377 = vld [vmem:[%s259 + $0x1c8] sm:$0xff]
        %v378 = vld [vmem:[%s259 + $0x1d0] sm:$0xff]
        %v379 = vld [vmem:[%s259 + $0x1d8] sm:$0xff]
        %v380 = vld [vmem:[%s259 + $0x1e0] sm:$0xff]
        %v381 = vld [vmem:[%s259 + $0x1e8] sm:$0xff]
        %v382 = vld [vmem:[%s259 + $0x1f0] sm:$0xff]
        %v383 = vld [vmem:[%s259 + $0x1f8] sm:$0xff]
        %v384 = vld [vmem:[%s259 + $0x200] sm:$0xff]
        %v385 = vld [vmem:[%s259 + $0x208] sm:$0xff]
        %v386 = vld [vmem:[%s259 + $0x210] sm:$0xff]
        %v387 = vld [vmem:[%s259 + $0x218] sm:$0xff]
        %v388 = vld [vmem:[%s259 + $0x220] sm:$0xff]
        %v389 = vld [vmem:[%s259 + $0x228] sm:$0xff]
        %v390 = vld [vmem:[%s259 + $0x230] sm:$0xff]
        %v391 = vld [vmem:[%s259 + $0x238] sm:$0xff]
        %v392 = vld [vmem:[%s259 + $0x240] sm:$0xff]
        %v393 = vld [vmem:[%s259 + $0x248] sm:$0xff]
        %v394 = vld [vmem:[%s259 + $0x250] sm:$0xff]
        %v395 = vld [vmem:[%s259 + $0x258] sm:$0xff]
        %v396 = vld [vmem:[%s259 + $0x260] sm:$0xff]
        %v397 = vld [vmem:[%s259 + $0x268] sm:$0xff]
        %v398 = vld [vmem:[%s259 + $0x270] sm:$0xff]
        %v399 = vld [vmem:[%s259 + $0x278] sm:$0xff]
        %v400 = vld [vmem:[%s259 + $0x280] sm:$0xff]
        %v401 = vld [vmem:[%s259 + $0x288] sm:$0xff]
        %v402 = vld [vmem:[%s259 + $0x290] sm:$0xff]
        %v403 = vld [vmem:[%s259 + $0x298] sm:$0xff]
        %v404 = vld [vmem:[%s259 + $0x2a0] sm:$0xff]
        %v405 = vld [vmem:[%s259 + $0x2a8] sm:$0xff]
        %v406 = vld [vmem:[%s259 + $0x2b0] sm:$0xff]
        %v407 = vld [vmem:[%s259 + $0x2b8] sm:$0xff]
        %v408 = vld [vmem:[%s259 + $0x2c0] sm:$0xff]
        %v409 = vld [vmem:[%s259 + $0x2c8] sm:$0xff]
        %v410 = vld [vmem:[%s259 + $0x2d0] sm:$0xff]
        %v411 = vld [vmem:[%s259 + $0x2d8] sm:$0xff]
        %v412 = vld [vmem:[%s259 + $0x2e0] sm:$0xff]
        %v413 = vld [vmem:[%s259 + $0x2e8] sm:$0xff]
        %v414 = vld [vmem:[%s259 + $0x2f0] sm:$0xff]
        %v415 = vld [vmem:[%s259 + $0x2f8] sm:$0xff]
        %v416 = vld [vmem:[%s259 + $0x300] sm:$0xff]
        %v417 = vld [vmem:[%s259 + $0x308] sm:$0xff]
        %v418 = vld [vmem:[%s259 + $0x310] sm:$0xff]
        %v419 = vld [vmem:[%s259 + $0x318] sm:$0xff]
        %v420 = vld [vmem:[%s259 + $0x320] sm:$0xff]
        %v421 = vld [vmem:[%s259 + $0x328] sm:$0xff]
        %v422 = vld [vmem:[%s259 + $0x330] sm:$0xff]
        %v423 = vld [vmem:[%s259 + $0x338] sm:$0xff]
        %v424 = vld [vmem:[%s259 + $0x340] sm:$0xff]
        %v425 = vld [vmem:[%s259 + $0x348] sm:$0xff]
        %v426 = vld [vmem:[%s259 + $0x350] sm:$0xff]
        %v427 = vld [vmem:[%s259 + $0x358] sm:$0xff]
        %v428 = vld [vmem:[%s259 + $0x360] sm:$0xff]
        %v429 = vld [vmem:[%s259 + $0x368] sm:$0xff]
        %v430 = vld [vmem:[%s259 + $0x370] sm:$0xff]
        %v431 = vld [vmem:[%s259 + $0x378] sm:$0xff]
        %v432 = vld [vmem:[%s259 + $0x380] sm:$0xff]
        %v433 = vld [vmem:[%s259 + $0x388] sm:$0xff]
        %v434 = vld [vmem:[%s259 + $0x390] sm:$0xff]
        %v435 = vld [vmem:[%s259 + $0x398] sm:$0xff]
        %v436 = vld [vmem:[%s259 + $0x3a0] sm:$0xff]
        %v437 = vld [vmem:[%s259 + $0x3a8] sm:$0xff]
        %v438 = vld [vmem:[%s259 + $0x3b0] sm:$0xff]
        %v439 = vld [vmem:[%s259 + $0x3b8] sm:$0xff]
        %v440 = vld [vmem:[%s259 + $0x3c0] sm:$0xff]
        %v441 = vld [vmem:[%s259 + $0x3c8] sm:$0xff]
        %v442 = vld [vmem:[%s259 + $0x3d0] sm:$0xff]
        %v443 = vld [vmem:[%s259 + $0x3d8] sm:$0xff]
        %v444 = vld [vmem:[%s259 + $0x3e0] sm:$0xff]
        %v445 = vld [vmem:[%s259 + $0x3e8] sm:$0xff]
        %v446 = vld [vmem:[%s259 + $0x3f0] sm:$0xff]
        %v447 = vld [vmem:[%s259 + $0x3f8] sm:$0xff]
        %v448 = vld [vmem:[%s259 + $0x400] sm:$0xff]
        %v449 = vld [vmem:[%s259 + $0x408] sm:$0xff]
        %v450 = vld [vmem:[%s259 + $0x410] sm:$0xff]
        %v451 = vld [vmem:[%s259 + $0x418] sm:$0xff]
        %v452 = vld [vmem:[%s259 + $0x420] sm:$0xff]
        %v453 = vld [vmem:[%s259 + $0x428] sm:$0xff]
        %v454 = vld [vmem:[%s259 + $0x430] sm:$0xff]
        %v455 = vld [vmem:[%s259 + $0x438] sm:$0xff]
        %v456 = vld [vmem:[%s259 + $0x440] sm:$0xff]
        %v457 = vld [vmem:[%s259 + $0x448] sm:$0xff]
        %v458 = vld [vmem:[%s259 + $0x450] sm:$0xff]
        %v459 = vld [vmem:[%s259 + $0x458] sm:$0xff]
        %v460 = vld [vmem:[%s259 + $0x460] sm:$0xff]
        %v461 = vld [vmem:[%s259 + $0x468] sm:$0xff]
        %v462 = vld [vmem:[%s259 + $0x470] sm:$0xff]
        %v463 = vld [vmem:[%s259 + $0x478] sm:$0xff]
        %v464 = vld [vmem:[%s259 + $0x480] sm:$0xff]
        %v465 = vld [vmem:[%s259 + $0x488] sm:$0xff]
        %v466 = vld [vmem:[%s259 + $0x490] sm:$0xff]
        %v467 = vld [vmem:[%s259 + $0x498] sm:$0xff]
        %v468 = vld [vmem:[%s259 + $0x4a0] sm:$0xff]
        %v469 = vld [vmem:[%s259 + $0x4a8] sm:$0xff]
        %v470 = vld [vmem:[%s259 + $0x4b0] sm:$0xff]
        %v471 = vld [vmem:[%s259 + $0x4b8] sm:$0xff]
        %v472 = vld [vmem:[%s259 + $0x4c0] sm:$0xff]
        %v473 = vld [vmem:[%s259 + $0x4c8] sm:$0xff]
        %v474 = vld [vmem:[%s259 + $0x4d0] sm:$0xff]
        %v475 = vld [vmem:[%s259 + $0x4d8] sm:$0xff]
        %v476 = vld [vmem:[%s259 + $0x4e0] sm:$0xff]
        %v477 = vld [vmem:[%s259 + $0x4e8] sm:$0xff]
        %v478 = vld [vmem:[%s259 + $0x4f0] sm:$0xff]
        %v479 = vld [vmem:[%s259 + $0x4f8] sm:$0xff]
        %v480 = vld [vmem:[%s259 + $0x500] sm:$0xff]
        %v481 = vld [vmem:[%s259 + $0x508] sm:$0xff]
        %v482 = vld [vmem:[%s259 + $0x510] sm:$0xff]
        %v483 = vld [vmem:[%s259 + $0x518] sm:$0xff]
        %v484 = vld [vmem:[%s259 + $0x520] sm:$0xff]
        %v485 = vld [vmem:[%s259 + $0x528] sm:$0xff]
        %v486 = vld [vmem:[%s259 + $0x530] sm:$0xff]
        %v487 = vld [vmem:[%s259 + $0x538] sm:$0xff]
        %v488 = vld [vmem:[%s259 + $0x540] sm:$0xff]
        %v489 = vld [vmem:[%s259 + $0x548] sm:$0xff]
        %v490 = vld [vmem:[%s259 + $0x550] sm:$0xff]
        %v491 = vld [vmem:[%s259 + $0x558] sm:$0xff]
        %v492 = vld [vmem:[%s259 + $0x560] sm:$0xff]
        %v493 = vld [vmem:[%s259 + $0x568] sm:$0xff]
        %v494 = vld [vmem:[%s259 + $0x570] sm:$0xff]
        %v495 = vld [vmem:[%s259 + $0x578] sm:$0xff]
        %v496 = vld [vmem:[%s259 + $0x580] sm:$0xff]
        %v497 = vld [vmem:[%s259 + $0x588] sm:$0xff]
        %v498 = vld [vmem:[%s259 + $0x590] sm:$0xff]
        %v499 = vld [vmem:[%s259 + $0x598] sm:$0xff]
        %v500 = vld [vmem:[%s259 + $0x5a0] sm:$0xff]
        %v501 = vld [vmem:[%s259 + $0x5a8] sm:$0xff]
        %v502 = vld [vmem:[%s259 + $0x5b0] sm:$0xff]
        %v503 = vld [vmem:[%s259 + $0x5b8] sm:$0xff]
        %v504 = vld [vmem:[%s259 + $0x5c0] sm:$0xff]
        %v505 = vld [vmem:[%s259 + $0x5c8] sm:$0xff]
        %v506 = vld [vmem:[%s259 + $0x5d0] sm:$0xff]
        %v507 = vld [vmem:[%s259 + $0x5d8] sm:$0xff]
        %v508 = vld [vmem:[%s259 + $0x5e0] sm:$0xff]
        %v509 = vld [vmem:[%s259 + $0x5e8] sm:$0xff]
        %v510 = vld [vmem:[%s259 + $0x5f0] sm:$0xff]
        %v511 = vld [vmem:[%s259 + $0x5f8] sm:$0xff]
        %v512 = vld [vmem:[%s259 + $0x600] sm:$0xff]
        %v513 = vld [vmem:[%s259 + $0x608] sm:$0xff]
        %v514 = vld [vmem:[%s259 + $0x610] sm:$0xff]
        %v515 = vld [vmem:[%s259 + $0x618] sm:$0xff]
        %v516 = vld [vmem:[%s259 + $0x620] sm:$0xff]
        %v517 = vld [vmem:[%s259 + $0x628] sm:$0xff]
        %v518 = vld [vmem:[%s259 + $0x630] sm:$0xff]
        %v519 = vld [vmem:[%s259 + $0x638] sm:$0xff]
        %v520 = vld [vmem:[%s259 + $0x640] sm:$0xff]
        %v521 = vld [vmem:[%s259 + $0x648] sm:$0xff]
        %v522 = vld [vmem:[%s259 + $0x650] sm:$0xff]
        %v523 = vld [vmem:[%s259 + $0x658] sm:$0xff]
        %v524 = vld [vmem:[%s259 + $0x660] sm:$0xff]
        %v525 = vld [vmem:[%s259 + $0x668] sm:$0xff]
        %v526 = vld [vmem:[%s259 + $0x670] sm:$0xff]
        %v527 = vld [vmem:[%s259 + $0x678] sm:$0xff]
        %v528 = vld [vmem:[%s259 + $0x680] sm:$0xff]
        %v529 = vld [vmem:[%s259 + $0x688] sm:$0xff]
        %v530 = vld [vmem:[%s259 + $0x690] sm:$0xff]
        %v531 = vld [vmem:[%s259 + $0x698] sm:$0xff]
        %v532 = vld [vmem:[%s259 + $0x6a0] sm:$0xff]
        %v533 = vld [vmem:[%s259 + $0x6a8] sm:$0xff]
        %v534 = vld [vmem:[%s259 + $0x6b0] sm:$0xff]
        %v535 = vld [vmem:[%s259 + $0x6b8] sm:$0xff]
        %v536 = vld [vmem:[%s259 + $0x6c0] sm:$0xff]
        %v537 = vld [vmem:[%s259 + $0x6c8] sm:$0xff]
        %v538 = vld [vmem:[%s259 + $0x6d0] sm:$0xff]
        %v539 = vld [vmem:[%s259 + $0x6d8] sm:$0xff]
        %v540 = vld [vmem:[%s259 + $0x6e0] sm:$0xff]
        %v541 = vld [vmem:[%s259 + $0x6e8] sm:$0xff]
        %v542 = vld [vmem:[%s259 + $0x6f0] sm:$0xff]
        %v543 = vld [vmem:[%s259 + $0x6f8] sm:$0xff]
        %v544 = vld [vmem:[%s259 + $0x700] sm:$0xff]
        %v545 = vld [vmem:[%s259 + $0x708] sm:$0xff]
        %v546 = vld [vmem:[%s259 + $0x710] sm:$0xff]
        %v547 = vld [vmem:[%s259 + $0x718] sm:$0xff]
        %v548 = vld [vmem:[%s259 + $0x720] sm:$0xff]
        %v549 = vld [vmem:[%s259 + $0x728] sm:$0xff]
        %v550 = vld [vmem:[%s259 + $0x730] sm:$0xff]
        %v551 = vld [vmem:[%s259 + $0x738] sm:$0xff]
        %v552 = vld [vmem:[%s259 + $0x740] sm:$0xff]
        %v553 = vld [vmem:[%s259 + $0x748] sm:$0xff]
        %v554 = vld [vmem:[%s259 + $0x750] sm:$0xff]
        %v555 = vld [vmem:[%s259 + $0x758] sm:$0xff]
        %v556 = vld [vmem:[%s259 + $0x760] sm:$0xff]
        %v557 = vld [vmem:[%s259 + $0x768] sm:$0xff]
        %v558 = vld [vmem:[%s259 + $0x770] sm:$0xff]
        %v559 = vld [vmem:[%s259 + $0x778] sm:$0xff]
        %v560 = vld [vmem:[%s259 + $0x780] sm:$0xff]
        %v561 = vld [vmem:[%s259 + $0x788] sm:$0xff]
        %v562 = vld [vmem:[%s259 + $0x790] sm:$0xff]
        %v563 = vld [vmem:[%s259 + $0x798] sm:$0xff]
        %v564 = vld [vmem:[%s259 + $0x7a0] sm:$0xff]
        %v565 = vld [vmem:[%s259 + $0x7a8] sm:$0xff]
        %v566 = vld [vmem:[%s259 + $0x7b0] sm:$0xff]
        %v567 = vld [vmem:[%s259 + $0x7b8] sm:$0xff]
        %v568 = vld [vmem:[%s259 + $0x7c0] sm:$0xff]
        %v569 = vld [vmem:[%s259 + $0x7c8] sm:$0xff]
        %v570 = vld [vmem:[%s259 + $0x7d0] sm:$0xff]
        %v571 = vld [vmem:[%s259 + $0x7d8] sm:$0xff]
        %v572 = vld [vmem:[%s259 + $0x7e0] sm:$0xff]
        %v573 = vld [vmem:[%s259 + $0x7e8] sm:$0xff]
        %v574 = vld [vmem:[%s259 + $0x7f0] sm:$0xff]
        %v575 = vld [vmem:[%s259 + $0x7f8] sm:$0xff]
        %v592 = vunpack.c.l.b16 %v304
        %v593 = vunpack.c.h.b16 %v304
        %v594 = vunpack.c.l.b16 %v305
        %v595 = vunpack.c.h.b16 %v305
        %v596 = vunpack.c.l.b16 %v306
        %v597 = vunpack.c.h.b16 %v306
        %v598 = vunpack.c.l.b16 %v307
        %v599 = vunpack.c.h.b16 %v307
        %v600 = vunpack.c.l.b16 %v308
        %v601 = vunpack.c.h.b16 %v308
        %v602 = vunpack.c.l.b16 %v309
        %v603 = vunpack.c.h.b16 %v309
        %v604 = vunpack.c.l.b16 %v310
        %v605 = vunpack.c.h.b16 %v310
        %v606 = vunpack.c.l.b16 %v311
        %v607 = vunpack.c.h.b16 %v311
        %v608 = vunpack.c.l.b16 %v312
        %v609 = vunpack.c.h.b16 %v312
        %v610 = vunpack.c.l.b16 %v313
        %v611 = vunpack.c.h.b16 %v313
        %v612 = vunpack.c.l.b16 %v314
        %v613 = vunpack.c.h.b16 %v314
        %v614 = vunpack.c.l.b16 %v315
        %v615 = vunpack.c.h.b16 %v315
        %v616 = vunpack.c.l.b16 %v316
        %v617 = vunpack.c.h.b16 %v316
        %v618 = vunpack.c.l.b16 %v317
        %v619 = vunpack.c.h.b16 %v317
        %v620 = vunpack.c.l.b16 %v318
        %v621 = vunpack.c.h.b16 %v318
        %v622 = vunpack.c.l.b16 %v319
        %v623 = vunpack.c.h.b16 %v319
        %v624 = vpack.c.b16 %v600, %v592
        %v625 = vpack.c.b16 %v601, %v593
        %v626 = vpack.c.b16 %v602, %v594
        %v627 = vpack.c.b16 %v603, %v595
        %v628 = vpack.c.b16 %v604, %v596
        %v629 = vpack.c.b16 %v605, %v597
        %v630 = vpack.c.b16 %v606, %v598
        %v631 = vpack.c.b16 %v607, %v599
        %v632 = vpack.c.b16 %v616, %v608
        %v633 = vpack.c.b16 %v617, %v609
        %v634 = vpack.c.b16 %v618, %v610
        %v635 = vpack.c.b16 %v619, %v611
        %v636 = vpack.c.b16 %v620, %v612
        %v637 = vpack.c.b16 %v621, %v613
        %v638 = vpack.c.b16 %v622, %v614
        %v639 = vpack.c.b16 %v623, %v615
        %v912 = vunpack.c.l.b16 %v320
        %v913 = vunpack.c.h.b16 %v320
        %v914 = vunpack.c.l.b16 %v321
        %v915 = vunpack.c.h.b16 %v321
        %v916 = vunpack.c.l.b16 %v322
        %v917 = vunpack.c.h.b16 %v322
        %v918 = vunpack.c.l.b16 %v323
        %v919 = vunpack.c.h.b16 %v323
        %v920 = vunpack.c.l.b16 %v324
        %v921 = vunpack.c.h.b16 %v324
        %v922 = vunpack.c.l.b16 %v325
        %v923 = vunpack.c.h.b16 %v325
        %v924 = vunpack.c.l.b16 %v326
        %v925 = vunpack.c.h.b16 %v326
        %v926 = vunpack.c.l.b16 %v327
        %v927 = vunpack.c.h.b16 %v327
        %v928 = vunpack.c.l.b16 %v328
        %v929 = vunpack.c.h.b16 %v328
        %v930 = vunpack.c.l.b16 %v329
        %v931 = vunpack.c.h.b16 %v329
        %v932 = vunpack.c.l.b16 %v330
        %v933 = vunpack.c.h.b16 %v330
        %v934 = vunpack.c.l.b16 %v331
        %v935 = vunpack.c.h.b16 %v331
        %v936 = vunpack.c.l.b16 %v332
        %v937 = vunpack.c.h.b16 %v332
        %v938 = vunpack.c.l.b16 %v333
        %v939 = vunpack.c.h.b16 %v333
        %v940 = vunpack.c.l.b16 %v334
        %v941 = vunpack.c.h.b16 %v334
        %v942 = vunpack.c.l.b16 %v335
        %v943 = vunpack.c.h.b16 %v335
        %v944 = vunpack.c.l.b16 %v336
        %v945 = vunpack.c.h.b16 %v336
        %v946 = vunpack.c.l.b16 %v337
        %v947 = vunpack.c.h.b16 %v337
        %v948 = vunpack.c.l.b16 %v338
        %v949 = vunpack.c.h.b16 %v338
        %v950 = vunpack.c.l.b16 %v339
        %v951 = vunpack.c.h.b16 %v339
        %v952 = vunpack.c.l.b16 %v340
        %v953 = vunpack.c.h.b16 %v340
        %v954 = vunpack.c.l.b16 %v341
        %v955 = vunpack.c.h.b16 %v341
        %v956 = vunpack.c.l.b16 %v342
        %v957 = vunpack.c.h.b16 %v342
        %v958 = vunpack.c.l.b16 %v343
        %v959 = vunpack.c.h.b16 %v343
        %v960 = vunpack.c.l.b16 %v344
        %v961 = vunpack.c.h.b16 %v344
        %v962 = vunpack.c.l.b16 %v345
        %v963 = vunpack.c.h.b16 %v345
        %v964 = vunpack.c.l.b16 %v346
        %v965 = vunpack.c.h.b16 %v346
        %v966 = vunpack.c.l.b16 %v347
        %v967 = vunpack.c.h.b16 %v347
        %v968 = vunpack.c.l.b16 %v348
        %v969 = vunpack.c.h.b16 %v348
        %v970 = vunpack.c.l.b16 %v349
        %v971 = vunpack.c.h.b16 %v349
        %v972 = vunpack.c.l.b16 %v350
        %v973 = vunpack.c.h.b16 %v350
        %v974 = vunpack.c.l.b16 %v351
        %v975 = vunpack.c.h.b16 %v351
        %v976 = vunpack.c.l.b16 %v352
        %v977 = vunpack.c.h.b16 %v352
        %v978 = vunpack.c.l.b16 %v353
        %v979 = vunpack.c.h.b16 %v353
        %v980 = vunpack.c.l.b16 %v354
        %v981 = vunpack.c.h.b16 %v354
        %v982 = vunpack.c.l.b16 %v355
        %v983 = vunpack.c.h.b16 %v355
        %v984 = vunpack.c.l.b16 %v356
        %v985 = vunpack.c.h.b16 %v356
        %v986 = vunpack.c.l.b16 %v357
        %v987 = vunpack.c.h.b16 %v357
        %v988 = vunpack.c.l.b16 %v358
        %v989 = vunpack.c.h.b16 %v358
        %v990 = vunpack.c.l.b16 %v359
        %v991 = vunpack.c.h.b16 %v359
        %v992 = vunpack.c.l.b16 %v360
        %v993 = vunpack.c.h.b16 %v360
        %v994 = vunpack.c.l.b16 %v361
        %v995 = vunpack.c.h.b16 %v361
        %v996 = vunpack.c.l.b16 %v362
        %v997 = vunpack.c.h.b16 %v362
        %v998 = vunpack.c.l.b16 %v363
        %v999 = vunpack.c.h.b16 %v363
        %v1000 = vunpack.c.l.b16 %v364
        %v1001 = vunpack.c.h.b16 %v364
        %v1002 = vunpack.c.l.b16 %v365
        %v1003 = vunpack.c.h.b16 %v365
        %v1004 = vunpack.c.l.b16 %v366
        %v1005 = vunpack.c.h.b16 %v366
        %v1006 = vunpack.c.l.b16 %v367
        %v1007 = vunpack.c.h.b16 %v367
        %v1008 = vunpack.c.l.b16 %v368
        %v1009 = vunpack.c.h.b16 %v368
        %v1010 = vunpack.c.l.b16 %v369
        %v1011 = vunpack.c.h.b16 %v369
        %v1012 = vunpack.c.l.b16 %v370
        %v1013 = vunpack.c.h.b16 %v370
        %v1014 = vunpack.c.l.b16 %v371
        %v1015 = vunpack.c.h.b16 %v371
        %v1016 = vunpack.c.l.b16 %v372
        %v1017 = vunpack.c.h.b16 %v372
        %v1018 = vunpack.c.l.b16 %v373
        %v1019 = vunpack.c.h.b16 %v373
        %v1020 = vunpack.c.l.b16 %v374
        %v1021 = vunpack.c.h.b16 %v374
        %v1022 = vunpack.c.l.b16 %v375
        %v1023 = vunpack.c.h.b16 %v375
        %v1024 = vunpack.c.l.b16 %v376
        %v1025 = vunpack.c.h.b16 %v376
        %v1026 = vunpack.c.l.b16 %v377
        %v1027 = vunpack.c.h.b16 %v377
        %v1028 = vunpack.c.l.b16 %v378
        %v1029 = vunpack.c.h.b16 %v378
        %v1030 = vunpack.c.l.b16 %v379
        %v1031 = vunpack.c.h.b16 %v379
        %v1032 = vunpack.c.l.b16 %v380
        %v1033 = vunpack.c.h.b16 %v380
        %v1034 = vunpack.c.l.b16 %v381
        %v1035 = vunpack.c.h.b16 %v381
        %v1036 = vunpack.c.l.b16 %v382
        %v1037 = vunpack.c.h.b16 %v382
        %v1038 = vunpack.c.l.b16 %v383
        %v1039 = vunpack.c.h.b16 %v383
        %v1040 = vunpack.c.l.b16 %v384
        %v1041 = vunpack.c.h.b16 %v384
        %v1042 = vunpack.c.l.b16 %v385
        %v1043 = vunpack.c.h.b16 %v385
        %v1044 = vunpack.c.l.b16 %v386
        %v1045 = vunpack.c.h.b16 %v386
        %v1046 = vunpack.c.l.b16 %v387
        %v1047 = vunpack.c.h.b16 %v387
        %v1048 = vunpack.c.l.b16 %v388
        %v1049 = vunpack.c.h.b16 %v388
        %v1050 = vunpack.c.l.b16 %v389
        %v1051 = vunpack.c.h.b16 %v389
        %v1052 = vunpack.c.l.b16 %v390
        %v1053 = vunpack.c.h.b16 %v390
        %v1054 = vunpack.c.l.b16 %v391
        %v1055 = vunpack.c.h.b16 %v391
        %v1056 = vunpack.c.l.b16 %v392
        %v1057 = vunpack.c.h.b16 %v392
        %v1058 = vunpack.c.l.b16 %v393
        %v1059 = vunpack.c.h.b16 %v393
        %v1060 = vunpack.c.l.b16 %v394
        %v1061 = vunpack.c.h.b16 %v394
        %v1062 = vunpack.c.l.b16 %v395
        %v1063 = vunpack.c.h.b16 %v395
        %v1064 = vunpack.c.l.b16 %v396
        %v1065 = vunpack.c.h.b16 %v396
        %v1066 = vunpack.c.l.b16 %v397
        %v1067 = vunpack.c.h.b16 %v397
        %v1068 = vunpack.c.l.b16 %v398
        %v1069 = vunpack.c.h.b16 %v398
        %v1070 = vunpack.c.l.b16 %v399
        %v1071 = vunpack.c.h.b16 %v399
        %v1072 = vunpack.c.l.b16 %v400
        %v1073 = vunpack.c.h.b16 %v400
        %v1074 = vunpack.c.l.b16 %v401
        %v1075 = vunpack.c.h.b16 %v401
        %v1076 = vunpack.c.l.b16 %v402
        %v1077 = vunpack.c.h.b16 %v402
        %v1078 = vunpack.c.l.b16 %v403
        %v1079 = vunpack.c.h.b16 %v403
        %v1080 = vunpack.c.l.b16 %v404
        %v1081 = vunpack.c.h.b16 %v404
        %v1082 = vunpack.c.l.b16 %v405
        %v1083 = vunpack.c.h.b16 %v405
        %v1084 = vunpack.c.l.b16 %v406
        %v1085 = vunpack.c.h.b16 %v406
        %v1086 = vunpack.c.l.b16 %v407
        %v1087 = vunpack.c.h.b16 %v407
        %v1088 = vunpack.c.l.b16 %v408
        %v1089 = vunpack.c.h.b16 %v408
        %v1090 = vunpack.c.l.b16 %v409
        %v1091 = vunpack.c.h.b16 %v409
        %v1092 = vunpack.c.l.b16 %v410
        %v1093 = vunpack.c.h.b16 %v410
        %v1094 = vunpack.c.l.b16 %v411
        %v1095 = vunpack.c.h.b16 %v411
        %v1096 = vunpack.c.l.b16 %v412
        %v1097 = vunpack.c.h.b16 %v412
        %v1098 = vunpack.c.l.b16 %v413
        %v1099 = vunpack.c.h.b16 %v413
        %v1100 = vunpack.c.l.b16 %v414
        %v1101 = vunpack.c.h.b16 %v414
        %v1102 = vunpack.c.l.b16 %v415
        %v1103 = vunpack.c.h.b16 %v415
        %v1104 = vunpack.c.l.b16 %v416
        %v1105 = vunpack.c.h.b16 %v416
        %v1106 = vunpack.c.l.b16 %v417
        %v1107 = vunpack.c.h.b16 %v417
        %v1108 = vunpack.c.l.b16 %v418
        %v1109 = vunpack.c.h.b16 %v418
        %v1110 = vunpack.c.l.b16 %v419
        %v1111 = vunpack.c.h.b16 %v419
        %v1112 = vunpack.c.l.b16 %v420
        %v1113 = vunpack.c.h.b16 %v420
        %v1114 = vunpack.c.l.b16 %v421
        %v1115 = vunpack.c.h.b16 %v421
        %v1116 = vunpack.c.l.b16 %v422
        %v1117 = vunpack.c.h.b16 %v422
        %v1118 = vunpack.c.l.b16 %v423
        %v1119 = vunpack.c.h.b16 %v423
        %v1120 = vunpack.c.l.b16 %v424
        %v1121 = vunpack.c.h.b16 %v424
        %v1122 = vunpack.c.l.b16 %v425
        %v1123 = vunpack.c.h.b16 %v425
        %v1124 = vunpack.c.l.b16 %v426
        %v1125 = vunpack.c.h.b16 %v426
        %v1126 = vunpack.c.l.b16 %v427
        %v1127 = vunpack.c.h.b16 %v427
        %v1128 = vunpack.c.l.b16 %v428
        %v1129 = vunpack.c.h.b16 %v428
        %v1130 = vunpack.c.l.b16 %v429
        %v1131 = vunpack.c.h.b16 %v429
        %v1132 = vunpack.c.l.b16 %v430
        %v1133 = vunpack.c.h.b16 %v430
        %v1134 = vunpack.c.l.b16 %v431
        %v1135 = vunpack.c.h.b16 %v431
        %v1136 = vunpack.c.l.b16 %v432
        %v1137 = vunpack.c.h.b16 %v432
        %v1138 = vunpack.c.l.b16 %v433
        %v1139 = vunpack.c.h.b16 %v433
        %v1140 = vunpack.c.l.b16 %v434
        %v1141 = vunpack.c.h.b16 %v434
        %v1142 = vunpack.c.l.b16 %v435
        %v1143 = vunpack.c.h.b16 %v435
        %v1144 = vunpack.c.l.b16 %v436
        %v1145 = vunpack.c.h.b16 %v436
        %v1146 = vunpack.c.l.b16 %v437
        %v1147 = vunpack.c.h.b16 %v437
        %v1148 = vunpack.c.l.b16 %v438
        %v1149 = vunpack.c.h.b16 %v438
        %v1150 = vunpack.c.l.b16 %v439
        %v1151 = vunpack.c.h.b16 %v439
        %v1152 = vunpack.c.l.b16 %v440
        %v1153 = vunpack.c.h.b16 %v440
        %v1154 = vunpack.c.l.b16 %v441
        %v1155 = vunpack.c.h.b16 %v441
        %v1156 = vunpack.c.l.b16 %v442
        %v1157 = vunpack.c.h.b16 %v442
        %v1158 = vunpack.c.l.b16 %v443
        %v1159 = vunpack.c.h.b16 %v443
        %v1160 = vunpack.c.l.b16 %v444
        %v1161 = vunpack.c.h.b16 %v444
        %v1162 = vunpack.c.l.b16 %v445
        %v1163 = vunpack.c.h.b16 %v445
        %v1164 = vunpack.c.l.b16 %v446
        %v1165 = vunpack.c.h.b16 %v446
        %v1166 = vunpack.c.l.b16 %v447
        %v1167 = vunpack.c.h.b16 %v447
        %v1168 = vunpack.c.l.b16 %v448
        %v1169 = vunpack.c.h.b16 %v448
        %v1170 = vunpack.c.l.b16 %v449
        %v1171 = vunpack.c.h.b16 %v449
        %v1172 = vunpack.c.l.b16 %v450
        %v1173 = vunpack.c.h.b16 %v450
        %v1174 = vunpack.c.l.b16 %v451
        %v1175 = vunpack.c.h.b16 %v451
        %v1176 = vunpack.c.l.b16 %v452
        %v1177 = vunpack.c.h.b16 %v452
        %v1178 = vunpack.c.l.b16 %v453
        %v1179 = vunpack.c.h.b16 %v453
        %v1180 = vunpack.c.l.b16 %v454
        %v1181 = vunpack.c.h.b16 %v454
        %v1182 = vunpack.c.l.b16 %v455
        %v1183 = vunpack.c.h.b16 %v455
        %v1184 = vunpack.c.l.b16 %v456
        %v1185 = vunpack.c.h.b16 %v456
        %v1186 = vunpack.c.l.b16 %v457
        %v1187 = vunpack.c.h.b16 %v457
        %v1188 = vunpack.c.l.b16 %v458
        %v1189 = vunpack.c.h.b16 %v458
        %v1190 = vunpack.c.l.b16 %v459
        %v1191 = vunpack.c.h.b16 %v459
        %v1192 = vunpack.c.l.b16 %v460
        %v1193 = vunpack.c.h.b16 %v460
        %v1194 = vunpack.c.l.b16 %v461
        %v1195 = vunpack.c.h.b16 %v461
        %v1196 = vunpack.c.l.b16 %v462
        %v1197 = vunpack.c.h.b16 %v462
        %v1198 = vunpack.c.l.b16 %v463
        %v1199 = vunpack.c.h.b16 %v463
        %v1200 = vunpack.c.l.b16 %v464
        %v1201 = vunpack.c.h.b16 %v464
        %v1202 = vunpack.c.l.b16 %v465
        %v1203 = vunpack.c.h.b16 %v465
        %v1204 = vunpack.c.l.b16 %v466
        %v1205 = vunpack.c.h.b16 %v466
        %v1206 = vunpack.c.l.b16 %v467
        %v1207 = vunpack.c.h.b16 %v467
        %v1208 = vunpack.c.l.b16 %v468
        %v1209 = vunpack.c.h.b16 %v468
        %v1210 = vunpack.c.l.b16 %v469
        %v1211 = vunpack.c.h.b16 %v469
        %v1212 = vunpack.c.l.b16 %v470
        %v1213 = vunpack.c.h.b16 %v470
        %v1214 = vunpack.c.l.b16 %v471
        %v1215 = vunpack.c.h.b16 %v471
        %v1216 = vunpack.c.l.b16 %v472
        %v1217 = vunpack.c.h.b16 %v472
        %v1218 = vunpack.c.l.b16 %v473
        %v1219 = vunpack.c.h.b16 %v473
        %v1220 = vunpack.c.l.b16 %v474
        %v1221 = vunpack.c.h.b16 %v474
        %v1222 = vunpack.c.l.b16 %v475
        %v1223 = vunpack.c.h.b16 %v475
        %v1224 = vunpack.c.l.b16 %v476
        %v1225 = vunpack.c.h.b16 %v476
        %v1226 = vunpack.c.l.b16 %v477
        %v1227 = vunpack.c.h.b16 %v477
        %v1228 = vunpack.c.l.b16 %v478
        %v1229 = vunpack.c.h.b16 %v478
        %v1230 = vunpack.c.l.b16 %v479
        %v1231 = vunpack.c.h.b16 %v479
        %v1232 = vunpack.c.l.b16 %v480
        %v1233 = vunpack.c.h.b16 %v480
        %v1234 = vunpack.c.l.b16 %v481
        %v1235 = vunpack.c.h.b16 %v481
        %v1236 = vunpack.c.l.b16 %v482
        %v1237 = vunpack.c.h.b16 %v482
        %v1238 = vunpack.c.l.b16 %v483
        %v1239 = vunpack.c.h.b16 %v483
        %v1240 = vunpack.c.l.b16 %v484
        %v1241 = vunpack.c.h.b16 %v484
        %v1242 = vunpack.c.l.b16 %v485
        %v1243 = vunpack.c.h.b16 %v485
        %v1244 = vunpack.c.l.b16 %v486
        %v1245 = vunpack.c.h.b16 %v486
        %v1246 = vunpack.c.l.b16 %v487
        %v1247 = vunpack.c.h.b16 %v487
        %v1248 = vunpack.c.l.b16 %v488
        %v1249 = vunpack.c.h.b16 %v488
        %v1250 = vunpack.c.l.b16 %v489
        %v1251 = vunpack.c.h.b16 %v489
        %v1252 = vunpack.c.l.b16 %v490
        %v1253 = vunpack.c.h.b16 %v490
        %v1254 = vunpack.c.l.b16 %v491
        %v1255 = vunpack.c.h.b16 %v491
        %v1256 = vunpack.c.l.b16 %v492
        %v1257 = vunpack.c.h.b16 %v492
        %v1258 = vunpack.c.l.b16 %v493
        %v1259 = vunpack.c.h.b16 %v493
        %v1260 = vunpack.c.l.b16 %v494
        %v1261 = vunpack.c.h.b16 %v494
        %v1262 = vunpack.c.l.b16 %v495
        %v1263 = vunpack.c.h.b16 %v495
        %v1264 = vunpack.c.l.b16 %v496
        %v1265 = vunpack.c.h.b16 %v496
        %v1266 = vunpack.c.l.b16 %v497
        %v1267 = vunpack.c.h.b16 %v497
        %v1268 = vunpack.c.l.b16 %v498
        %v1269 = vunpack.c.h.b16 %v498
        %v1270 = vunpack.c.l.b16 %v499
        %v1271 = vunpack.c.h.b16 %v499
        %v1272 = vunpack.c.l.b16 %v500
        %v1273 = vunpack.c.h.b16 %v500
        %v1274 = vunpack.c.l.b16 %v501
        %v1275 = vunpack.c.h.b16 %v501
        %v1276 = vunpack.c.l.b16 %v502
        %v1277 = vunpack.c.h.b16 %v502
        %v1278 = vunpack.c.l.b16 %v503
        %v1279 = vunpack.c.h.b16 %v503
        %v1280 = vunpack.c.l.b16 %v504
        %v1281 = vunpack.c.h.b16 %v504
        %v1282 = vunpack.c.l.b16 %v505
        %v1283 = vunpack.c.h.b16 %v505
        %v1284 = vunpack.c.l.b16 %v506
        %v1285 = vunpack.c.h.b16 %v506
        %v1286 = vunpack.c.l.b16 %v507
        %v1287 = vunpack.c.h.b16 %v507
        %v1288 = vunpack.c.l.b16 %v508
        %v1289 = vunpack.c.h.b16 %v508
        %v1290 = vunpack.c.l.b16 %v509
        %v1291 = vunpack.c.h.b16 %v509
        %v1292 = vunpack.c.l.b16 %v510
        %v1293 = vunpack.c.h.b16 %v510
        %v1294 = vunpack.c.l.b16 %v511
        %v1295 = vunpack.c.h.b16 %v511
        %v1296 = vunpack.c.l.b16 %v512
        %v1297 = vunpack.c.h.b16 %v512
        %v1298 = vunpack.c.l.b16 %v513
        %v1299 = vunpack.c.h.b16 %v513
        %v1300 = vunpack.c.l.b16 %v514
        %v1301 = vunpack.c.h.b16 %v514
        %v1302 = vunpack.c.l.b16 %v515
        %v1303 = vunpack.c.h.b16 %v515
        %v1304 = vunpack.c.l.b16 %v516
        %v1305 = vunpack.c.h.b16 %v516
        %v1306 = vunpack.c.l.b16 %v517
        %v1307 = vunpack.c.h.b16 %v517
        %v1308 = vunpack.c.l.b16 %v518
        %v1309 = vunpack.c.h.b16 %v518
        %v1310 = vunpack.c.l.b16 %v519
        %v1311 = vunpack.c.h.b16 %v519
        %v1312 = vunpack.c.l.b16 %v520
        %v1313 = vunpack.c.h.b16 %v520
        %v1314 = vunpack.c.l.b16 %v521
        %v1315 = vunpack.c.h.b16 %v521
        %v1316 = vunpack.c.l.b16 %v522
        %v1317 = vunpack.c.h.b16 %v522
        %v1318 = vunpack.c.l.b16 %v523
        %v1319 = vunpack.c.h.b16 %v523
        %v1320 = vunpack.c.l.b16 %v524
        %v1321 = vunpack.c.h.b16 %v524
        %v1322 = vunpack.c.l.b16 %v525
        %v1323 = vunpack.c.h.b16 %v525
        %v1324 = vunpack.c.l.b16 %v526
        %v1325 = vunpack.c.h.b16 %v526
        %v1326 = vunpack.c.l.b16 %v527
        %v1327 = vunpack.c.h.b16 %v527
        %v1328 = vunpack.c.l.b16 %v528
        %v1329 = vunpack.c.h.b16 %v528
        %v1330 = vunpack.c.l.b16 %v529
        %v1331 = vunpack.c.h.b16 %v529
        %v1332 = vunpack.c.l.b16 %v530
        %v1333 = vunpack.c.h.b16 %v530
        %v1334 = vunpack.c.l.b16 %v531
        %v1335 = vunpack.c.h.b16 %v531
        %v1336 = vunpack.c.l.b16 %v532
        %v1337 = vunpack.c.h.b16 %v532
        %v1338 = vunpack.c.l.b16 %v533
        %v1339 = vunpack.c.h.b16 %v533
        %v1340 = vunpack.c.l.b16 %v534
        %v1341 = vunpack.c.h.b16 %v534
        %v1342 = vunpack.c.l.b16 %v535
        %v1343 = vunpack.c.h.b16 %v535
        %v1344 = vunpack.c.l.b16 %v536
        %v1345 = vunpack.c.h.b16 %v536
        %v1346 = vunpack.c.l.b16 %v537
        %v1347 = vunpack.c.h.b16 %v537
        %v1348 = vunpack.c.l.b16 %v538
        %v1349 = vunpack.c.h.b16 %v538
        %v1350 = vunpack.c.l.b16 %v539
        %v1351 = vunpack.c.h.b16 %v539
        %v1352 = vunpack.c.l.b16 %v540
        %v1353 = vunpack.c.h.b16 %v540
        %v1354 = vunpack.c.l.b16 %v541
        %v1355 = vunpack.c.h.b16 %v541
        %v1356 = vunpack.c.l.b16 %v542
        %v1357 = vunpack.c.h.b16 %v542
        %v1358 = vunpack.c.l.b16 %v543
        %v1359 = vunpack.c.h.b16 %v543
        %v1360 = vunpack.c.l.b16 %v544
        %v1361 = vunpack.c.h.b16 %v544
        %v1362 = vunpack.c.l.b16 %v545
        %v1363 = vunpack.c.h.b16 %v545
        %v1364 = vunpack.c.l.b16 %v546
        %v1365 = vunpack.c.h.b16 %v546
        %v1366 = vunpack.c.l.b16 %v547
        %v1367 = vunpack.c.h.b16 %v547
        %v1368 = vunpack.c.l.b16 %v548
        %v1369 = vunpack.c.h.b16 %v548
        %v1370 = vunpack.c.l.b16 %v549
        %v1371 = vunpack.c.h.b16 %v549
        %v1372 = vunpack.c.l.b16 %v550
        %v1373 = vunpack.c.h.b16 %v550
        %v1374 = vunpack.c.l.b16 %v551
        %v1375 = vunpack.c.h.b16 %v551
        %v1376 = vunpack.c.l.b16 %v552
        %v1377 = vunpack.c.h.b16 %v552
        %v1378 = vunpack.c.l.b16 %v553
        %v1379 = vunpack.c.h.b16 %v553
        %v1380 = vunpack.c.l.b16 %v554
        %v1381 = vunpack.c.h.b16 %v554
        %v1382 = vunpack.c.l.b16 %v555
        %v1383 = vunpack.c.h.b16 %v555
        %v1384 = vunpack.c.l.b16 %v556
        %v1385 = vunpack.c.h.b16 %v556
        %v1386 = vunpack.c.l.b16 %v557
        %v1387 = vunpack.c.h.b16 %v557
        %v1388 = vunpack.c.l.b16 %v558
        %v1389 = vunpack.c.h.b16 %v558
        %v1390 = vunpack.c.l.b16 %v559
        %v1391 = vunpack.c.h.b16 %v559
        %v1392 = vunpack.c.l.b16 %v560
        %v1393 = vunpack.c.h.b16 %v560
        %v1394 = vunpack.c.l.b16 %v561
        %v1395 = vunpack.c.h.b16 %v561
        %v1396 = vunpack.c.l.b16 %v562
        %v1397 = vunpack.c.h.b16 %v562
        %v1398 = vunpack.c.l.b16 %v563
        %v1399 = vunpack.c.h.b16 %v563
        %v1400 = vunpack.c.l.b16 %v564
        %v1401 = vunpack.c.h.b16 %v564
        %v1402 = vunpack.c.l.b16 %v565
        %v1403 = vunpack.c.h.b16 %v565
        %v1404 = vunpack.c.l.b16 %v566
        %v1405 = vunpack.c.h.b16 %v566
        %v1406 = vunpack.c.l.b16 %v567
        %v1407 = vunpack.c.h.b16 %v567
        %v1408 = vunpack.c.l.b16 %v568
        %v1409 = vunpack.c.h.b16 %v568
        %v1410 = vunpack.c.l.b16 %v569
        %v1411 = vunpack.c.h.b16 %v569
        %v1412 = vunpack.c.l.b16 %v570
        %v1413 = vunpack.c.h.b16 %v570
        %v1414 = vunpack.c.l.b16 %v571
        %v1415 = vunpack.c.h.b16 %v571
        %v1416 = vunpack.c.l.b16 %v572
        %v1417 = vunpack.c.h.b16 %v572
        %v1418 = vunpack.c.l.b16 %v573
        %v1419 = vunpack.c.h.b16 %v573
        %v1420 = vunpack.c.l.b16 %v574
        %v1421 = vunpack.c.h.b16 %v574
        %v1422 = vunpack.c.l.b16 %v575
        %v1423 = vunpack.c.h.b16 %v575
        %v1424 = vpack.c.b16 %v916, %v912
        %v1425 = vpack.c.b16 %v917, %v913
        %v1426 = vpack.c.b16 %v918, %v914
        %v1427 = vpack.c.b16 %v919, %v915
        %v1428 = vpack.c.b16 %v924, %v920
        %v1429 = vpack.c.b16 %v925, %v921
        %v1430 = vpack.c.b16 %v926, %v922
        %v1431 = vpack.c.b16 %v927, %v923
        %v1432 = vpack.c.b16 %v932, %v928
        %v1433 = vpack.c.b16 %v933, %v929
        %v1434 = vpack.c.b16 %v934, %v930
        %v1435 = vpack.c.b16 %v935, %v931
        %v1436 = vpack.c.b16 %v940, %v936
        %v1437 = vpack.c.b16 %v941, %v937
        %v1438 = vpack.c.b16 %v942, %v938
        %v1439 = vpack.c.b16 %v943, %v939
        %v1440 = vpack.c.b16 %v948, %v944
        %v1441 = vpack.c.b16 %v949, %v945
        %v1442 = vpack.c.b16 %v950, %v946
        %v1443 = vpack.c.b16 %v951, %v947
        %v1444 = vpack.c.b16 %v956, %v952
        %v1445 = vpack.c.b16 %v957, %v953
        %v1446 = vpack.c.b16 %v958, %v954
        %v1447 = vpack.c.b16 %v959, %v955
        %v1448 = vpack.c.b16 %v964, %v960
        %v1449 = vpack.c.b16 %v965, %v961
        %v1450 = vpack.c.b16 %v966, %v962
        %v1451 = vpack.c.b16 %v967, %v963
        %v1452 = vpack.c.b16 %v972, %v968
        %v1453 = vpack.c.b16 %v973, %v969
        %v1454 = vpack.c.b16 %v974, %v970
        %v1455 = vpack.c.b16 %v975, %v971
        %v1456 = vpack.c.b16 %v980, %v976
        %v1457 = vpack.c.b16 %v981, %v977
        %v1458 = vpack.c.b16 %v982, %v978
        %v1459 = vpack.c.b16 %v983, %v979
        %v1460 = vpack.c.b16 %v988, %v984
        %v1461 = vpack.c.b16 %v989, %v985
        %v1462 = vpack.c.b16 %v990, %v986
        %v1463 = vpack.c.b16 %v991, %v987
        %v1464 = vpack.c.b16 %v996, %v992
        %v1465 = vpack.c.b16 %v997, %v993
        %v1466 = vpack.c.b16 %v998, %v994
        %v1467 = vpack.c.b16 %v999, %v995
        %v1468 = vpack.c.b16 %v1004, %v1000
        %v1469 = vpack.c.b16 %v1005, %v1001
        %v1470 = vpack.c.b16 %v1006, %v1002
        %v1471 = vpack.c.b16 %v1007, %v1003
        %v1472 = vpack.c.b16 %v1012, %v1008
        %v1473 = vpack.c.b16 %v1013, %v1009
        %v1474 = vpack.c.b16 %v1014, %v1010
        %v1475 = vpack.c.b16 %v1015, %v1011
        %v1476 = vpack.c.b16 %v1020, %v1016
        %v1477 = vpack.c.b16 %v1021, %v1017
        %v1478 = vpack.c.b16 %v1022, %v1018
        %v1479 = vpack.c.b16 %v1023, %v1019
        %v1480 = vpack.c.b16 %v1028, %v1024
        %v1481 = vpack.c.b16 %v1029, %v1025
        %v1482 = vpack.c.b16 %v1030, %v1026
        %v1483 = vpack.c.b16 %v1031, %v1027
        %v1484 = vpack.c.b16 %v1036, %v1032
        %v1485 = vpack.c.b16 %v1037, %v1033
        %v1486 = vpack.c.b16 %v1038, %v1034
        %v1487 = vpack.c.b16 %v1039, %v1035
        %v1488 = vpack.c.b16 %v1044, %v1040
        %v1489 = vpack.c.b16 %v1045, %v1041
        %v1490 = vpack.c.b16 %v1046, %v1042
        %v1491 = vpack.c.b16 %v1047, %v1043
        %v1492 = vpack.c.b16 %v1052, %v1048
        %v1493 = vpack.c.b16 %v1053, %v1049
        %v1494 = vpack.c.b16 %v1054, %v1050
        %v1495 = vpack.c.b16 %v1055, %v1051
        %v1496 = vpack.c.b16 %v1060, %v1056
        %v1497 = vpack.c.b16 %v1061, %v1057
        %v1498 = vpack.c.b16 %v1062, %v1058
        %v1499 = vpack.c.b16 %v1063, %v1059
        %v1500 = vpack.c.b16 %v1068, %v1064
        %v1501 = vpack.c.b16 %v1069, %v1065
        %v1502 = vpack.c.b16 %v1070, %v1066
        %v1503 = vpack.c.b16 %v1071, %v1067
        %v1504 = vpack.c.b16 %v1076, %v1072
        %v1505 = vpack.c.b16 %v1077, %v1073
        %v1506 = vpack.c.b16 %v1078, %v1074
        %v1507 = vpack.c.b16 %v1079, %v1075
        %v1508 = vpack.c.b16 %v1084, %v1080
        %v1509 = vpack.c.b16 %v1085, %v1081
        %v1510 = vpack.c.b16 %v1086, %v1082
        %v1511 = vpack.c.b16 %v1087, %v1083
        %v1512 = vpack.c.b16 %v1092, %v1088
        %v1513 = vpack.c.b16 %v1093, %v1089
        %v1514 = vpack.c.b16 %v1094, %v1090
        %v1515 = vpack.c.b16 %v1095, %v1091
        %v1516 = vpack.c.b16 %v1100, %v1096
        %v1517 = vpack.c.b16 %v1101, %v1097
        %v1518 = vpack.c.b16 %v1102, %v1098
        %v1519 = vpack.c.b16 %v1103, %v1099
        %v1520 = vpack.c.b16 %v1108, %v1104
        %v1521 = vpack.c.b16 %v1109, %v1105
        %v1522 = vpack.c.b16 %v1110, %v1106
        %v1523 = vpack.c.b16 %v1111, %v1107
        %v1524 = vpack.c.b16 %v1116, %v1112
        %v1525 = vpack.c.b16 %v1117, %v1113
        %v1526 = vpack.c.b16 %v1118, %v1114
        %v1527 = vpack.c.b16 %v1119, %v1115
        %v1528 = vpack.c.b16 %v1124, %v1120
        %v1529 = vpack.c.b16 %v1125, %v1121
        %v1530 = vpack.c.b16 %v1126, %v1122
        %v1531 = vpack.c.b16 %v1127, %v1123
        %v1532 = vpack.c.b16 %v1132, %v1128
        %v1533 = vpack.c.b16 %v1133, %v1129
        %v1534 = vpack.c.b16 %v1134, %v1130
        %v1535 = vpack.c.b16 %v1135, %v1131
        %v1536 = vpack.c.b16 %v1140, %v1136
        %v1537 = vpack.c.b16 %v1141, %v1137
        %v1538 = vpack.c.b16 %v1142, %v1138
        %v1539 = vpack.c.b16 %v1143, %v1139
        %v1540 = vpack.c.b16 %v1148, %v1144
        %v1541 = vpack.c.b16 %v1149, %v1145
        %v1542 = vpack.c.b16 %v1150, %v1146
        %v1543 = vpack.c.b16 %v1151, %v1147
        %v1544 = vpack.c.b16 %v1156, %v1152
        %v1545 = vpack.c.b16 %v1157, %v1153
        %v1546 = vpack.c.b16 %v1158, %v1154
        %v1547 = vpack.c.b16 %v1159, %v1155
        %v1548 = vpack.c.b16 %v1164, %v1160
        %v1549 = vpack.c.b16 %v1165, %v1161
        %v1550 = vpack.c.b16 %v1166, %v1162
        %v1551 = vpack.c.b16 %v1167, %v1163
        %v1552 = vpack.c.b16 %v1172, %v1168
        %v1553 = vpack.c.b16 %v1173, %v1169
        %v1554 = vpack.c.b16 %v1174, %v1170
        %v1555 = vpack.c.b16 %v1175, %v1171
        %v1556 = vpack.c.b16 %v1180, %v1176
        %v1557 = vpack.c.b16 %v1181, %v1177
        %v1558 = vpack.c.b16 %v1182, %v1178
        %v1559 = vpack.c.b16 %v1183, %v1179
        %v1560 = vpack.c.b16 %v1188, %v1184
        %v1561 = vpack.c.b16 %v1189, %v1185
        %v1562 = vpack.c.b16 %v1190, %v1186
        %v1563 = vpack.c.b16 %v1191, %v1187
        %v1564 = vpack.c.b16 %v1196, %v1192
        %v1565 = vpack.c.b16 %v1197, %v1193
        %v1566 = vpack.c.b16 %v1198, %v1194
        %v1567 = vpack.c.b16 %v1199, %v1195
        %v1568 = vpack.c.b16 %v1204, %v1200
        %v1569 = vpack.c.b16 %v1205, %v1201
        %v1570 = vpack.c.b16 %v1206, %v1202
        %v1571 = vpack.c.b16 %v1207, %v1203
        %v1572 = vpack.c.b16 %v1212, %v1208
        %v1573 = vpack.c.b16 %v1213, %v1209
        %v1574 = vpack.c.b16 %v1214, %v1210
        %v1575 = vpack.c.b16 %v1215, %v1211
        %v1576 = vpack.c.b16 %v1220, %v1216
        %v1577 = vpack.c.b16 %v1221, %v1217
        %v1578 = vpack.c.b16 %v1222, %v1218
        %v1579 = vpack.c.b16 %v1223, %v1219
        %v1580 = vpack.c.b16 %v1228, %v1224
        %v1581 = vpack.c.b16 %v1229, %v1225
        %v1582 = vpack.c.b16 %v1230, %v1226
        %v1583 = vpack.c.b16 %v1231, %v1227
        %v1584 = vpack.c.b16 %v1236, %v1232
        %v1585 = vpack.c.b16 %v1237, %v1233
        %v1586 = vpack.c.b16 %v1238, %v1234
        %v1587 = vpack.c.b16 %v1239, %v1235
        %v1588 = vpack.c.b16 %v1244, %v1240
        %v1589 = vpack.c.b16 %v1245, %v1241
        %v1590 = vpack.c.b16 %v1246, %v1242
        %v1591 = vpack.c.b16 %v1247, %v1243
        %v1592 = vpack.c.b16 %v1252, %v1248
        %v1593 = vpack.c.b16 %v1253, %v1249
        %v1594 = vpack.c.b16 %v1254, %v1250
        %v1595 = vpack.c.b16 %v1255, %v1251
        %v1596 = vpack.c.b16 %v1260, %v1256
        %v1597 = vpack.c.b16 %v1261, %v1257
        %v1598 = vpack.c.b16 %v1262, %v1258
        %v1599 = vpack.c.b16 %v1263, %v1259
        %v1600 = vpack.c.b16 %v1268, %v1264
        %v1601 = vpack.c.b16 %v1269, %v1265
        %v1602 = vpack.c.b16 %v1270, %v1266
        %v1603 = vpack.c.b16 %v1271, %v1267
        %v1604 = vpack.c.b16 %v1276, %v1272
        %v1605 = vpack.c.b16 %v1277, %v1273
        %v1606 = vpack.c.b16 %v1278, %v1274
        %v1607 = vpack.c.b16 %v1279, %v1275
        %v1608 = vpack.c.b16 %v1284, %v1280
        %v1609 = vpack.c.b16 %v1285, %v1281
        %v1610 = vpack.c.b16 %v1286, %v1282
        %v1611 = vpack.c.b16 %v1287, %v1283
        %v1612 = vpack.c.b16 %v1292, %v1288
        %v1613 = vpack.c.b16 %v1293, %v1289
        %v1614 = vpack.c.b16 %v1294, %v1290
        %v1615 = vpack.c.b16 %v1295, %v1291
        %v1616 = vpack.c.b16 %v1300, %v1296
        %v1617 = vpack.c.b16 %v1301, %v1297
        %v1618 = vpack.c.b16 %v1302, %v1298
        %v1619 = vpack.c.b16 %v1303, %v1299
        %v1620 = vpack.c.b16 %v1308, %v1304
        %v1621 = vpack.c.b16 %v1309, %v1305
        %v1622 = vpack.c.b16 %v1310, %v1306
        %v1623 = vpack.c.b16 %v1311, %v1307
        %v1624 = vpack.c.b16 %v1316, %v1312
        %v1625 = vpack.c.b16 %v1317, %v1313
        %v1626 = vpack.c.b16 %v1318, %v1314
        %v1627 = vpack.c.b16 %v1319, %v1315
        %v1628 = vpack.c.b16 %v1324, %v1320
        %v1629 = vpack.c.b16 %v1325, %v1321
        %v1630 = vpack.c.b16 %v1326, %v1322
        %v1631 = vpack.c.b16 %v1327, %v1323
        %v1632 = vpack.c.b16 %v1332, %v1328
        %v1633 = vpack.c.b16 %v1333, %v1329
        %v1634 = vpack.c.b16 %v1334, %v1330
        %v1635 = vpack.c.b16 %v1335, %v1331
        %v1636 = vpack.c.b16 %v1340, %v1336
        %v1637 = vpack.c.b16 %v1341, %v1337
        %v1638 = vpack.c.b16 %v1342, %v1338
        %v1639 = vpack.c.b16 %v1343, %v1339
        %v1640 = vpack.c.b16 %v1348, %v1344
        %v1641 = vpack.c.b16 %v1349, %v1345
        %v1642 = vpack.c.b16 %v1350, %v1346
        %v1643 = vpack.c.b16 %v1351, %v1347
        %v1644 = vpack.c.b16 %v1356, %v1352
        %v1645 = vpack.c.b16 %v1357, %v1353
        %v1646 = vpack.c.b16 %v1358, %v1354
        %v1647 = vpack.c.b16 %v1359, %v1355
        %v1648 = vpack.c.b16 %v1364, %v1360
        %v1649 = vpack.c.b16 %v1365, %v1361
        %v1650 = vpack.c.b16 %v1366, %v1362
        %v1651 = vpack.c.b16 %v1367, %v1363
        %v1652 = vpack.c.b16 %v1372, %v1368
        %v1653 = vpack.c.b16 %v1373, %v1369
        %v1654 = vpack.c.b16 %v1374, %v1370
        %v1655 = vpack.c.b16 %v1375, %v1371
        %v1656 = vpack.c.b16 %v1380, %v1376
        %v1657 = vpack.c.b16 %v1381, %v1377
        %v1658 = vpack.c.b16 %v1382, %v1378
        %v1659 = vpack.c.b16 %v1383, %v1379
        %v1660 = vpack.c.b16 %v1388, %v1384
        %v1661 = vpack.c.b16 %v1389, %v1385
        %v1662 = vpack.c.b16 %v1390, %v1386
        %v1663 = vpack.c.b16 %v1391, %v1387
        %v1664 = vpack.c.b16 %v1396, %v1392
        %v1665 = vpack.c.b16 %v1397, %v1393
        %v1666 = vpack.c.b16 %v1398, %v1394
        %v1667 = vpack.c.b16 %v1399, %v1395
        %v1668 = vpack.c.b16 %v1404, %v1400
        %v1669 = vpack.c.b16 %v1405, %v1401
        %v1670 = vpack.c.b16 %v1406, %v1402
        %v1671 = vpack.c.b16 %v1407, %v1403
        %v1672 = vpack.c.b16 %v1412, %v1408
        %v1673 = vpack.c.b16 %v1413, %v1409
        %v1674 = vpack.c.b16 %v1414, %v1410
        %v1675 = vpack.c.b16 %v1415, %v1411
        %v1676 = vpack.c.b16 %v1420, %v1416
        %v1677 = vpack.c.b16 %v1421, %v1417
        %v1678 = vpack.c.b16 %v1422, %v1418
        %v1679 = vpack.c.b16 %v1423, %v1419
        %1936 = vmatprep.subr.bf16.mxu0 %v1425
        %1937 = vmatpush1.bf16.msra.mxu0 %v1424
        %1938 = vmatprep.subr.bf16.mxu0 %v1429
        %1939 = vmatpush1.bf16.msra.mxu0 %v1428
        %1940 = vmatprep.subr.bf16.mxu0 %v1433
        %1941 = vmatpush1.bf16.msra.mxu0 %v1432
        %1942 = vmatprep.subr.bf16.mxu0 %v1437
        %1943 = vmatpush1.bf16.msra.mxu0 %v1436
        %1944 = vmatprep.subr.bf16.mxu0 %v1441
        %1945 = vmatpush1.bf16.msra.mxu0 %v1440
        %1946 = vmatprep.subr.bf16.mxu0 %v1445
        %1947 = vmatpush1.bf16.msra.mxu0 %v1444
        %1948 = vmatprep.subr.bf16.mxu0 %v1449
        %1949 = vmatpush1.bf16.msra.mxu0 %v1448
        %1950 = vmatprep.subr.bf16.mxu0 %v1453
        %1951 = vmatpush1.bf16.msra.mxu0 %v1452
        %1952 = vmatprep.subr.bf16.mxu0 %v1457
        %1953 = vmatpush1.bf16.msra.mxu0 %v1456
        %1954 = vmatprep.subr.bf16.mxu0 %v1461
        %1955 = vmatpush1.bf16.msra.mxu0 %v1460
        %1956 = vmatprep.subr.bf16.mxu0 %v1465
        %1957 = vmatpush1.bf16.msra.mxu0 %v1464
        %1958 = vmatprep.subr.bf16.mxu0 %v1469
        %1959 = vmatpush1.bf16.msra.mxu0 %v1468
        %1960 = vmatprep.subr.bf16.mxu0 %v1473
        %1961 = vmatpush1.bf16.msra.mxu0 %v1472
        %1962 = vmatprep.subr.bf16.mxu0 %v1477
        %1963 = vmatpush1.bf16.msra.mxu0 %v1476
        %1964 = vmatprep.subr.bf16.mxu0 %v1481
        %1965 = vmatpush1.bf16.msra.mxu0 %v1480
        %1966 = vmatprep.subr.bf16.mxu0 %v1485
        %1967 = vmatpush1.bf16.msra.mxu0 %v1484
        %1968 = vmatprep.mubr.bf16.mxu0 %v625
        %1969 = vmatmul.mubr.bf16.gmra.mrb[0].mxu0 %v624
        %v1970 = vpop.f32.mrb[0].mxu0
        %v1971 = vadd.f32 0.0, %v1970
        %v1972 = vpop.f32.mrb[0].mxu0
        %v1973 = vadd.f32 0.0, %v1972
        %v1974 = vpop.f32.mrb[0].mxu0
        %v1975 = vadd.f32 0.0, %v1974
        %v1976 = vpop.f32.mrb[0].mxu0
        %v1977 = vadd.f32 0.0, %v1976
        %1978 = vmatprep.mubr.bf16.mxu0 %v633
        %1979 = vmatmul.mubr.bf16.gmra.mrb[0].mxu0 %v632
        %v1980 = vpop.f32.mrb[0].mxu0
        %v1981 = vadd.f32 0.0, %v1980
        %v1982 = vpop.f32.mrb[0].mxu0
        %v1983 = vadd.f32 0.0, %v1982
        %v1984 = vpop.f32.mrb[0].mxu0
        %v1985 = vadd.f32 0.0, %v1984
        %v1986 = vpop.f32.mrb[0].mxu0
        %v1987 = vadd.f32 0.0, %v1986
        %1988 = vdwg.mxu0
        %1989 = vmatprep.subr.bf16.mxu0 %v1489
        %1990 = vmatpush1.bf16.msra.mxu0 %v1488
        %1991 = vmatprep.subr.bf16.mxu0 %v1493
        %1992 = vmatpush1.bf16.msra.mxu0 %v1492
        %1993 = vmatprep.subr.bf16.mxu0 %v1497
        %1994 = vmatpush1.bf16.msra.mxu0 %v1496
        %1995 = vmatprep.subr.bf16.mxu0 %v1501
        %1996 = vmatpush1.bf16.msra.mxu0 %v1500
        %1997 = vmatprep.subr.bf16.mxu0 %v1505
        %1998 = vmatpush1.bf16.msra.mxu0 %v1504
        %1999 = vmatprep.subr.bf16.mxu0 %v1509
        %2000 = vmatpush1.bf16.msra.mxu0 %v1508
        %2001 = vmatprep.subr.bf16.mxu0 %v1513
        %2002 = vmatpush1.bf16.msra.mxu0 %v1512
        %2003 = vmatprep.subr.bf16.mxu0 %v1517
        %2004 = vmatpush1.bf16.msra.mxu0 %v1516
        %2005 = vmatprep.subr.bf16.mxu0 %v1521
        %2006 = vmatpush1.bf16.msra.mxu0 %v1520
        %2007 = vmatprep.subr.bf16.mxu0 %v1525
        %2008 = vmatpush1.bf16.msra.mxu0 %v1524
        %2009 = vmatprep.subr.bf16.mxu0 %v1529
        %2010 = vmatpush1.bf16.msra.mxu0 %v1528
        %2011 = vmatprep.subr.bf16.mxu0 %v1533
        %2012 = vmatpush1.bf16.msra.mxu0 %v1532
        %2013 = vmatprep.subr.bf16.mxu0 %v1537
        %2014 = vmatpush1.bf16.msra.mxu0 %v1536
        %2015 = vmatprep.subr.bf16.mxu0 %v1541
        %2016 = vmatpush1.bf16.msra.mxu0 %v1540
        %2017 = vmatprep.subr.bf16.mxu0 %v1545
        %2018 = vmatpush1.bf16.msra.mxu0 %v1544
        %2019 = vmatprep.subr.bf16.mxu0 %v1549
        %2020 = vmatpush1.bf16.msra.mxu0 %v1548
        %2021 = vmatprep.mubr.bf16.mxu0 %v627
        %2022 = vmatmul.mubr.bf16.gmra.mrb[0].mxu0 %v626
        %v2023 = vpop.f32.mrb[0].mxu0
        %v2024 = vadd.f32 %v1971, %v2023
        %v2025 = vpop.f32.mrb[0].mxu0
        %v2026 = vadd.f32 %v1973, %v2025
        %v2027 = vpop.f32.mrb[0].mxu0
        %v2028 = vadd.f32 %v1975, %v2027
        %v2029 = vpop.f32.mrb[0].mxu0
        %v2030 = vadd.f32 %v1977, %v2029
        %2031 = vmatprep.mubr.bf16.mxu0 %v635
        %2032 = vmatmul.mubr.bf16.gmra.mrb[0].mxu0 %v634
        %v2033 = vpop.f32.mrb[0].mxu0
        %v2034 = vadd.f32 %v1981, %v2033
        %v2035 = vpop.f32.mrb[0].mxu0
        %v2036 = vadd.f32 %v1983, %v2035
        %v2037 = vpop.f32.mrb[0].mxu0
        %v2038 = vadd.f32 %v1985, %v2037
        %v2039 = vpop.f32.mrb[0].mxu0
        %v2040 = vadd.f32 %v1987, %v2039
        %2041 = vdwg.mxu0
        %2042 = vmatprep.subr.bf16.mxu0 %v1553
        %2043 = vmatpush1.bf16.msra.mxu0 %v1552
        %2044 = vmatprep.subr.bf16.mxu0 %v1557
        %2045 = vmatpush1.bf16.msra.mxu0 %v1556
        %2046 = vmatprep.subr.bf16.mxu0 %v1561
        %2047 = vmatpush1.bf16.msra.mxu0 %v1560
        %2048 = vmatprep.subr.bf16.mxu0 %v1565
        %2049 = vmatpush1.bf16.msra.mxu0 %v1564
        %2050 = vmatprep.subr.bf16.mxu0 %v1569
        %2051 = vmatpush1.bf16.msra.mxu0 %v1568
        %2052 = vmatprep.subr.bf16.mxu0 %v1573
        %2053 = vmatpush1.bf16.msra.mxu0 %v1572
        %2054 = vmatprep.subr.bf16.mxu0 %v1577
        %2055 = vmatpush1.bf16.msra.mxu0 %v1576
        %2056 = vmatprep.subr.bf16.mxu0 %v1581
        %2057 = vmatpush1.bf16.msra.mxu0 %v1580
        %2058 = vmatprep.subr.bf16.mxu0 %v1585
        %2059 = vmatpush1.bf16.msra.mxu0 %v1584
        %2060 = vmatprep.subr.bf16.mxu0 %v1589
        %2061 = vmatpush1.bf16.msra.mxu0 %v1588
        %2062 = vmatprep.subr.bf16.mxu0 %v1593
        %2063 = vmatpush1.bf16.msra.mxu0 %v1592
        %2064 = vmatprep.subr.bf16.mxu0 %v1597
        %2065 = vmatpush1.bf16.msra.mxu0 %v1596
        %2066 = vmatprep.subr.bf16.mxu0 %v1601
        %2067 = vmatpush1.bf16.msra.mxu0 %v1600
        %2068 = vmatprep.subr.bf16.mxu0 %v1605
        %2069 = vmatpush1.bf16.msra.mxu0 %v1604
        %2070 = vmatprep.subr.bf16.mxu0 %v1609
        %2071 = vmatpush1.bf16.msra.mxu0 %v1608
        %2072 = vmatprep.subr.bf16.mxu0 %v1613
        %2073 = vmatpush1.bf16.msra.mxu0 %v1612
        %2074 = vmatprep.mubr.bf16.mxu0 %v629
        %2075 = vmatmul.mubr.bf16.gmra.mrb[0].mxu0 %v628
        %v2076 = vpop.f32.mrb[0].mxu0
        %v2077 = vadd.f32 %v2024, %v2076
        %v2078 = vpop.f32.mrb[0].mxu0
        %v2079 = vadd.f32 %v2026, %v2078
        %v2080 = vpop.f32.mrb[0].mxu0
        %v2081 = vadd.f32 %v2028, %v2080
        %v2082 = vpop.f32.mrb[0].mxu0
        %v2083 = vadd.f32 %v2030, %v2082
        %2084 = vmatprep.mubr.bf16.mxu0 %v637
        %2085 = vmatmul.mubr.bf16.gmra.mrb[0].mxu0 %v636
        %v2086 = vpop.f32.mrb[0].mxu0
        %v2087 = vadd.f32 %v2034, %v2086
        %v2088 = vpop.f32.mrb[0].mxu0
        %v2089 = vadd.f32 %v2036, %v2088
        %v2090 = vpop.f32.mrb[0].mxu0
        %v2091 = vadd.f32 %v2038, %v2090
        %v2092 = vpop.f32.mrb[0].mxu0
        %v2093 = vadd.f32 %v2040, %v2092
        %2094 = vdwg.mxu0
        %2095 = vmatprep.subr.bf16.mxu0 %v1617
        %2096 = vmatpush1.bf16.msra.mxu0 %v1616
        %2097 = vmatprep.subr.bf16.mxu0 %v1621
        %2098 = vmatpush1.bf16.msra.mxu0 %v1620
        %2099 = vmatprep.subr.bf16.mxu0 %v1625
        %2100 = vmatpush1.bf16.msra.mxu0 %v1624
        %2101 = vmatprep.subr.bf16.mxu0 %v1629
        %2102 = vmatpush1.bf16.msra.mxu0 %v1628
        %2103 = vmatprep.subr.bf16.mxu0 %v1633
        %2104 = vmatpush1.bf16.msra.mxu0 %v1632
        %2105 = vmatprep.subr.bf16.mxu0 %v1637
        %2106 = vmatpush1.bf16.msra.mxu0 %v1636
        %2107 = vmatprep.subr.bf16.mxu0 %v1641
        %2108 = vmatpush1.bf16.msra.mxu0 %v1640
        %2109 = vmatprep.subr.bf16.mxu0 %v1645
        %2110 = vmatpush1.bf16.msra.mxu0 %v1644
        %2111 = vmatprep.subr.bf16.mxu0 %v1649
        %2112 = vmatpush1.bf16.msra.mxu0 %v1648
        %2113 = vmatprep.subr.bf16.mxu0 %v1653
        %2114 = vmatpush1.bf16.msra.mxu0 %v1652
        %2115 = vmatprep.subr.bf16.mxu0 %v1657
        %2116 = vmatpush1.bf16.msra.mxu0 %v1656
        %2117 = vmatprep.subr.bf16.mxu0 %v1661
        %2118 = vmatpush1.bf16.msra.mxu0 %v1660
        %2119 = vmatprep.subr.bf16.mxu0 %v1665
        %2120 = vmatpush1.bf16.msra.mxu0 %v1664
        %2121 = vmatprep.subr.bf16.mxu0 %v1669
        %2122 = vmatpush1.bf16.msra.mxu0 %v1668
        %2123 = vmatprep.subr.bf16.mxu0 %v1673
        %2124 = vmatpush1.bf16.msra.mxu0 %v1672
        %2125 = vmatprep.subr.bf16.mxu0 %v1677
        %2126 = vmatpush1.bf16.msra.mxu0 %v1676
        %2127 = vmatprep.mubr.bf16.mxu0 %v631
        %2128 = vmatmul.mubr.bf16.gmra.mrb[0].mxu0 %v630
        %v2129 = vpop.f32.mrb[0].mxu0
        %v2130 = vadd.f32 %v2077, %v2129
        %v2131 = vpop.f32.mrb[0].mxu0
        %v2132 = vadd.f32 %v2079, %v2131
        %v2133 = vpop.f32.mrb[0].mxu0
        %v2134 = vadd.f32 %v2081, %v2133
        %v2135 = vpop.f32.mrb[0].mxu0
        %v2136 = vadd.f32 %v2083, %v2135
        %2137 = vmatprep.mubr.bf16.mxu0 %v639
        %2138 = vmatmul.mubr.bf16.gmra.mrb[0].mxu0 %v638
        %v2139 = vpop.f32.mrb[0].mxu0
        %v2140 = vadd.f32 %v2087, %v2139
        %v2141 = vpop.f32.mrb[0].mxu0
        %v2142 = vadd.f32 %v2089, %v2141
        %v2143 = vpop.f32.mrb[0].mxu0
        %v2144 = vadd.f32 %v2091, %v2143
        %v2145 = vpop.f32.mrb[0].mxu0
        %v2146 = vadd.f32 %v2093, %v2145
        %2147 = vdwg.mxu0
        %2148 = vmatprep.subr.bf16.mxu0 %v1427
        %2149 = vmatpush1.bf16.msra.mxu0 %v1426
        %2150 = vmatprep.subr.bf16.mxu0 %v1431
        %2151 = vmatpush1.bf16.msra.mxu0 %v1430
        %2152 = vmatprep.subr.bf16.mxu0 %v1435
        %2153 = vmatpush1.bf16.msra.mxu0 %v1434
        %2154 = vmatprep.subr.bf16.mxu0 %v1439
        %2155 = vmatpush1.bf16.msra.mxu0 %v1438
        %2156 = vmatprep.subr.bf16.mxu0 %v1443
        %2157 = vmatpush1.bf16.msra.mxu0 %v1442
        %2158 = vmatprep.subr.bf16.mxu0 %v1447
        %2159 = vmatpush1.bf16.msra.mxu0 %v1446
        %2160 = vmatprep.subr.bf16.mxu0 %v1451
        %2161 = vmatpush1.bf16.msra.mxu0 %v1450
        %2162 = vmatprep.subr.bf16.mxu0 %v1455
        %2163 = vmatpush1.bf16.msra.mxu0 %v1454
        %2164 = vmatprep.subr.bf16.mxu0 %v1459
        %2165 = vmatpush1.bf16.msra.mxu0 %v1458
        %2166 = vmatprep.subr.bf16.mxu0 %v1463
        %2167 = vmatpush1.bf16.msra.mxu0 %v1462
        %2168 = vmatprep.subr.bf16.mxu0 %v1467
        %2169 = vmatpush1.bf16.msra.mxu0 %v1466
        %2170 = vmatprep.subr.bf16.mxu0 %v1471
        %2171 = vmatpush1.bf16.msra.mxu0 %v1470
        %2172 = vmatprep.subr.bf16.mxu0 %v1475
        %2173 = vmatpush1.bf16.msra.mxu0 %v1474
        %2174 = vmatprep.subr.bf16.mxu0 %v1479
        %2175 = vmatpush1.bf16.msra.mxu0 %v1478
        %2176 = vmatprep.subr.bf16.mxu0 %v1483
        %2177 = vmatpush1.bf16.msra.mxu0 %v1482
        %2178 = vmatprep.subr.bf16.mxu0 %v1487
        %2179 = vmatpush1.bf16.msra.mxu0 %v1486
        %2180 = vmatprep.mubr.bf16.mxu0 %v625
        %2181 = vmatmul.mubr.bf16.gmra.mrb[0].mxu0 %v624
        %v2182 = vpop.f32.mrb[0].mxu0
        %v2183 = vadd.f32 0.0, %v2182
        %v2184 = vpop.f32.mrb[0].mxu0
        %v2185 = vadd.f32 0.0, %v2184
        %v2186 = vpop.f32.mrb[0].mxu0
        %v2187 = vadd.f32 0.0, %v2186
        %v2188 = vpop.f32.mrb[0].mxu0
        %v2189 = vadd.f32 0.0, %v2188
        %2190 = vmatprep.mubr.bf16.mxu0 %v633
        %2191 = vmatmul.mubr.bf16.gmra.mrb[0].mxu0 %v632
        %v2192 = vpop.f32.mrb[0].mxu0
        %v2193 = vadd.f32 0.0, %v2192
        %v2194 = vpop.f32.mrb[0].mxu0
        %v2195 = vadd.f32 0.0, %v2194
        %v2196 = vpop.f32.mrb[0].mxu0
        %v2197 = vadd.f32 0.0, %v2196
        %v2198 = vpop.f32.mrb[0].mxu0
        %v2199 = vadd.f32 0.0, %v2198
        %2200 = vdwg.mxu0
        %2201 = vmatprep.subr.bf16.mxu0 %v1491
        %2202 = vmatpush1.bf16.msra.mxu0 %v1490
        %2203 = vmatprep.subr.bf16.mxu0 %v1495
        %2204 = vmatpush1.bf16.msra.mxu0 %v1494
        %2205 = vmatprep.subr.bf16.mxu0 %v1499
        %2206 = vmatpush1.bf16.msra.mxu0 %v1498
        %2207 = vmatprep.subr.bf16.mxu0 %v1503
        %2208 = vmatpush1.bf16.msra.mxu0 %v1502
        %2209 = vmatprep.subr.bf16.mxu0 %v1507
        %2210 = vmatpush1.bf16.msra.mxu0 %v1506
        %2211 = vmatprep.subr.bf16.mxu0 %v1511
        %2212 = vmatpush1.bf16.msra.mxu0 %v1510
        %2213 = vmatprep.subr.bf16.mxu0 %v1515
        %2214 = vmatpush1.bf16.msra.mxu0 %v1514
        %2215 = vmatprep.subr.bf16.mxu0 %v1519
        %2216 = vmatpush1.bf16.msra.mxu0 %v1518
        %2217 = vmatprep.subr.bf16.mxu0 %v1523
        %2218 = vmatpush1.bf16.msra.mxu0 %v1522
        %2219 = vmatprep.subr.bf16.mxu0 %v1527
        %2220 = vmatpush1.bf16.msra.mxu0 %v1526
        %2221 = vmatprep.subr.bf16.mxu0 %v1531
        %2222 = vmatpush1.bf16.msra.mxu0 %v1530
        %2223 = vmatprep.subr.bf16.mxu0 %v1535
        %2224 = vmatpush1.bf16.msra.mxu0 %v1534
        %2225 = vmatprep.subr.bf16.mxu0 %v1539
        %2226 = vmatpush1.bf16.msra.mxu0 %v1538
        %2227 = vmatprep.subr.bf16.mxu0 %v1543
        %2228 = vmatpush1.bf16.msra.mxu0 %v1542
        %2229 = vmatprep.subr.bf16.mxu0 %v1547
        %2230 = vmatpush1.bf16.msra.mxu0 %v1546
        %2231 = vmatprep.subr.bf16.mxu0 %v1551
        %2232 = vmatpush1.bf16.msra.mxu0 %v1550
        %2233 = vmatprep.mubr.bf16.mxu0 %v627
        %2234 = vmatmul.mubr.bf16.gmra.mrb[0].mxu0 %v626
        %v2235 = vpop.f32.mrb[0].mxu0
        %v2236 = vadd.f32 %v2183, %v2235
        %v2237 = vpop.f32.mrb[0].mxu0
        %v2238 = vadd.f32 %v2185, %v2237
        %v2239 = vpop.f32.mrb[0].mxu0
        %v2240 = vadd.f32 %v2187, %v2239
        %v2241 = vpop.f32.mrb[0].mxu0
        %v2242 = vadd.f32 %v2189, %v2241
        %2243 = vmatprep.mubr.bf16.mxu0 %v635
        %2244 = vmatmul.mubr.bf16.gmra.mrb[0].mxu0 %v634
        %v2245 = vpop.f32.mrb[0].mxu0
        %v2246 = vadd.f32 %v2193, %v2245
        %v2247 = vpop.f32.mrb[0].mxu0
        %v2248 = vadd.f32 %v2195, %v2247
        %v2249 = vpop.f32.mrb[0].mxu0
        %v2250 = vadd.f32 %v2197, %v2249
        %v2251 = vpop.f32.mrb[0].mxu0
        %v2252 = vadd.f32 %v2199, %v2251
        %2253 = vdwg.mxu0
        %2254 = vmatprep.subr.bf16.mxu0 %v1555
        %2255 = vmatpush1.bf16.msra.mxu0 %v1554
        %2256 = vmatprep.subr.bf16.mxu0 %v1559
        %2257 = vmatpush1.bf16.msra.mxu0 %v1558
        %2258 = vmatprep.subr.bf16.mxu0 %v1563
        %2259 = vmatpush1.bf16.msra.mxu0 %v1562
        %2260 = vmatprep.subr.bf16.mxu0 %v1567
        %2261 = vmatpush1.bf16.msra.mxu0 %v1566
        %2262 = vmatprep.subr.bf16.mxu0 %v1571
        %2263 = vmatpush1.bf16.msra.mxu0 %v1570
        %2264 = vmatprep.subr.bf16.mxu0 %v1575
        %2265 = vmatpush1.bf16.msra.mxu0 %v1574
        %2266 = vmatprep.subr.bf16.mxu0 %v1579
        %2267 = vmatpush1.bf16.msra.mxu0 %v1578
        %2268 = vmatprep.subr.bf16.mxu0 %v1583
        %2269 = vmatpush1.bf16.msra.mxu0 %v1582
        %2270 = vmatprep.subr.bf16.mxu0 %v1587
        %2271 = vmatpush1.bf16.msra.mxu0 %v1586
        %2272 = vmatprep.subr.bf16.mxu0 %v1591
        %2273 = vmatpush1.bf16.msra.mxu0 %v1590
        %2274 = vmatprep.subr.bf16.mxu0 %v1595
        %2275 = vmatpush1.bf16.msra.mxu0 %v1594
        %2276 = vmatprep.subr.bf16.mxu0 %v1599
        %2277 = vmatpush1.bf16.msra.mxu0 %v1598
        %2278 = vmatprep.subr.bf16.mxu0 %v1603
        %2279 = vmatpush1.bf16.msra.mxu0 %v1602
        %2280 = vmatprep.subr.bf16.mxu0 %v1607
        %2281 = vmatpush1.bf16.msra.mxu0 %v1606
        %2282 = vmatprep.subr.bf16.mxu0 %v1611
        %2283 = vmatpush1.bf16.msra.mxu0 %v1610
        %2284 = vmatprep.subr.bf16.mxu0 %v1615
        %2285 = vmatpush1.bf16.msra.mxu0 %v1614
        %2286 = vmatprep.mubr.bf16.mxu0 %v629
        %2287 = vmatmul.mubr.bf16.gmra.mrb[0].mxu0 %v628
        %v2288 = vpop.f32.mrb[0].mxu0
        %v2289 = vadd.f32 %v2236, %v2288
        %v2290 = vpop.f32.mrb[0].mxu0
        %v2291 = vadd.f32 %v2238, %v2290
        %v2292 = vpop.f32.mrb[0].mxu0
        %v2293 = vadd.f32 %v2240, %v2292
        %v2294 = vpop.f32.mrb[0].mxu0
        %v2295 = vadd.f32 %v2242, %v2294
        %2296 = vmatprep.mubr.bf16.mxu0 %v637
        %2297 = vmatmul.mubr.bf16.gmra.mrb[0].mxu0 %v636
        %v2298 = vpop.f32.mrb[0].mxu0
        %v2299 = vadd.f32 %v2246, %v2298
        %v2300 = vpop.f32.mrb[0].mxu0
        %v2301 = vadd.f32 %v2248, %v2300
        %v2302 = vpop.f32.mrb[0].mxu0
        %v2303 = vadd.f32 %v2250, %v2302
        %v2304 = vpop.f32.mrb[0].mxu0
        %v2305 = vadd.f32 %v2252, %v2304
        %2306 = vdwg.mxu0
        %2307 = vmatprep.subr.bf16.mxu0 %v1619
        %2308 = vmatpush1.bf16.msra.mxu0 %v1618
        %2309 = vmatprep.subr.bf16.mxu0 %v1623
        %2310 = vmatpush1.bf16.msra.mxu0 %v1622
        %2311 = vmatprep.subr.bf16.mxu0 %v1627
        %2312 = vmatpush1.bf16.msra.mxu0 %v1626
        %2313 = vmatprep.subr.bf16.mxu0 %v1631
        %2314 = vmatpush1.bf16.msra.mxu0 %v1630
        %2315 = vmatprep.subr.bf16.mxu0 %v1635
        %2316 = vmatpush1.bf16.msra.mxu0 %v1634
        %2317 = vmatprep.subr.bf16.mxu0 %v1639
        %2318 = vmatpush1.bf16.msra.mxu0 %v1638
        %2319 = vmatprep.subr.bf16.mxu0 %v1643
        %2320 = vmatpush1.bf16.msra.mxu0 %v1642
        %2321 = vmatprep.subr.bf16.mxu0 %v1647
        %2322 = vmatpush1.bf16.msra.mxu0 %v1646
        %2323 = vmatprep.subr.bf16.mxu0 %v1651
        %2324 = vmatpush1.bf16.msra.mxu0 %v1650
        %2325 = vmatprep.subr.bf16.mxu0 %v1655
        %2326 = vmatpush1.bf16.msra.mxu0 %v1654
        %2327 = vmatprep.subr.bf16.mxu0 %v1659
        %2328 = vmatpush1.bf16.msra.mxu0 %v1658
        %2329 = vmatprep.subr.bf16.mxu0 %v1663
        %2330 = vmatpush1.bf16.msra.mxu0 %v1662
        %2331 = vmatprep.subr.bf16.mxu0 %v1667
        %2332 = vmatpush1.bf16.msra.mxu0 %v1666
        %2333 = vmatprep.subr.bf16.mxu0 %v1671
        %2334 = vmatpush1.bf16.msra.mxu0 %v1670
        %2335 = vmatprep.subr.bf16.mxu0 %v1675
        %2336 = vmatpush1.bf16.msra.mxu0 %v1674
        %2337 = vmatprep.subr.bf16.mxu0 %v1679
        %2338 = vmatpush1.bf16.msra.mxu0 %v1678
        %2339 = vmatprep.mubr.bf16.mxu0 %v631
        %2340 = vmatmul.mubr.bf16.gmra.mrb[0].mxu0 %v630
        %v2341 = vpop.f32.mrb[0].mxu0
        %v2342 = vadd.f32 %v2289, %v2341
        %v2343 = vpop.f32.mrb[0].mxu0
        %v2344 = vadd.f32 %v2291, %v2343
        %v2345 = vpop.f32.mrb[0].mxu0
        %v2346 = vadd.f32 %v2293, %v2345
        %v2347 = vpop.f32.mrb[0].mxu0
        %v2348 = vadd.f32 %v2295, %v2347
        %2349 = vmatprep.mubr.bf16.mxu0 %v639
        %2350 = vmatmul.mubr.bf16.gmra.mrb[0].mxu0 %v638
        %v2351 = vpop.f32.mrb[0].mxu0
        %v2352 = vadd.f32 %v2299, %v2351
        %v2353 = vpop.f32.mrb[0].mxu0
        %v2354 = vadd.f32 %v2301, %v2353
        %v2355 = vpop.f32.mrb[0].mxu0
        %v2356 = vadd.f32 %v2303, %v2355
        %v2357 = vpop.f32.mrb[0].mxu0
        %v2358 = vadd.f32 %v2305, %v2357
        %2359 = vdwg.mxu0
        %v2360 = vadd.f32 %v288, %v2130
        %v2361 = vadd.f32 %v289, %v2132
        %v2362 = vadd.f32 %v290, %v2342
        %v2363 = vadd.f32 %v291, %v2344
        %v2364 = vadd.f32 %v292, %v2134
        %v2365 = vadd.f32 %v293, %v2136
        %v2366 = vadd.f32 %v294, %v2346
        %v2367 = vadd.f32 %v295, %v2348
        %v2368 = vadd.f32 %v296, %v2140
        %v2369 = vadd.f32 %v297, %v2142
        %v2370 = vadd.f32 %v298, %v2352
        %v2371 = vadd.f32 %v299, %v2354
        %v2372 = vadd.f32 %v300, %v2144
        %v2373 = vadd.f32 %v301, %v2146
        %v2374 = vadd.f32 %v302, %v2356
        %v2375 = vadd.f32 %v303, %v2358
        %2376 = vst [vmem:[#allocation2] sm:$0xff] %v2360
        %2377 = vst [vmem:[#allocation2 + $0x8] sm:$0xff] %v2361
        %2378 = vst [vmem:[#allocation2 + $0x10] sm:$0xff] %v2362
        %2379 = vst [vmem:[#allocation2 + $0x18] sm:$0xff] %v2363
        %2380 = vst [vmem:[#allocation2 + $0x20] sm:$0xff] %v2364
        %2381 = vst [vmem:[#allocation2 + $0x28] sm:$0xff] %v2365
        %2382 = vst [vmem:[#allocation2 + $0x30] sm:$0xff] %v2366
        %2383 = vst [vmem:[#allocation2 + $0x38] sm:$0xff] %v2367
        %2384 = vst [vmem:[#allocation2 + $0x40] sm:$0xff] %v2368
        %2385 = vst [vmem:[#allocation2 + $0x48] sm:$0xff] %v2369
        %2386 = vst [vmem:[#allocation2 + $0x50] sm:$0xff] %v2370
        %2387 = vst [vmem:[#allocation2 + $0x58] sm:$0xff] %v2371
        %2388 = vst [vmem:[#allocation2 + $0x60] sm:$0xff] %v2372
        %2389 = vst [vmem:[#allocation2 + $0x68] sm:$0xff] %v2373
        %2390 = vst [vmem:[#allocation2 + $0x70] sm:$0xff] %v2374
        %2391 = vst [vmem:[#allocation2 + $0x78] sm:$0xff] %v2375
        %p2392 = scmp.eq.s32.totalorder %s19, 3
        // Predicated region
        $region60: #{discriminator_forward.8} parent=50 // pred_check
          %p2393 = pneg %p2392
        $region61: #{discriminator_forward.8} parent=50 // pred_check_branch
          %2395 = sbr.rel (%p2393) target = $region63
        $region62: #{discriminator_forward.8} parent=50 // pred_region
          %v2396 = vld [vmem:[#allocation2] sm:$0xff]
          %v2397 = vld [vmem:[#allocation2 + $0x8] sm:$0xff]
          %v2398 = vld [vmem:[#allocation2 + $0x10] sm:$0xff]
          %v2399 = vld [vmem:[#allocation2 + $0x18] sm:$0xff]
          %v2400 = vld [vmem:[#allocation2 + $0x20] sm:$0xff]
          %v2401 = vld [vmem:[#allocation2 + $0x28] sm:$0xff]
          %v2402 = vld [vmem:[#allocation2 + $0x30] sm:$0xff]
          %v2403 = vld [vmem:[#allocation2 + $0x38] sm:$0xff]
          %v2404 = vld [vmem:[#allocation2 + $0x40] sm:$0xff]
          %v2405 = vld [vmem:[#allocation2 + $0x48] sm:$0xff]
          %v2406 = vld [vmem:[#allocation2 + $0x50] sm:$0xff]
          %v2407 = vld [vmem:[#allocation2 + $0x58] sm:$0xff]
          %v2408 = vld [vmem:[#allocation2 + $0x60] sm:$0xff]
          %v2409 = vld [vmem:[#allocation2 + $0x68] sm:$0xff]
          %v2410 = vld [vmem:[#allocation2 + $0x70] sm:$0xff]
          %v2411 = vld [vmem:[#allocation2 + $0x78] sm:$0xff]
          %v2412 = vld [vmem:[%s2] sm:$0xf]
          %v2414 = vlaneseq
          %v2415 = vshrl.u32 %v2414, 7
          %v2416 = vsub.s32 0, %v2415
          %v2417 = vrot.slane %v2412, %v2416
          %v2418 = vlaneseq
          %v2419 = vshrl.u32 %v2418, 7
          %v2420 = vsub.s32 1, %v2419
          %v2421 = vrot.slane %v2412, %v2420
          %v2422 = vlaneseq
          %v2423 = vshrl.u32 %v2422, 7
          %v2424 = vsub.s32 2, %v2423
          %v2425 = vrot.slane %v2412, %v2424
          %v2426 = vlaneseq
          %v2427 = vshrl.u32 %v2426, 7
          %v2428 = vsub.s32 3, %v2427
          %v2429 = vrot.slane %v2412, %v2428
          %v2434 = vadd.f32 %v2396, %v2417
          %v2435 = vadd.f32 %v2397, %v2421
          %v2436 = vadd.f32 %v2398, %v2425
          %v2437 = vadd.f32 %v2399, %v2429
          %v2438 = vadd.f32 %v2400, %v2417
          %v2439 = vadd.f32 %v2401, %v2421
          %v2440 = vadd.f32 %v2402, %v2425
          %v2441 = vadd.f32 %v2403, %v2429
          %v2442 = vadd.f32 %v2404, %v2417
          %v2443 = vadd.f32 %v2405, %v2421
          %v2444 = vadd.f32 %v2406, %v2425
          %v2445 = vadd.f32 %v2407, %v2429
          %v2446 = vadd.f32 %v2408, %v2417
          %v2447 = vadd.f32 %v2409, %v2421
          %v2448 = vadd.f32 %v2410, %v2425
          %v2449 = vadd.f32 %v2411, %v2429
          %vm2450 = vcmp.gt.f32.partialorder %v2434, 0.0
          %vm2451 = vcmp.gt.f32.partialorder %v2435, 0.0
          %vm2452 = vcmp.gt.f32.partialorder %v2436, 0.0
          %vm2453 = vcmp.gt.f32.partialorder %v2437, 0.0
          %vm2454 = vcmp.gt.f32.partialorder %v2438, 0.0
          %vm2455 = vcmp.gt.f32.partialorder %v2439, 0.0
          %vm2456 = vcmp.gt.f32.partialorder %v2440, 0.0
          %vm2457 = vcmp.gt.f32.partialorder %v2441, 0.0
          %vm2458 = vcmp.gt.f32.partialorder %v2442, 0.0
          %vm2459 = vcmp.gt.f32.partialorder %v2443, 0.0
          %vm2460 = vcmp.gt.f32.partialorder %v2444, 0.0
          %vm2461 = vcmp.gt.f32.partialorder %v2445, 0.0
          %vm2462 = vcmp.gt.f32.partialorder %v2446, 0.0
          %vm2463 = vcmp.gt.f32.partialorder %v2447, 0.0
          %vm2464 = vcmp.gt.f32.partialorder %v2448, 0.0
          %vm2465 = vcmp.gt.f32.partialorder %v2449, 0.0
          %v2466 = vmul.f32 %v2434, 0.2
          %v2467 = vmul.f32 %v2435, 0.2
          %v2468 = vmul.f32 %v2436, 0.2
          %v2469 = vmul.f32 %v2437, 0.2
          %v2470 = vmul.f32 %v2438, 0.2
          %v2471 = vmul.f32 %v2439, 0.2
          %v2472 = vmul.f32 %v2440, 0.2
          %v2473 = vmul.f32 %v2441, 0.2
          %v2474 = vmul.f32 %v2442, 0.2
          %v2475 = vmul.f32 %v2443, 0.2
          %v2476 = vmul.f32 %v2444, 0.2
          %v2477 = vmul.f32 %v2445, 0.2
          %v2478 = vmul.f32 %v2446, 0.2
          %v2479 = vmul.f32 %v2447, 0.2
          %v2480 = vmul.f32 %v2448, 0.2
          %v2481 = vmul.f32 %v2449, 0.2
          %v2482 = vsel %vm2450, %v2434, %v2466
          %v2483 = vsel %vm2451, %v2435, %v2467
          %v2484 = vsel %vm2452, %v2436, %v2468
          %v2485 = vsel %vm2453, %v2437, %v2469
          %v2486 = vsel %vm2454, %v2438, %v2470
          %v2487 = vsel %vm2455, %v2439, %v2471
          %v2488 = vsel %vm2456, %v2440, %v2472
          %v2489 = vsel %vm2457, %v2441, %v2473
          %v2490 = vsel %vm2458, %v2442, %v2474
          %v2491 = vsel %vm2459, %v2443, %v2475
          %v2492 = vsel %vm2460, %v2444, %v2476
          %v2493 = vsel %vm2461, %v2445, %v2477
          %v2494 = vsel %vm2462, %v2446, %v2478
          %v2495 = vsel %vm2463, %v2447, %v2479
          %v2496 = vsel %vm2464, %v2448, %v2480
          %v2497 = vsel %vm2465, %v2449, %v2481
          %2498 = vst [vmem:[%s266] sm:$0xff] %v2482
          %2499 = vst [vmem:[%s266 + $0x8] sm:$0xff] %v2483
          %2500 = vst [vmem:[%s266 + $0x10] sm:$0xff] %v2484
          %2501 = vst [vmem:[%s266 + $0x18] sm:$0xff] %v2485
          %2502 = vst [vmem:[%s266 + $0x20] sm:$0xff] %v2486
          %2503 = vst [vmem:[%s266 + $0x28] sm:$0xff] %v2487
          %2504 = vst [vmem:[%s266 + $0x30] sm:$0xff] %v2488
          %2505 = vst [vmem:[%s266 + $0x38] sm:$0xff] %v2489
          %2506 = vst [vmem:[%s266 + $0x40] sm:$0xff] %v2490
          %2507 = vst [vmem:[%s266 + $0x48] sm:$0xff] %v2491
          %2508 = vst [vmem:[%s266 + $0x50] sm:$0xff] %v2492
          %2509 = vst [vmem:[%s266 + $0x58] sm:$0xff] %v2493
          %2510 = vst [vmem:[%s266 + $0x60] sm:$0xff] %v2494
          %2511 = vst [vmem:[%s266 + $0x68] sm:$0xff] %v2495
          %2512 = vst [vmem:[%s266 + $0x70] sm:$0xff] %v2496
          %2513 = vst [vmem:[%s266 + $0x78] sm:$0xff] %v2497
        $region63: #{discriminator_forward.8} parent=50 // pred_fallthru
          _
        %s2514 = smul.u32 4, %s18
        %p2515 = scmp.lt.s32.totalorder %s2514, 3
        %s2516 = scalar_select %p2515, %s2514, 3
        %s2517 = smul.addr %s2516, 4
        %s2518 = smul.addr %s2517, 8
        %s2519 = scalar_lea.vmem %s3, %s2518
        // Predicated region
        $region64: #{discriminator_forward.8} parent=50 // pred_check
          %p2520 = pneg %p119
        $region65: #{discriminator_forward.8} parent=50 // pred_check_branch
          %2522 = sbr.rel (%p2520) target = $region67
        $region66: #{discriminator_forward.8} parent=50 // pred_region
          %s2523 = smul.u32 4, %s18
        $region67: #{discriminator_forward.8} parent=50 // pred_fallthru
          _
        // Predicated region
        $region68: #{discriminator_forward.8} parent=50 // pred_check
          %p2524 = pneg %p119
        $region69: #{discriminator_forward.8} parent=50 // pred_check_branch
          %2526 = sbr.rel (%p2524) target = $region71
        $region70: #{discriminator_forward.8} parent=50 // pred_region
          %s2527 = smul.u32 4, %s18
          %p2528 = scmp.lt.s32.totalorder %s2527, 3
          %s2529 = scalar_select %p2528, %s2527, 3
          %s2530 = smul.addr %s2529, 4
          %s2531 = smul.addr %s2530, 8
          %s2532 = scalar_lea.vmem %s3, %s2531
        $region71: #{discriminator_forward.8} parent=50 // pred_fallthru
          _
      $region51: #{discriminator_forward.8} parent=5 // pred_fallthru
        _
      %p2533 = scmp.le.s32.totalorder 2, %s9
      // Predicated region
      $region72: #{discriminator_forward.8} parent=5 // pred_check
        %p2534 = pneg %p2533
      $region73: #{discriminator_forward.8} parent=5 // pred_check_branch
        %2536 = sbr.rel (%p2534) target = $region75
      $region74: #{discriminator_forward.8} parent=5 // pred_region
        %s2537 = ssub.s32 %s9, 2
      $region75: #{discriminator_forward.8} parent=5 // pred_fallthru
        _
    $region6: #{discriminator_forward.8} parent=1 // loop_footer
      %s13 = sadd.s32 1, %s9
    $region7: #{discriminator_forward.8} parent=1 // loop_footer_branch
      %8 = sbr.rel target = $region3
    $region8: #{discriminator_forward.8} parent=1 // loop_exit
      _

// kernel: discriminator_forward.9
$region0: #{discriminator_forward.9}
  #allocation0 [shape = 'u32[]', space=smem, size = 0x4, offset = 0x4, fixed_abs, tag = 'smem constant byte address 0x4 - core index']
  #allocation1 [shape = 'u32[144,128]{1,0:T(1,128)}', space=vmem, size = 0x12000, scoped, tag = 'internal scratch']
  #allocation2 [shape = 'f32[8,1]{1,0:T(8,128)}', space=vmem, size = 0x1000, scoped, tag = 'scratch operand']
  #allocation3 [shape = 'f32[1,1]{1,0:T(1,128)S(1)}', space=vmem, size = 0x200, scoped, tag = 'scoped memory for discriminator_forward.9']
  %s0 = inlined_call_operand.vmem [shape: bf16[8,8192], index: 0, kind: input, shape index: {}]
  %s1 = inlined_call_operand.vmem [shape: bf16[8192,1], index: 1, kind: input, shape index: {}]
  %s2 = inlined_call_operand.<no memory space> [shape: f32[1,1], index: 2, kind: input, shape index: {}]
  %s3 = inlined_call_operand.vmem [shape: f32[8,1], index: 3, kind: output, shape index: {}]
  %s4 = sld [smem:[#allocation0]]
  $region53: #{discriminator_forward.9} parent=0
    _
  %s6 = ssub.s32 1, %s4
  %s7 = scalar_select 0, %s6, %s4
  %v8 = vstv %s2
  %9 = vst [vmem:[#allocation3] sm:$0x1] %v8
  loop: start=0, step=1, limit=10
  $region2: #{discriminator_forward.9} parent=0 // loop_pre_header
    _
  $region3: #{discriminator_forward.9} parent=0 // loop_header
    %s11 = sphi 0, %s15
    %p12 = scmp.ge.s32.totalorder %s11, 10
    %s18 = sphi 0, %s30
    %s19 = sphi 0, %s26
    %s20 = sphi 0, %s18
    %s21 = sphi 0, %s19
    %s22 = sphi 0, %s20
    %s23 = sphi 0, %s21
    %s35 = sphi 0, %s37
    %s38 = sphi 0, %s35
    %s39 = sphi 0, %s38
    %s55 = sphi 0, %s39
    %s61 = sphi 0, %s63
    %s64 = sphi 0, %s61
    %s65 = sphi 0, %s64
    %s81 = sphi 0, %s65
    %s85 = sphi 0, %s85
    %s87 = sphi 0, %s85
    %s88 = sphi 0, %s87
    %s102 = sphi 0, %s88
    %s108 = sphi 0, %s110
    %s111 = sphi 0, %s108
    %s112 = sphi 0, %s111
    %s128 = sphi 0, %s112
  $region4: #{discriminator_forward.9} parent=0 // loop_header_branch
    %14 = sbr.rel (%p12) target = $region8
  $region5: #{discriminator_forward.9} parent=0 // loop_body
    %s16 = ssub.s32 %s11, 1
    %s17 = ssub.s32 %s11, 2
    %s24 = sadd.s32 1, %s19
    %p25 = scmp.ge.s32.totalorder %s24, 8
    %s26 = scalar_select %p25, 0, %s24
    %s27 = sadd.s32 1, %s18
    %s28 = scalar_select %p25, %s27, %s18
    %p29 = scmp.ge.s32.totalorder %s28, 1
    %s30 = scalar_select %p29, 0, %s28
    %s31 = ssub.s32 %s18, %s30
    %s32 = ssub.s32 %s19, %s26
    %s33 = sor.u32 %s31, %s32
    %p34 = scmp.eq.s32.totalorder %s33, 0
    %s36 = sadd.s32 %s35, 1
    %s37 = scalar_select %p34, %s35, %s36
    %p40 = pneg %p34
    %p41 = scmp.eq.s32.totalorder %s11, 7
    %p42 = por %p40, %p41
    %p43 = scmp.ne.s32.totalorder %s35, %s38
    %p44 = scmp.eq.s32.totalorder %s11, 0
    %p45 = por %p43, %p44
    %p46 = scmp.ne.s32.totalorder %s35, %s38
    %p47 = scmp.eq.s32.totalorder %s16, 7
    %p48 = por %p46, %p47
    %p49 = scmp.ne.s32.totalorder %s38, %s39
    %p50 = scmp.eq.s32.totalorder %s16, 0
    %p51 = por %p49, %p50
    %p52 = scmp.ne.s32.totalorder %s38, %s39
    %p53 = scmp.eq.s32.totalorder %s17, 7
    %p54 = por %p52, %p53
    %p56 = scmp.ne.s32.totalorder %s39, %s55
    %p57 = scmp.eq.s32.totalorder %s17, 0
    %p58 = por %p56, %p57
    %s59 = ssub.s32 %s19, %s26
    %p60 = scmp.eq.s32.totalorder %s59, 0
    %s62 = sadd.s32 %s61, 1
    %s63 = scalar_select %p60, %s61, %s62
    %p66 = pneg %p60
    %p67 = scmp.eq.s32.totalorder %s11, 7
    %p68 = por %p66, %p67
    %p69 = scmp.ne.s32.totalorder %s61, %s64
    %p70 = scmp.eq.s32.totalorder %s11, 0
    %p71 = por %p69, %p70
    %p72 = scmp.ne.s32.totalorder %s61, %s64
    %p73 = scmp.eq.s32.totalorder %s16, 7
    %p74 = por %p72, %p73
    %p75 = scmp.ne.s32.totalorder %s64, %s65
    %p76 = scmp.eq.s32.totalorder %s16, 0
    %p77 = por %p75, %p76
    %p78 = scmp.ne.s32.totalorder %s64, %s65
    %p79 = scmp.eq.s32.totalorder %s17, 7
    %p80 = por %p78, %p79
    %p82 = scmp.ne.s32.totalorder %s65, %s81
    %p83 = scmp.eq.s32.totalorder %s17, 0
    %p84 = por %p82, %p83
    %s86 = sadd.s32 %s85, 1
    %p89 = scmp.eq.s32.totalorder %s11, 7
    %p90 = scmp.ne.s32.totalorder %s85, %s87
    %p91 = scmp.eq.s32.totalorder %s11, 0
    %p92 = por %p90, %p91
    %p93 = scmp.ne.s32.totalorder %s85, %s87
    %p94 = scmp.eq.s32.totalorder %s16, 7
    %p95 = por %p93, %p94
    %p96 = scmp.ne.s32.totalorder %s87, %s88
    %p97 = scmp.eq.s32.totalorder %s16, 0
    %p98 = por %p96, %p97
    %p99 = scmp.ne.s32.totalorder %s87, %s88
    %p100 = scmp.eq.s32.totalorder %s17, 7
    %p101 = por %p99, %p100
    %p103 = scmp.ne.s32.totalorder %s88, %s102
    %p104 = scmp.eq.s32.totalorder %s17, 0
    %p105 = por %p103, %p104
    %s106 = ssub.s32 %s18, %s30
    %p107 = scmp.eq.s32.totalorder %s106, 0
    %s109 = sadd.s32 %s108, 1
    %s110 = scalar_select %p107, %s108, %s109
    %p113 = pneg %p107
    %p114 = scmp.eq.s32.totalorder %s11, 7
    %p115 = por %p113, %p114
    %p116 = scmp.ne.s32.totalorder %s108, %s111
    %p117 = scmp.eq.s32.totalorder %s11, 0
    %p118 = por %p116, %p117
    %p119 = scmp.ne.s32.totalorder %s108, %s111
    %p120 = scmp.eq.s32.totalorder %s16, 7
    %p121 = por %p119, %p120
    %p122 = scmp.ne.s32.totalorder %s111, %s112
    %p123 = scmp.eq.s32.totalorder %s16, 0
    %p124 = por %p122, %p123
    %p125 = scmp.ne.s32.totalorder %s111, %s112
    %p126 = scmp.eq.s32.totalorder %s17, 7
    %p127 = por %p125, %p126
    %p129 = scmp.ne.s32.totalorder %s112, %s128
    %p130 = scmp.eq.s32.totalorder %s17, 0
    %p131 = por %p129, %p130
    %p132 = scmp.le.s32.totalorder 1, %s11
    %p133 = scmp.lt.s32.totalorder %s11, 9
    %p134 = pnand %p132, %p133
    %p135 = pneg %p134
    // Predicated region
    $region9: #{discriminator_forward.9} parent=5 // pred_check
      _
    $region10: #{discriminator_forward.9} parent=5 // pred_check_branch
      %137 = sbr.rel (%p134) target = $region12
    $region11: #{discriminator_forward.9} parent=5 // pred_region
      %s138 = ssub.s32 %s11, 1
      // Predicated region
      $region13: #{discriminator_forward.9} parent=11 // pred_check
        %p139 = pneg %p98
      $region14: #{discriminator_forward.9} parent=11 // pred_check_branch
        %141 = sbr.rel (%p139) target = $region16
      $region15: #{discriminator_forward.9} parent=11 // pred_region
        _
      $region16: #{discriminator_forward.9} parent=11 // pred_fallthru
        _
    $region12: #{discriminator_forward.9} parent=5 // pred_fallthru
      _
    %p142 = scmp.lt.s32.totalorder %s11, 8
    // Predicated region
    $region17: #{discriminator_forward.9} parent=5 // pred_check
      %p143 = pneg %p142
    $region18: #{discriminator_forward.9} parent=5 // pred_check_branch
      %145 = sbr.rel (%p143) target = $region20
    $region19: #{discriminator_forward.9} parent=5 // pred_region
      // Predicated region
      $region21: #{discriminator_forward.9} parent=19 // pred_check
        %p146 = pneg %p45
      $region22: #{discriminator_forward.9} parent=19 // pred_check_branch
        %148 = sbr.rel (%p146) target = $region24
      $region23: #{discriminator_forward.9} parent=19 // pred_region
        %s149 = smul.u32 8, %s19
        %p150 = scmp.lt.s32.totalorder %s18, 0
        %s151 = scalar_select %p150, %s18, 0
        %p152 = scmp.lt.s32.totalorder %s149, 63
        %s153 = scalar_select %p152, %s149, 63
        %s154 = smul.addr %s151, 64
        %s155 = sadd.s32 %s153, %s154
        %s156 = smul.addr %s155, 4
        %s157 = scalar_lea.vmem %s0, %s156
        %s158 = smul.u32 8, %s19
      $region24: #{discriminator_forward.9} parent=19 // pred_fallthru
        _
      // Predicated region
      $region25: #{discriminator_forward.9} parent=19 // pred_check
        %p159 = pneg %p71
      $region26: #{discriminator_forward.9} parent=19 // pred_check_branch
        %161 = sbr.rel (%p159) target = $region28
      $region27: #{discriminator_forward.9} parent=19 // pred_region
        %s162 = smul.u32 128, %s19
        %p163 = scmp.lt.s32.totalorder %s162, 1023
        %s164 = scalar_select %p163, %s162, 1023
        %s165 = smul.addr %s164, 4
        %s166 = scalar_lea.vmem %s1, %s165
        %s167 = smul.u32 128, %s19
      $region28: #{discriminator_forward.9} parent=19 // pred_fallthru
        _
    $region20: #{discriminator_forward.9} parent=5 // pred_fallthru
      _
    %p168 = scmp.le.s32.totalorder 1, %s11
    %p169 = scmp.lt.s32.totalorder %s11, 9
    %p170 = pnand %p168, %p169
    %p171 = pneg %p170
    // Predicated region
    $region29: #{discriminator_forward.9} parent=5 // pred_check
      _
    $region30: #{discriminator_forward.9} parent=5 // pred_check_branch
      %173 = sbr.rel (%p170) target = $region32
    $region31: #{discriminator_forward.9} parent=5 // pred_region
      %s174 = ssub.s32 %s11, 1
      %s175 = smul.u32 8, %s21
      %p176 = scmp.lt.s32.totalorder %s20, 0
      %s177 = scalar_select %p176, %s20, 0
      %p178 = scmp.lt.s32.totalorder %s175, 63
      %s179 = scalar_select %p178, %s175, 63
      %s180 = smul.addr %s177, 64
      %s181 = sadd.s32 %s179, %s180
      %s182 = smul.addr %s181, 4
      %s183 = scalar_lea.vmem %s0, %s182
      %p184 = pneg %p51
      %p185 = pneg %p48
      %s186 = smul.u32 128, %s21
      %p187 = scmp.lt.s32.totalorder %s186, 1023
      %s188 = scalar_select %p187, %s186, 1023
      %s189 = smul.addr %s188, 4
      %s190 = scalar_lea.vmem %s1, %s189
      %p191 = pneg %p77
      %p192 = pneg %p74
      %p193 = pneg %p98
      %p194 = pneg %p95
      %p195 = pneg %p124
      %p196 = pneg %p121
      %p197 = scmp.lt.s32.totalorder %s20, 0
      %s198 = scalar_select %p197, %s20, 0
      %s199 = smul.addr %s198, 8
      %s200 = scalar_lea.vmem %s3, %s199
      %s201 = smul.u32 8, %s21
      %p202 = scmp.lt.s32.totalorder %s20, 0
      %s203 = scalar_select %p202, %s20, 0
      %p204 = scmp.lt.s32.totalorder %s201, 63
      %s205 = scalar_select %p204, %s201, 63
      %s206 = smul.addr %s203, 64
      %s207 = sadd.s32 %s205, %s206
      %s208 = smul.addr %s207, 4
      %s209 = scalar_lea.vmem %s0, %s208
      %s210 = smul.u32 8, %s21
      %s211 = smul.u32 128, %s21
      %p212 = scmp.lt.s32.totalorder %s211, 1023
      %s213 = scalar_select %p212, %s211, 1023
      %s214 = smul.addr %s213, 4
      %s215 = scalar_lea.vmem %s1, %s214
      %s216 = smul.u32 128, %s21
      %p217 = scmp.lt.s32.totalorder %s20, 0
      %s218 = scalar_select %p217, %s20, 0
      %s219 = smul.addr %s218, 8
      %s220 = scalar_lea.vmem %s3, %s219
      %p222 = scmp.eq.s32.totalorder %s21, 0
      // Predicated region
      $region33: #{discriminator_forward.9} parent=31 // pred_check
        %p223 = pneg %p222
      $region34: #{discriminator_forward.9} parent=31 // pred_check_branch
        %225 = sbr.rel (%p223) target = $region36
      $region35: #{discriminator_forward.9} parent=31 // pred_region
        %vm226 = vcmask 7168
        %227 = vst.msk [vmem:[#allocation2] sm:$0xff] %vm226, 0.0
      $region36: #{discriminator_forward.9} parent=31 // pred_fallthru
        _
      %v228 = vld [vmem:[#allocation2] sm:$0xff]
      %v229 = vld [vmem:[%s209] sm:$0xff]
      %v230 = vld [vmem:[%s209 + $0x8] sm:$0xff]
      %v231 = vld [vmem:[%s209 + $0x10] sm:$0xff]
      %v232 = vld [vmem:[%s209 + $0x18] sm:$0xff]
      %v233 = vld [vmem:[%s215] sm:$0xf]
      %v234 = vld [vmem:[%s215 + $0x4] sm:$0xf]
      %v235 = vld [vmem:[%s215 + $0x8] sm:$0xf]
      %v236 = vld [vmem:[%s215 + $0xc] sm:$0xf]
      %v237 = vld [vmem:[%s215 + $0x10] sm:$0xf]
      %v238 = vld [vmem:[%s215 + $0x14] sm:$0xf]
      %v239 = vld [vmem:[%s215 + $0x18] sm:$0xf]
      %v240 = vld [vmem:[%s215 + $0x1c] sm:$0xf]
      %v241 = vld [vmem:[%s215 + $0x20] sm:$0xf]
      %v242 = vld [vmem:[%s215 + $0x24] sm:$0xf]
      %v243 = vld [vmem:[%s215 + $0x28] sm:$0xf]
      %v244 = vld [vmem:[%s215 + $0x2c] sm:$0xf]
      %v245 = vld [vmem:[%s215 + $0x30] sm:$0xf]
      %v246 = vld [vmem:[%s215 + $0x34] sm:$0xf]
      %v247 = vld [vmem:[%s215 + $0x38] sm:$0xf]
      %v248 = vld [vmem:[%s215 + $0x3c] sm:$0xf]
      %v249 = vld [vmem:[%s215 + $0x40] sm:$0xf]
      %v250 = vld [vmem:[%s215 + $0x44] sm:$0xf]
      %v251 = vld [vmem:[%s215 + $0x48] sm:$0xf]
      %v252 = vld [vmem:[%s215 + $0x4c] sm:$0xf]
      %v253 = vld [vmem:[%s215 + $0x50] sm:$0xf]
      %v254 = vld [vmem:[%s215 + $0x54] sm:$0xf]
      %v255 = vld [vmem:[%s215 + $0x58] sm:$0xf]
      %v256 = vld [vmem:[%s215 + $0x5c] sm:$0xf]
      %v257 = vld [vmem:[%s215 + $0x60] sm:$0xf]
      %v258 = vld [vmem:[%s215 + $0x64] sm:$0xf]
      %v259 = vld [vmem:[%s215 + $0x68] sm:$0xf]
      %v260 = vld [vmem:[%s215 + $0x6c] sm:$0xf]
      %v261 = vld [vmem:[%s215 + $0x70] sm:$0xf]
      %v262 = vld [vmem:[%s215 + $0x74] sm:$0xf]
      %v263 = vld [vmem:[%s215 + $0x78] sm:$0xf]
      %v264 = vld [vmem:[%s215 + $0x7c] sm:$0xf]
      %v265 = vld [vmem:[%s215 + $0x80] sm:$0xf]
      %v266 = vld [vmem:[%s215 + $0x84] sm:$0xf]
      %v267 = vld [vmem:[%s215 + $0x88] sm:$0xf]
      %v268 = vld [vmem:[%s215 + $0x8c] sm:$0xf]
      %v269 = vld [vmem:[%s215 + $0x90] sm:$0xf]
      %v270 = vld [vmem:[%s215 + $0x94] sm:$0xf]
      %v271 = vld [vmem:[%s215 + $0x98] sm:$0xf]
      %v272 = vld [vmem:[%s215 + $0x9c] sm:$0xf]
      %v273 = vld [vmem:[%s215 + $0xa0] sm:$0xf]
      %v274 = vld [vmem:[%s215 + $0xa4] sm:$0xf]
      %v275 = vld [vmem:[%s215 + $0xa8] sm:$0xf]
      %v276 = vld [vmem:[%s215 + $0xac] sm:$0xf]
      %v277 = vld [vmem:[%s215 + $0xb0] sm:$0xf]
      %v278 = vld [vmem:[%s215 + $0xb4] sm:$0xf]
      %v279 = vld [vmem:[%s215 + $0xb8] sm:$0xf]
      %v280 = vld [vmem:[%s215 + $0xbc] sm:$0xf]
      %v281 = vld [vmem:[%s215 + $0xc0] sm:$0xf]
      %v282 = vld [vmem:[%s215 + $0xc4] sm:$0xf]
      %v283 = vld [vmem:[%s215 + $0xc8] sm:$0xf]
      %v284 = vld [vmem:[%s215 + $0xcc] sm:$0xf]
      %v285 = vld [vmem:[%s215 + $0xd0] sm:$0xf]
      %v286 = vld [vmem:[%s215 + $0xd4] sm:$0xf]
      %v287 = vld [vmem:[%s215 + $0xd8] sm:$0xf]
      %v288 = vld [vmem:[%s215 + $0xdc] sm:$0xf]
      %v289 = vld [vmem:[%s215 + $0xe0] sm:$0xf]
      %v290 = vld [vmem:[%s215 + $0xe4] sm:$0xf]
      %v291 = vld [vmem:[%s215 + $0xe8] sm:$0xf]
      %v292 = vld [vmem:[%s215 + $0xec] sm:$0xf]
      %v293 = vld [vmem:[%s215 + $0xf0] sm:$0xf]
      %v294 = vld [vmem:[%s215 + $0xf4] sm:$0xf]
      %v295 = vld [vmem:[%s215 + $0xf8] sm:$0xf]
      %v296 = vld [vmem:[%s215 + $0xfc] sm:$0xf]
      %v297 = vld [vmem:[%s215 + $0x100] sm:$0xf]
      %v298 = vld [vmem:[%s215 + $0x104] sm:$0xf]
      %v299 = vld [vmem:[%s215 + $0x108] sm:$0xf]
      %v300 = vld [vmem:[%s215 + $0x10c] sm:$0xf]
      %v301 = vld [vmem:[%s215 + $0x110] sm:$0xf]
      %v302 = vld [vmem:[%s215 + $0x114] sm:$0xf]
      %v303 = vld [vmem:[%s215 + $0x118] sm:$0xf]
      %v304 = vld [vmem:[%s215 + $0x11c] sm:$0xf]
      %v305 = vld [vmem:[%s215 + $0x120] sm:$0xf]
      %v306 = vld [vmem:[%s215 + $0x124] sm:$0xf]
      %v307 = vld [vmem:[%s215 + $0x128] sm:$0xf]
      %v308 = vld [vmem:[%s215 + $0x12c] sm:$0xf]
      %v309 = vld [vmem:[%s215 + $0x130] sm:$0xf]
      %v310 = vld [vmem:[%s215 + $0x134] sm:$0xf]
      %v311 = vld [vmem:[%s215 + $0x138] sm:$0xf]
      %v312 = vld [vmem:[%s215 + $0x13c] sm:$0xf]
      %v313 = vld [vmem:[%s215 + $0x140] sm:$0xf]
      %v314 = vld [vmem:[%s215 + $0x144] sm:$0xf]
      %v315 = vld [vmem:[%s215 + $0x148] sm:$0xf]
      %v316 = vld [vmem:[%s215 + $0x14c] sm:$0xf]
      %v317 = vld [vmem:[%s215 + $0x150] sm:$0xf]
      %v318 = vld [vmem:[%s215 + $0x154] sm:$0xf]
      %v319 = vld [vmem:[%s215 + $0x158] sm:$0xf]
      %v320 = vld [vmem:[%s215 + $0x15c] sm:$0xf]
      %v321 = vld [vmem:[%s215 + $0x160] sm:$0xf]
      %v322 = vld [vmem:[%s215 + $0x164] sm:$0xf]
      %v323 = vld [vmem:[%s215 + $0x168] sm:$0xf]
      %v324 = vld [vmem:[%s215 + $0x16c] sm:$0xf]
      %v325 = vld [vmem:[%s215 + $0x170] sm:$0xf]
      %v326 = vld [vmem:[%s215 + $0x174] sm:$0xf]
      %v327 = vld [vmem:[%s215 + $0x178] sm:$0xf]
      %v328 = vld [vmem:[%s215 + $0x17c] sm:$0xf]
      %v329 = vld [vmem:[%s215 + $0x180] sm:$0xf]
      %v330 = vld [vmem:[%s215 + $0x184] sm:$0xf]
      %v331 = vld [vmem:[%s215 + $0x188] sm:$0xf]
      %v332 = vld [vmem:[%s215 + $0x18c] sm:$0xf]
      %v333 = vld [vmem:[%s215 + $0x190] sm:$0xf]
      %v334 = vld [vmem:[%s215 + $0x194] sm:$0xf]
      %v335 = vld [vmem:[%s215 + $0x198] sm:$0xf]
      %v336 = vld [vmem:[%s215 + $0x19c] sm:$0xf]
      %v337 = vld [vmem:[%s215 + $0x1a0] sm:$0xf]
      %v338 = vld [vmem:[%s215 + $0x1a4] sm:$0xf]
      %v339 = vld [vmem:[%s215 + $0x1a8] sm:$0xf]
      %v340 = vld [vmem:[%s215 + $0x1ac] sm:$0xf]
      %v341 = vld [vmem:[%s215 + $0x1b0] sm:$0xf]
      %v342 = vld [vmem:[%s215 + $0x1b4] sm:$0xf]
      %v343 = vld [vmem:[%s215 + $0x1b8] sm:$0xf]
      %v344 = vld [vmem:[%s215 + $0x1bc] sm:$0xf]
      %v345 = vld [vmem:[%s215 + $0x1c0] sm:$0xf]
      %v346 = vld [vmem:[%s215 + $0x1c4] sm:$0xf]
      %v347 = vld [vmem:[%s215 + $0x1c8] sm:$0xf]
      %v348 = vld [vmem:[%s215 + $0x1cc] sm:$0xf]
      %v349 = vld [vmem:[%s215 + $0x1d0] sm:$0xf]
      %v350 = vld [vmem:[%s215 + $0x1d4] sm:$0xf]
      %v351 = vld [vmem:[%s215 + $0x1d8] sm:$0xf]
      %v352 = vld [vmem:[%s215 + $0x1dc] sm:$0xf]
      %v353 = vld [vmem:[%s215 + $0x1e0] sm:$0xf]
      %v354 = vld [vmem:[%s215 + $0x1e4] sm:$0xf]
      %v355 = vld [vmem:[%s215 + $0x1e8] sm:$0xf]
      %v356 = vld [vmem:[%s215 + $0x1ec] sm:$0xf]
      %v357 = vld [vmem:[%s215 + $0x1f0] sm:$0xf]
      %v358 = vld [vmem:[%s215 + $0x1f4] sm:$0xf]
      %v359 = vld [vmem:[%s215 + $0x1f8] sm:$0xf]
      %v360 = vld [vmem:[%s215 + $0x1fc] sm:$0xf]
      %v365 = vunpack.c.l.b16 %v229
      %v366 = vunpack.c.h.b16 %v229
      %v367 = vunpack.c.l.b16 %v230
      %v368 = vunpack.c.h.b16 %v230
      %v369 = vunpack.c.l.b16 %v231
      %v370 = vunpack.c.h.b16 %v231
      %v371 = vunpack.c.l.b16 %v232
      %v372 = vunpack.c.h.b16 %v232
      %v373 = vpack.c.b16 %v365, %v365
      %v374 = vpack.c.b16 %v366, %v366
      %v375 = vpack.c.b16 %v367, %v367
      %v376 = vpack.c.b16 %v368, %v368
      %v377 = vpack.c.b16 %v369, %v369
      %v378 = vpack.c.b16 %v370, %v370
      %v379 = vpack.c.b16 %v371, %v371
      %v380 = vpack.c.b16 %v372, %v372
      %v517 = vunpack.c.l.b16 %v233
      %v518 = vunpack.c.l.b16 %v234
      %v519 = vunpack.c.l.b16 %v235
      %v520 = vunpack.c.l.b16 %v236
      %v521 = vunpack.c.l.b16 %v237
      %v522 = vunpack.c.l.b16 %v238
      %v523 = vunpack.c.l.b16 %v239
      %v524 = vunpack.c.l.b16 %v240
      %v525 = vunpack.c.l.b16 %v241
      %v526 = vunpack.c.l.b16 %v242
      %v527 = vunpack.c.l.b16 %v243
      %v528 = vunpack.c.l.b16 %v244
      %v529 = vunpack.c.l.b16 %v245
      %v530 = vunpack.c.l.b16 %v246
      %v531 = vunpack.c.l.b16 %v247
      %v532 = vunpack.c.l.b16 %v248
      %v533 = vunpack.c.l.b16 %v249
      %v534 = vunpack.c.l.b16 %v250
      %v535 = vunpack.c.l.b16 %v251
      %v536 = vunpack.c.l.b16 %v252
      %v537 = vunpack.c.l.b16 %v253
      %v538 = vunpack.c.l.b16 %v254
      %v539 = vunpack.c.l.b16 %v255
      %v540 = vunpack.c.l.b16 %v256
      %v541 = vunpack.c.l.b16 %v257
      %v542 = vunpack.c.l.b16 %v258
      %v543 = vunpack.c.l.b16 %v259
      %v544 = vunpack.c.l.b16 %v260
      %v545 = vunpack.c.l.b16 %v261
      %v546 = vunpack.c.l.b16 %v262
      %v547 = vunpack.c.l.b16 %v263
      %v548 = vunpack.c.l.b16 %v264
      %v549 = vunpack.c.l.b16 %v265
      %v550 = vunpack.c.l.b16 %v266
      %v551 = vunpack.c.l.b16 %v267
      %v552 = vunpack.c.l.b16 %v268
      %v553 = vunpack.c.l.b16 %v269
      %v554 = vunpack.c.l.b16 %v270
      %v555 = vunpack.c.l.b16 %v271
      %v556 = vunpack.c.l.b16 %v272
      %v557 = vunpack.c.l.b16 %v273
      %v558 = vunpack.c.l.b16 %v274
      %v559 = vunpack.c.l.b16 %v275
      %v560 = vunpack.c.l.b16 %v276
      %v561 = vunpack.c.l.b16 %v277
      %v562 = vunpack.c.l.b16 %v278
      %v563 = vunpack.c.l.b16 %v279
      %v564 = vunpack.c.l.b16 %v280
      %v565 = vunpack.c.l.b16 %v281
      %v566 = vunpack.c.l.b16 %v282
      %v567 = vunpack.c.l.b16 %v283
      %v568 = vunpack.c.l.b16 %v284
      %v569 = vunpack.c.l.b16 %v285
      %v570 = vunpack.c.l.b16 %v286
      %v571 = vunpack.c.l.b16 %v287
      %v572 = vunpack.c.l.b16 %v288
      %v573 = vunpack.c.l.b16 %v289
      %v574 = vunpack.c.l.b16 %v290
      %v575 = vunpack.c.l.b16 %v291
      %v576 = vunpack.c.l.b16 %v292
      %v577 = vunpack.c.l.b16 %v293
      %v578 = vunpack.c.l.b16 %v294
      %v579 = vunpack.c.l.b16 %v295
      %v580 = vunpack.c.l.b16 %v296
      %v581 = vunpack.c.l.b16 %v297
      %v582 = vunpack.c.l.b16 %v298
      %v583 = vunpack.c.l.b16 %v299
      %v584 = vunpack.c.l.b16 %v300
      %v585 = vunpack.c.l.b16 %v301
      %v586 = vunpack.c.l.b16 %v302
      %v587 = vunpack.c.l.b16 %v303
      %v588 = vunpack.c.l.b16 %v304
      %v589 = vunpack.c.l.b16 %v305
      %v590 = vunpack.c.l.b16 %v306
      %v591 = vunpack.c.l.b16 %v307
      %v592 = vunpack.c.l.b16 %v308
      %v593 = vunpack.c.l.b16 %v309
      %v594 = vunpack.c.l.b16 %v310
      %v595 = vunpack.c.l.b16 %v311
      %v596 = vunpack.c.l.b16 %v312
      %v597 = vunpack.c.l.b16 %v313
      %v598 = vunpack.c.l.b16 %v314
      %v599 = vunpack.c.l.b16 %v315
      %v600 = vunpack.c.l.b16 %v316
      %v601 = vunpack.c.l.b16 %v317
      %v602 = vunpack.c.l.b16 %v318
      %v603 = vunpack.c.l.b16 %v319
      %v604 = vunpack.c.l.b16 %v320
      %v605 = vunpack.c.l.b16 %v321
      %v606 = vunpack.c.l.b16 %v322
      %v607 = vunpack.c.l.b16 %v323
      %v608 = vunpack.c.l.b16 %v324
      %v609 = vunpack.c.l.b16 %v325
      %v610 = vunpack.c.l.b16 %v326
      %v611 = vunpack.c.l.b16 %v327
      %v612 = vunpack.c.l.b16 %v328
      %v613 = vunpack.c.l.b16 %v329
      %v614 = vunpack.c.l.b16 %v330
      %v615 = vunpack.c.l.b16 %v331
      %v616 = vunpack.c.l.b16 %v332
      %v617 = vunpack.c.l.b16 %v333
      %v618 = vunpack.c.l.b16 %v334
      %v619 = vunpack.c.l.b16 %v335
      %v620 = vunpack.c.l.b16 %v336
      %v621 = vunpack.c.l.b16 %v337
      %v622 = vunpack.c.l.b16 %v338
      %v623 = vunpack.c.l.b16 %v339
      %v624 = vunpack.c.l.b16 %v340
      %v625 = vunpack.c.l.b16 %v341
      %v626 = vunpack.c.l.b16 %v342
      %v627 = vunpack.c.l.b16 %v343
      %v628 = vunpack.c.l.b16 %v344
      %v629 = vunpack.c.l.b16 %v345
      %v630 = vunpack.c.l.b16 %v346
      %v631 = vunpack.c.l.b16 %v347
      %v632 = vunpack.c.l.b16 %v348
      %v633 = vunpack.c.l.b16 %v349
      %v634 = vunpack.c.l.b16 %v350
      %v635 = vunpack.c.l.b16 %v351
      %v636 = vunpack.c.l.b16 %v352
      %v637 = vunpack.c.l.b16 %v353
      %v638 = vunpack.c.l.b16 %v354
      %v639 = vunpack.c.l.b16 %v355
      %v640 = vunpack.c.l.b16 %v356
      %v641 = vunpack.c.l.b16 %v357
      %v642 = vunpack.c.l.b16 %v358
      %v643 = vunpack.c.l.b16 %v359
      %v644 = vunpack.c.l.b16 %v360
      %v645 = vpack.c.b16 %v518, %v517
      %v646 = vpack.c.b16 %v520, %v519
      %v647 = vpack.c.b16 %v522, %v521
      %v648 = vpack.c.b16 %v524, %v523
      %v649 = vpack.c.b16 %v526, %v525
      %v650 = vpack.c.b16 %v528, %v527
      %v651 = vpack.c.b16 %v530, %v529
      %v652 = vpack.c.b16 %v532, %v531
      %v653 = vpack.c.b16 %v534, %v533
      %v654 = vpack.c.b16 %v536, %v535
      %v655 = vpack.c.b16 %v538, %v537
      %v656 = vpack.c.b16 %v540, %v539
      %v657 = vpack.c.b16 %v542, %v541
      %v658 = vpack.c.b16 %v544, %v543
      %v659 = vpack.c.b16 %v546, %v545
      %v660 = vpack.c.b16 %v548, %v547
      %v661 = vpack.c.b16 %v550, %v549
      %v662 = vpack.c.b16 %v552, %v551
      %v663 = vpack.c.b16 %v554, %v553
      %v664 = vpack.c.b16 %v556, %v555
      %v665 = vpack.c.b16 %v558, %v557
      %v666 = vpack.c.b16 %v560, %v559
      %v667 = vpack.c.b16 %v562, %v561
      %v668 = vpack.c.b16 %v564, %v563
      %v669 = vpack.c.b16 %v566, %v565
      %v670 = vpack.c.b16 %v568, %v567
      %v671 = vpack.c.b16 %v570, %v569
      %v672 = vpack.c.b16 %v572, %v571
      %v673 = vpack.c.b16 %v574, %v573
      %v674 = vpack.c.b16 %v576, %v575
      %v675 = vpack.c.b16 %v578, %v577
      %v676 = vpack.c.b16 %v580, %v579
      %v677 = vpack.c.b16 %v582, %v581
      %v678 = vpack.c.b16 %v584, %v583
      %v679 = vpack.c.b16 %v586, %v585
      %v680 = vpack.c.b16 %v588, %v587
      %v681 = vpack.c.b16 %v590, %v589
      %v682 = vpack.c.b16 %v592, %v591
      %v683 = vpack.c.b16 %v594, %v593
      %v684 = vpack.c.b16 %v596, %v595
      %v685 = vpack.c.b16 %v598, %v597
      %v686 = vpack.c.b16 %v600, %v599
      %v687 = vpack.c.b16 %v602, %v601
      %v688 = vpack.c.b16 %v604, %v603
      %v689 = vpack.c.b16 %v606, %v605
      %v690 = vpack.c.b16 %v608, %v607
      %v691 = vpack.c.b16 %v610, %v609
      %v692 = vpack.c.b16 %v612, %v611
      %v693 = vpack.c.b16 %v614, %v613
      %v694 = vpack.c.b16 %v616, %v615
      %v695 = vpack.c.b16 %v618, %v617
      %v696 = vpack.c.b16 %v620, %v619
      %v697 = vpack.c.b16 %v622, %v621
      %v698 = vpack.c.b16 %v624, %v623
      %v699 = vpack.c.b16 %v626, %v625
      %v700 = vpack.c.b16 %v628, %v627
      %v701 = vpack.c.b16 %v630, %v629
      %v702 = vpack.c.b16 %v632, %v631
      %v703 = vpack.c.b16 %v634, %v633
      %v704 = vpack.c.b16 %v636, %v635
      %v705 = vpack.c.b16 %v638, %v637
      %v706 = vpack.c.b16 %v640, %v639
      %v707 = vpack.c.b16 %v642, %v641
      %v708 = vpack.c.b16 %v644, %v643
      %773 = vmatprep.subr.bf16.mxu0 0
      %774 = vmatpush1.bf16.msra.mxu0 %v645
      %775 = vmatprep.subr.bf16.mxu0 0
      %776 = vmatpush1.bf16.msra.mxu0 %v646
      %777 = vmatprep.subr.bf16.mxu0 0
      %778 = vmatpush1.bf16.msra.mxu0 %v647
      %779 = vmatprep.subr.bf16.mxu0 0
      %780 = vmatpush1.bf16.msra.mxu0 %v648
      %781 = vmatprep.subr.bf16.mxu0 0
      %782 = vmatpush1.bf16.msra.mxu0 %v649
      %783 = vmatprep.subr.bf16.mxu0 0
      %784 = vmatpush1.bf16.msra.mxu0 %v650
      %785 = vmatprep.subr.bf16.mxu0 0
      %786 = vmatpush1.bf16.msra.mxu0 %v651
      %787 = vmatprep.subr.bf16.mxu0 0
      %788 = vmatpush1.bf16.msra.mxu0 %v652
      %789 = vmatprep.subr.bf16.mxu0 0
      %790 = vmatpush1.bf16.msra.mxu0 %v653
      %791 = vmatprep.subr.bf16.mxu0 0
      %792 = vmatpush1.bf16.msra.mxu0 %v654
      %793 = vmatprep.subr.bf16.mxu0 0
      %794 = vmatpush1.bf16.msra.mxu0 %v655
      %795 = vmatprep.subr.bf16.mxu0 0
      %796 = vmatpush1.bf16.msra.mxu0 %v656
      %797 = vmatprep.subr.bf16.mxu0 0
      %798 = vmatpush1.bf16.msra.mxu0 %v657
      %799 = vmatprep.subr.bf16.mxu0 0
      %800 = vmatpush1.bf16.msra.mxu0 %v658
      %801 = vmatprep.subr.bf16.mxu0 0
      %802 = vmatpush1.bf16.msra.mxu0 %v659
      %803 = vmatprep.subr.bf16.mxu0 0
      %804 = vmatpush1.bf16.msra.mxu0 %v660
      %805 = vmatprep.mubr.bf16.mxu0 %v374
      %806 = vmatmul.mubr.bf16.gmra.mrb[0].mxu0 %v373
      %v807 = vpop.f32.mrb[0].mxu0
      %v808 = vadd.f32 0.0, %v807
      %v809 = vpop.f32.mrb[0].mxu0
      %v810 = vpop.f32.mrb[0].mxu0
      %v811 = vpop.f32.mrb[0].mxu0
      %812 = vdwg.mxu0
      %813 = vmatprep.subr.bf16.mxu0 0
      %814 = vmatpush1.bf16.msra.mxu0 %v661
      %815 = vmatprep.subr.bf16.mxu0 0
      %816 = vmatpush1.bf16.msra.mxu0 %v662
      %817 = vmatprep.subr.bf16.mxu0 0
      %818 = vmatpush1.bf16.msra.mxu0 %v663
      %819 = vmatprep.subr.bf16.mxu0 0
      %820 = vmatpush1.bf16.msra.mxu0 %v664
      %821 = vmatprep.subr.bf16.mxu0 0
      %822 = vmatpush1.bf16.msra.mxu0 %v665
      %823 = vmatprep.subr.bf16.mxu0 0
      %824 = vmatpush1.bf16.msra.mxu0 %v666
      %825 = vmatprep.subr.bf16.mxu0 0
      %826 = vmatpush1.bf16.msra.mxu0 %v667
      %827 = vmatprep.subr.bf16.mxu0 0
      %828 = vmatpush1.bf16.msra.mxu0 %v668
      %829 = vmatprep.subr.bf16.mxu0 0
      %830 = vmatpush1.bf16.msra.mxu0 %v669
      %831 = vmatprep.subr.bf16.mxu0 0
      %832 = vmatpush1.bf16.msra.mxu0 %v670
      %833 = vmatprep.subr.bf16.mxu0 0
      %834 = vmatpush1.bf16.msra.mxu0 %v671
      %835 = vmatprep.subr.bf16.mxu0 0
      %836 = vmatpush1.bf16.msra.mxu0 %v672
      %837 = vmatprep.subr.bf16.mxu0 0
      %838 = vmatpush1.bf16.msra.mxu0 %v673
      %839 = vmatprep.subr.bf16.mxu0 0
      %840 = vmatpush1.bf16.msra.mxu0 %v674
      %841 = vmatprep.subr.bf16.mxu0 0
      %842 = vmatpush1.bf16.msra.mxu0 %v675
      %843 = vmatprep.subr.bf16.mxu0 0
      %844 = vmatpush1.bf16.msra.mxu0 %v676
      %845 = vmatprep.mubr.bf16.mxu0 %v376
      %846 = vmatmul.mubr.bf16.gmra.mrb[0].mxu0 %v375
      %v847 = vpop.f32.mrb[0].mxu0
      %v848 = vadd.f32 %v808, %v847
      %v849 = vpop.f32.mrb[0].mxu0
      %v850 = vpop.f32.mrb[0].mxu0
      %v851 = vpop.f32.mrb[0].mxu0
      %852 = vdwg.mxu0
      %853 = vmatprep.subr.bf16.mxu0 0
      %854 = vmatpush1.bf16.msra.mxu0 %v677
      %855 = vmatprep.subr.bf16.mxu0 0
      %856 = vmatpush1.bf16.msra.mxu0 %v678
      %857 = vmatprep.subr.bf16.mxu0 0
      %858 = vmatpush1.bf16.msra.mxu0 %v679
      %859 = vmatprep.subr.bf16.mxu0 0
      %860 = vmatpush1.bf16.msra.mxu0 %v680
      %861 = vmatprep.subr.bf16.mxu0 0
      %862 = vmatpush1.bf16.msra.mxu0 %v681
      %863 = vmatprep.subr.bf16.mxu0 0
      %864 = vmatpush1.bf16.msra.mxu0 %v682
      %865 = vmatprep.subr.bf16.mxu0 0
      %866 = vmatpush1.bf16.msra.mxu0 %v683
      %867 = vmatprep.subr.bf16.mxu0 0
      %868 = vmatpush1.bf16.msra.mxu0 %v684
      %869 = vmatprep.subr.bf16.mxu0 0
      %870 = vmatpush1.bf16.msra.mxu0 %v685
      %871 = vmatprep.subr.bf16.mxu0 0
      %872 = vmatpush1.bf16.msra.mxu0 %v686
      %873 = vmatprep.subr.bf16.mxu0 0
      %874 = vmatpush1.bf16.msra.mxu0 %v687
      %875 = vmatprep.subr.bf16.mxu0 0
      %876 = vmatpush1.bf16.msra.mxu0 %v688
      %877 = vmatprep.subr.bf16.mxu0 0
      %878 = vmatpush1.bf16.msra.mxu0 %v689
      %879 = vmatprep.subr.bf16.mxu0 0
      %880 = vmatpush1.bf16.msra.mxu0 %v690
      %881 = vmatprep.subr.bf16.mxu0 0
      %882 = vmatpush1.bf16.msra.mxu0 %v691
      %883 = vmatprep.subr.bf16.mxu0 0
      %884 = vmatpush1.bf16.msra.mxu0 %v692
      %885 = vmatprep.mubr.bf16.mxu0 %v378
      %886 = vmatmul.mubr.bf16.gmra.mrb[0].mxu0 %v377
      %v887 = vpop.f32.mrb[0].mxu0
      %v888 = vadd.f32 %v848, %v887
      %v889 = vpop.f32.mrb[0].mxu0
      %v890 = vpop.f32.mrb[0].mxu0
      %v891 = vpop.f32.mrb[0].mxu0
      %892 = vdwg.mxu0
      %893 = vmatprep.subr.bf16.mxu0 0
      %894 = vmatpush1.bf16.msra.mxu0 %v693
      %895 = vmatprep.subr.bf16.mxu0 0
      %896 = vmatpush1.bf16.msra.mxu0 %v694
      %897 = vmatprep.subr.bf16.mxu0 0
      %898 = vmatpush1.bf16.msra.mxu0 %v695
      %899 = vmatprep.subr.bf16.mxu0 0
      %900 = vmatpush1.bf16.msra.mxu0 %v696
      %901 = vmatprep.subr.bf16.mxu0 0
      %902 = vmatpush1.bf16.msra.mxu0 %v697
      %903 = vmatprep.subr.bf16.mxu0 0
      %904 = vmatpush1.bf16.msra.mxu0 %v698
      %905 = vmatprep.subr.bf16.mxu0 0
      %906 = vmatpush1.bf16.msra.mxu0 %v699
      %907 = vmatprep.subr.bf16.mxu0 0
      %908 = vmatpush1.bf16.msra.mxu0 %v700
      %909 = vmatprep.subr.bf16.mxu0 0
      %910 = vmatpush1.bf16.msra.mxu0 %v701
      %911 = vmatprep.subr.bf16.mxu0 0
      %912 = vmatpush1.bf16.msra.mxu0 %v702
      %913 = vmatprep.subr.bf16.mxu0 0
      %914 = vmatpush1.bf16.msra.mxu0 %v703
      %915 = vmatprep.subr.bf16.mxu0 0
      %916 = vmatpush1.bf16.msra.mxu0 %v704
      %917 = vmatprep.subr.bf16.mxu0 0
      %918 = vmatpush1.bf16.msra.mxu0 %v705
      %919 = vmatprep.subr.bf16.mxu0 0
      %920 = vmatpush1.bf16.msra.mxu0 %v706
      %921 = vmatprep.subr.bf16.mxu0 0
      %922 = vmatpush1.bf16.msra.mxu0 %v707
      %923 = vmatprep.subr.bf16.mxu0 0
      %924 = vmatpush1.bf16.msra.mxu0 %v708
      %925 = vmatprep.mubr.bf16.mxu0 %v380
      %926 = vmatmul.mubr.bf16.gmra.mrb[0].mxu0 %v379
      %v927 = vpop.f32.mrb[0].mxu0
      %v928 = vadd.f32 %v888, %v927
      %v929 = vpop.f32.mrb[0].mxu0
      %v930 = vpop.f32.mrb[0].mxu0
      %v931 = vpop.f32.mrb[0].mxu0
      %932 = vdwg.mxu0
      %v933 = vadd.f32 %v228, %v928
      %vm934 = vcmask 7168
      %935 = vst.msk [vmem:[#allocation2] sm:$0xff] %vm934, %v933
      %p936 = scmp.eq.s32.totalorder %s21, 7
      // Predicated region
      $region37: #{discriminator_forward.9} parent=31 // pred_check
        %p937 = pneg %p936
      $region38: #{discriminator_forward.9} parent=31 // pred_check_branch
        %939 = sbr.rel (%p937) target = $region40
      $region39: #{discriminator_forward.9} parent=31 // pred_region
        %v940 = vld [vmem:[#allocation2] sm:$0xff]
        %v941 = vld [vmem:[#allocation3] sm:$0x1]
        %v943 = vlaneseq
        %v944 = vshrl.u32 %v943, 7
        %v945 = vsub.s32 0, %v944
        %v946 = vrot.slane %v941, %v945
        %v948 = vadd.f32 %v940, %v946
        %v949 = vsub.f32 0.0, %v948
        %v950 = vmul.f32 %v949, 1.442695
        %v951 = vpow.pop %v950
        %v952 = vadd.f32 %v951, 1.0
        %v953 = vrcp.pop %v952
        %v954 = vmul.f32 1.0, %v953
        %955 = vst.msk [vmem:[%s220] sm:$0xff] %vm934, %v954
      $region40: #{discriminator_forward.9} parent=31 // pred_fallthru
        _
      %p956 = scmp.lt.s32.totalorder %s20, 0
      %s957 = scalar_select %p956, %s20, 0
      %s958 = smul.addr %s957, 8
      %s959 = scalar_lea.vmem %s3, %s958
      // Predicated region
      $region41: #{discriminator_forward.9} parent=31 // pred_check
        %p960 = pneg %p121
      $region42: #{discriminator_forward.9} parent=31 // pred_check_branch
        %962 = sbr.rel (%p960) target = $region44
      $region43: #{discriminator_forward.9} parent=31 // pred_region
        _
      $region44: #{discriminator_forward.9} parent=31 // pred_fallthru
        _
      // Predicated region
      $region45: #{discriminator_forward.9} parent=31 // pred_check
        %p963 = pneg %p121
      $region46: #{discriminator_forward.9} parent=31 // pred_check_branch
        %965 = sbr.rel (%p963) target = $region48
      $region47: #{discriminator_forward.9} parent=31 // pred_region
        %p966 = scmp.lt.s32.totalorder %s20, 0
        %s967 = scalar_select %p966, %s20, 0
        %s968 = smul.addr %s967, 8
        %s969 = scalar_lea.vmem %s3, %s968
      $region48: #{discriminator_forward.9} parent=31 // pred_fallthru
        _
    $region32: #{discriminator_forward.9} parent=5 // pred_fallthru
      _
    %p970 = scmp.le.s32.totalorder 2, %s11
    // Predicated region
    $region49: #{discriminator_forward.9} parent=5 // pred_check
      %p971 = pneg %p970
    $region50: #{discriminator_forward.9} parent=5 // pred_check_branch
      %973 = sbr.rel (%p971) target = $region52
    $region51: #{discriminator_forward.9} parent=5 // pred_region
      %s974 = ssub.s32 %s11, 2
    $region52: #{discriminator_forward.9} parent=5 // pred_fallthru
      _
  $region6: #{discriminator_forward.9} parent=0 // loop_footer
    %s15 = sadd.s32 1, %s11
  $region7: #{discriminator_forward.9} parent=0 // loop_footer_branch
    %10 = sbr.rel target = $region3
  $region8: #{discriminator_forward.9} parent=0 // loop_exit
    _

</llo_original>
